<compile_context>
chip_gen: v6e
topology: v6e:2x2x1
jax: 0.10.0
libtpu: 0.0.40
codegen_flags: <defaults>
</compile_context>

<pallas_src>
import math

import jax
import jax.numpy as jnp
from jax import lax
from jax.experimental import pallas as pl
from jax.experimental.pallas import tpu as pltpu

HID = 100        # LSTM hidden size (fixed by the PyTorch module)
HP = 128         # hidden padded to one full 128-lane vreg
C = 64           # conv output channels

_VMEM_LIMIT = 32 * 1024 * 1024


def _sigmoid(x):
    # tanh runs on the EUP slot; avoids the VPU divide of 1/(1+exp(-x)).
    return 0.5 * (jnp.tanh(0.5 * x) + 1.0)


def _row_tile(m, max_rows):
    """Pick a row tile (multiple of 8, or the full extent) and the grid size."""
    if m <= max_rows:
        return m, 1
    return max_rows, pl.cdiv(m, max_rows)


# ---------------------------------------------------------------------------
# Kernel 1: fused  Conv2d(1->64,3x3,pad=1) + ReLU + MaxPool(2,1) + permute
#           + bidirectional-LSTM input projection (x @ wx + bx).
# The conv is expressed as two (Kc=3*(H+2), 1024) matmuls (even / odd pooled
# rows) whose columns already carry the (h2,c) -> c*H2+h2 permute; the pooled
# row never leaves VMEM before the 1024x1024 projection.  Outputs are the fwd
# and bwd gate pre-activation streams.
# ---------------------------------------------------------------------------
def _make_conv_proj_kernel(m_real):
    def kernel(x_ref, we_ref, wo_ref, bc_ref, wx_ref, bx_ref, of_ref, ob_ref):
        xe = jnp.dot(x_ref[...], we_ref[...],
                     preferred_element_type=jnp.float32) + bc_ref[...]
        xo = jnp.dot(x_ref[...], wo_ref[...],
                     preferred_element_type=jnp.float32) + bc_ref[...]
        pooled = jnp.maximum(jnp.maximum(xe, 0.0), jnp.maximum(xo, 0.0))
        g = jnp.dot(pooled, wx_ref[...],
                    preferred_element_type=jnp.float32) + bx_ref[...]
        if m_real is not None:
            # Zero the time-padded rows so the backward LSTM state stays zero
            # through its (leading) padded timesteps.
            tm = x_ref.shape[0]
            row = pl.program_id(0) * tm + lax.broadcasted_iota(
                jnp.int32, (tm, 1), 0)
            g = jnp.where(row < m_real, g, 0.0)
        of_ref[...] = g[:, :4 * HP]
        ob_ref[...] = g[:, 4 * HP:]
    return kernel


def conv_relu_pool_proj(x, conv_w, conv_b, wx, bx, Tp, max_rows=256):
    N, _, H, W = x.shape
    H2 = H // 2
    F = C * H2                       # 1024 when H == 32
    Kc = 3 * (H + 2)                 # 3 W-taps x (H+2) padded rows = 102
    m_real = W * N
    Mp = Tp * N

    # im2col-lite: only the 3 W-shifted (H+2)-wide column slabs, not 9 taps.
    xp = jnp.pad(x[:, 0], ((0, 0), (1, 1), (1, 1)))              # (N, H+2, W+2)
    xt = jnp.transpose(xp, (2, 0, 1))                            # (W+2, N, H+2)
    xcat = jnp.concatenate([xt[d:d + W] for d in range(3)], axis=-1)
    xcat = xcat.reshape(m_real, Kc)                              # rows = (w, n)
    if Mp > m_real:
        xcat = jnp.pad(xcat, ((0, Mp - m_real), (0, 0)))

    # Conv weights folded into even/odd pooled-row matmul weights; the H taps
    # live in the K dim, the (c*H2+h2) permute lives in the columns.
    wmat = conv_w.reshape(C, 3, 3).astype(jnp.float32)           # [c, di, dj]
    h_id = jnp.arange(H + 2)[:, None, None]
    h2_id = jnp.arange(H2)[None, :, None]
    di_id = jnp.arange(3)[None, None, :]

    def tap_weight(offset):
        sel = (h_id == 2 * h2_id + offset + di_id).astype(jnp.float32)
        wd = jnp.einsum('hki,cij->jhck', sel, wmat)              # (3, H+2, C, H2)
        return wd.reshape(Kc, F)

    w_even = tap_weight(0)
    w_odd = tap_weight(1)
    bc = jnp.repeat(conv_b.astype(jnp.float32), H2).reshape(1, F)

    tm, nblk = _row_tile(Mp, max_rows)
    kernel = _make_conv_proj_kernel(m_real if Mp > m_real else None)
    return pl.pallas_call(
        kernel,
        out_shape=(jax.ShapeDtypeStruct((Mp, 4 * HP), jnp.float32),
                   jax.ShapeDtypeStruct((Mp, 4 * HP), jnp.float32)),
        grid=(nblk,),
        in_specs=[pl.BlockSpec((tm, Kc), lambda i: (i, 0)),
                  pl.BlockSpec((Kc, F), lambda i: (0, 0)),
                  pl.BlockSpec((Kc, F), lambda i: (0, 0)),
                  pl.BlockSpec((1, F), lambda i: (0, 0)),
                  pl.BlockSpec((F, 8 * HP), lambda i: (0, 0)),
                  pl.BlockSpec((1, 8 * HP), lambda i: (0, 0))],
        out_specs=(pl.BlockSpec((tm, 4 * HP), lambda i: (i, 0)),
                   pl.BlockSpec((tm, 4 * HP), lambda i: (i, 0))),
        compiler_params=pltpu.CompilerParams(
            dimension_semantics=("parallel",),
            vmem_limit_bytes=_VMEM_LIMIT),
    )(xcat, w_even, w_odd, bc, wx, bx.reshape(1, 8 * HP))


# ---------------------------------------------------------------------------
# Kernel 2: fused bidirectional LSTM recurrence, time-blocked (TB steps per
# grid iteration).  fwd handles global times [t*TB, t*TB+TB), bwd handles the
# mirrored block in reverse.  h/c live in per-direction (N, 128) VMEM scratch;
# each step does two (N,128)@(128,512) recurrent dots; all gate slices and
# h stores are on 128-lane boundaries.
# ---------------------------------------------------------------------------
def bilstm_kernel(xwf_ref, xwb_ref, whhf_ref, whhb_ref, of_ref, ob_ref,
                  hf_ref, cf_ref, hb_ref, cb_ref):
    @pl.when(pl.program_id(0) == 0)
    def _():
        hf_ref[...] = jnp.zeros_like(hf_ref)
        cf_ref[...] = jnp.zeros_like(cf_ref)
        hb_ref[...] = jnp.zeros_like(hb_ref)
        cb_ref[...] = jnp.zeros_like(cb_ref)

    tb = xwf_ref.shape[0]

    def gate_update(g, c_prev):                 # g: (N, 512)
        i = _sigmoid(g[:, 0 * HP:1 * HP])
        f = _sigmoid(g[:, 1 * HP:2 * HP])
        gg = jnp.tanh(g[:, 2 * HP:3 * HP])
        o = _sigmoid(g[:, 3 * HP:4 * HP])
        c_new = f * c_prev + i * gg
        h_new = o * jnp.tanh(c_new)
        return h_new, c_new

    # TODO(synk): on v7x, split the two directions over a leading "parallel"
    # grid axis so each TensorCore runs one direction.
    for i in range(tb):
        hwf = jnp.dot(hf_ref[...], whhf_ref[...],
                      preferred_element_type=jnp.float32)        # (N, 512)
        hwb = jnp.dot(hb_ref[...], whhb_ref[...],
                      preferred_element_type=jnp.float32)
        hfn, cfn = gate_update(xwf_ref[i] + hwf, cf_ref[...])
        hbn, cbn = gate_update(xwb_ref[tb - 1 - i] + hwb, cb_ref[...])
        hf_ref[...] = hfn
        cf_ref[...] = cfn
        hb_ref[...] = hbn
        cb_ref[...] = cbn
        of_ref[i] = hfn
        ob_ref[tb - 1 - i] = hbn


def bilstm(xw_f, xw_b, whh_f, whh_b, TB):
    Tp, N, _ = xw_f.shape
    nb = Tp // TB
    return pl.pallas_call(
        bilstm_kernel,
        out_shape=(jax.ShapeDtypeStruct((Tp, N, HP), jnp.float32),
                   jax.ShapeDtypeStruct((Tp, N, HP), jnp.float32)),
        grid=(nb,),
        in_specs=[pl.BlockSpec((TB, N, 4 * HP), lambda t: (t, 0, 0)),
                  pl.BlockSpec((TB, N, 4 * HP), lambda t: (nb - 1 - t, 0, 0)),
                  pl.BlockSpec((HP, 4 * HP), lambda t: (0, 0)),
                  pl.BlockSpec((HP, 4 * HP), lambda t: (0, 0))],
        out_specs=(pl.BlockSpec((TB, N, HP), lambda t: (t, 0, 0)),
                   pl.BlockSpec((TB, N, HP), lambda t: (nb - 1 - t, 0, 0))),
        scratch_shapes=[pltpu.VMEM((N, HP), jnp.float32) for _ in range(4)],
        compiler_params=pltpu.CompilerParams(
            dimension_semantics=("arbitrary",),
            vmem_limit_bytes=_VMEM_LIMIT),
    )(xw_f, xw_b, whh_f, whh_b)


# ---------------------------------------------------------------------------
# Kernel 3: Linear(200 -> num_classes) + log_softmax, consuming hf/hb directly
# (no (T,N,200) concat); classes padded to 128 lanes for unmasked stores.
# ---------------------------------------------------------------------------
def fc_logsoftmax_kernel(hf_ref, hb_ref, w1_ref, w2_ref, b_ref, o_ref):
    z = (jnp.dot(hf_ref[...], w1_ref[...], preferred_element_type=jnp.float32)
         + jnp.dot(hb_ref[...], w2_ref[...], preferred_element_type=jnp.float32)
         + b_ref[...])
    m = jnp.max(z, axis=-1, keepdims=True)
    lse = m + jnp.log(jnp.sum(jnp.exp(z - m), axis=-1, keepdims=True))
    o_ref[...] = z - lse


def fc_logsoftmax(hf, hb, fc_w, fc_b, T, max_rows=1024):
    Tp, N, _ = hf.shape
    nc = fc_b.shape[0]
    ncp = ((nc + 127) // 128) * 128
    w1 = jnp.zeros((HP, ncp), jnp.float32).at[:HID, :nc].set(fc_w[:, :HID].T)
    w2 = jnp.zeros((HP, ncp), jnp.float32).at[:HID, :nc].set(fc_w[:, HID:].T)
    # Padded class lanes get -1e30 so they vanish from the logsumexp.
    bp = jnp.full((1, ncp), -1e30, jnp.float32).at[0, :nc].set(fc_b)
    M = Tp * N
    tm, nblk = _row_tile(M, max_rows)
    out = pl.pallas_call(
        fc_logsoftmax_kernel,
        out_shape=jax.ShapeDtypeStruct((M, ncp), jnp.float32),
        grid=(nblk,),
        in_specs=[pl.BlockSpec((tm, HP), lambda i: (i, 0)),
                  pl.BlockSpec((tm, HP), lambda i: (i, 0)),
                  pl.BlockSpec((HP, ncp), lambda i: (0, 0)),
                  pl.BlockSpec((HP, ncp), lambda i: (0, 0)),
                  pl.BlockSpec((1, ncp), lambda i: (0, 0))],
        out_specs=pl.BlockSpec((tm, ncp), lambda i: (i, 0)),
        compiler_params=pltpu.CompilerParams(
            dimension_semantics=("parallel",),
            vmem_limit_bytes=_VMEM_LIMIT),
    )(hf.reshape(M, HP), hb.reshape(M, HP), w1, w2, bp)
    # TODO(synk): keep the lane-dense (Tp, N, ncp) slab when the consumer
    # (e.g. CTC loss) can take padded classes; the slice forces an XLA copy.
    return out.reshape(Tp, N, ncp)[:T, :, :nc]


# ---------------------------------------------------------------------------
# Weight repacking: per-gate 100 -> 128 lane padding, fwd/bwd fusion.
# ---------------------------------------------------------------------------
def _pack_gate_cols(w, b):
    """(4*HID, K) torch layout -> (K, 4*HP) columns with each gate padded to 128."""
    K = w.shape[1]
    wp = jnp.zeros((K, 4 * HP), jnp.float32)
    bp = jnp.zeros((4 * HP,), jnp.float32)
    for g in range(4):
        wp = wp.at[:, g * HP:g * HP + HID].set(w[g * HID:(g + 1) * HID, :].T)
        bp = bp.at[g * HP:g * HP + HID].set(b[g * HID:(g + 1) * HID])
    return wp, bp


def _pack_lstm_weights(params):
    wxf, bxf = _pack_gate_cols(params['w_ih_fwd'],
                               params['b_ih_fwd'] + params['b_hh_fwd'])
    wxb, bxb = _pack_gate_cols(params['w_ih_bwd'],
                               params['b_ih_bwd'] + params['b_hh_bwd'])
    wx = jnp.concatenate([wxf, wxb], axis=1)                     # (1024, 1024)
    bx = jnp.concatenate([bxf, bxb], axis=0)                     # (1024,)
    zb = jnp.zeros((4 * HID,), jnp.float32)
    whhf, _ = _pack_gate_cols(params['w_hh_fwd'], zb)            # (100, 512)
    whhb, _ = _pack_gate_cols(params['w_hh_bwd'], zb)            # (100, 512)
    whh_f = jnp.zeros((HP, 4 * HP), jnp.float32).at[:HID].set(whhf)
    whh_b = jnp.zeros((HP, 4 * HP), jnp.float32).at[:HID].set(whhb)
    return wx, bx, whh_f, whh_b


# ---------------------------------------------------------------------------
# Full forward
# ---------------------------------------------------------------------------
def ocr_forward(x, params, tb=8):
    N, _, H, W = x.shape
    assert H == 32, "LSTM input size 1024 requires H == 32 (64 channels * H/2)"
    T = W
    TB = min(tb, T)
    nb = pl.cdiv(T, TB)
    Tp = nb * TB                                     # time padded to TB blocks

    wx, bx, whh_f, whh_b = _pack_lstm_weights(params)

    # Fused conv + relu + pool + permute + input projection -> gate streams.
    xw_f, xw_b = conv_relu_pool_proj(x, params['conv_w'], params['conv_b'],
                                     wx, bx, Tp)                 # (Tp*N, 512) x2
    xw_f = xw_f.reshape(Tp, N, 4 * HP)
    xw_b = xw_b.reshape(Tp, N, 4 * HP)

    hf, hb = bilstm(xw_f, xw_b, whh_f, whh_b, TB)                # 2 x (Tp, N, 128)
    return fc_logsoftmax(hf, hb, params['fc_w'], params['fc_b'], T)   # (T, N, nc)


# ---------------------------------------------------------------------------
# Pure-JAX reference (mirrors the PyTorch forward) for correctness checking.
# ---------------------------------------------------------------------------
def reference_forward(x, params):
    with jax.default_matmul_precision('highest'):
        conv = lax.conv_general_dilated(
            x, params['conv_w'], window_strides=(1, 1), padding='SAME',
            dimension_numbers=('NCHW', 'OIHW', 'NCHW'))
        conv = jnp.maximum(conv + params['conv_b'][None, :, None, None], 0.0)
        N, Cc, H, W = conv.shape
        pooled = conv.reshape(N, Cc, H // 2, 2, W).max(axis=3)           # (N, C, H2, W)
        seq = pooled.transpose(0, 3, 1, 2).reshape(N, W, Cc * (H // 2)).transpose(1, 0, 2)

        def run_dir(xs, wih, whh, bih, bhh, reverse):
            def step(carry, xt):
                h, c = carry
                gates = xt @ wih.T + bih + h @ whh.T + bhh
                i = _sigmoid(gates[:, :HID])
                f = _sigmoid(gates[:, HID:2 * HID])
                g = jnp.tanh(gates[:, 2 * HID:3 * HID])
                o = _sigmoid(gates[:, 3 * HID:])
                c = f * c + i * g
                h = o * jnp.tanh(c)
                return (h, c), h
            h0 = jnp.zeros((xs.shape[1], HID), jnp.float32)
            xs_ = xs[::-1] if reverse else xs
            _, hs = lax.scan(step, (h0, h0), xs_)
            return hs[::-1] if reverse else hs

        hf = run_dir(seq, params['w_ih_fwd'], params['w_hh_fwd'],
                     params['b_ih_fwd'], params['b_hh_fwd'], False)
        hb = run_dir(seq, params['w_ih_bwd'], params['w_hh_bwd'],
                     params['b_ih_bwd'], params['b_hh_bwd'], True)
        out = jnp.concatenate([hf, hb], axis=-1)
        logits = out @ params['fc_w'].T + params['fc_b']
        return jax.nn.log_softmax(logits, axis=2)


def init_params(key, num_classes):
    ks = jax.random.split(key, 12)

    def u(k, shape, scale):
        return jax.random.uniform(k, shape, jnp.float32, -scale, scale)

    s_conv = 1.0 / 3.0
    s_lstm = 1.0 / math.sqrt(HID)
    s_fc = 1.0 / math.sqrt(2 * HID)
    return {
        'conv_w': u(ks[0], (64, 1, 3, 3), s_conv),
        'conv_b': u(ks[1], (64,), s_conv),
        'w_ih_fwd': u(ks[2], (4 * HID, 1024), s_lstm),
        'w_hh_fwd': u(ks[3], (4 * HID, HID), s_lstm),
        'b_ih_fwd': u(ks[4], (4 * HID,), s_lstm),
        'b_hh_fwd': u(ks[5], (4 * HID,), s_lstm),
        'w_ih_bwd': u(ks[6], (4 * HID, 1024), s_lstm),
        'w_hh_bwd': u(ks[7], (4 * HID, HID), s_lstm),
        'b_ih_bwd': u(ks[8], (4 * HID,), s_lstm),
        'b_hh_bwd': u(ks[9], (4 * HID,), s_lstm),
        'fc_w': u(ks[10], (num_classes, 2 * HID), s_fc),
        'fc_b': u(ks[11], (num_classes,), s_fc),
    }


if __name__ == "__main__":
    key = jax.random.PRNGKey(0)
    kx, kp = jax.random.split(key)

    # H must be 32 so that the LSTM input size is 64 * (H/2) = 1024.
    N, H, W = 2, 32, 8
    num_classes = 16

    x = jax.random.normal(kx, (N, 1, H, W), jnp.float32)
    params = init_params(kp, num_classes)

    fwd = jax.jit(ocr_forward)
    out = jax.block_until_ready(fwd(x, params))
    assert out.shape == (W, N, num_classes), out.shape

    ref = jax.block_until_ready(reference_forward(x, params))
    assert jnp.allclose(out, ref, atol=5e-3, rtol=5e-3), \
        float(jnp.max(jnp.abs(out - ref)))

    print("KERNEL_OK")
</pallas_src>

<mosaic_0001>
module attributes {stable_mosaic.version = 11 : i64} {
  func.func @kernel(%arg0: i32, %arg1: memref<16x102xf32, #tpu.memory_space<vmem>>, %arg2: memref<102x1024xf32, #tpu.memory_space<vmem>>, %arg3: memref<102x1024xf32, #tpu.memory_space<vmem>>, %arg4: memref<1x1024xf32, #tpu.memory_space<vmem>>, %arg5: memref<1024x1024xf32, #tpu.memory_space<vmem>>, %arg6: memref<1x1024xf32, #tpu.memory_space<vmem>>, %arg7: memref<16x512xf32, #tpu.memory_space<vmem>>, %arg8: memref<16x512xf32, #tpu.memory_space<vmem>>) attributes {dimension_semantics = [#tpu.dimension_semantics<parallel>], iteration_bounds = array<i64: 1>, scalar_prefetch = 0 : i64, scratch_operands = 0 : i64, tpu.core_type = #tpu.core_type<tc>, window_params = [{transform_indices = @transform_0, window_bounds = array<i64: 16, 102>}, {pipeline_mode = #tpu.pipeline_mode<synchronous>, transform_indices = @transform_1, window_bounds = array<i64: 102, 1024>}, {pipeline_mode = #tpu.pipeline_mode<synchronous>, transform_indices = @transform_2, window_bounds = array<i64: 102, 1024>}, {pipeline_mode = #tpu.pipeline_mode<synchronous>, transform_indices = @transform_3, window_bounds = array<i64: 1, 1024>}, {pipeline_mode = #tpu.pipeline_mode<synchronous>, transform_indices = @transform_4, window_bounds = array<i64: 1024, 1024>}, {pipeline_mode = #tpu.pipeline_mode<synchronous>, transform_indices = @transform_5, window_bounds = array<i64: 1, 1024>}, {transform_indices = @transform_6, window_bounds = array<i64: 16, 512>}, {transform_indices = @transform_7, window_bounds = array<i64: 16, 512>}]} {
    %c0 = arith.constant 0 : index
    %c0_0 = arith.constant 0 : index
    %0 = vector.load %arg1[%c0, %c0_0] : memref<16x102xf32, #tpu.memory_space<vmem>>, vector<16x102xf32>
    %c0_1 = arith.constant 0 : index
    %c0_2 = arith.constant 0 : index
    %1 = vector.load %arg2[%c0_1, %c0_2] : memref<102x1024xf32, #tpu.memory_space<vmem>>, vector<102x1024xf32>
    %cst = arith.constant dense<0.000000e+00> : vector<16x1024xf32>
    %2 = tpu.matmul %0, %1, %cst {dimension_numbers = #tpu.dot_dimension_numbers<[1], [0], [0], [1], [0, 0, 1, 1], [], []>} : vector<16x102xf32>, vector<102x1024xf32>, vector<16x1024xf32> -> vector<16x1024xf32>
    %c0_3 = arith.constant 0 : index
    %c0_4 = arith.constant 0 : index
    %3 = vector.load %arg4[%c0_3, %c0_4] : memref<1x1024xf32, #tpu.memory_space<vmem>>, vector<1x1024xf32>
    %4 = vector.broadcast %3 : vector<1x1024xf32> to vector<16x1024xf32>
    %5 = arith.addf %2, %4 : vector<16x1024xf32>
    %c0_5 = arith.constant 0 : index
    %c0_6 = arith.constant 0 : index
    %6 = vector.load %arg1[%c0_5, %c0_6] : memref<16x102xf32, #tpu.memory_space<vmem>>, vector<16x102xf32>
    %c0_7 = arith.constant 0 : index
    %c0_8 = arith.constant 0 : index
    %7 = vector.load %arg3[%c0_7, %c0_8] : memref<102x1024xf32, #tpu.memory_space<vmem>>, vector<102x1024xf32>
    %cst_9 = arith.constant dense<0.000000e+00> : vector<16x1024xf32>
    %8 = tpu.matmul %6, %7, %cst_9 {dimension_numbers = #tpu.dot_dimension_numbers<[1], [0], [0], [1], [0, 0, 1, 1], [], []>} : vector<16x102xf32>, vector<102x1024xf32>, vector<16x1024xf32> -> vector<16x1024xf32>
    %c0_10 = arith.constant 0 : index
    %c0_11 = arith.constant 0 : index
    %9 = vector.load %arg4[%c0_10, %c0_11] : memref<1x1024xf32, #tpu.memory_space<vmem>>, vector<1x1024xf32>
    %10 = vector.broadcast %9 : vector<1x1024xf32> to vector<16x1024xf32>
    %11 = arith.addf %8, %10 : vector<16x1024xf32>
    %cst_12 = arith.constant 0.000000e+00 : f32
    %12 = vector.broadcast %cst_12 : f32 to vector<16x1024xf32>
    %13 = arith.maximumf %5, %12 : vector<16x1024xf32>
    %cst_13 = arith.constant 0.000000e+00 : f32
    %14 = vector.broadcast %cst_13 : f32 to vector<16x1024xf32>
    %15 = arith.maximumf %11, %14 : vector<16x1024xf32>
    %16 = arith.maximumf %13, %15 : vector<16x1024xf32>
    %c0_14 = arith.constant 0 : index
    %c0_15 = arith.constant 0 : index
    %17 = vector.load %arg5[%c0_14, %c0_15] : memref<1024x1024xf32, #tpu.memory_space<vmem>>, vector<1024x1024xf32>
    %cst_16 = arith.constant dense<0.000000e+00> : vector<16x1024xf32>
    %18 = tpu.matmul %16, %17, %cst_16 {dimension_numbers = #tpu.dot_dimension_numbers<[1], [0], [0], [1], [0, 0, 1, 1], [], []>} : vector<16x1024xf32>, vector<1024x1024xf32>, vector<16x1024xf32> -> vector<16x1024xf32>
    %c0_17 = arith.constant 0 : index
    %c0_18 = arith.constant 0 : index
    %19 = vector.load %arg6[%c0_17, %c0_18] : memref<1x1024xf32, #tpu.memory_space<vmem>>, vector<1x1024xf32>
    %20 = vector.broadcast %19 : vector<1x1024xf32> to vector<16x1024xf32>
    %21 = arith.addf %18, %20 : vector<16x1024xf32>
    %22 = vector.extract_strided_slice %21 {offsets = [0, 0], sizes = [16, 512], strides = [1, 1]} : vector<16x1024xf32> to vector<16x512xf32>
    %c0_19 = arith.constant 0 : index
    %c0_20 = arith.constant 0 : index
    %23 = vector.load %arg7[%c0_19, %c0_20] : memref<16x512xf32, #tpu.memory_space<vmem>>, vector<16x512xf32>
    tpu.vector_store %arg7[%c0_19, %c0_20], %22 {strides = array<i32>} : memref<16x512xf32, #tpu.memory_space<vmem>>, vector<16x512xf32>,
    %24 = vector.extract_strided_slice %21 {offsets = [0, 512], sizes = [16, 512], strides = [1, 1]} : vector<16x1024xf32> to vector<16x512xf32>
    %c0_21 = arith.constant 0 : index
    %c0_22 = arith.constant 0 : index
    %25 = vector.load %arg8[%c0_21, %c0_22] : memref<16x512xf32, #tpu.memory_space<vmem>>, vector<16x512xf32>
    tpu.vector_store %arg8[%c0_21, %c0_22], %24 {strides = array<i32>} : memref<16x512xf32, #tpu.memory_space<vmem>>, vector<16x512xf32>,
    return
  }
  func.func @transform_0(%arg0: i32) -> (i32, i32) {
    %c0_i32 = arith.constant 0 : i32
    %c0_i32_0 = arith.constant 0 : i32
    return %arg0, %c0_i32 : i32, i32
  }
  func.func @transform_1(%arg0: i32) -> (i32, i32) {
    %c0_i32 = arith.constant 0 : i32
    %c0_i32_0 = arith.constant 0 : i32
    %c0_i32_1 = arith.constant 0 : i32
    return %c0_i32, %c0_i32_0 : i32, i32
  }
  func.func @transform_2(%arg0: i32) -> (i32, i32) {
    %c0_i32 = arith.constant 0 : i32
    %c0_i32_0 = arith.constant 0 : i32
    %c0_i32_1 = arith.constant 0 : i32
    return %c0_i32, %c0_i32_0 : i32, i32
  }
  func.func @transform_3(%arg0: i32) -> (i32, i32) {
    %c0_i32 = arith.constant 0 : i32
    %c0_i32_0 = arith.constant 0 : i32
    %c0_i32_1 = arith.constant 0 : i32
    return %c0_i32, %c0_i32_0 : i32, i32
  }
  func.func @transform_4(%arg0: i32) -> (i32, i32) {
    %c0_i32 = arith.constant 0 : i32
    %c0_i32_0 = arith.constant 0 : i32
    %c0_i32_1 = arith.constant 0 : i32
    return %c0_i32, %c0_i32_0 : i32, i32
  }
  func.func @transform_5(%arg0: i32) -> (i32, i32) {
    %c0_i32 = arith.constant 0 : i32
    %c0_i32_0 = arith.constant 0 : i32
    %c0_i32_1 = arith.constant 0 : i32
    return %c0_i32, %c0_i32_0 : i32, i32
  }
  func.func @transform_6(%arg0: i32) -> (i32, i32) {
    %c0_i32 = arith.constant 0 : i32
    %c0_i32_0 = arith.constant 0 : i32
    return %arg0, %c0_i32 : i32, i32
  }
  func.func @transform_7(%arg0: i32) -> (i32, i32) {
    %c0_i32 = arith.constant 0 : i32
    %c0_i32_0 = arith.constant 0 : i32
    return %arg0, %c0_i32 : i32, i32
  }
}

module attributes {stable_mosaic.version = 11 : i64} {
  func.func @bilstm_kernel(%arg0: i32, %arg1: memref<8x2x512xf32, #tpu.memory_space<vmem>>, %arg2: memref<8x2x512xf32, #tpu.memory_space<vmem>>, %arg3: memref<128x512xf32, #tpu.memory_space<vmem>>, %arg4: memref<128x512xf32, #tpu.memory_space<vmem>>, %arg5: memref<8x2x128xf32, #tpu.memory_space<vmem>>, %arg6: memref<8x2x128xf32, #tpu.memory_space<vmem>>, %arg7: memref<2x128xf32, #tpu.memory_space<vmem>>, %arg8: memref<2x128xf32, #tpu.memory_space<vmem>>, %arg9: memref<2x128xf32, #tpu.memory_space<vmem>>, %arg10: memref<2x128xf32, #tpu.memory_space<vmem>>) attributes {dimension_semantics = [#tpu.dimension_semantics<arbitrary>], iteration_bounds = array<i64: 1>, scalar_prefetch = 0 : i64, scratch_operands = 4 : i64, tpu.core_type = #tpu.core_type<tc>, window_params = [{transform_indices = @transform_0, window_bounds = array<i64: 8, 2, 512>}, {transform_indices = @transform_1, window_bounds = array<i64: 8, 2, 512>}, {pipeline_mode = #tpu.pipeline_mode<synchronous>, transform_indices = @transform_2, window_bounds = array<i64: 128, 512>}, {pipeline_mode = #tpu.pipeline_mode<synchronous>, transform_indices = @transform_3, window_bounds = array<i64: 128, 512>}, {transform_indices = @transform_4, window_bounds = array<i64: 8, 2, 128>}, {transform_indices = @transform_5, window_bounds = array<i64: 8, 2, 128>}]} {
    %c0_i32 = arith.constant 0 : i32
    %0 = arith.cmpi eq, %arg0, %c0_i32 : i32
    %1 = arith.extui %0 : i1 to i32
    %c0_i32_0 = arith.constant 0 : i32
    %2 = arith.cmpi ne, %1, %c0_i32_0 : i32
    scf.if %2 {
      %cst_408 = arith.constant 0.000000e+00 : f32
      %691 = vector.broadcast %cst_408 : f32 to vector<2x128xf32>
      %c0_409 = arith.constant 0 : index
      %c0_410 = arith.constant 0 : index
      %692 = vector.load %arg7[%c0_409, %c0_410] : memref<2x128xf32, #tpu.memory_space<vmem>>, vector<2x128xf32>
      tpu.vector_store %arg7[%c0_409, %c0_410], %691 {strides = array<i32>} : memref<2x128xf32, #tpu.memory_space<vmem>>, vector<2x128xf32>,
      %cst_411 = arith.constant 0.000000e+00 : f32
      %693 = vector.broadcast %cst_411 : f32 to vector<2x128xf32>
      %c0_412 = arith.constant 0 : index
      %c0_413 = arith.constant 0 : index
      %694 = vector.load %arg8[%c0_412, %c0_413] : memref<2x128xf32, #tpu.memory_space<vmem>>, vector<2x128xf32>
      tpu.vector_store %arg8[%c0_412, %c0_413], %693 {strides = array<i32>} : memref<2x128xf32, #tpu.memory_space<vmem>>, vector<2x128xf32>,
      %cst_414 = arith.constant 0.000000e+00 : f32
      %695 = vector.broadcast %cst_414 : f32 to vector<2x128xf32>
      %c0_415 = arith.constant 0 : index
      %c0_416 = arith.constant 0 : index
      %696 = vector.load %arg9[%c0_415, %c0_416] : memref<2x128xf32, #tpu.memory_space<vmem>>, vector<2x128xf32>
      tpu.vector_store %arg9[%c0_415, %c0_416], %695 {strides = array<i32>} : memref<2x128xf32, #tpu.memory_space<vmem>>, vector<2x128xf32>,
      %cst_417 = arith.constant 0.000000e+00 : f32
      %697 = vector.broadcast %cst_417 : f32 to vector<2x128xf32>
      %c0_418 = arith.constant 0 : index
      %c0_419 = arith.constant 0 : index
      %698 = vector.load %arg10[%c0_418, %c0_419] : memref<2x128xf32, #tpu.memory_space<vmem>>, vector<2x128xf32>
      tpu.vector_store %arg10[%c0_418, %c0_419], %697 {strides = array<i32>} : memref<2x128xf32, #tpu.memory_space<vmem>>, vector<2x128xf32>,
    } else {
    }
    %c0 = arith.constant 0 : index
    %c0_1 = arith.constant 0 : index
    %3 = vector.load %arg7[%c0, %c0_1] : memref<2x128xf32, #tpu.memory_space<vmem>>, vector<2x128xf32>
    %c0_2 = arith.constant 0 : index
    %c0_3 = arith.constant 0 : index
    %4 = vector.load %arg3[%c0_2, %c0_3] : memref<128x512xf32, #tpu.memory_space<vmem>>, vector<128x512xf32>
    %cst = arith.constant dense<0.000000e+00> : vector<2x512xf32>
    %5 = tpu.matmul %3, %4, %cst {dimension_numbers = #tpu.dot_dimension_numbers<[1], [0], [0], [1], [0, 0, 1, 1], [], []>} : vector<2x128xf32>, vector<128x512xf32>, vector<2x512xf32> -> vector<2x512xf32>
    %c0_4 = arith.constant 0 : index
    %c0_5 = arith.constant 0 : index
    %6 = vector.load %arg9[%c0_4, %c0_5] : memref<2x128xf32, #tpu.memory_space<vmem>>, vector<2x128xf32>
    %c0_6 = arith.constant 0 : index
    %c0_7 = arith.constant 0 : index
    %7 = vector.load %arg4[%c0_6, %c0_7] : memref<128x512xf32, #tpu.memory_space<vmem>>, vector<128x512xf32>
    %cst_8 = arith.constant dense<0.000000e+00> : vector<2x512xf32>
    %8 = tpu.matmul %6, %7, %cst_8 {dimension_numbers = #tpu.dot_dimension_numbers<[1], [0], [0], [1], [0, 0, 1, 1], [], []>} : vector<2x128xf32>, vector<128x512xf32>, vector<2x512xf32> -> vector<2x512xf32>
    %c0_9 = arith.constant 0 : index
    %c0_10 = arith.constant 0 : index
    %c0_11 = arith.constant 0 : index
    %9 = vector.load %arg1[%c0_9, %c0_10, %c0_11] : memref<8x2x512xf32, #tpu.memory_space<vmem>>, vector<1x2x512xf32>
    %10 = vector.shape_cast %9 : vector<1x2x512xf32> to vector<2x512xf32>
    %11 = arith.addf %10, %5 : vector<2x512xf32>
    %c0_12 = arith.constant 0 : index
    %c0_13 = arith.constant 0 : index
    %12 = vector.load %arg8[%c0_12, %c0_13] : memref<2x128xf32, #tpu.memory_space<vmem>>, vector<2x128xf32>
    %13 = vector.extract_strided_slice %11 {offsets = [0, 0], sizes = [2, 128], strides = [1, 1]} : vector<2x512xf32> to vector<2x128xf32>
    %cst_14 = arith.constant 5.000000e-01 : f32
    %14 = vector.broadcast %cst_14 : f32 to vector<2x128xf32>
    %15 = arith.mulf %14, %13 : vector<2x128xf32>
    %16 = math.tanh %15 : vector<2x128xf32>
    %cst_15 = arith.constant 1.000000e+00 : f32
    %17 = vector.broadcast %cst_15 : f32 to vector<2x128xf32>
    %18 = arith.addf %16, %17 : vector<2x128xf32>
    %cst_16 = arith.constant 5.000000e-01 : f32
    %19 = vector.broadcast %cst_16 : f32 to vector<2x128xf32>
    %20 = arith.mulf %19, %18 : vector<2x128xf32>
    %21 = vector.extract_strided_slice %11 {offsets = [0, 128], sizes = [2, 128], strides = [1, 1]} : vector<2x512xf32> to vector<2x128xf32>
    %cst_17 = arith.constant 5.000000e-01 : f32
    %22 = vector.broadcast %cst_17 : f32 to vector<2x128xf32>
    %23 = arith.mulf %22, %21 : vector<2x128xf32>
    %24 = math.tanh %23 : vector<2x128xf32>
    %cst_18 = arith.constant 1.000000e+00 : f32
    %25 = vector.broadcast %cst_18 : f32 to vector<2x128xf32>
    %26 = arith.addf %24, %25 : vector<2x128xf32>
    %cst_19 = arith.constant 5.000000e-01 : f32
    %27 = vector.broadcast %cst_19 : f32 to vector<2x128xf32>
    %28 = arith.mulf %27, %26 : vector<2x128xf32>
    %29 = vector.extract_strided_slice %11 {offsets = [0, 256], sizes = [2, 128], strides = [1, 1]} : vector<2x512xf32> to vector<2x128xf32>
    %30 = math.tanh %29 : vector<2x128xf32>
    %31 = vector.extract_strided_slice %11 {offsets = [0, 384], sizes = [2, 128], strides = [1, 1]} : vector<2x512xf32> to vector<2x128xf32>
    %cst_20 = arith.constant 5.000000e-01 : f32
    %32 = vector.broadcast %cst_20 : f32 to vector<2x128xf32>
    %33 = arith.mulf %32, %31 : vector<2x128xf32>
    %34 = math.tanh %33 : vector<2x128xf32>
    %cst_21 = arith.constant 1.000000e+00 : f32
    %35 = vector.broadcast %cst_21 : f32 to vector<2x128xf32>
    %36 = arith.addf %34, %35 : vector<2x128xf32>
    %cst_22 = arith.constant 5.000000e-01 : f32
    %37 = vector.broadcast %cst_22 : f32 to vector<2x128xf32>
    %38 = arith.mulf %37, %36 : vector<2x128xf32>
    %39 = arith.mulf %28, %12 : vector<2x128xf32>
    %40 = arith.mulf %20, %30 : vector<2x128xf32>
    %41 = arith.addf %39, %40 : vector<2x128xf32>
    %42 = math.tanh %41 : vector<2x128xf32>
    %43 = arith.mulf %38, %42 : vector<2x128xf32>
    %c7 = arith.constant 7 : index
    %c0_23 = arith.constant 0 : index
    %c0_24 = arith.constant 0 : index
    %44 = vector.load %arg2[%c7, %c0_23, %c0_24] : memref<8x2x512xf32, #tpu.memory_space<vmem>>, vector<1x2x512xf32>
    %45 = vector.shape_cast %44 : vector<1x2x512xf32> to vector<2x512xf32>
    %46 = arith.addf %45, %8 : vector<2x512xf32>
    %c0_25 = arith.constant 0 : index
    %c0_26 = arith.constant 0 : index
    %47 = vector.load %arg10[%c0_25, %c0_26] : memref<2x128xf32, #tpu.memory_space<vmem>>, vector<2x128xf32>
    %48 = vector.extract_strided_slice %46 {offsets = [0, 0], sizes = [2, 128], strides = [1, 1]} : vector<2x512xf32> to vector<2x128xf32>
    %cst_27 = arith.constant 5.000000e-01 : f32
    %49 = vector.broadcast %cst_27 : f32 to vector<2x128xf32>
    %50 = arith.mulf %49, %48 : vector<2x128xf32>
    %51 = math.tanh %50 : vector<2x128xf32>
    %cst_28 = arith.constant 1.000000e+00 : f32
    %52 = vector.broadcast %cst_28 : f32 to vector<2x128xf32>
    %53 = arith.addf %51, %52 : vector<2x128xf32>
    %cst_29 = arith.constant 5.000000e-01 : f32
    %54 = vector.broadcast %cst_29 : f32 to vector<2x128xf32>
    %55 = arith.mulf %54, %53 : vector<2x128xf32>
    %56 = vector.extract_strided_slice %46 {offsets = [0, 128], sizes = [2, 128], strides = [1, 1]} : vector<2x512xf32> to vector<2x128xf32>
    %cst_30 = arith.constant 5.000000e-01 : f32
    %57 = vector.broadcast %cst_30 : f32 to vector<2x128xf32>
    %58 = arith.mulf %57, %56 : vector<2x128xf32>
    %59 = math.tanh %58 : vector<2x128xf32>
    %cst_31 = arith.constant 1.000000e+00 : f32
    %60 = vector.broadcast %cst_31 : f32 to vector<2x128xf32>
    %61 = arith.addf %59, %60 : vector<2x128xf32>
    %cst_32 = arith.constant 5.000000e-01 : f32
    %62 = vector.broadcast %cst_32 : f32 to vector<2x128xf32>
    %63 = arith.mulf %62, %61 : vector<2x128xf32>
    %64 = vector.extract_strided_slice %46 {offsets = [0, 256], sizes = [2, 128], strides = [1, 1]} : vector<2x512xf32> to vector<2x128xf32>
    %65 = math.tanh %64 : vector<2x128xf32>
    %66 = vector.extract_strided_slice %46 {offsets = [0, 384], sizes = [2, 128], strides = [1, 1]} : vector<2x512xf32> to vector<2x128xf32>
    %cst_33 = arith.constant 5.000000e-01 : f32
    %67 = vector.broadcast %cst_33 : f32 to vector<2x128xf32>
    %68 = arith.mulf %67, %66 : vector<2x128xf32>
    %69 = math.tanh %68 : vector<2x128xf32>
    %cst_34 = arith.constant 1.000000e+00 : f32
    %70 = vector.broadcast %cst_34 : f32 to vector<2x128xf32>
    %71 = arith.addf %69, %70 : vector<2x128xf32>
    %cst_35 = arith.constant 5.000000e-01 : f32
    %72 = vector.broadcast %cst_35 : f32 to vector<2x128xf32>
    %73 = arith.mulf %72, %71 : vector<2x128xf32>
    %74 = arith.mulf %63, %47 : vector<2x128xf32>
    %75 = arith.mulf %55, %65 : vector<2x128xf32>
    %76 = arith.addf %74, %75 : vector<2x128xf32>
    %77 = math.tanh %76 : vector<2x128xf32>
    %78 = arith.mulf %73, %77 : vector<2x128xf32>
    %c0_36 = arith.constant 0 : index
    %c0_37 = arith.constant 0 : index
    %79 = vector.load %arg7[%c0_36, %c0_37] : memref<2x128xf32, #tpu.memory_space<vmem>>, vector<2x128xf32>
    tpu.vector_store %arg7[%c0_36, %c0_37], %43 {strides = array<i32>} : memref<2x128xf32, #tpu.memory_space<vmem>>, vector<2x128xf32>,
    %c0_38 = arith.constant 0 : index
    %c0_39 = arith.constant 0 : index
    %80 = vector.load %arg8[%c0_38, %c0_39] : memref<2x128xf32, #tpu.memory_space<vmem>>, vector<2x128xf32>
    tpu.vector_store %arg8[%c0_38, %c0_39], %41 {strides = array<i32>} : memref<2x128xf32, #tpu.memory_space<vmem>>, vector<2x128xf32>,
    %c0_40 = arith.constant 0 : index
    %c0_41 = arith.constant 0 : index
    %81 = vector.load %arg9[%c0_40, %c0_41] : memref<2x128xf32, #tpu.memory_space<vmem>>, vector<2x128xf32>
    tpu.vector_store %arg9[%c0_40, %c0_41], %78 {strides = array<i32>} : memref<2x128xf32, #tpu.memory_space<vmem>>, vector<2x128xf32>,
    %c0_42 = arith.constant 0 : index
    %c0_43 = arith.constant 0 : index
    %82 = vector.load %arg10[%c0_42, %c0_43] : memref<2x128xf32, #tpu.memory_space<vmem>>, vector<2x128xf32>
    tpu.vector_store %arg10[%c0_42, %c0_43], %76 {strides = array<i32>} : memref<2x128xf32, #tpu.memory_space<vmem>>, vector<2x128xf32>,
    %c0_44 = arith.constant 0 : index
    %c0_45 = arith.constant 0 : index
    %c0_46 = arith.constant 0 : index
    %83 = vector.load %arg5[%c0_44, %c0_45, %c0_46] : memref<8x2x128xf32, #tpu.memory_space<vmem>>, vector<1x2x128xf32>
    %84 = vector.shape_cast %83 : vector<1x2x128xf32> to vector<2x128xf32>
    %85 = vector.shape_cast %43 : vector<2x128xf32> to vector<1x2x128xf32>
    tpu.vector_store %arg5[%c0_44, %c0_45, %c0_46], %85 {strides = array<i32>} : memref<8x2x128xf32, #tpu.memory_space<vmem>>, vector<1x2x128xf32>,
    %c7_47 = arith.constant 7 : index
    %c0_48 = arith.constant 0 : index
    %c0_49 = arith.constant 0 : index
    %86 = vector.load %arg6[%c7_47, %c0_48, %c0_49] : memref<8x2x128xf32, #tpu.memory_space<vmem>>, vector<1x2x128xf32>
    %87 = vector.shape_cast %86 : vector<1x2x128xf32> to vector<2x128xf32>
    %88 = vector.shape_cast %78 : vector<2x128xf32> to vector<1x2x128xf32>
    tpu.vector_store %arg6[%c7_47, %c0_48, %c0_49], %88 {strides = array<i32>} : memref<8x2x128xf32, #tpu.memory_space<vmem>>, vector<1x2x128xf32>,
    %c0_50 = arith.constant 0 : index
    %c0_51 = arith.constant 0 : index
    %89 = vector.load %arg7[%c0_50, %c0_51] : memref<2x128xf32, #tpu.memory_space<vmem>>, vector<2x128xf32>
    %c0_52 = arith.constant 0 : index
    %c0_53 = arith.constant 0 : index
    %90 = vector.load %arg3[%c0_52, %c0_53] : memref<128x512xf32, #tpu.memory_space<vmem>>, vector<128x512xf32>
    %cst_54 = arith.constant dense<0.000000e+00> : vector<2x512xf32>
    %91 = tpu.matmul %89, %90, %cst_54 {dimension_numbers = #tpu.dot_dimension_numbers<[1], [0], [0], [1], [0, 0, 1, 1], [], []>} : vector<2x128xf32>, vector<128x512xf32>, vector<2x512xf32> -> vector<2x512xf32>
    %c0_55 = arith.constant 0 : index
    %c0_56 = arith.constant 0 : index
    %92 = vector.load %arg9[%c0_55, %c0_56] : memref<2x128xf32, #tpu.memory_space<vmem>>, vector<2x128xf32>
    %c0_57 = arith.constant 0 : index
    %c0_58 = arith.constant 0 : index
    %93 = vector.load %arg4[%c0_57, %c0_58] : memref<128x512xf32, #tpu.memory_space<vmem>>, vector<128x512xf32>
    %cst_59 = arith.constant dense<0.000000e+00> : vector<2x512xf32>
    %94 = tpu.matmul %92, %93, %cst_59 {dimension_numbers = #tpu.dot_dimension_numbers<[1], [0], [0], [1], [0, 0, 1, 1], [], []>} : vector<2x128xf32>, vector<128x512xf32>, vector<2x512xf32> -> vector<2x512xf32>
    %c1 = arith.constant 1 : index
    %c0_60 = arith.constant 0 : index
    %c0_61 = arith.constant 0 : index
    %95 = vector.load %arg1[%c1, %c0_60, %c0_61] : memref<8x2x512xf32, #tpu.memory_space<vmem>>, vector<1x2x512xf32>
    %96 = vector.shape_cast %95 : vector<1x2x512xf32> to vector<2x512xf32>
    %97 = arith.addf %96, %91 : vector<2x512xf32>
    %c0_62 = arith.constant 0 : index
    %c0_63 = arith.constant 0 : index
    %98 = vector.load %arg8[%c0_62, %c0_63] : memref<2x128xf32, #tpu.memory_space<vmem>>, vector<2x128xf32>
    %99 = vector.extract_strided_slice %97 {offsets = [0, 0], sizes = [2, 128], strides = [1, 1]} : vector<2x512xf32> to vector<2x128xf32>
    %cst_64 = arith.constant 5.000000e-01 : f32
    %100 = vector.broadcast %cst_64 : f32 to vector<2x128xf32>
    %101 = arith.mulf %100, %99 : vector<2x128xf32>
    %102 = math.tanh %101 : vector<2x128xf32>
    %cst_65 = arith.constant 1.000000e+00 : f32
    %103 = vector.broadcast %cst_65 : f32 to vector<2x128xf32>
    %104 = arith.addf %102, %103 : vector<2x128xf32>
    %cst_66 = arith.constant 5.000000e-01 : f32
    %105 = vector.broadcast %cst_66 : f32 to vector<2x128xf32>
    %106 = arith.mulf %105, %104 : vector<2x128xf32>
    %107 = vector.extract_strided_slice %97 {offsets = [0, 128], sizes = [2, 128], strides = [1, 1]} : vector<2x512xf32> to vector<2x128xf32>
    %cst_67 = arith.constant 5.000000e-01 : f32
    %108 = vector.broadcast %cst_67 : f32 to vector<2x128xf32>
    %109 = arith.mulf %108, %107 : vector<2x128xf32>
    %110 = math.tanh %109 : vector<2x128xf32>
    %cst_68 = arith.constant 1.000000e+00 : f32
    %111 = vector.broadcast %cst_68 : f32 to vector<2x128xf32>
    %112 = arith.addf %110, %111 : vector<2x128xf32>
    %cst_69 = arith.constant 5.000000e-01 : f32
    %113 = vector.broadcast %cst_69 : f32 to vector<2x128xf32>
    %114 = arith.mulf %113, %112 : vector<2x128xf32>
    %115 = vector.extract_strided_slice %97 {offsets = [0, 256], sizes = [2, 128], strides = [1, 1]} : vector<2x512xf32> to vector<2x128xf32>
    %116 = math.tanh %115 : vector<2x128xf32>
    %117 = vector.extract_strided_slice %97 {offsets = [0, 384], sizes = [2, 128], strides = [1, 1]} : vector<2x512xf32> to vector<2x128xf32>
    %cst_70 = arith.constant 5.000000e-01 : f32
    %118 = vector.broadcast %cst_70 : f32 to vector<2x128xf32>
    %119 = arith.mulf %118, %117 : vector<2x128xf32>
    %120 = math.tanh %119 : vector<2x128xf32>
    %cst_71 = arith.constant 1.000000e+00 : f32
    %121 = vector.broadcast %cst_71 : f32 to vector<2x128xf32>
    %122 = arith.addf %120, %121 : vector<2x128xf32>
    %cst_72 = arith.constant 5.000000e-01 : f32
    %123 = vector.broadcast %cst_72 : f32 to vector<2x128xf32>
    %124 = arith.mulf %123, %122 : vector<2x128xf32>
    %125 = arith.mulf %114, %98 : vector<2x128xf32>
    %126 = arith.mulf %106, %116 : vector<2x128xf32>
    %127 = arith.addf %125, %126 : vector<2x128xf32>
    %128 = math.tanh %127 : vector<2x128xf32>
    %129 = arith.mulf %124, %128 : vector<2x128xf32>
    %c6 = arith.constant 6 : index
    %c0_73 = arith.constant 0 : index
    %c0_74 = arith.constant 0 : index
    %130 = vector.load %arg2[%c6, %c0_73, %c0_74] : memref<8x2x512xf32, #tpu.memory_space<vmem>>, vector<1x2x512xf32>
    %131 = vector.shape_cast %130 : vector<1x2x512xf32> to vector<2x512xf32>
    %132 = arith.addf %131, %94 : vector<2x512xf32>
    %c0_75 = arith.constant 0 : index
    %c0_76 = arith.constant 0 : index
    %133 = vector.load %arg10[%c0_75, %c0_76] : memref<2x128xf32, #tpu.memory_space<vmem>>, vector<2x128xf32>
    %134 = vector.extract_strided_slice %132 {offsets = [0, 0], sizes = [2, 128], strides = [1, 1]} : vector<2x512xf32> to vector<2x128xf32>
    %cst_77 = arith.constant 5.000000e-01 : f32
    %135 = vector.broadcast %cst_77 : f32 to vector<2x128xf32>
    %136 = arith.mulf %135, %134 : vector<2x128xf32>
    %137 = math.tanh %136 : vector<2x128xf32>
    %cst_78 = arith.constant 1.000000e+00 : f32
    %138 = vector.broadcast %cst_78 : f32 to vector<2x128xf32>
    %139 = arith.addf %137, %138 : vector<2x128xf32>
    %cst_79 = arith.constant 5.000000e-01 : f32
    %140 = vector.broadcast %cst_79 : f32 to vector<2x128xf32>
    %141 = arith.mulf %140, %139 : vector<2x128xf32>
    %142 = vector.extract_strided_slice %132 {offsets = [0, 128], sizes = [2, 128], strides = [1, 1]} : vector<2x512xf32> to vector<2x128xf32>
    %cst_80 = arith.constant 5.000000e-01 : f32
    %143 = vector.broadcast %cst_80 : f32 to vector<2x128xf32>
    %144 = arith.mulf %143, %142 : vector<2x128xf32>
    %145 = math.tanh %144 : vector<2x128xf32>
    %cst_81 = arith.constant 1.000000e+00 : f32
    %146 = vector.broadcast %cst_81 : f32 to vector<2x128xf32>
    %147 = arith.addf %145, %146 : vector<2x128xf32>
    %cst_82 = arith.constant 5.000000e-01 : f32
    %148 = vector.broadcast %cst_82 : f32 to vector<2x128xf32>
    %149 = arith.mulf %148, %147 : vector<2x128xf32>
    %150 = vector.extract_strided_slice %132 {offsets = [0, 256], sizes = [2, 128], strides = [1, 1]} : vector<2x512xf32> to vector<2x128xf32>
    %151 = math.tanh %150 : vector<2x128xf32>
    %152 = vector.extract_strided_slice %132 {offsets = [0, 384], sizes = [2, 128], strides = [1, 1]} : vector<2x512xf32> to vector<2x128xf32>
    %cst_83 = arith.constant 5.000000e-01 : f32
    %153 = vector.broadcast %cst_83 : f32 to vector<2x128xf32>
    %154 = arith.mulf %153, %152 : vector<2x128xf32>
    %155 = math.tanh %154 : vector<2x128xf32>
    %cst_84 = arith.constant 1.000000e+00 : f32
    %156 = vector.broadcast %cst_84 : f32 to vector<2x128xf32>
    %157 = arith.addf %155, %156 : vector<2x128xf32>
    %cst_85 = arith.constant 5.000000e-01 : f32
    %158 = vector.broadcast %cst_85 : f32 to vector<2x128xf32>
    %159 = arith.mulf %158, %157 : vector<2x128xf32>
    %160 = arith.mulf %149, %133 : vector<2x128xf32>
    %161 = arith.mulf %141, %151 : vector<2x128xf32>
    %162 = arith.addf %160, %161 : vector<2x128xf32>
    %163 = math.tanh %162 : vector<2x128xf32>
    %164 = arith.mulf %159, %163 : vector<2x128xf32>
    %c0_86 = arith.constant 0 : index
    %c0_87 = arith.constant 0 : index
    %165 = vector.load %arg7[%c0_86, %c0_87] : memref<2x128xf32, #tpu.memory_space<vmem>>, vector<2x128xf32>
    tpu.vector_store %arg7[%c0_86, %c0_87], %129 {strides = array<i32>} : memref<2x128xf32, #tpu.memory_space<vmem>>, vector<2x128xf32>,
    %c0_88 = arith.constant 0 : index
    %c0_89 = arith.constant 0 : index
    %166 = vector.load %arg8[%c0_88, %c0_89] : memref<2x128xf32, #tpu.memory_space<vmem>>, vector<2x128xf32>
    tpu.vector_store %arg8[%c0_88, %c0_89], %127 {strides = array<i32>} : memref<2x128xf32, #tpu.memory_space<vmem>>, vector<2x128xf32>,
    %c0_90 = arith.constant 0 : index
    %c0_91 = arith.constant 0 : index
    %167 = vector.load %arg9[%c0_90, %c0_91] : memref<2x128xf32, #tpu.memory_space<vmem>>, vector<2x128xf32>
    tpu.vector_store %arg9[%c0_90, %c0_91], %164 {strides = array<i32>} : memref<2x128xf32, #tpu.memory_space<vmem>>, vector<2x128xf32>,
    %c0_92 = arith.constant 0 : index
    %c0_93 = arith.constant 0 : index
    %168 = vector.load %arg10[%c0_92, %c0_93] : memref<2x128xf32, #tpu.memory_space<vmem>>, vector<2x128xf32>
    tpu.vector_store %arg10[%c0_92, %c0_93], %162 {strides = array<i32>} : memref<2x128xf32, #tpu.memory_space<vmem>>, vector<2x128xf32>,
    %c1_94 = arith.constant 1 : index
    %c0_95 = arith.constant 0 : index
    %c0_96 = arith.constant 0 : index
    %169 = vector.load %arg5[%c1_94, %c0_95, %c0_96] : memref<8x2x128xf32, #tpu.memory_space<vmem>>, vector<1x2x128xf32>
    %170 = vector.shape_cast %169 : vector<1x2x128xf32> to vector<2x128xf32>
    %171 = vector.shape_cast %129 : vector<2x128xf32> to vector<1x2x128xf32>
    tpu.vector_store %arg5[%c1_94, %c0_95, %c0_96], %171 {strides = array<i32>} : memref<8x2x128xf32, #tpu.memory_space<vmem>>, vector<1x2x128xf32>,
    %c6_97 = arith.constant 6 : index
    %c0_98 = arith.constant 0 : index
    %c0_99 = arith.constant 0 : index
    %172 = vector.load %arg6[%c6_97, %c0_98, %c0_99] : memref<8x2x128xf32, #tpu.memory_space<vmem>>, vector<1x2x128xf32>
    %173 = vector.shape_cast %172 : vector<1x2x128xf32> to vector<2x128xf32>
    %174 = vector.shape_cast %164 : vector<2x128xf32> to vector<1x2x128xf32>
    tpu.vector_store %arg6[%c6_97, %c0_98, %c0_99], %174 {strides = array<i32>} : memref<8x2x128xf32, #tpu.memory_space<vmem>>, vector<1x2x128xf32>,
    %c0_100 = arith.constant 0 : index
    %c0_101 = arith.constant 0 : index
    %175 = vector.load %arg7[%c0_100, %c0_101] : memref<2x128xf32, #tpu.memory_space<vmem>>, vector<2x128xf32>
    %c0_102 = arith.constant 0 : index
    %c0_103 = arith.constant 0 : index
    %176 = vector.load %arg3[%c0_102, %c0_103] : memref<128x512xf32, #tpu.memory_space<vmem>>, vector<128x512xf32>
    %cst_104 = arith.constant dense<0.000000e+00> : vector<2x512xf32>
    %177 = tpu.matmul %175, %176, %cst_104 {dimension_numbers = #tpu.dot_dimension_numbers<[1], [0], [0], [1], [0, 0, 1, 1], [], []>} : vector<2x128xf32>, vector<128x512xf32>, vector<2x512xf32> -> vector<2x512xf32>
    %c0_105 = arith.constant 0 : index
    %c0_106 = arith.constant 0 : index
    %178 = vector.load %arg9[%c0_105, %c0_106] : memref<2x128xf32, #tpu.memory_space<vmem>>, vector<2x128xf32>
    %c0_107 = arith.constant 0 : index
    %c0_108 = arith.constant 0 : index
    %179 = vector.load %arg4[%c0_107, %c0_108] : memref<128x512xf32, #tpu.memory_space<vmem>>, vector<128x512xf32>
    %cst_109 = arith.constant dense<0.000000e+00> : vector<2x512xf32>
    %180 = tpu.matmul %178, %179, %cst_109 {dimension_numbers = #tpu.dot_dimension_numbers<[1], [0], [0], [1], [0, 0, 1, 1], [], []>} : vector<2x128xf32>, vector<128x512xf32>, vector<2x512xf32> -> vector<2x512xf32>
    %c2 = arith.constant 2 : index
    %c0_110 = arith.constant 0 : index
    %c0_111 = arith.constant 0 : index
    %181 = vector.load %arg1[%c2, %c0_110, %c0_111] : memref<8x2x512xf32, #tpu.memory_space<vmem>>, vector<1x2x512xf32>
    %182 = vector.shape_cast %181 : vector<1x2x512xf32> to vector<2x512xf32>
    %183 = arith.addf %182, %177 : vector<2x512xf32>
    %c0_112 = arith.constant 0 : index
    %c0_113 = arith.constant 0 : index
    %184 = vector.load %arg8[%c0_112, %c0_113] : memref<2x128xf32, #tpu.memory_space<vmem>>, vector<2x128xf32>
    %185 = vector.extract_strided_slice %183 {offsets = [0, 0], sizes = [2, 128], strides = [1, 1]} : vector<2x512xf32> to vector<2x128xf32>
    %cst_114 = arith.constant 5.000000e-01 : f32
    %186 = vector.broadcast %cst_114 : f32 to vector<2x128xf32>
    %187 = arith.mulf %186, %185 : vector<2x128xf32>
    %188 = math.tanh %187 : vector<2x128xf32>
    %cst_115 = arith.constant 1.000000e+00 : f32
    %189 = vector.broadcast %cst_115 : f32 to vector<2x128xf32>
    %190 = arith.addf %188, %189 : vector<2x128xf32>
    %cst_116 = arith.constant 5.000000e-01 : f32
    %191 = vector.broadcast %cst_116 : f32 to vector<2x128xf32>
    %192 = arith.mulf %191, %190 : vector<2x128xf32>
    %193 = vector.extract_strided_slice %183 {offsets = [0, 128], sizes = [2, 128], strides = [1, 1]} : vector<2x512xf32> to vector<2x128xf32>
    %cst_117 = arith.constant 5.000000e-01 : f32
    %194 = vector.broadcast %cst_117 : f32 to vector<2x128xf32>
    %195 = arith.mulf %194, %193 : vector<2x128xf32>
    %196 = math.tanh %195 : vector<2x128xf32>
    %cst_118 = arith.constant 1.000000e+00 : f32
    %197 = vector.broadcast %cst_118 : f32 to vector<2x128xf32>
    %198 = arith.addf %196, %197 : vector<2x128xf32>
    %cst_119 = arith.constant 5.000000e-01 : f32
    %199 = vector.broadcast %cst_119 : f32 to vector<2x128xf32>
    %200 = arith.mulf %199, %198 : vector<2x128xf32>
    %201 = vector.extract_strided_slice %183 {offsets = [0, 256], sizes = [2, 128], strides = [1, 1]} : vector<2x512xf32> to vector<2x128xf32>
    %202 = math.tanh %201 : vector<2x128xf32>
    %203 = vector.extract_strided_slice %183 {offsets = [0, 384], sizes = [2, 128], strides = [1, 1]} : vector<2x512xf32> to vector<2x128xf32>
    %cst_120 = arith.constant 5.000000e-01 : f32
    %204 = vector.broadcast %cst_120 : f32 to vector<2x128xf32>
    %205 = arith.mulf %204, %203 : vector<2x128xf32>
    %206 = math.tanh %205 : vector<2x128xf32>
    %cst_121 = arith.constant 1.000000e+00 : f32
    %207 = vector.broadcast %cst_121 : f32 to vector<2x128xf32>
    %208 = arith.addf %206, %207 : vector<2x128xf32>
    %cst_122 = arith.constant 5.000000e-01 : f32
    %209 = vector.broadcast %cst_122 : f32 to vector<2x128xf32>
    %210 = arith.mulf %209, %208 : vector<2x128xf32>
    %211 = arith.mulf %200, %184 : vector<2x128xf32>
    %212 = arith.mulf %192, %202 : vector<2x128xf32>
    %213 = arith.addf %211, %212 : vector<2x128xf32>
    %214 = math.tanh %213 : vector<2x128xf32>
    %215 = arith.mulf %210, %214 : vector<2x128xf32>
    %c5 = arith.constant 5 : index
    %c0_123 = arith.constant 0 : index
    %c0_124 = arith.constant 0 : index
    %216 = vector.load %arg2[%c5, %c0_123, %c0_124] : memref<8x2x512xf32, #tpu.memory_space<vmem>>, vector<1x2x512xf32>
    %217 = vector.shape_cast %216 : vector<1x2x512xf32> to vector<2x512xf32>
    %218 = arith.addf %217, %180 : vector<2x512xf32>
    %c0_125 = arith.constant 0 : index
    %c0_126 = arith.constant 0 : index
    %219 = vector.load %arg10[%c0_125, %c0_126] : memref<2x128xf32, #tpu.memory_space<vmem>>, vector<2x128xf32>
    %220 = vector.extract_strided_slice %218 {offsets = [0, 0], sizes = [2, 128], strides = [1, 1]} : vector<2x512xf32> to vector<2x128xf32>
    %cst_127 = arith.constant 5.000000e-01 : f32
    %221 = vector.broadcast %cst_127 : f32 to vector<2x128xf32>
    %222 = arith.mulf %221, %220 : vector<2x128xf32>
    %223 = math.tanh %222 : vector<2x128xf32>
    %cst_128 = arith.constant 1.000000e+00 : f32
    %224 = vector.broadcast %cst_128 : f32 to vector<2x128xf32>
    %225 = arith.addf %223, %224 : vector<2x128xf32>
    %cst_129 = arith.constant 5.000000e-01 : f32
    %226 = vector.broadcast %cst_129 : f32 to vector<2x128xf32>
    %227 = arith.mulf %226, %225 : vector<2x128xf32>
    %228 = vector.extract_strided_slice %218 {offsets = [0, 128], sizes = [2, 128], strides = [1, 1]} : vector<2x512xf32> to vector<2x128xf32>
    %cst_130 = arith.constant 5.000000e-01 : f32
    %229 = vector.broadcast %cst_130 : f32 to vector<2x128xf32>
    %230 = arith.mulf %229, %228 : vector<2x128xf32>
    %231 = math.tanh %230 : vector<2x128xf32>
    %cst_131 = arith.constant 1.000000e+00 : f32
    %232 = vector.broadcast %cst_131 : f32 to vector<2x128xf32>
    %233 = arith.addf %231, %232 : vector<2x128xf32>
    %cst_132 = arith.constant 5.000000e-01 : f32
    %234 = vector.broadcast %cst_132 : f32 to vector<2x128xf32>
    %235 = arith.mulf %234, %233 : vector<2x128xf32>
    %236 = vector.extract_strided_slice %218 {offsets = [0, 256], sizes = [2, 128], strides = [1, 1]} : vector<2x512xf32> to vector<2x128xf32>
    %237 = math.tanh %236 : vector<2x128xf32>
    %238 = vector.extract_strided_slice %218 {offsets = [0, 384], sizes = [2, 128], strides = [1, 1]} : vector<2x512xf32> to vector<2x128xf32>
    %cst_133 = arith.constant 5.000000e-01 : f32
    %239 = vector.broadcast %cst_133 : f32 to vector<2x128xf32>
    %240 = arith.mulf %239, %238 : vector<2x128xf32>
    %241 = math.tanh %240 : vector<2x128xf32>
    %cst_134 = arith.constant 1.000000e+00 : f32
    %242 = vector.broadcast %cst_134 : f32 to vector<2x128xf32>
    %243 = arith.addf %241, %242 : vector<2x128xf32>
    %cst_135 = arith.constant 5.000000e-01 : f32
    %244 = vector.broadcast %cst_135 : f32 to vector<2x128xf32>
    %245 = arith.mulf %244, %243 : vector<2x128xf32>
    %246 = arith.mulf %235, %219 : vector<2x128xf32>
    %247 = arith.mulf %227, %237 : vector<2x128xf32>
    %248 = arith.addf %246, %247 : vector<2x128xf32>
    %249 = math.tanh %248 : vector<2x128xf32>
    %250 = arith.mulf %245, %249 : vector<2x128xf32>
    %c0_136 = arith.constant 0 : index
    %c0_137 = arith.constant 0 : index
    %251 = vector.load %arg7[%c0_136, %c0_137] : memref<2x128xf32, #tpu.memory_space<vmem>>, vector<2x128xf32>
    tpu.vector_store %arg7[%c0_136, %c0_137], %215 {strides = array<i32>} : memref<2x128xf32, #tpu.memory_space<vmem>>, vector<2x128xf32>,
    %c0_138 = arith.constant 0 : index
    %c0_139 = arith.constant 0 : index
    %252 = vector.load %arg8[%c0_138, %c0_139] : memref<2x128xf32, #tpu.memory_space<vmem>>, vector<2x128xf32>
    tpu.vector_store %arg8[%c0_138, %c0_139], %213 {strides = array<i32>} : memref<2x128xf32, #tpu.memory_space<vmem>>, vector<2x128xf32>,
    %c0_140 = arith.constant 0 : index
    %c0_141 = arith.constant 0 : index
    %253 = vector.load %arg9[%c0_140, %c0_141] : memref<2x128xf32, #tpu.memory_space<vmem>>, vector<2x128xf32>
    tpu.vector_store %arg9[%c0_140, %c0_141], %250 {strides = array<i32>} : memref<2x128xf32, #tpu.memory_space<vmem>>, vector<2x128xf32>,
    %c0_142 = arith.constant 0 : index
    %c0_143 = arith.constant 0 : index
    %254 = vector.load %arg10[%c0_142, %c0_143] : memref<2x128xf32, #tpu.memory_space<vmem>>, vector<2x128xf32>
    tpu.vector_store %arg10[%c0_142, %c0_143], %248 {strides = array<i32>} : memref<2x128xf32, #tpu.memory_space<vmem>>, vector<2x128xf32>,
    %c2_144 = arith.constant 2 : index
    %c0_145 = arith.constant 0 : index
    %c0_146 = arith.constant 0 : index
    %255 = vector.load %arg5[%c2_144, %c0_145, %c0_146] : memref<8x2x128xf32, #tpu.memory_space<vmem>>, vector<1x2x128xf32>
    %256 = vector.shape_cast %255 : vector<1x2x128xf32> to vector<2x128xf32>
    %257 = vector.shape_cast %215 : vector<2x128xf32> to vector<1x2x128xf32>
    tpu.vector_store %arg5[%c2_144, %c0_145, %c0_146], %257 {strides = array<i32>} : memref<8x2x128xf32, #tpu.memory_space<vmem>>, vector<1x2x128xf32>,
    %c5_147 = arith.constant 5 : index
    %c0_148 = arith.constant 0 : index
    %c0_149 = arith.constant 0 : index
    %258 = vector.load %arg6[%c5_147, %c0_148, %c0_149] : memref<8x2x128xf32, #tpu.memory_space<vmem>>, vector<1x2x128xf32>
    %259 = vector.shape_cast %258 : vector<1x2x128xf32> to vector<2x128xf32>
    %260 = vector.shape_cast %250 : vector<2x128xf32> to vector<1x2x128xf32>
    tpu.vector_store %arg6[%c5_147, %c0_148, %c0_149], %260 {strides = array<i32>} : memref<8x2x128xf32, #tpu.memory_space<vmem>>, vector<1x2x128xf32>,
    %c0_150 = arith.constant 0 : index
    %c0_151 = arith.constant 0 : index
    %261 = vector.load %arg7[%c0_150, %c0_151] : memref<2x128xf32, #tpu.memory_space<vmem>>, vector<2x128xf32>
    %c0_152 = arith.constant 0 : index
    %c0_153 = arith.constant 0 : index
    %262 = vector.load %arg3[%c0_152, %c0_153] : memref<128x512xf32, #tpu.memory_space<vmem>>, vector<128x512xf32>
    %cst_154 = arith.constant dense<0.000000e+00> : vector<2x512xf32>
    %263 = tpu.matmul %261, %262, %cst_154 {dimension_numbers = #tpu.dot_dimension_numbers<[1], [0], [0], [1], [0, 0, 1, 1], [], []>} : vector<2x128xf32>, vector<128x512xf32>, vector<2x512xf32> -> vector<2x512xf32>
    %c0_155 = arith.constant 0 : index
    %c0_156 = arith.constant 0 : index
    %264 = vector.load %arg9[%c0_155, %c0_156] : memref<2x128xf32, #tpu.memory_space<vmem>>, vector<2x128xf32>
    %c0_157 = arith.constant 0 : index
    %c0_158 = arith.constant 0 : index
    %265 = vector.load %arg4[%c0_157, %c0_158] : memref<128x512xf32, #tpu.memory_space<vmem>>, vector<128x512xf32>
    %cst_159 = arith.constant dense<0.000000e+00> : vector<2x512xf32>
    %266 = tpu.matmul %264, %265, %cst_159 {dimension_numbers = #tpu.dot_dimension_numbers<[1], [0], [0], [1], [0, 0, 1, 1], [], []>} : vector<2x128xf32>, vector<128x512xf32>, vector<2x512xf32> -> vector<2x512xf32>
    %c3 = arith.constant 3 : index
    %c0_160 = arith.constant 0 : index
    %c0_161 = arith.constant 0 : index
    %267 = vector.load %arg1[%c3, %c0_160, %c0_161] : memref<8x2x512xf32, #tpu.memory_space<vmem>>, vector<1x2x512xf32>
    %268 = vector.shape_cast %267 : vector<1x2x512xf32> to vector<2x512xf32>
    %269 = arith.addf %268, %263 : vector<2x512xf32>
    %c0_162 = arith.constant 0 : index
    %c0_163 = arith.constant 0 : index
    %270 = vector.load %arg8[%c0_162, %c0_163] : memref<2x128xf32, #tpu.memory_space<vmem>>, vector<2x128xf32>
    %271 = vector.extract_strided_slice %269 {offsets = [0, 0], sizes = [2, 128], strides = [1, 1]} : vector<2x512xf32> to vector<2x128xf32>
    %cst_164 = arith.constant 5.000000e-01 : f32
    %272 = vector.broadcast %cst_164 : f32 to vector<2x128xf32>
    %273 = arith.mulf %272, %271 : vector<2x128xf32>
    %274 = math.tanh %273 : vector<2x128xf32>
    %cst_165 = arith.constant 1.000000e+00 : f32
    %275 = vector.broadcast %cst_165 : f32 to vector<2x128xf32>
    %276 = arith.addf %274, %275 : vector<2x128xf32>
    %cst_166 = arith.constant 5.000000e-01 : f32
    %277 = vector.broadcast %cst_166 : f32 to vector<2x128xf32>
    %278 = arith.mulf %277, %276 : vector<2x128xf32>
    %279 = vector.extract_strided_slice %269 {offsets = [0, 128], sizes = [2, 128], strides = [1, 1]} : vector<2x512xf32> to vector<2x128xf32>
    %cst_167 = arith.constant 5.000000e-01 : f32
    %280 = vector.broadcast %cst_167 : f32 to vector<2x128xf32>
    %281 = arith.mulf %280, %279 : vector<2x128xf32>
    %282 = math.tanh %281 : vector<2x128xf32>
    %cst_168 = arith.constant 1.000000e+00 : f32
    %283 = vector.broadcast %cst_168 : f32 to vector<2x128xf32>
    %284 = arith.addf %282, %283 : vector<2x128xf32>
    %cst_169 = arith.constant 5.000000e-01 : f32
    %285 = vector.broadcast %cst_169 : f32 to vector<2x128xf32>
    %286 = arith.mulf %285, %284 : vector<2x128xf32>
    %287 = vector.extract_strided_slice %269 {offsets = [0, 256], sizes = [2, 128], strides = [1, 1]} : vector<2x512xf32> to vector<2x128xf32>
    %288 = math.tanh %287 : vector<2x128xf32>
    %289 = vector.extract_strided_slice %269 {offsets = [0, 384], sizes = [2, 128], strides = [1, 1]} : vector<2x512xf32> to vector<2x128xf32>
    %cst_170 = arith.constant 5.000000e-01 : f32
    %290 = vector.broadcast %cst_170 : f32 to vector<2x128xf32>
    %291 = arith.mulf %290, %289 : vector<2x128xf32>
    %292 = math.tanh %291 : vector<2x128xf32>
    %cst_171 = arith.constant 1.000000e+00 : f32
    %293 = vector.broadcast %cst_171 : f32 to vector<2x128xf32>
    %294 = arith.addf %292, %293 : vector<2x128xf32>
    %cst_172 = arith.constant 5.000000e-01 : f32
    %295 = vector.broadcast %cst_172 : f32 to vector<2x128xf32>
    %296 = arith.mulf %295, %294 : vector<2x128xf32>
    %297 = arith.mulf %286, %270 : vector<2x128xf32>
    %298 = arith.mulf %278, %288 : vector<2x128xf32>
    %299 = arith.addf %297, %298 : vector<2x128xf32>
    %300 = math.tanh %299 : vector<2x128xf32>
    %301 = arith.mulf %296, %300 : vector<2x128xf32>
    %c4 = arith.constant 4 : index
    %c0_173 = arith.constant 0 : index
    %c0_174 = arith.constant 0 : index
    %302 = vector.load %arg2[%c4, %c0_173, %c0_174] : memref<8x2x512xf32, #tpu.memory_space<vmem>>, vector<1x2x512xf32>
    %303 = vector.shape_cast %302 : vector<1x2x512xf32> to vector<2x512xf32>
    %304 = arith.addf %303, %266 : vector<2x512xf32>
    %c0_175 = arith.constant 0 : index
    %c0_176 = arith.constant 0 : index
    %305 = vector.load %arg10[%c0_175, %c0_176] : memref<2x128xf32, #tpu.memory_space<vmem>>, vector<2x128xf32>
    %306 = vector.extract_strided_slice %304 {offsets = [0, 0], sizes = [2, 128], strides = [1, 1]} : vector<2x512xf32> to vector<2x128xf32>
    %cst_177 = arith.constant 5.000000e-01 : f32
    %307 = vector.broadcast %cst_177 : f32 to vector<2x128xf32>
    %308 = arith.mulf %307, %306 : vector<2x128xf32>
    %309 = math.tanh %308 : vector<2x128xf32>
    %cst_178 = arith.constant 1.000000e+00 : f32
    %310 = vector.broadcast %cst_178 : f32 to vector<2x128xf32>
    %311 = arith.addf %309, %310 : vector<2x128xf32>
    %cst_179 = arith.constant 5.000000e-01 : f32
    %312 = vector.broadcast %cst_179 : f32 to vector<2x128xf32>
    %313 = arith.mulf %312, %311 : vector<2x128xf32>
    %314 = vector.extract_strided_slice %304 {offsets = [0, 128], sizes = [2, 128], strides = [1, 1]} : vector<2x512xf32> to vector<2x128xf32>
    %cst_180 = arith.constant 5.000000e-01 : f32
    %315 = vector.broadcast %cst_180 : f32 to vector<2x128xf32>
    %316 = arith.mulf %315, %314 : vector<2x128xf32>
    %317 = math.tanh %316 : vector<2x128xf32>
    %cst_181 = arith.constant 1.000000e+00 : f32
    %318 = vector.broadcast %cst_181 : f32 to vector<2x128xf32>
    %319 = arith.addf %317, %318 : vector<2x128xf32>
    %cst_182 = arith.constant 5.000000e-01 : f32
    %320 = vector.broadcast %cst_182 : f32 to vector<2x128xf32>
    %321 = arith.mulf %320, %319 : vector<2x128xf32>
    %322 = vector.extract_strided_slice %304 {offsets = [0, 256], sizes = [2, 128], strides = [1, 1]} : vector<2x512xf32> to vector<2x128xf32>
    %323 = math.tanh %322 : vector<2x128xf32>
    %324 = vector.extract_strided_slice %304 {offsets = [0, 384], sizes = [2, 128], strides = [1, 1]} : vector<2x512xf32> to vector<2x128xf32>
    %cst_183 = arith.constant 5.000000e-01 : f32
    %325 = vector.broadcast %cst_183 : f32 to vector<2x128xf32>
    %326 = arith.mulf %325, %324 : vector<2x128xf32>
    %327 = math.tanh %326 : vector<2x128xf32>
    %cst_184 = arith.constant 1.000000e+00 : f32
    %328 = vector.broadcast %cst_184 : f32 to vector<2x128xf32>
    %329 = arith.addf %327, %328 : vector<2x128xf32>
    %cst_185 = arith.constant 5.000000e-01 : f32
    %330 = vector.broadcast %cst_185 : f32 to vector<2x128xf32>
    %331 = arith.mulf %330, %329 : vector<2x128xf32>
    %332 = arith.mulf %321, %305 : vector<2x128xf32>
    %333 = arith.mulf %313, %323 : vector<2x128xf32>
    %334 = arith.addf %332, %333 : vector<2x128xf32>
    %335 = math.tanh %334 : vector<2x128xf32>
    %336 = arith.mulf %331, %335 : vector<2x128xf32>
    %c0_186 = arith.constant 0 : index
    %c0_187 = arith.constant 0 : index
    %337 = vector.load %arg7[%c0_186, %c0_187] : memref<2x128xf32, #tpu.memory_space<vmem>>, vector<2x128xf32>
    tpu.vector_store %arg7[%c0_186, %c0_187], %301 {strides = array<i32>} : memref<2x128xf32, #tpu.memory_space<vmem>>, vector<2x128xf32>,
    %c0_188 = arith.constant 0 : index
    %c0_189 = arith.constant 0 : index
    %338 = vector.load %arg8[%c0_188, %c0_189] : memref<2x128xf32, #tpu.memory_space<vmem>>, vector<2x128xf32>
    tpu.vector_store %arg8[%c0_188, %c0_189], %299 {strides = array<i32>} : memref<2x128xf32, #tpu.memory_space<vmem>>, vector<2x128xf32>,
    %c0_190 = arith.constant 0 : index
    %c0_191 = arith.constant 0 : index
    %339 = vector.load %arg9[%c0_190, %c0_191] : memref<2x128xf32, #tpu.memory_space<vmem>>, vector<2x128xf32>
    tpu.vector_store %arg9[%c0_190, %c0_191], %336 {strides = array<i32>} : memref<2x128xf32, #tpu.memory_space<vmem>>, vector<2x128xf32>,
    %c0_192 = arith.constant 0 : index
    %c0_193 = arith.constant 0 : index
    %340 = vector.load %arg10[%c0_192, %c0_193] : memref<2x128xf32, #tpu.memory_space<vmem>>, vector<2x128xf32>
    tpu.vector_store %arg10[%c0_192, %c0_193], %334 {strides = array<i32>} : memref<2x128xf32, #tpu.memory_space<vmem>>, vector<2x128xf32>,
    %c3_194 = arith.constant 3 : index
    %c0_195 = arith.constant 0 : index
    %c0_196 = arith.constant 0 : index
    %341 = vector.load %arg5[%c3_194, %c0_195, %c0_196] : memref<8x2x128xf32, #tpu.memory_space<vmem>>, vector<1x2x128xf32>
    %342 = vector.shape_cast %341 : vector<1x2x128xf32> to vector<2x128xf32>
    %343 = vector.shape_cast %301 : vector<2x128xf32> to vector<1x2x128xf32>
    tpu.vector_store %arg5[%c3_194, %c0_195, %c0_196], %343 {strides = array<i32>} : memref<8x2x128xf32, #tpu.memory_space<vmem>>, vector<1x2x128xf32>,
    %c4_197 = arith.constant 4 : index
    %c0_198 = arith.constant 0 : index
    %c0_199 = arith.constant 0 : index
    %344 = vector.load %arg6[%c4_197, %c0_198, %c0_199] : memref<8x2x128xf32, #tpu.memory_space<vmem>>, vector<1x2x128xf32>
    %345 = vector.shape_cast %344 : vector<1x2x128xf32> to vector<2x128xf32>
    %346 = vector.shape_cast %336 : vector<2x128xf32> to vector<1x2x128xf32>
    tpu.vector_store %arg6[%c4_197, %c0_198, %c0_199], %346 {strides = array<i32>} : memref<8x2x128xf32, #tpu.memory_space<vmem>>, vector<1x2x128xf32>,
    %c0_200 = arith.constant 0 : index
    %c0_201 = arith.constant 0 : index
    %347 = vector.load %arg7[%c0_200, %c0_201] : memref<2x128xf32, #tpu.memory_space<vmem>>, vector<2x128xf32>
    %c0_202 = arith.constant 0 : index
    %c0_203 = arith.constant 0 : index
    %348 = vector.load %arg3[%c0_202, %c0_203] : memref<128x512xf32, #tpu.memory_space<vmem>>, vector<128x512xf32>
    %cst_204 = arith.constant dense<0.000000e+00> : vector<2x512xf32>
    %349 = tpu.matmul %347, %348, %cst_204 {dimension_numbers = #tpu.dot_dimension_numbers<[1], [0], [0], [1], [0, 0, 1, 1], [], []>} : vector<2x128xf32>, vector<128x512xf32>, vector<2x512xf32> -> vector<2x512xf32>
    %c0_205 = arith.constant 0 : index
    %c0_206 = arith.constant 0 : index
    %350 = vector.load %arg9[%c0_205, %c0_206] : memref<2x128xf32, #tpu.memory_space<vmem>>, vector<2x128xf32>
    %c0_207 = arith.constant 0 : index
    %c0_208 = arith.constant 0 : index
    %351 = vector.load %arg4[%c0_207, %c0_208] : memref<128x512xf32, #tpu.memory_space<vmem>>, vector<128x512xf32>
    %cst_209 = arith.constant dense<0.000000e+00> : vector<2x512xf32>
    %352 = tpu.matmul %350, %351, %cst_209 {dimension_numbers = #tpu.dot_dimension_numbers<[1], [0], [0], [1], [0, 0, 1, 1], [], []>} : vector<2x128xf32>, vector<128x512xf32>, vector<2x512xf32> -> vector<2x512xf32>
    %c4_210 = arith.constant 4 : index
    %c0_211 = arith.constant 0 : index
    %c0_212 = arith.constant 0 : index
    %353 = vector.load %arg1[%c4_210, %c0_211, %c0_212] : memref<8x2x512xf32, #tpu.memory_space<vmem>>, vector<1x2x512xf32>
    %354 = vector.shape_cast %353 : vector<1x2x512xf32> to vector<2x512xf32>
    %355 = arith.addf %354, %349 : vector<2x512xf32>
    %c0_213 = arith.constant 0 : index
    %c0_214 = arith.constant 0 : index
    %356 = vector.load %arg8[%c0_213, %c0_214] : memref<2x128xf32, #tpu.memory_space<vmem>>, vector<2x128xf32>
    %357 = vector.extract_strided_slice %355 {offsets = [0, 0], sizes = [2, 128], strides = [1, 1]} : vector<2x512xf32> to vector<2x128xf32>
    %cst_215 = arith.constant 5.000000e-01 : f32
    %358 = vector.broadcast %cst_215 : f32 to vector<2x128xf32>
    %359 = arith.mulf %358, %357 : vector<2x128xf32>
    %360 = math.tanh %359 : vector<2x128xf32>
    %cst_216 = arith.constant 1.000000e+00 : f32
    %361 = vector.broadcast %cst_216 : f32 to vector<2x128xf32>
    %362 = arith.addf %360, %361 : vector<2x128xf32>
    %cst_217 = arith.constant 5.000000e-01 : f32
    %363 = vector.broadcast %cst_217 : f32 to vector<2x128xf32>
    %364 = arith.mulf %363, %362 : vector<2x128xf32>
    %365 = vector.extract_strided_slice %355 {offsets = [0, 128], sizes = [2, 128], strides = [1, 1]} : vector<2x512xf32> to vector<2x128xf32>
    %cst_218 = arith.constant 5.000000e-01 : f32
    %366 = vector.broadcast %cst_218 : f32 to vector<2x128xf32>
    %367 = arith.mulf %366, %365 : vector<2x128xf32>
    %368 = math.tanh %367 : vector<2x128xf32>
    %cst_219 = arith.constant 1.000000e+00 : f32
    %369 = vector.broadcast %cst_219 : f32 to vector<2x128xf32>
    %370 = arith.addf %368, %369 : vector<2x128xf32>
    %cst_220 = arith.constant 5.000000e-01 : f32
    %371 = vector.broadcast %cst_220 : f32 to vector<2x128xf32>
    %372 = arith.mulf %371, %370 : vector<2x128xf32>
    %373 = vector.extract_strided_slice %355 {offsets = [0, 256], sizes = [2, 128], strides = [1, 1]} : vector<2x512xf32> to vector<2x128xf32>
    %374 = math.tanh %373 : vector<2x128xf32>
    %375 = vector.extract_strided_slice %355 {offsets = [0, 384], sizes = [2, 128], strides = [1, 1]} : vector<2x512xf32> to vector<2x128xf32>
    %cst_221 = arith.constant 5.000000e-01 : f32
    %376 = vector.broadcast %cst_221 : f32 to vector<2x128xf32>
    %377 = arith.mulf %376, %375 : vector<2x128xf32>
    %378 = math.tanh %377 : vector<2x128xf32>
    %cst_222 = arith.constant 1.000000e+00 : f32
    %379 = vector.broadcast %cst_222 : f32 to vector<2x128xf32>
    %380 = arith.addf %378, %379 : vector<2x128xf32>
    %cst_223 = arith.constant 5.000000e-01 : f32
    %381 = vector.broadcast %cst_223 : f32 to vector<2x128xf32>
    %382 = arith.mulf %381, %380 : vector<2x128xf32>
    %383 = arith.mulf %372, %356 : vector<2x128xf32>
    %384 = arith.mulf %364, %374 : vector<2x128xf32>
    %385 = arith.addf %383, %384 : vector<2x128xf32>
    %386 = math.tanh %385 : vector<2x128xf32>
    %387 = arith.mulf %382, %386 : vector<2x128xf32>
    %c3_224 = arith.constant 3 : index
    %c0_225 = arith.constant 0 : index
    %c0_226 = arith.constant 0 : index
    %388 = vector.load %arg2[%c3_224, %c0_225, %c0_226] : memref<8x2x512xf32, #tpu.memory_space<vmem>>, vector<1x2x512xf32>
    %389 = vector.shape_cast %388 : vector<1x2x512xf32> to vector<2x512xf32>
    %390 = arith.addf %389, %352 : vector<2x512xf32>
    %c0_227 = arith.constant 0 : index
    %c0_228 = arith.constant 0 : index
    %391 = vector.load %arg10[%c0_227, %c0_228] : memref<2x128xf32, #tpu.memory_space<vmem>>, vector<2x128xf32>
    %392 = vector.extract_strided_slice %390 {offsets = [0, 0], sizes = [2, 128], strides = [1, 1]} : vector<2x512xf32> to vector<2x128xf32>
    %cst_229 = arith.constant 5.000000e-01 : f32
    %393 = vector.broadcast %cst_229 : f32 to vector<2x128xf32>
    %394 = arith.mulf %393, %392 : vector<2x128xf32>
    %395 = math.tanh %394 : vector<2x128xf32>
    %cst_230 = arith.constant 1.000000e+00 : f32
    %396 = vector.broadcast %cst_230 : f32 to vector<2x128xf32>
    %397 = arith.addf %395, %396 : vector<2x128xf32>
    %cst_231 = arith.constant 5.000000e-01 : f32
    %398 = vector.broadcast %cst_231 : f32 to vector<2x128xf32>
    %399 = arith.mulf %398, %397 : vector<2x128xf32>
    %400 = vector.extract_strided_slice %390 {offsets = [0, 128], sizes = [2, 128], strides = [1, 1]} : vector<2x512xf32> to vector<2x128xf32>
    %cst_232 = arith.constant 5.000000e-01 : f32
    %401 = vector.broadcast %cst_232 : f32 to vector<2x128xf32>
    %402 = arith.mulf %401, %400 : vector<2x128xf32>
    %403 = math.tanh %402 : vector<2x128xf32>
    %cst_233 = arith.constant 1.000000e+00 : f32
    %404 = vector.broadcast %cst_233 : f32 to vector<2x128xf32>
    %405 = arith.addf %403, %404 : vector<2x128xf32>
    %cst_234 = arith.constant 5.000000e-01 : f32
    %406 = vector.broadcast %cst_234 : f32 to vector<2x128xf32>
    %407 = arith.mulf %406, %405 : vector<2x128xf32>
    %408 = vector.extract_strided_slice %390 {offsets = [0, 256], sizes = [2, 128], strides = [1, 1]} : vector<2x512xf32> to vector<2x128xf32>
    %409 = math.tanh %408 : vector<2x128xf32>
    %410 = vector.extract_strided_slice %390 {offsets = [0, 384], sizes = [2, 128], strides = [1, 1]} : vector<2x512xf32> to vector<2x128xf32>
    %cst_235 = arith.constant 5.000000e-01 : f32
    %411 = vector.broadcast %cst_235 : f32 to vector<2x128xf32>
    %412 = arith.mulf %411, %410 : vector<2x128xf32>
    %413 = math.tanh %412 : vector<2x128xf32>
    %cst_236 = arith.constant 1.000000e+00 : f32
    %414 = vector.broadcast %cst_236 : f32 to vector<2x128xf32>
    %415 = arith.addf %413, %414 : vector<2x128xf32>
    %cst_237 = arith.constant 5.000000e-01 : f32
    %416 = vector.broadcast %cst_237 : f32 to vector<2x128xf32>
    %417 = arith.mulf %416, %415 : vector<2x128xf32>
    %418 = arith.mulf %407, %391 : vector<2x128xf32>
    %419 = arith.mulf %399, %409 : vector<2x128xf32>
    %420 = arith.addf %418, %419 : vector<2x128xf32>
    %421 = math.tanh %420 : vector<2x128xf32>
    %422 = arith.mulf %417, %421 : vector<2x128xf32>
    %c0_238 = arith.constant 0 : index
    %c0_239 = arith.constant 0 : index
    %423 = vector.load %arg7[%c0_238, %c0_239] : memref<2x128xf32, #tpu.memory_space<vmem>>, vector<2x128xf32>
    tpu.vector_store %arg7[%c0_238, %c0_239], %387 {strides = array<i32>} : memref<2x128xf32, #tpu.memory_space<vmem>>, vector<2x128xf32>,
    %c0_240 = arith.constant 0 : index
    %c0_241 = arith.constant 0 : index
    %424 = vector.load %arg8[%c0_240, %c0_241] : memref<2x128xf32, #tpu.memory_space<vmem>>, vector<2x128xf32>
    tpu.vector_store %arg8[%c0_240, %c0_241], %385 {strides = array<i32>} : memref<2x128xf32, #tpu.memory_space<vmem>>, vector<2x128xf32>,
    %c0_242 = arith.constant 0 : index
    %c0_243 = arith.constant 0 : index
    %425 = vector.load %arg9[%c0_242, %c0_243] : memref<2x128xf32, #tpu.memory_space<vmem>>, vector<2x128xf32>
    tpu.vector_store %arg9[%c0_242, %c0_243], %422 {strides = array<i32>} : memref<2x128xf32, #tpu.memory_space<vmem>>, vector<2x128xf32>,
    %c0_244 = arith.constant 0 : index
    %c0_245 = arith.constant 0 : index
    %426 = vector.load %arg10[%c0_244, %c0_245] : memref<2x128xf32, #tpu.memory_space<vmem>>, vector<2x128xf32>
    tpu.vector_store %arg10[%c0_244, %c0_245], %420 {strides = array<i32>} : memref<2x128xf32, #tpu.memory_space<vmem>>, vector<2x128xf32>,
    %c4_246 = arith.constant 4 : index
    %c0_247 = arith.constant 0 : index
    %c0_248 = arith.constant 0 : index
    %427 = vector.load %arg5[%c4_246, %c0_247, %c0_248] : memref<8x2x128xf32, #tpu.memory_space<vmem>>, vector<1x2x128xf32>
    %428 = vector.shape_cast %427 : vector<1x2x128xf32> to vector<2x128xf32>
    %429 = vector.shape_cast %387 : vector<2x128xf32> to vector<1x2x128xf32>
    tpu.vector_store %arg5[%c4_246, %c0_247, %c0_248], %429 {strides = array<i32>} : memref<8x2x128xf32, #tpu.memory_space<vmem>>, vector<1x2x128xf32>,
    %c3_249 = arith.constant 3 : index
    %c0_250 = arith.constant 0 : index
    %c0_251 = arith.constant 0 : index
    %430 = vector.load %arg6[%c3_249, %c0_250, %c0_251] : memref<8x2x128xf32, #tpu.memory_space<vmem>>, vector<1x2x128xf32>
    %431 = vector.shape_cast %430 : vector<1x2x128xf32> to vector<2x128xf32>
    %432 = vector.shape_cast %422 : vector<2x128xf32> to vector<1x2x128xf32>
    tpu.vector_store %arg6[%c3_249, %c0_250, %c0_251], %432 {strides = array<i32>} : memref<8x2x128xf32, #tpu.memory_space<vmem>>, vector<1x2x128xf32>,
    %c0_252 = arith.constant 0 : index
    %c0_253 = arith.constant 0 : index
    %433 = vector.load %arg7[%c0_252, %c0_253] : memref<2x128xf32, #tpu.memory_space<vmem>>, vector<2x128xf32>
    %c0_254 = arith.constant 0 : index
    %c0_255 = arith.constant 0 : index
    %434 = vector.load %arg3[%c0_254, %c0_255] : memref<128x512xf32, #tpu.memory_space<vmem>>, vector<128x512xf32>
    %cst_256 = arith.constant dense<0.000000e+00> : vector<2x512xf32>
    %435 = tpu.matmul %433, %434, %cst_256 {dimension_numbers = #tpu.dot_dimension_numbers<[1], [0], [0], [1], [0, 0, 1, 1], [], []>} : vector<2x128xf32>, vector<128x512xf32>, vector<2x512xf32> -> vector<2x512xf32>
    %c0_257 = arith.constant 0 : index
    %c0_258 = arith.constant 0 : index
    %436 = vector.load %arg9[%c0_257, %c0_258] : memref<2x128xf32, #tpu.memory_space<vmem>>, vector<2x128xf32>
    %c0_259 = arith.constant 0 : index
    %c0_260 = arith.constant 0 : index
    %437 = vector.load %arg4[%c0_259, %c0_260] : memref<128x512xf32, #tpu.memory_space<vmem>>, vector<128x512xf32>
    %cst_261 = arith.constant dense<0.000000e+00> : vector<2x512xf32>
    %438 = tpu.matmul %436, %437, %cst_261 {dimension_numbers = #tpu.dot_dimension_numbers<[1], [0], [0], [1], [0, 0, 1, 1], [], []>} : vector<2x128xf32>, vector<128x512xf32>, vector<2x512xf32> -> vector<2x512xf32>
    %c5_262 = arith.constant 5 : index
    %c0_263 = arith.constant 0 : index
    %c0_264 = arith.constant 0 : index
    %439 = vector.load %arg1[%c5_262, %c0_263, %c0_264] : memref<8x2x512xf32, #tpu.memory_space<vmem>>, vector<1x2x512xf32>
    %440 = vector.shape_cast %439 : vector<1x2x512xf32> to vector<2x512xf32>
    %441 = arith.addf %440, %435 : vector<2x512xf32>
    %c0_265 = arith.constant 0 : index
    %c0_266 = arith.constant 0 : index
    %442 = vector.load %arg8[%c0_265, %c0_266] : memref<2x128xf32, #tpu.memory_space<vmem>>, vector<2x128xf32>
    %443 = vector.extract_strided_slice %441 {offsets = [0, 0], sizes = [2, 128], strides = [1, 1]} : vector<2x512xf32> to vector<2x128xf32>
    %cst_267 = arith.constant 5.000000e-01 : f32
    %444 = vector.broadcast %cst_267 : f32 to vector<2x128xf32>
    %445 = arith.mulf %444, %443 : vector<2x128xf32>
    %446 = math.tanh %445 : vector<2x128xf32>
    %cst_268 = arith.constant 1.000000e+00 : f32
    %447 = vector.broadcast %cst_268 : f32 to vector<2x128xf32>
    %448 = arith.addf %446, %447 : vector<2x128xf32>
    %cst_269 = arith.constant 5.000000e-01 : f32
    %449 = vector.broadcast %cst_269 : f32 to vector<2x128xf32>
    %450 = arith.mulf %449, %448 : vector<2x128xf32>
    %451 = vector.extract_strided_slice %441 {offsets = [0, 128], sizes = [2, 128], strides = [1, 1]} : vector<2x512xf32> to vector<2x128xf32>
    %cst_270 = arith.constant 5.000000e-01 : f32
    %452 = vector.broadcast %cst_270 : f32 to vector<2x128xf32>
    %453 = arith.mulf %452, %451 : vector<2x128xf32>
    %454 = math.tanh %453 : vector<2x128xf32>
    %cst_271 = arith.constant 1.000000e+00 : f32
    %455 = vector.broadcast %cst_271 : f32 to vector<2x128xf32>
    %456 = arith.addf %454, %455 : vector<2x128xf32>
    %cst_272 = arith.constant 5.000000e-01 : f32
    %457 = vector.broadcast %cst_272 : f32 to vector<2x128xf32>
    %458 = arith.mulf %457, %456 : vector<2x128xf32>
    %459 = vector.extract_strided_slice %441 {offsets = [0, 256], sizes = [2, 128], strides = [1, 1]} : vector<2x512xf32> to vector<2x128xf32>
    %460 = math.tanh %459 : vector<2x128xf32>
    %461 = vector.extract_strided_slice %441 {offsets = [0, 384], sizes = [2, 128], strides = [1, 1]} : vector<2x512xf32> to vector<2x128xf32>
    %cst_273 = arith.constant 5.000000e-01 : f32
    %462 = vector.broadcast %cst_273 : f32 to vector<2x128xf32>
    %463 = arith.mulf %462, %461 : vector<2x128xf32>
    %464 = math.tanh %463 : vector<2x128xf32>
    %cst_274 = arith.constant 1.000000e+00 : f32
    %465 = vector.broadcast %cst_274 : f32 to vector<2x128xf32>
    %466 = arith.addf %464, %465 : vector<2x128xf32>
    %cst_275 = arith.constant 5.000000e-01 : f32
    %467 = vector.broadcast %cst_275 : f32 to vector<2x128xf32>
    %468 = arith.mulf %467, %466 : vector<2x128xf32>
    %469 = arith.mulf %458, %442 : vector<2x128xf32>
    %470 = arith.mulf %450, %460 : vector<2x128xf32>
    %471 = arith.addf %469, %470 : vector<2x128xf32>
    %472 = math.tanh %471 : vector<2x128xf32>
    %473 = arith.mulf %468, %472 : vector<2x128xf32>
    %c2_276 = arith.constant 2 : index
    %c0_277 = arith.constant 0 : index
    %c0_278 = arith.constant 0 : index
    %474 = vector.load %arg2[%c2_276, %c0_277, %c0_278] : memref<8x2x512xf32, #tpu.memory_space<vmem>>, vector<1x2x512xf32>
    %475 = vector.shape_cast %474 : vector<1x2x512xf32> to vector<2x512xf32>
    %476 = arith.addf %475, %438 : vector<2x512xf32>
    %c0_279 = arith.constant 0 : index
    %c0_280 = arith.constant 0 : index
    %477 = vector.load %arg10[%c0_279, %c0_280] : memref<2x128xf32, #tpu.memory_space<vmem>>, vector<2x128xf32>
    %478 = vector.extract_strided_slice %476 {offsets = [0, 0], sizes = [2, 128], strides = [1, 1]} : vector<2x512xf32> to vector<2x128xf32>
    %cst_281 = arith.constant 5.000000e-01 : f32
    %479 = vector.broadcast %cst_281 : f32 to vector<2x128xf32>
    %480 = arith.mulf %479, %478 : vector<2x128xf32>
    %481 = math.tanh %480 : vector<2x128xf32>
    %cst_282 = arith.constant 1.000000e+00 : f32
    %482 = vector.broadcast %cst_282 : f32 to vector<2x128xf32>
    %483 = arith.addf %481, %482 : vector<2x128xf32>
    %cst_283 = arith.constant 5.000000e-01 : f32
    %484 = vector.broadcast %cst_283 : f32 to vector<2x128xf32>
    %485 = arith.mulf %484, %483 : vector<2x128xf32>
    %486 = vector.extract_strided_slice %476 {offsets = [0, 128], sizes = [2, 128], strides = [1, 1]} : vector<2x512xf32> to vector<2x128xf32>
    %cst_284 = arith.constant 5.000000e-01 : f32
    %487 = vector.broadcast %cst_284 : f32 to vector<2x128xf32>
    %488 = arith.mulf %487, %486 : vector<2x128xf32>
    %489 = math.tanh %488 : vector<2x128xf32>
    %cst_285 = arith.constant 1.000000e+00 : f32
    %490 = vector.broadcast %cst_285 : f32 to vector<2x128xf32>
    %491 = arith.addf %489, %490 : vector<2x128xf32>
    %cst_286 = arith.constant 5.000000e-01 : f32
    %492 = vector.broadcast %cst_286 : f32 to vector<2x128xf32>
    %493 = arith.mulf %492, %491 : vector<2x128xf32>
    %494 = vector.extract_strided_slice %476 {offsets = [0, 256], sizes = [2, 128], strides = [1, 1]} : vector<2x512xf32> to vector<2x128xf32>
    %495 = math.tanh %494 : vector<2x128xf32>
    %496 = vector.extract_strided_slice %476 {offsets = [0, 384], sizes = [2, 128], strides = [1, 1]} : vector<2x512xf32> to vector<2x128xf32>
    %cst_287 = arith.constant 5.000000e-01 : f32
    %497 = vector.broadcast %cst_287 : f32 to vector<2x128xf32>
    %498 = arith.mulf %497, %496 : vector<2x128xf32>
    %499 = math.tanh %498 : vector<2x128xf32>
    %cst_288 = arith.constant 1.000000e+00 : f32
    %500 = vector.broadcast %cst_288 : f32 to vector<2x128xf32>
    %501 = arith.addf %499, %500 : vector<2x128xf32>
    %cst_289 = arith.constant 5.000000e-01 : f32
    %502 = vector.broadcast %cst_289 : f32 to vector<2x128xf32>
    %503 = arith.mulf %502, %501 : vector<2x128xf32>
    %504 = arith.mulf %493, %477 : vector<2x128xf32>
    %505 = arith.mulf %485, %495 : vector<2x128xf32>
    %506 = arith.addf %504, %505 : vector<2x128xf32>
    %507 = math.tanh %506 : vector<2x128xf32>
    %508 = arith.mulf %503, %507 : vector<2x128xf32>
    %c0_290 = arith.constant 0 : index
    %c0_291 = arith.constant 0 : index
    %509 = vector.load %arg7[%c0_290, %c0_291] : memref<2x128xf32, #tpu.memory_space<vmem>>, vector<2x128xf32>
    tpu.vector_store %arg7[%c0_290, %c0_291], %473 {strides = array<i32>} : memref<2x128xf32, #tpu.memory_space<vmem>>, vector<2x128xf32>,
    %c0_292 = arith.constant 0 : index
    %c0_293 = arith.constant 0 : index
    %510 = vector.load %arg8[%c0_292, %c0_293] : memref<2x128xf32, #tpu.memory_space<vmem>>, vector<2x128xf32>
    tpu.vector_store %arg8[%c0_292, %c0_293], %471 {strides = array<i32>} : memref<2x128xf32, #tpu.memory_space<vmem>>, vector<2x128xf32>,
    %c0_294 = arith.constant 0 : index
    %c0_295 = arith.constant 0 : index
    %511 = vector.load %arg9[%c0_294, %c0_295] : memref<2x128xf32, #tpu.memory_space<vmem>>, vector<2x128xf32>
    tpu.vector_store %arg9[%c0_294, %c0_295], %508 {strides = array<i32>} : memref<2x128xf32, #tpu.memory_space<vmem>>, vector<2x128xf32>,
    %c0_296 = arith.constant 0 : index
    %c0_297 = arith.constant 0 : index
    %512 = vector.load %arg10[%c0_296, %c0_297] : memref<2x128xf32, #tpu.memory_space<vmem>>, vector<2x128xf32>
    tpu.vector_store %arg10[%c0_296, %c0_297], %506 {strides = array<i32>} : memref<2x128xf32, #tpu.memory_space<vmem>>, vector<2x128xf32>,
    %c5_298 = arith.constant 5 : index
    %c0_299 = arith.constant 0 : index
    %c0_300 = arith.constant 0 : index
    %513 = vector.load %arg5[%c5_298, %c0_299, %c0_300] : memref<8x2x128xf32, #tpu.memory_space<vmem>>, vector<1x2x128xf32>
    %514 = vector.shape_cast %513 : vector<1x2x128xf32> to vector<2x128xf32>
    %515 = vector.shape_cast %473 : vector<2x128xf32> to vector<1x2x128xf32>
    tpu.vector_store %arg5[%c5_298, %c0_299, %c0_300], %515 {strides = array<i32>} : memref<8x2x128xf32, #tpu.memory_space<vmem>>, vector<1x2x128xf32>,
    %c2_301 = arith.constant 2 : index
    %c0_302 = arith.constant 0 : index
    %c0_303 = arith.constant 0 : index
    %516 = vector.load %arg6[%c2_301, %c0_302, %c0_303] : memref<8x2x128xf32, #tpu.memory_space<vmem>>, vector<1x2x128xf32>
    %517 = vector.shape_cast %516 : vector<1x2x128xf32> to vector<2x128xf32>
    %518 = vector.shape_cast %508 : vector<2x128xf32> to vector<1x2x128xf32>
    tpu.vector_store %arg6[%c2_301, %c0_302, %c0_303], %518 {strides = array<i32>} : memref<8x2x128xf32, #tpu.memory_space<vmem>>, vector<1x2x128xf32>,
    %c0_304 = arith.constant 0 : index
    %c0_305 = arith.constant 0 : index
    %519 = vector.load %arg7[%c0_304, %c0_305] : memref<2x128xf32, #tpu.memory_space<vmem>>, vector<2x128xf32>
    %c0_306 = arith.constant 0 : index
    %c0_307 = arith.constant 0 : index
    %520 = vector.load %arg3[%c0_306, %c0_307] : memref<128x512xf32, #tpu.memory_space<vmem>>, vector<128x512xf32>
    %cst_308 = arith.constant dense<0.000000e+00> : vector<2x512xf32>
    %521 = tpu.matmul %519, %520, %cst_308 {dimension_numbers = #tpu.dot_dimension_numbers<[1], [0], [0], [1], [0, 0, 1, 1], [], []>} : vector<2x128xf32>, vector<128x512xf32>, vector<2x512xf32> -> vector<2x512xf32>
    %c0_309 = arith.constant 0 : index
    %c0_310 = arith.constant 0 : index
    %522 = vector.load %arg9[%c0_309, %c0_310] : memref<2x128xf32, #tpu.memory_space<vmem>>, vector<2x128xf32>
    %c0_311 = arith.constant 0 : index
    %c0_312 = arith.constant 0 : index
    %523 = vector.load %arg4[%c0_311, %c0_312] : memref<128x512xf32, #tpu.memory_space<vmem>>, vector<128x512xf32>
    %cst_313 = arith.constant dense<0.000000e+00> : vector<2x512xf32>
    %524 = tpu.matmul %522, %523, %cst_313 {dimension_numbers = #tpu.dot_dimension_numbers<[1], [0], [0], [1], [0, 0, 1, 1], [], []>} : vector<2x128xf32>, vector<128x512xf32>, vector<2x512xf32> -> vector<2x512xf32>
    %c6_314 = arith.constant 6 : index
    %c0_315 = arith.constant 0 : index
    %c0_316 = arith.constant 0 : index
    %525 = vector.load %arg1[%c6_314, %c0_315, %c0_316] : memref<8x2x512xf32, #tpu.memory_space<vmem>>, vector<1x2x512xf32>
    %526 = vector.shape_cast %525 : vector<1x2x512xf32> to vector<2x512xf32>
    %527 = arith.addf %526, %521 : vector<2x512xf32>
    %c0_317 = arith.constant 0 : index
    %c0_318 = arith.constant 0 : index
    %528 = vector.load %arg8[%c0_317, %c0_318] : memref<2x128xf32, #tpu.memory_space<vmem>>, vector<2x128xf32>
    %529 = vector.extract_strided_slice %527 {offsets = [0, 0], sizes = [2, 128], strides = [1, 1]} : vector<2x512xf32> to vector<2x128xf32>
    %cst_319 = arith.constant 5.000000e-01 : f32
    %530 = vector.broadcast %cst_319 : f32 to vector<2x128xf32>
    %531 = arith.mulf %530, %529 : vector<2x128xf32>
    %532 = math.tanh %531 : vector<2x128xf32>
    %cst_320 = arith.constant 1.000000e+00 : f32
    %533 = vector.broadcast %cst_320 : f32 to vector<2x128xf32>
    %534 = arith.addf %532, %533 : vector<2x128xf32>
    %cst_321 = arith.constant 5.000000e-01 : f32
    %535 = vector.broadcast %cst_321 : f32 to vector<2x128xf32>
    %536 = arith.mulf %535, %534 : vector<2x128xf32>
    %537 = vector.extract_strided_slice %527 {offsets = [0, 128], sizes = [2, 128], strides = [1, 1]} : vector<2x512xf32> to vector<2x128xf32>
    %cst_322 = arith.constant 5.000000e-01 : f32
    %538 = vector.broadcast %cst_322 : f32 to vector<2x128xf32>
    %539 = arith.mulf %538, %537 : vector<2x128xf32>
    %540 = math.tanh %539 : vector<2x128xf32>
    %cst_323 = arith.constant 1.000000e+00 : f32
    %541 = vector.broadcast %cst_323 : f32 to vector<2x128xf32>
    %542 = arith.addf %540, %541 : vector<2x128xf32>
    %cst_324 = arith.constant 5.000000e-01 : f32
    %543 = vector.broadcast %cst_324 : f32 to vector<2x128xf32>
    %544 = arith.mulf %543, %542 : vector<2x128xf32>
    %545 = vector.extract_strided_slice %527 {offsets = [0, 256], sizes = [2, 128], strides = [1, 1]} : vector<2x512xf32> to vector<2x128xf32>
    %546 = math.tanh %545 : vector<2x128xf32>
    %547 = vector.extract_strided_slice %527 {offsets = [0, 384], sizes = [2, 128], strides = [1, 1]} : vector<2x512xf32> to vector<2x128xf32>
    %cst_325 = arith.constant 5.000000e-01 : f32
    %548 = vector.broadcast %cst_325 : f32 to vector<2x128xf32>
    %549 = arith.mulf %548, %547 : vector<2x128xf32>
    %550 = math.tanh %549 : vector<2x128xf32>
    %cst_326 = arith.constant 1.000000e+00 : f32
    %551 = vector.broadcast %cst_326 : f32 to vector<2x128xf32>
    %552 = arith.addf %550, %551 : vector<2x128xf32>
    %cst_327 = arith.constant 5.000000e-01 : f32
    %553 = vector.broadcast %cst_327 : f32 to vector<2x128xf32>
    %554 = arith.mulf %553, %552 : vector<2x128xf32>
    %555 = arith.mulf %544, %528 : vector<2x128xf32>
    %556 = arith.mulf %536, %546 : vector<2x128xf32>
    %557 = arith.addf %555, %556 : vector<2x128xf32>
    %558 = math.tanh %557 : vector<2x128xf32>
    %559 = arith.mulf %554, %558 : vector<2x128xf32>
    %c1_328 = arith.constant 1 : index
    %c0_329 = arith.constant 0 : index
    %c0_330 = arith.constant 0 : index
    %560 = vector.load %arg2[%c1_328, %c0_329, %c0_330] : memref<8x2x512xf32, #tpu.memory_space<vmem>>, vector<1x2x512xf32>
    %561 = vector.shape_cast %560 : vector<1x2x512xf32> to vector<2x512xf32>
    %562 = arith.addf %561, %524 : vector<2x512xf32>
    %c0_331 = arith.constant 0 : index
    %c0_332 = arith.constant 0 : index
    %563 = vector.load %arg10[%c0_331, %c0_332] : memref<2x128xf32, #tpu.memory_space<vmem>>, vector<2x128xf32>
    %564 = vector.extract_strided_slice %562 {offsets = [0, 0], sizes = [2, 128], strides = [1, 1]} : vector<2x512xf32> to vector<2x128xf32>
    %cst_333 = arith.constant 5.000000e-01 : f32
    %565 = vector.broadcast %cst_333 : f32 to vector<2x128xf32>
    %566 = arith.mulf %565, %564 : vector<2x128xf32>
    %567 = math.tanh %566 : vector<2x128xf32>
    %cst_334 = arith.constant 1.000000e+00 : f32
    %568 = vector.broadcast %cst_334 : f32 to vector<2x128xf32>
    %569 = arith.addf %567, %568 : vector<2x128xf32>
    %cst_335 = arith.constant 5.000000e-01 : f32
    %570 = vector.broadcast %cst_335 : f32 to vector<2x128xf32>
    %571 = arith.mulf %570, %569 : vector<2x128xf32>
    %572 = vector.extract_strided_slice %562 {offsets = [0, 128], sizes = [2, 128], strides = [1, 1]} : vector<2x512xf32> to vector<2x128xf32>
    %cst_336 = arith.constant 5.000000e-01 : f32
    %573 = vector.broadcast %cst_336 : f32 to vector<2x128xf32>
    %574 = arith.mulf %573, %572 : vector<2x128xf32>
    %575 = math.tanh %574 : vector<2x128xf32>
    %cst_337 = arith.constant 1.000000e+00 : f32
    %576 = vector.broadcast %cst_337 : f32 to vector<2x128xf32>
    %577 = arith.addf %575, %576 : vector<2x128xf32>
    %cst_338 = arith.constant 5.000000e-01 : f32
    %578 = vector.broadcast %cst_338 : f32 to vector<2x128xf32>
    %579 = arith.mulf %578, %577 : vector<2x128xf32>
    %580 = vector.extract_strided_slice %562 {offsets = [0, 256], sizes = [2, 128], strides = [1, 1]} : vector<2x512xf32> to vector<2x128xf32>
    %581 = math.tanh %580 : vector<2x128xf32>
    %582 = vector.extract_strided_slice %562 {offsets = [0, 384], sizes = [2, 128], strides = [1, 1]} : vector<2x512xf32> to vector<2x128xf32>
    %cst_339 = arith.constant 5.000000e-01 : f32
    %583 = vector.broadcast %cst_339 : f32 to vector<2x128xf32>
    %584 = arith.mulf %583, %582 : vector<2x128xf32>
    %585 = math.tanh %584 : vector<2x128xf32>
    %cst_340 = arith.constant 1.000000e+00 : f32
    %586 = vector.broadcast %cst_340 : f32 to vector<2x128xf32>
    %587 = arith.addf %585, %586 : vector<2x128xf32>
    %cst_341 = arith.constant 5.000000e-01 : f32
    %588 = vector.broadcast %cst_341 : f32 to vector<2x128xf32>
    %589 = arith.mulf %588, %587 : vector<2x128xf32>
    %590 = arith.mulf %579, %563 : vector<2x128xf32>
    %591 = arith.mulf %571, %581 : vector<2x128xf32>
    %592 = arith.addf %590, %591 : vector<2x128xf32>
    %593 = math.tanh %592 : vector<2x128xf32>
    %594 = arith.mulf %589, %593 : vector<2x128xf32>
    %c0_342 = arith.constant 0 : index
    %c0_343 = arith.constant 0 : index
    %595 = vector.load %arg7[%c0_342, %c0_343] : memref<2x128xf32, #tpu.memory_space<vmem>>, vector<2x128xf32>
    tpu.vector_store %arg7[%c0_342, %c0_343], %559 {strides = array<i32>} : memref<2x128xf32, #tpu.memory_space<vmem>>, vector<2x128xf32>,
    %c0_344 = arith.constant 0 : index
    %c0_345 = arith.constant 0 : index
    %596 = vector.load %arg8[%c0_344, %c0_345] : memref<2x128xf32, #tpu.memory_space<vmem>>, vector<2x128xf32>
    tpu.vector_store %arg8[%c0_344, %c0_345], %557 {strides = array<i32>} : memref<2x128xf32, #tpu.memory_space<vmem>>, vector<2x128xf32>,
    %c0_346 = arith.constant 0 : index
    %c0_347 = arith.constant 0 : index
    %597 = vector.load %arg9[%c0_346, %c0_347] : memref<2x128xf32, #tpu.memory_space<vmem>>, vector<2x128xf32>
    tpu.vector_store %arg9[%c0_346, %c0_347], %594 {strides = array<i32>} : memref<2x128xf32, #tpu.memory_space<vmem>>, vector<2x128xf32>,
    %c0_348 = arith.constant 0 : index
    %c0_349 = arith.constant 0 : index
    %598 = vector.load %arg10[%c0_348, %c0_349] : memref<2x128xf32, #tpu.memory_space<vmem>>, vector<2x128xf32>
    tpu.vector_store %arg10[%c0_348, %c0_349], %592 {strides = array<i32>} : memref<2x128xf32, #tpu.memory_space<vmem>>, vector<2x128xf32>,
    %c6_350 = arith.constant 6 : index
    %c0_351 = arith.constant 0 : index
    %c0_352 = arith.constant 0 : index
    %599 = vector.load %arg5[%c6_350, %c0_351, %c0_352] : memref<8x2x128xf32, #tpu.memory_space<vmem>>, vector<1x2x128xf32>
    %600 = vector.shape_cast %599 : vector<1x2x128xf32> to vector<2x128xf32>
    %601 = vector.shape_cast %559 : vector<2x128xf32> to vector<1x2x128xf32>
    tpu.vector_store %arg5[%c6_350, %c0_351, %c0_352], %601 {strides = array<i32>} : memref<8x2x128xf32, #tpu.memory_space<vmem>>, vector<1x2x128xf32>,
    %c1_353 = arith.constant 1 : index
    %c0_354 = arith.constant 0 : index
    %c0_355 = arith.constant 0 : index
    %602 = vector.load %arg6[%c1_353, %c0_354, %c0_355] : memref<8x2x128xf32, #tpu.memory_space<vmem>>, vector<1x2x128xf32>
    %603 = vector.shape_cast %602 : vector<1x2x128xf32> to vector<2x128xf32>
    %604 = vector.shape_cast %594 : vector<2x128xf32> to vector<1x2x128xf32>
    tpu.vector_store %arg6[%c1_353, %c0_354, %c0_355], %604 {strides = array<i32>} : memref<8x2x128xf32, #tpu.memory_space<vmem>>, vector<1x2x128xf32>,
    %c0_356 = arith.constant 0 : index
    %c0_357 = arith.constant 0 : index
    %605 = vector.load %arg7[%c0_356, %c0_357] : memref<2x128xf32, #tpu.memory_space<vmem>>, vector<2x128xf32>
    %c0_358 = arith.constant 0 : index
    %c0_359 = arith.constant 0 : index
    %606 = vector.load %arg3[%c0_358, %c0_359] : memref<128x512xf32, #tpu.memory_space<vmem>>, vector<128x512xf32>
    %cst_360 = arith.constant dense<0.000000e+00> : vector<2x512xf32>
    %607 = tpu.matmul %605, %606, %cst_360 {dimension_numbers = #tpu.dot_dimension_numbers<[1], [0], [0], [1], [0, 0, 1, 1], [], []>} : vector<2x128xf32>, vector<128x512xf32>, vector<2x512xf32> -> vector<2x512xf32>
    %c0_361 = arith.constant 0 : index
    %c0_362 = arith.constant 0 : index
    %608 = vector.load %arg9[%c0_361, %c0_362] : memref<2x128xf32, #tpu.memory_space<vmem>>, vector<2x128xf32>
    %c0_363 = arith.constant 0 : index
    %c0_364 = arith.constant 0 : index
    %609 = vector.load %arg4[%c0_363, %c0_364] : memref<128x512xf32, #tpu.memory_space<vmem>>, vector<128x512xf32>
    %cst_365 = arith.constant dense<0.000000e+00> : vector<2x512xf32>
    %610 = tpu.matmul %608, %609, %cst_365 {dimension_numbers = #tpu.dot_dimension_numbers<[1], [0], [0], [1], [0, 0, 1, 1], [], []>} : vector<2x128xf32>, vector<128x512xf32>, vector<2x512xf32> -> vector<2x512xf32>
    %c7_366 = arith.constant 7 : index
    %c0_367 = arith.constant 0 : index
    %c0_368 = arith.constant 0 : index
    %611 = vector.load %arg1[%c7_366, %c0_367, %c0_368] : memref<8x2x512xf32, #tpu.memory_space<vmem>>, vector<1x2x512xf32>
    %612 = vector.shape_cast %611 : vector<1x2x512xf32> to vector<2x512xf32>
    %613 = arith.addf %612, %607 : vector<2x512xf32>
    %c0_369 = arith.constant 0 : index
    %c0_370 = arith.constant 0 : index
    %614 = vector.load %arg8[%c0_369, %c0_370] : memref<2x128xf32, #tpu.memory_space<vmem>>, vector<2x128xf32>
    %615 = vector.extract_strided_slice %613 {offsets = [0, 0], sizes = [2, 128], strides = [1, 1]} : vector<2x512xf32> to vector<2x128xf32>
    %cst_371 = arith.constant 5.000000e-01 : f32
    %616 = vector.broadcast %cst_371 : f32 to vector<2x128xf32>
    %617 = arith.mulf %616, %615 : vector<2x128xf32>
    %618 = math.tanh %617 : vector<2x128xf32>
    %cst_372 = arith.constant 1.000000e+00 : f32
    %619 = vector.broadcast %cst_372 : f32 to vector<2x128xf32>
    %620 = arith.addf %618, %619 : vector<2x128xf32>
    %cst_373 = arith.constant 5.000000e-01 : f32
    %621 = vector.broadcast %cst_373 : f32 to vector<2x128xf32>
    %622 = arith.mulf %621, %620 : vector<2x128xf32>
    %623 = vector.extract_strided_slice %613 {offsets = [0, 128], sizes = [2, 128], strides = [1, 1]} : vector<2x512xf32> to vector<2x128xf32>
    %cst_374 = arith.constant 5.000000e-01 : f32
    %624 = vector.broadcast %cst_374 : f32 to vector<2x128xf32>
    %625 = arith.mulf %624, %623 : vector<2x128xf32>
    %626 = math.tanh %625 : vector<2x128xf32>
    %cst_375 = arith.constant 1.000000e+00 : f32
    %627 = vector.broadcast %cst_375 : f32 to vector<2x128xf32>
    %628 = arith.addf %626, %627 : vector<2x128xf32>
    %cst_376 = arith.constant 5.000000e-01 : f32
    %629 = vector.broadcast %cst_376 : f32 to vector<2x128xf32>
    %630 = arith.mulf %629, %628 : vector<2x128xf32>
    %631 = vector.extract_strided_slice %613 {offsets = [0, 256], sizes = [2, 128], strides = [1, 1]} : vector<2x512xf32> to vector<2x128xf32>
    %632 = math.tanh %631 : vector<2x128xf32>
    %633 = vector.extract_strided_slice %613 {offsets = [0, 384], sizes = [2, 128], strides = [1, 1]} : vector<2x512xf32> to vector<2x128xf32>
    %cst_377 = arith.constant 5.000000e-01 : f32
    %634 = vector.broadcast %cst_377 : f32 to vector<2x128xf32>
    %635 = arith.mulf %634, %633 : vector<2x128xf32>
    %636 = math.tanh %635 : vector<2x128xf32>
    %cst_378 = arith.constant 1.000000e+00 : f32
    %637 = vector.broadcast %cst_378 : f32 to vector<2x128xf32>
    %638 = arith.addf %636, %637 : vector<2x128xf32>
    %cst_379 = arith.constant 5.000000e-01 : f32
    %639 = vector.broadcast %cst_379 : f32 to vector<2x128xf32>
    %640 = arith.mulf %639, %638 : vector<2x128xf32>
    %641 = arith.mulf %630, %614 : vector<2x128xf32>
    %642 = arith.mulf %622, %632 : vector<2x128xf32>
    %643 = arith.addf %641, %642 : vector<2x128xf32>
    %644 = math.tanh %643 : vector<2x128xf32>
    %645 = arith.mulf %640, %644 : vector<2x128xf32>
    %c0_380 = arith.constant 0 : index
    %c0_381 = arith.constant 0 : index
    %c0_382 = arith.constant 0 : index
    %646 = vector.load %arg2[%c0_380, %c0_381, %c0_382] : memref<8x2x512xf32, #tpu.memory_space<vmem>>, vector<1x2x512xf32>
    %647 = vector.shape_cast %646 : vector<1x2x512xf32> to vector<2x512xf32>
    %648 = arith.addf %647, %610 : vector<2x512xf32>
    %c0_383 = arith.constant 0 : index
    %c0_384 = arith.constant 0 : index
    %649 = vector.load %arg10[%c0_383, %c0_384] : memref<2x128xf32, #tpu.memory_space<vmem>>, vector<2x128xf32>
    %650 = vector.extract_strided_slice %648 {offsets = [0, 0], sizes = [2, 128], strides = [1, 1]} : vector<2x512xf32> to vector<2x128xf32>
    %cst_385 = arith.constant 5.000000e-01 : f32
    %651 = vector.broadcast %cst_385 : f32 to vector<2x128xf32>
    %652 = arith.mulf %651, %650 : vector<2x128xf32>
    %653 = math.tanh %652 : vector<2x128xf32>
    %cst_386 = arith.constant 1.000000e+00 : f32
    %654 = vector.broadcast %cst_386 : f32 to vector<2x128xf32>
    %655 = arith.addf %653, %654 : vector<2x128xf32>
    %cst_387 = arith.constant 5.000000e-01 : f32
    %656 = vector.broadcast %cst_387 : f32 to vector<2x128xf32>
    %657 = arith.mulf %656, %655 : vector<2x128xf32>
    %658 = vector.extract_strided_slice %648 {offsets = [0, 128], sizes = [2, 128], strides = [1, 1]} : vector<2x512xf32> to vector<2x128xf32>
    %cst_388 = arith.constant 5.000000e-01 : f32
    %659 = vector.broadcast %cst_388 : f32 to vector<2x128xf32>
    %660 = arith.mulf %659, %658 : vector<2x128xf32>
    %661 = math.tanh %660 : vector<2x128xf32>
    %cst_389 = arith.constant 1.000000e+00 : f32
    %662 = vector.broadcast %cst_389 : f32 to vector<2x128xf32>
    %663 = arith.addf %661, %662 : vector<2x128xf32>
    %cst_390 = arith.constant 5.000000e-01 : f32
    %664 = vector.broadcast %cst_390 : f32 to vector<2x128xf32>
    %665 = arith.mulf %664, %663 : vector<2x128xf32>
    %666 = vector.extract_strided_slice %648 {offsets = [0, 256], sizes = [2, 128], strides = [1, 1]} : vector<2x512xf32> to vector<2x128xf32>
    %667 = math.tanh %666 : vector<2x128xf32>
    %668 = vector.extract_strided_slice %648 {offsets = [0, 384], sizes = [2, 128], strides = [1, 1]} : vector<2x512xf32> to vector<2x128xf32>
    %cst_391 = arith.constant 5.000000e-01 : f32
    %669 = vector.broadcast %cst_391 : f32 to vector<2x128xf32>
    %670 = arith.mulf %669, %668 : vector<2x128xf32>
    %671 = math.tanh %670 : vector<2x128xf32>
    %cst_392 = arith.constant 1.000000e+00 : f32
    %672 = vector.broadcast %cst_392 : f32 to vector<2x128xf32>
    %673 = arith.addf %671, %672 : vector<2x128xf32>
    %cst_393 = arith.constant 5.000000e-01 : f32
    %674 = vector.broadcast %cst_393 : f32 to vector<2x128xf32>
    %675 = arith.mulf %674, %673 : vector<2x128xf32>
    %676 = arith.mulf %665, %649 : vector<2x128xf32>
    %677 = arith.mulf %657, %667 : vector<2x128xf32>
    %678 = arith.addf %676, %677 : vector<2x128xf32>
    %679 = math.tanh %678 : vector<2x128xf32>
    %680 = arith.mulf %675, %679 : vector<2x128xf32>
    %c0_394 = arith.constant 0 : index
    %c0_395 = arith.constant 0 : index
    %681 = vector.load %arg7[%c0_394, %c0_395] : memref<2x128xf32, #tpu.memory_space<vmem>>, vector<2x128xf32>
    tpu.vector_store %arg7[%c0_394, %c0_395], %645 {strides = array<i32>} : memref<2x128xf32, #tpu.memory_space<vmem>>, vector<2x128xf32>,
    %c0_396 = arith.constant 0 : index
    %c0_397 = arith.constant 0 : index
    %682 = vector.load %arg8[%c0_396, %c0_397] : memref<2x128xf32, #tpu.memory_space<vmem>>, vector<2x128xf32>
    tpu.vector_store %arg8[%c0_396, %c0_397], %643 {strides = array<i32>} : memref<2x128xf32, #tpu.memory_space<vmem>>, vector<2x128xf32>,
    %c0_398 = arith.constant 0 : index
    %c0_399 = arith.constant 0 : index
    %683 = vector.load %arg9[%c0_398, %c0_399] : memref<2x128xf32, #tpu.memory_space<vmem>>, vector<2x128xf32>
    tpu.vector_store %arg9[%c0_398, %c0_399], %680 {strides = array<i32>} : memref<2x128xf32, #tpu.memory_space<vmem>>, vector<2x128xf32>,
    %c0_400 = arith.constant 0 : index
    %c0_401 = arith.constant 0 : index
    %684 = vector.load %arg10[%c0_400, %c0_401] : memref<2x128xf32, #tpu.memory_space<vmem>>, vector<2x128xf32>
    tpu.vector_store %arg10[%c0_400, %c0_401], %678 {strides = array<i32>} : memref<2x128xf32, #tpu.memory_space<vmem>>, vector<2x128xf32>,
    %c7_402 = arith.constant 7 : index
    %c0_403 = arith.constant 0 : index
    %c0_404 = arith.constant 0 : index
    %685 = vector.load %arg5[%c7_402, %c0_403, %c0_404] : memref<8x2x128xf32, #tpu.memory_space<vmem>>, vector<1x2x128xf32>
    %686 = vector.shape_cast %685 : vector<1x2x128xf32> to vector<2x128xf32>
    %687 = vector.shape_cast %645 : vector<2x128xf32> to vector<1x2x128xf32>
    tpu.vector_store %arg5[%c7_402, %c0_403, %c0_404], %687 {strides = array<i32>} : memref<8x2x128xf32, #tpu.memory_space<vmem>>, vector<1x2x128xf32>,
    %c0_405 = arith.constant 0 : index
    %c0_406 = arith.constant 0 : index
    %c0_407 = arith.constant 0 : index
    %688 = vector.load %arg6[%c0_405, %c0_406, %c0_407] : memref<8x2x128xf32, #tpu.memory_space<vmem>>, vector<1x2x128xf32>
    %689 = vector.shape_cast %688 : vector<1x2x128xf32> to vector<2x128xf32>
    %690 = vector.shape_cast %680 : vector<2x128xf32> to vector<1x2x128xf32>
    tpu.vector_store %arg6[%c0_405, %c0_406, %c0_407], %690 {strides = array<i32>} : memref<8x2x128xf32, #tpu.memory_space<vmem>>, vector<1x2x128xf32>,
    return
  }
  func.func @transform_0(%arg0: i32) -> (i32, i32, i32) {
    %c0_i32 = arith.constant 0 : i32
    %c0_i32_0 = arith.constant 0 : i32
    %c0_i32_1 = arith.constant 0 : i32
    return %arg0, %c0_i32, %c0_i32_0 : i32, i32, i32
  }
  func.func @transform_1(%arg0: i32) -> (i32, i32, i32) {
    %c0_i32 = arith.constant 0 : i32
    %0 = arith.subi %c0_i32, %arg0 : i32
    %c0_i32_0 = arith.constant 0 : i32
    %c0_i32_1 = arith.constant 0 : i32
    %c0_i32_2 = arith.constant 0 : i32
    return %0, %c0_i32_0, %c0_i32_1 : i32, i32, i32
  }
  func.func @transform_2(%arg0: i32) -> (i32, i32) {
    %c0_i32 = arith.constant 0 : i32
    %c0_i32_0 = arith.constant 0 : i32
    %c0_i32_1 = arith.constant 0 : i32
    return %c0_i32, %c0_i32_0 : i32, i32
  }
  func.func @transform_3(%arg0: i32) -> (i32, i32) {
    %c0_i32 = arith.constant 0 : i32
    %c0_i32_0 = arith.constant 0 : i32
    %c0_i32_1 = arith.constant 0 : i32
    return %c0_i32, %c0_i32_0 : i32, i32
  }
  func.func @transform_4(%arg0: i32) -> (i32, i32, i32) {
    %c0_i32 = arith.constant 0 : i32
    %c0_i32_0 = arith.constant 0 : i32
    %c0_i32_1 = arith.constant 0 : i32
    return %arg0, %c0_i32, %c0_i32_0 : i32, i32, i32
  }
  func.func @transform_5(%arg0: i32) -> (i32, i32, i32) {
    %c0_i32 = arith.constant 0 : i32
    %0 = arith.subi %c0_i32, %arg0 : i32
    %c0_i32_0 = arith.constant 0 : i32
    %c0_i32_1 = arith.constant 0 : i32
    %c0_i32_2 = arith.constant 0 : i32
    return %0, %c0_i32_0, %c0_i32_1 : i32, i32, i32
  }
}

module attributes {stable_mosaic.version = 11 : i64} {
  func.func @fc_logsoftmax_kernel(%arg0: i32, %arg1: memref<16x128xf32, #tpu.memory_space<vmem>>, %arg2: memref<16x128xf32, #tpu.memory_space<vmem>>, %arg3: memref<128x128xf32, #tpu.memory_space<vmem>>, %arg4: memref<128x128xf32, #tpu.memory_space<vmem>>, %arg5: memref<1x128xf32, #tpu.memory_space<vmem>>, %arg6: memref<16x128xf32, #tpu.memory_space<vmem>>) attributes {dimension_semantics = [#tpu.dimension_semantics<parallel>], iteration_bounds = array<i64: 1>, scalar_prefetch = 0 : i64, scratch_operands = 0 : i64, tpu.core_type = #tpu.core_type<tc>, window_params = [{transform_indices = @transform_0, window_bounds = array<i64: 16, 128>}, {transform_indices = @transform_1, window_bounds = array<i64: 16, 128>}, {pipeline_mode = #tpu.pipeline_mode<synchronous>, transform_indices = @transform_2, window_bounds = array<i64: 128, 128>}, {pipeline_mode = #tpu.pipeline_mode<synchronous>, transform_indices = @transform_3, window_bounds = array<i64: 128, 128>}, {pipeline_mode = #tpu.pipeline_mode<synchronous>, transform_indices = @transform_4, window_bounds = array<i64: 1, 128>}, {transform_indices = @transform_5, window_bounds = array<i64: 16, 128>}]} {
    %c0 = arith.constant 0 : index
    %c0_0 = arith.constant 0 : index
    %0 = vector.load %arg1[%c0, %c0_0] : memref<16x128xf32, #tpu.memory_space<vmem>>, vector<16x128xf32>
    %c0_1 = arith.constant 0 : index
    %c0_2 = arith.constant 0 : index
    %1 = vector.load %arg3[%c0_1, %c0_2] : memref<128x128xf32, #tpu.memory_space<vmem>>, vector<128x128xf32>
    %cst = arith.constant dense<0.000000e+00> : vector<16x128xf32>
    %2 = tpu.matmul %0, %1, %cst {dimension_numbers = #tpu.dot_dimension_numbers<[1], [0], [0], [1], [0, 0, 1, 1], [], []>} : vector<16x128xf32>, vector<128x128xf32>, vector<16x128xf32> -> vector<16x128xf32>
    %c0_3 = arith.constant 0 : index
    %c0_4 = arith.constant 0 : index
    %3 = vector.load %arg2[%c0_3, %c0_4] : memref<16x128xf32, #tpu.memory_space<vmem>>, vector<16x128xf32>
    %c0_5 = arith.constant 0 : index
    %c0_6 = arith.constant 0 : index
    %4 = vector.load %arg4[%c0_5, %c0_6] : memref<128x128xf32, #tpu.memory_space<vmem>>, vector<128x128xf32>
    %cst_7 = arith.constant dense<0.000000e+00> : vector<16x128xf32>
    %5 = tpu.matmul %3, %4, %cst_7 {dimension_numbers = #tpu.dot_dimension_numbers<[1], [0], [0], [1], [0, 0, 1, 1], [], []>} : vector<16x128xf32>, vector<128x128xf32>, vector<16x128xf32> -> vector<16x128xf32>
    %6 = arith.addf %2, %5 : vector<16x128xf32>
    %c0_8 = arith.constant 0 : index
    %c0_9 = arith.constant 0 : index
    %7 = vector.load %arg5[%c0_8, %c0_9] : memref<1x128xf32, #tpu.memory_space<vmem>>, vector<1x128xf32>
    %8 = vector.broadcast %7 : vector<1x128xf32> to vector<16x128xf32>
    %9 = arith.addf %6, %8 : vector<16x128xf32>
    %cst_10 = arith.constant dense<0xFF800000> : vector<16xf32>
    %10 = vector.multi_reduction <maximumf>, %9, %cst_10 [1] : vector<16x128xf32> to vector<16xf32>
    %11 = vector.shape_cast %10 : vector<16xf32> to vector<16x1xf32>
    %12 = vector.broadcast %11 : vector<16x1xf32> to vector<16x128xf32>
    %13 = arith.subf %9, %12 : vector<16x128xf32>
    %14 = math.exp %13 : vector<16x128xf32>
    %cst_11 = arith.constant dense<0.000000e+00> : vector<16xf32>
    %15 = vector.multi_reduction <add>, %14, %cst_11 [1] : vector<16x128xf32> to vector<16xf32>
    %16 = vector.shape_cast %15 : vector<16xf32> to vector<16x1xf32>
    %17 = math.log %16 : vector<16x1xf32>
    %18 = arith.addf %11, %17 : vector<16x1xf32>
    %19 = vector.broadcast %18 : vector<16x1xf32> to vector<16x128xf32>
    %20 = arith.subf %9, %19 : vector<16x128xf32>
    %c0_12 = arith.constant 0 : index
    %c0_13 = arith.constant 0 : index
    %21 = vector.load %arg6[%c0_12, %c0_13] : memref<16x128xf32, #tpu.memory_space<vmem>>, vector<16x128xf32>
    tpu.vector_store %arg6[%c0_12, %c0_13], %20 {strides = array<i32>} : memref<16x128xf32, #tpu.memory_space<vmem>>, vector<16x128xf32>,
    return
  }
  func.func @transform_0(%arg0: i32) -> (i32, i32) {
    %c0_i32 = arith.constant 0 : i32
    %c0_i32_0 = arith.constant 0 : i32
    return %arg0, %c0_i32 : i32, i32
  }
  func.func @transform_1(%arg0: i32) -> (i32, i32) {
    %c0_i32 = arith.constant 0 : i32
    %c0_i32_0 = arith.constant 0 : i32
    return %arg0, %c0_i32 : i32, i32
  }
  func.func @transform_2(%arg0: i32) -> (i32, i32) {
    %c0_i32 = arith.constant 0 : i32
    %c0_i32_0 = arith.constant 0 : i32
    %c0_i32_1 = arith.constant 0 : i32
    return %c0_i32, %c0_i32_0 : i32, i32
  }
  func.func @transform_3(%arg0: i32) -> (i32, i32) {
    %c0_i32 = arith.constant 0 : i32
    %c0_i32_0 = arith.constant 0 : i32
    %c0_i32_1 = arith.constant 0 : i32
    return %c0_i32, %c0_i32_0 : i32, i32
  }
  func.func @transform_4(%arg0: i32) -> (i32, i32) {
    %c0_i32 = arith.constant 0 : i32
    %c0_i32_0 = arith.constant 0 : i32
    %c0_i32_1 = arith.constant 0 : i32
    return %c0_i32, %c0_i32_0 : i32, i32
  }
  func.func @transform_5(%arg0: i32) -> (i32, i32) {
    %c0_i32 = arith.constant 0 : i32
    %c0_i32_0 = arith.constant 0 : i32
    return %arg0, %c0_i32 : i32, i32
  }
}

</mosaic_0001>

<llo_original>
// kernel: ocr_forward.3
$region0: #{ocr_forward.3}
  #allocation0 [shape = 'u32[]', space=smem, size = 0x4, offset = 0x4, fixed_abs, tag = 'smem constant byte address 0x4 - core index']
  #allocation1 [shape = 'u32[144,128]{1,0:T(1,128)}', space=vmem, size = 0x12000, scoped, tag = 'internal scratch']
  %s0 = inlined_call_operand.vmem [shape: f32[16,102], index: 0, kind: input, shape index: {}]
  %s1 = inlined_call_operand.vmem [shape: f32[102,1024], index: 1, kind: input, shape index: {}]
  %s2 = inlined_call_operand.vmem [shape: f32[102,1024], index: 2, kind: input, shape index: {}]
  %s3 = inlined_call_operand.vmem [shape: f32[1,1024], index: 3, kind: input, shape index: {}]
  %s4 = inlined_call_operand.vmem [shape: f32[1024,1024], index: 4, kind: input, shape index: {}]
  %s5 = inlined_call_operand.vmem [shape: f32[1,1024], index: 5, kind: input, shape index: {}]
  %s6 = inlined_call_operand.vmem [shape: f32[16,512], index: 6, kind: output, shape index: {0}]
  %s7 = inlined_call_operand.vmem [shape: f32[16,512], index: 7, kind: output, shape index: {1}]
  %8 = xla_tuple %s6, %s7
  %s9 = sld [smem:[#allocation0]]
  $region42: #{ocr_forward.3} parent=0
    _
  %s11 = ssub.s32 1, %s9
  %s12 = scalar_select 0, %s11, %s9
  // Predicated region
  $region2: #{ocr_forward.3} parent=0 // pred_check
    _
  $region3: #{ocr_forward.3} parent=0 // pred_check_branch
    %14 = sbr.rel (0) target = $region5
  $region4: #{ocr_forward.3} parent=0 // pred_region
    _
  $region5: #{ocr_forward.3} parent=0 // pred_fallthru
    _
  // Predicated region
  $region6: #{ocr_forward.3} parent=0 // pred_check
    _
  $region7: #{ocr_forward.3} parent=0 // pred_check_branch
    %16 = sbr.rel (0) target = $region9
  $region8: #{ocr_forward.3} parent=0 // pred_region
    _
  $region9: #{ocr_forward.3} parent=0 // pred_fallthru
    _
  // Predicated region
  $region10: #{ocr_forward.3} parent=0 // pred_check
    _
  $region11: #{ocr_forward.3} parent=0 // pred_check_branch
    %18 = sbr.rel (0) target = $region13
  $region12: #{ocr_forward.3} parent=0 // pred_region
    _
  $region13: #{ocr_forward.3} parent=0 // pred_fallthru
    _
  // Predicated region
  $region14: #{ocr_forward.3} parent=0 // pred_check
    _
  $region15: #{ocr_forward.3} parent=0 // pred_check_branch
    %20 = sbr.rel (0) target = $region17
  $region16: #{ocr_forward.3} parent=0 // pred_region
    _
  $region17: #{ocr_forward.3} parent=0 // pred_fallthru
    _
  // Predicated region
  $region18: #{ocr_forward.3} parent=0 // pred_check
    _
  $region19: #{ocr_forward.3} parent=0 // pred_check_branch
    %22 = sbr.rel (0) target = $region21
  $region20: #{ocr_forward.3} parent=0 // pred_region
    _
  $region21: #{ocr_forward.3} parent=0 // pred_fallthru
    _
  // Predicated region
  $region22: #{ocr_forward.3} parent=0 // pred_check
    _
  $region23: #{ocr_forward.3} parent=0 // pred_check_branch
    %24 = sbr.rel (0) target = $region25
  $region24: #{ocr_forward.3} parent=0 // pred_region
    _
  $region25: #{ocr_forward.3} parent=0 // pred_fallthru
    _
  %v25 = vld [vmem:[%s0] sm:$0xff]
  %v26 = vld [vmem:[%s0 + $0x8] sm:$0xff]
  %v27 = vld [vmem:[%s1] sm:$0xff]
  %v28 = vld [vmem:[%s1 + $0x8] sm:$0xff]
  %v29 = vld [vmem:[%s1 + $0x10] sm:$0xff]
  %v30 = vld [vmem:[%s1 + $0x18] sm:$0xff]
  %v31 = vld [vmem:[%s1 + $0x20] sm:$0xff]
  %v32 = vld [vmem:[%s1 + $0x28] sm:$0xff]
  %v33 = vld [vmem:[%s1 + $0x30] sm:$0xff]
  %v34 = vld [vmem:[%s1 + $0x38] sm:$0xff]
  %v35 = vld [vmem:[%s1 + $0x40] sm:$0xff]
  %v36 = vld [vmem:[%s1 + $0x48] sm:$0xff]
  %v37 = vld [vmem:[%s1 + $0x50] sm:$0xff]
  %v38 = vld [vmem:[%s1 + $0x58] sm:$0xff]
  %v39 = vld [vmem:[%s1 + $0x60] sm:$0xff]
  %v40 = vld [vmem:[%s1 + $0x68] sm:$0xff]
  %v41 = vld [vmem:[%s1 + $0x70] sm:$0xff]
  %v42 = vld [vmem:[%s1 + $0x78] sm:$0xff]
  %v43 = vld [vmem:[%s1 + $0x80] sm:$0xff]
  %v44 = vld [vmem:[%s1 + $0x88] sm:$0xff]
  %v45 = vld [vmem:[%s1 + $0x90] sm:$0xff]
  %v46 = vld [vmem:[%s1 + $0x98] sm:$0xff]
  %v47 = vld [vmem:[%s1 + $0xa0] sm:$0xff]
  %v48 = vld [vmem:[%s1 + $0xa8] sm:$0xff]
  %v49 = vld [vmem:[%s1 + $0xb0] sm:$0xff]
  %v50 = vld [vmem:[%s1 + $0xb8] sm:$0xff]
  %v51 = vld [vmem:[%s1 + $0xc0] sm:$0xff]
  %v52 = vld [vmem:[%s1 + $0xc8] sm:$0xff]
  %v53 = vld [vmem:[%s1 + $0xd0] sm:$0xff]
  %v54 = vld [vmem:[%s1 + $0xd8] sm:$0xff]
  %v55 = vld [vmem:[%s1 + $0xe0] sm:$0xff]
  %v56 = vld [vmem:[%s1 + $0xe8] sm:$0xff]
  %v57 = vld [vmem:[%s1 + $0xf0] sm:$0xff]
  %v58 = vld [vmem:[%s1 + $0xf8] sm:$0xff]
  %v59 = vld [vmem:[%s1 + $0x100] sm:$0xff]
  %v60 = vld [vmem:[%s1 + $0x108] sm:$0xff]
  %v61 = vld [vmem:[%s1 + $0x110] sm:$0xff]
  %v62 = vld [vmem:[%s1 + $0x118] sm:$0xff]
  %v63 = vld [vmem:[%s1 + $0x120] sm:$0xff]
  %v64 = vld [vmem:[%s1 + $0x128] sm:$0xff]
  %v65 = vld [vmem:[%s1 + $0x130] sm:$0xff]
  %v66 = vld [vmem:[%s1 + $0x138] sm:$0xff]
  %v67 = vld [vmem:[%s1 + $0x140] sm:$0xff]
  %v68 = vld [vmem:[%s1 + $0x148] sm:$0xff]
  %v69 = vld [vmem:[%s1 + $0x150] sm:$0xff]
  %v70 = vld [vmem:[%s1 + $0x158] sm:$0xff]
  %v71 = vld [vmem:[%s1 + $0x160] sm:$0xff]
  %v72 = vld [vmem:[%s1 + $0x168] sm:$0xff]
  %v73 = vld [vmem:[%s1 + $0x170] sm:$0xff]
  %v74 = vld [vmem:[%s1 + $0x178] sm:$0xff]
  %v75 = vld [vmem:[%s1 + $0x180] sm:$0xff]
  %v76 = vld [vmem:[%s1 + $0x188] sm:$0xff]
  %v77 = vld [vmem:[%s1 + $0x190] sm:$0xff]
  %v78 = vld [vmem:[%s1 + $0x198] sm:$0xff]
  %v79 = vld [vmem:[%s1 + $0x1a0] sm:$0xff]
  %v80 = vld [vmem:[%s1 + $0x1a8] sm:$0xff]
  %v81 = vld [vmem:[%s1 + $0x1b0] sm:$0xff]
  %v82 = vld [vmem:[%s1 + $0x1b8] sm:$0xff]
  %v83 = vld [vmem:[%s1 + $0x1c0] sm:$0xff]
  %v84 = vld [vmem:[%s1 + $0x1c8] sm:$0xff]
  %v85 = vld [vmem:[%s1 + $0x1d0] sm:$0xff]
  %v86 = vld [vmem:[%s1 + $0x1d8] sm:$0xff]
  %v87 = vld [vmem:[%s1 + $0x1e0] sm:$0xff]
  %v88 = vld [vmem:[%s1 + $0x1e8] sm:$0xff]
  %v89 = vld [vmem:[%s1 + $0x1f0] sm:$0xff]
  %v90 = vld [vmem:[%s1 + $0x1f8] sm:$0xff]
  %v91 = vld [vmem:[%s1 + $0x200] sm:$0xff]
  %v92 = vld [vmem:[%s1 + $0x208] sm:$0xff]
  %v93 = vld [vmem:[%s1 + $0x210] sm:$0xff]
  %v94 = vld [vmem:[%s1 + $0x218] sm:$0xff]
  %v95 = vld [vmem:[%s1 + $0x220] sm:$0xff]
  %v96 = vld [vmem:[%s1 + $0x228] sm:$0xff]
  %v97 = vld [vmem:[%s1 + $0x230] sm:$0xff]
  %v98 = vld [vmem:[%s1 + $0x238] sm:$0xff]
  %v99 = vld [vmem:[%s1 + $0x240] sm:$0xff]
  %v100 = vld [vmem:[%s1 + $0x248] sm:$0xff]
  %v101 = vld [vmem:[%s1 + $0x250] sm:$0xff]
  %v102 = vld [vmem:[%s1 + $0x258] sm:$0xff]
  %v103 = vld [vmem:[%s1 + $0x260] sm:$0xff]
  %v104 = vld [vmem:[%s1 + $0x268] sm:$0xff]
  %v105 = vld [vmem:[%s1 + $0x270] sm:$0xff]
  %v106 = vld [vmem:[%s1 + $0x278] sm:$0xff]
  %v107 = vld [vmem:[%s1 + $0x280] sm:$0xff]
  %v108 = vld [vmem:[%s1 + $0x288] sm:$0xff]
  %v109 = vld [vmem:[%s1 + $0x290] sm:$0xff]
  %v110 = vld [vmem:[%s1 + $0x298] sm:$0xff]
  %v111 = vld [vmem:[%s1 + $0x2a0] sm:$0xff]
  %v112 = vld [vmem:[%s1 + $0x2a8] sm:$0xff]
  %v113 = vld [vmem:[%s1 + $0x2b0] sm:$0xff]
  %v114 = vld [vmem:[%s1 + $0x2b8] sm:$0xff]
  %v115 = vld [vmem:[%s1 + $0x2c0] sm:$0xff]
  %v116 = vld [vmem:[%s1 + $0x2c8] sm:$0xff]
  %v117 = vld [vmem:[%s1 + $0x2d0] sm:$0xff]
  %v118 = vld [vmem:[%s1 + $0x2d8] sm:$0xff]
  %v119 = vld [vmem:[%s1 + $0x2e0] sm:$0xff]
  %v120 = vld [vmem:[%s1 + $0x2e8] sm:$0xff]
  %v121 = vld [vmem:[%s1 + $0x2f0] sm:$0xff]
  %v122 = vld [vmem:[%s1 + $0x2f8] sm:$0xff]
  %v123 = vld [vmem:[%s1 + $0x300] sm:$0x3f]
  %v124 = vld [vmem:[%s1 + $0x308] sm:$0x3f]
  %v125 = vld [vmem:[%s1 + $0x310] sm:$0x3f]
  %v126 = vld [vmem:[%s1 + $0x318] sm:$0x3f]
  %v127 = vld [vmem:[%s1 + $0x320] sm:$0x3f]
  %v128 = vld [vmem:[%s1 + $0x328] sm:$0x3f]
  %v129 = vld [vmem:[%s1 + $0x330] sm:$0x3f]
  %v130 = vld [vmem:[%s1 + $0x338] sm:$0x3f]
  %v131 = vld [vmem:[%s3] sm:$0xff]
  %v133 = vlaneseq
  %v134 = vshrl.u32 %v133, 7
  %v135 = vsub.s32 0, %v134
  %v136 = vrot.slane %v131, %v135
  %v137 = vlaneseq
  %v138 = vshrl.u32 %v137, 7
  %v139 = vsub.s32 1, %v138
  %v140 = vrot.slane %v131, %v139
  %v141 = vlaneseq
  %v142 = vshrl.u32 %v141, 7
  %v143 = vsub.s32 2, %v142
  %v144 = vrot.slane %v131, %v143
  %v145 = vlaneseq
  %v146 = vshrl.u32 %v145, 7
  %v147 = vsub.s32 3, %v146
  %v148 = vrot.slane %v131, %v147
  %v149 = vlaneseq
  %v150 = vshrl.u32 %v149, 7
  %v151 = vsub.s32 4, %v150
  %v152 = vrot.slane %v131, %v151
  %v153 = vlaneseq
  %v154 = vshrl.u32 %v153, 7
  %v155 = vsub.s32 5, %v154
  %v156 = vrot.slane %v131, %v155
  %v157 = vlaneseq
  %v158 = vshrl.u32 %v157, 7
  %v159 = vsub.s32 6, %v158
  %v160 = vrot.slane %v131, %v159
  %v161 = vlaneseq
  %v162 = vshrl.u32 %v161, 7
  %v163 = vsub.s32 7, %v162
  %v164 = vrot.slane %v131, %v163
  %vm173 = vcmask 834560
  %v175 = vsel %vm173, %v25, 0
  %v178 = vsel %vm173, %v26, 0
  %vm180 = vcmask 1045504
  %v182 = vsel %vm180, %v123, 0
  %v185 = vsel %vm180, %v124, 0
  %v188 = vsel %vm180, %v125, 0
  %v191 = vsel %vm180, %v126, 0
  %v194 = vsel %vm180, %v127, 0
  %v197 = vsel %vm180, %v128, 0
  %v200 = vsel %vm180, %v129, 0
  %v203 = vsel %vm180, %v130, 0
  %205 = vmatprep.subr.mxu0 0.0
  %206 = vmatpush1.msra.mxu0 0.0
  %207 = vmatprep.subr.mxu0 0.0
  %208 = vmatpush1.msra.mxu0 0.0
  %209 = vmatprep.subr.mxu0 0.0
  %210 = vmatpush1.msra.mxu0 0.0
  %211 = vmatprep.subr.mxu0 %v185
  %212 = vmatpush1.msra.mxu0 %v182
  %213 = vmatprep.subr.mxu0 %v116
  %214 = vmatpush1.msra.mxu0 %v115
  %215 = vmatprep.subr.mxu0 %v108
  %216 = vmatpush1.msra.mxu0 %v107
  %217 = vmatprep.subr.mxu0 %v100
  %218 = vmatpush1.msra.mxu0 %v99
  %219 = vmatprep.subr.mxu0 %v92
  %220 = vmatpush1.msra.mxu0 %v91
  %221 = vmatprep.subr.mxu0 %v84
  %222 = vmatpush1.msra.mxu0 %v83
  %223 = vmatprep.subr.mxu0 %v76
  %224 = vmatpush1.msra.mxu0 %v75
  %225 = vmatprep.subr.mxu0 %v68
  %226 = vmatpush1.msra.mxu0 %v67
  %227 = vmatprep.subr.mxu0 %v60
  %228 = vmatpush1.msra.mxu0 %v59
  %229 = vmatprep.subr.mxu0 %v52
  %230 = vmatpush1.msra.mxu0 %v51
  %231 = vmatprep.subr.mxu0 %v44
  %232 = vmatpush1.msra.mxu0 %v43
  %233 = vmatprep.subr.mxu0 %v36
  %234 = vmatpush1.msra.mxu0 %v35
  %235 = vmatprep.subr.mxu0 %v28
  %236 = vmatpush1.msra.mxu0 %v27
  %237 = vmatprep.subr.mxu0 0.0
  %238 = vmatpush2.msra.mxu0 0.0
  %239 = vmatprep.subr.mxu0 0.0
  %240 = vmatpush2.msra.mxu0 0.0
  %241 = vmatprep.subr.mxu0 0.0
  %242 = vmatpush2.msra.mxu0 0.0
  %243 = vmatprep.subr.mxu0 0.0
  %244 = vmatpush2.msra.mxu0 0.0
  %245 = vmatprep.subr.mxu0 0.0
  %246 = vmatpush2.msra.mxu0 0.0
  %247 = vmatprep.subr.mxu0 0.0
  %248 = vmatpush2.msra.mxu0 0.0
  %249 = vmatprep.subr.mxu0 0.0
  %250 = vmatpush2.msra.mxu0 0.0
  %251 = vmatprep.subr.mxu0 0.0
  %252 = vmatpush2.msra.mxu0 0.0
  %253 = vmatprep.subr.mxu0 0.0
  %254 = vmatpush2.msra.mxu0 0.0
  %255 = vmatprep.subr.mxu0 0.0
  %256 = vmatpush2.msra.mxu0 0.0
  %257 = vmatprep.subr.mxu0 0.0
  %258 = vmatpush2.msra.mxu0 0.0
  %259 = vmatprep.subr.mxu0 0.0
  %260 = vmatpush2.msra.mxu0 0.0
  %261 = vmatprep.subr.mxu0 0.0
  %262 = vmatpush2.msra.mxu0 0.0
  %263 = vmatprep.subr.mxu0 0.0
  %264 = vmatpush2.msra.mxu0 0.0
  %265 = vmatprep.subr.mxu0 0.0
  %266 = vmatpush2.msra.mxu0 0.0
  %267 = vmatprep.subr.mxu0 0.0
  %268 = vmatpush2.msra.mxu0 0.0
  %269 = vmatprep.mubr.f32.mxu0 0.0
  %270 = vmatmul.mubr.f32.gmra.mxu0 %v175
  %v271 = vpop.f32.mrf.mxu0
  %v272 = vadd.f32 %v136, %v271
  %v273 = vpop.f32.mrf.mxu0
  %v274 = vadd.f32 %v140, %v273
  %275 = vmatprep.mubr.f32.mxu0 0.0
  %276 = vmatmul.mubr.f32.gmra.mxu0 %v178
  %v277 = vpop.f32.mrf.mxu0
  %v278 = vadd.f32 %v136, %v277
  %v279 = vpop.f32.mrf.mxu0
  %v280 = vadd.f32 %v140, %v279
  %281 = vdwg.mxu0
  %282 = vmatprep.subr.mxu0 0.0
  %283 = vmatpush1.msra.mxu0 0.0
  %284 = vmatprep.subr.mxu0 0.0
  %285 = vmatpush1.msra.mxu0 0.0
  %286 = vmatprep.subr.mxu0 0.0
  %287 = vmatpush1.msra.mxu0 0.0
  %288 = vmatprep.subr.mxu0 %v191
  %289 = vmatpush1.msra.mxu0 %v188
  %290 = vmatprep.subr.mxu0 %v118
  %291 = vmatpush1.msra.mxu0 %v117
  %292 = vmatprep.subr.mxu0 %v110
  %293 = vmatpush1.msra.mxu0 %v109
  %294 = vmatprep.subr.mxu0 %v102
  %295 = vmatpush1.msra.mxu0 %v101
  %296 = vmatprep.subr.mxu0 %v94
  %297 = vmatpush1.msra.mxu0 %v93
  %298 = vmatprep.subr.mxu0 %v86
  %299 = vmatpush1.msra.mxu0 %v85
  %300 = vmatprep.subr.mxu0 %v78
  %301 = vmatpush1.msra.mxu0 %v77
  %302 = vmatprep.subr.mxu0 %v70
  %303 = vmatpush1.msra.mxu0 %v69
  %304 = vmatprep.subr.mxu0 %v62
  %305 = vmatpush1.msra.mxu0 %v61
  %306 = vmatprep.subr.mxu0 %v54
  %307 = vmatpush1.msra.mxu0 %v53
  %308 = vmatprep.subr.mxu0 %v46
  %309 = vmatpush1.msra.mxu0 %v45
  %310 = vmatprep.subr.mxu0 %v38
  %311 = vmatpush1.msra.mxu0 %v37
  %312 = vmatprep.subr.mxu0 %v30
  %313 = vmatpush1.msra.mxu0 %v29
  %314 = vmatprep.subr.mxu0 0.0
  %315 = vmatpush2.msra.mxu0 0.0
  %316 = vmatprep.subr.mxu0 0.0
  %317 = vmatpush2.msra.mxu0 0.0
  %318 = vmatprep.subr.mxu0 0.0
  %319 = vmatpush2.msra.mxu0 0.0
  %320 = vmatprep.subr.mxu0 0.0
  %321 = vmatpush2.msra.mxu0 0.0
  %322 = vmatprep.subr.mxu0 0.0
  %323 = vmatpush2.msra.mxu0 0.0
  %324 = vmatprep.subr.mxu0 0.0
  %325 = vmatpush2.msra.mxu0 0.0
  %326 = vmatprep.subr.mxu0 0.0
  %327 = vmatpush2.msra.mxu0 0.0
  %328 = vmatprep.subr.mxu0 0.0
  %329 = vmatpush2.msra.mxu0 0.0
  %330 = vmatprep.subr.mxu0 0.0
  %331 = vmatpush2.msra.mxu0 0.0
  %332 = vmatprep.subr.mxu0 0.0
  %333 = vmatpush2.msra.mxu0 0.0
  %334 = vmatprep.subr.mxu0 0.0
  %335 = vmatpush2.msra.mxu0 0.0
  %336 = vmatprep.subr.mxu0 0.0
  %337 = vmatpush2.msra.mxu0 0.0
  %338 = vmatprep.subr.mxu0 0.0
  %339 = vmatpush2.msra.mxu0 0.0
  %340 = vmatprep.subr.mxu0 0.0
  %341 = vmatpush2.msra.mxu0 0.0
  %342 = vmatprep.subr.mxu0 0.0
  %343 = vmatpush2.msra.mxu0 0.0
  %344 = vmatprep.subr.mxu0 0.0
  %345 = vmatpush2.msra.mxu0 0.0
  %346 = vmatprep.mubr.f32.mxu0 0.0
  %347 = vmatmul.mubr.f32.gmra.mxu0 %v175
  %v348 = vpop.f32.mrf.mxu0
  %v349 = vadd.f32 %v144, %v348
  %v350 = vpop.f32.mrf.mxu0
  %v351 = vadd.f32 %v148, %v350
  %352 = vmatprep.mubr.f32.mxu0 0.0
  %353 = vmatmul.mubr.f32.gmra.mxu0 %v178
  %v354 = vpop.f32.mrf.mxu0
  %v355 = vadd.f32 %v144, %v354
  %v356 = vpop.f32.mrf.mxu0
  %v357 = vadd.f32 %v148, %v356
  %358 = vdwg.mxu0
  %359 = vmatprep.subr.mxu0 0.0
  %360 = vmatpush1.msra.mxu0 0.0
  %361 = vmatprep.subr.mxu0 0.0
  %362 = vmatpush1.msra.mxu0 0.0
  %363 = vmatprep.subr.mxu0 0.0
  %364 = vmatpush1.msra.mxu0 0.0
  %365 = vmatprep.subr.mxu0 %v197
  %366 = vmatpush1.msra.mxu0 %v194
  %367 = vmatprep.subr.mxu0 %v120
  %368 = vmatpush1.msra.mxu0 %v119
  %369 = vmatprep.subr.mxu0 %v112
  %370 = vmatpush1.msra.mxu0 %v111
  %371 = vmatprep.subr.mxu0 %v104
  %372 = vmatpush1.msra.mxu0 %v103
  %373 = vmatprep.subr.mxu0 %v96
  %374 = vmatpush1.msra.mxu0 %v95
  %375 = vmatprep.subr.mxu0 %v88
  %376 = vmatpush1.msra.mxu0 %v87
  %377 = vmatprep.subr.mxu0 %v80
  %378 = vmatpush1.msra.mxu0 %v79
  %379 = vmatprep.subr.mxu0 %v72
  %380 = vmatpush1.msra.mxu0 %v71
  %381 = vmatprep.subr.mxu0 %v64
  %382 = vmatpush1.msra.mxu0 %v63
  %383 = vmatprep.subr.mxu0 %v56
  %384 = vmatpush1.msra.mxu0 %v55
  %385 = vmatprep.subr.mxu0 %v48
  %386 = vmatpush1.msra.mxu0 %v47
  %387 = vmatprep.subr.mxu0 %v40
  %388 = vmatpush1.msra.mxu0 %v39
  %389 = vmatprep.subr.mxu0 %v32
  %390 = vmatpush1.msra.mxu0 %v31
  %391 = vmatprep.subr.mxu0 0.0
  %392 = vmatpush2.msra.mxu0 0.0
  %393 = vmatprep.subr.mxu0 0.0
  %394 = vmatpush2.msra.mxu0 0.0
  %395 = vmatprep.subr.mxu0 0.0
  %396 = vmatpush2.msra.mxu0 0.0
  %397 = vmatprep.subr.mxu0 0.0
  %398 = vmatpush2.msra.mxu0 0.0
  %399 = vmatprep.subr.mxu0 0.0
  %400 = vmatpush2.msra.mxu0 0.0
  %401 = vmatprep.subr.mxu0 0.0
  %402 = vmatpush2.msra.mxu0 0.0
  %403 = vmatprep.subr.mxu0 0.0
  %404 = vmatpush2.msra.mxu0 0.0
  %405 = vmatprep.subr.mxu0 0.0
  %406 = vmatpush2.msra.mxu0 0.0
  %407 = vmatprep.subr.mxu0 0.0
  %408 = vmatpush2.msra.mxu0 0.0
  %409 = vmatprep.subr.mxu0 0.0
  %410 = vmatpush2.msra.mxu0 0.0
  %411 = vmatprep.subr.mxu0 0.0
  %412 = vmatpush2.msra.mxu0 0.0
  %413 = vmatprep.subr.mxu0 0.0
  %414 = vmatpush2.msra.mxu0 0.0
  %415 = vmatprep.subr.mxu0 0.0
  %416 = vmatpush2.msra.mxu0 0.0
  %417 = vmatprep.subr.mxu0 0.0
  %418 = vmatpush2.msra.mxu0 0.0
  %419 = vmatprep.subr.mxu0 0.0
  %420 = vmatpush2.msra.mxu0 0.0
  %421 = vmatprep.subr.mxu0 0.0
  %422 = vmatpush2.msra.mxu0 0.0
  %423 = vmatprep.mubr.f32.mxu0 0.0
  %424 = vmatmul.mubr.f32.gmra.mxu0 %v175
  %v425 = vpop.f32.mrf.mxu0
  %v426 = vadd.f32 %v152, %v425
  %v427 = vpop.f32.mrf.mxu0
  %v428 = vadd.f32 %v156, %v427
  %429 = vmatprep.mubr.f32.mxu0 0.0
  %430 = vmatmul.mubr.f32.gmra.mxu0 %v178
  %v431 = vpop.f32.mrf.mxu0
  %v432 = vadd.f32 %v152, %v431
  %v433 = vpop.f32.mrf.mxu0
  %v434 = vadd.f32 %v156, %v433
  %435 = vdwg.mxu0
  %436 = vmatprep.subr.mxu0 0.0
  %437 = vmatpush1.msra.mxu0 0.0
  %438 = vmatprep.subr.mxu0 0.0
  %439 = vmatpush1.msra.mxu0 0.0
  %440 = vmatprep.subr.mxu0 0.0
  %441 = vmatpush1.msra.mxu0 0.0
  %442 = vmatprep.subr.mxu0 %v203
  %443 = vmatpush1.msra.mxu0 %v200
  %444 = vmatprep.subr.mxu0 %v122
  %445 = vmatpush1.msra.mxu0 %v121
  %446 = vmatprep.subr.mxu0 %v114
  %447 = vmatpush1.msra.mxu0 %v113
  %448 = vmatprep.subr.mxu0 %v106
  %449 = vmatpush1.msra.mxu0 %v105
  %450 = vmatprep.subr.mxu0 %v98
  %451 = vmatpush1.msra.mxu0 %v97
  %452 = vmatprep.subr.mxu0 %v90
  %453 = vmatpush1.msra.mxu0 %v89
  %454 = vmatprep.subr.mxu0 %v82
  %455 = vmatpush1.msra.mxu0 %v81
  %456 = vmatprep.subr.mxu0 %v74
  %457 = vmatpush1.msra.mxu0 %v73
  %458 = vmatprep.subr.mxu0 %v66
  %459 = vmatpush1.msra.mxu0 %v65
  %460 = vmatprep.subr.mxu0 %v58
  %461 = vmatpush1.msra.mxu0 %v57
  %462 = vmatprep.subr.mxu0 %v50
  %463 = vmatpush1.msra.mxu0 %v49
  %464 = vmatprep.subr.mxu0 %v42
  %465 = vmatpush1.msra.mxu0 %v41
  %466 = vmatprep.subr.mxu0 %v34
  %467 = vmatpush1.msra.mxu0 %v33
  %468 = vmatprep.subr.mxu0 0.0
  %469 = vmatpush2.msra.mxu0 0.0
  %470 = vmatprep.subr.mxu0 0.0
  %471 = vmatpush2.msra.mxu0 0.0
  %472 = vmatprep.subr.mxu0 0.0
  %473 = vmatpush2.msra.mxu0 0.0
  %474 = vmatprep.subr.mxu0 0.0
  %475 = vmatpush2.msra.mxu0 0.0
  %476 = vmatprep.subr.mxu0 0.0
  %477 = vmatpush2.msra.mxu0 0.0
  %478 = vmatprep.subr.mxu0 0.0
  %479 = vmatpush2.msra.mxu0 0.0
  %480 = vmatprep.subr.mxu0 0.0
  %481 = vmatpush2.msra.mxu0 0.0
  %482 = vmatprep.subr.mxu0 0.0
  %483 = vmatpush2.msra.mxu0 0.0
  %484 = vmatprep.subr.mxu0 0.0
  %485 = vmatpush2.msra.mxu0 0.0
  %486 = vmatprep.subr.mxu0 0.0
  %487 = vmatpush2.msra.mxu0 0.0
  %488 = vmatprep.subr.mxu0 0.0
  %489 = vmatpush2.msra.mxu0 0.0
  %490 = vmatprep.subr.mxu0 0.0
  %491 = vmatpush2.msra.mxu0 0.0
  %492 = vmatprep.subr.mxu0 0.0
  %493 = vmatpush2.msra.mxu0 0.0
  %494 = vmatprep.subr.mxu0 0.0
  %495 = vmatpush2.msra.mxu0 0.0
  %496 = vmatprep.subr.mxu0 0.0
  %497 = vmatpush2.msra.mxu0 0.0
  %498 = vmatprep.subr.mxu0 0.0
  %499 = vmatpush2.msra.mxu0 0.0
  %500 = vmatprep.mubr.f32.mxu0 0.0
  %501 = vmatmul.mubr.f32.gmra.mxu0 %v175
  %v502 = vpop.f32.mrf.mxu0
  %v503 = vadd.f32 %v160, %v502
  %v504 = vpop.f32.mrf.mxu0
  %v505 = vadd.f32 %v164, %v504
  %506 = vmatprep.mubr.f32.mxu0 0.0
  %507 = vmatmul.mubr.f32.gmra.mxu0 %v178
  %v508 = vpop.f32.mrf.mxu0
  %v509 = vadd.f32 %v160, %v508
  %v510 = vpop.f32.mrf.mxu0
  %v511 = vadd.f32 %v164, %v510
  %512 = vdwg.mxu0
  %v513 = vld [vmem:[%s2] sm:$0xff]
  %v514 = vld [vmem:[%s2 + $0x8] sm:$0xff]
  %v515 = vld [vmem:[%s2 + $0x10] sm:$0xff]
  %v516 = vld [vmem:[%s2 + $0x18] sm:$0xff]
  %v517 = vld [vmem:[%s2 + $0x20] sm:$0xff]
  %v518 = vld [vmem:[%s2 + $0x28] sm:$0xff]
  %v519 = vld [vmem:[%s2 + $0x30] sm:$0xff]
  %v520 = vld [vmem:[%s2 + $0x38] sm:$0xff]
  %v521 = vld [vmem:[%s2 + $0x40] sm:$0xff]
  %v522 = vld [vmem:[%s2 + $0x48] sm:$0xff]
  %v523 = vld [vmem:[%s2 + $0x50] sm:$0xff]
  %v524 = vld [vmem:[%s2 + $0x58] sm:$0xff]
  %v525 = vld [vmem:[%s2 + $0x60] sm:$0xff]
  %v526 = vld [vmem:[%s2 + $0x68] sm:$0xff]
  %v527 = vld [vmem:[%s2 + $0x70] sm:$0xff]
  %v528 = vld [vmem:[%s2 + $0x78] sm:$0xff]
  %v529 = vld [vmem:[%s2 + $0x80] sm:$0xff]
  %v530 = vld [vmem:[%s2 + $0x88] sm:$0xff]
  %v531 = vld [vmem:[%s2 + $0x90] sm:$0xff]
  %v532 = vld [vmem:[%s2 + $0x98] sm:$0xff]
  %v533 = vld [vmem:[%s2 + $0xa0] sm:$0xff]
  %v534 = vld [vmem:[%s2 + $0xa8] sm:$0xff]
  %v535 = vld [vmem:[%s2 + $0xb0] sm:$0xff]
  %v536 = vld [vmem:[%s2 + $0xb8] sm:$0xff]
  %v537 = vld [vmem:[%s2 + $0xc0] sm:$0xff]
  %v538 = vld [vmem:[%s2 + $0xc8] sm:$0xff]
  %v539 = vld [vmem:[%s2 + $0xd0] sm:$0xff]
  %v540 = vld [vmem:[%s2 + $0xd8] sm:$0xff]
  %v541 = vld [vmem:[%s2 + $0xe0] sm:$0xff]
  %v542 = vld [vmem:[%s2 + $0xe8] sm:$0xff]
  %v543 = vld [vmem:[%s2 + $0xf0] sm:$0xff]
  %v544 = vld [vmem:[%s2 + $0xf8] sm:$0xff]
  %v545 = vld [vmem:[%s2 + $0x100] sm:$0xff]
  %v546 = vld [vmem:[%s2 + $0x108] sm:$0xff]
  %v547 = vld [vmem:[%s2 + $0x110] sm:$0xff]
  %v548 = vld [vmem:[%s2 + $0x118] sm:$0xff]
  %v549 = vld [vmem:[%s2 + $0x120] sm:$0xff]
  %v550 = vld [vmem:[%s2 + $0x128] sm:$0xff]
  %v551 = vld [vmem:[%s2 + $0x130] sm:$0xff]
  %v552 = vld [vmem:[%s2 + $0x138] sm:$0xff]
  %v553 = vld [vmem:[%s2 + $0x140] sm:$0xff]
  %v554 = vld [vmem:[%s2 + $0x148] sm:$0xff]
  %v555 = vld [vmem:[%s2 + $0x150] sm:$0xff]
  %v556 = vld [vmem:[%s2 + $0x158] sm:$0xff]
  %v557 = vld [vmem:[%s2 + $0x160] sm:$0xff]
  %v558 = vld [vmem:[%s2 + $0x168] sm:$0xff]
  %v559 = vld [vmem:[%s2 + $0x170] sm:$0xff]
  %v560 = vld [vmem:[%s2 + $0x178] sm:$0xff]
  %v561 = vld [vmem:[%s2 + $0x180] sm:$0xff]
  %v562 = vld [vmem:[%s2 + $0x188] sm:$0xff]
  %v563 = vld [vmem:[%s2 + $0x190] sm:$0xff]
  %v564 = vld [vmem:[%s2 + $0x198] sm:$0xff]
  %v565 = vld [vmem:[%s2 + $0x1a0] sm:$0xff]
  %v566 = vld [vmem:[%s2 + $0x1a8] sm:$0xff]
  %v567 = vld [vmem:[%s2 + $0x1b0] sm:$0xff]
  %v568 = vld [vmem:[%s2 + $0x1b8] sm:$0xff]
  %v569 = vld [vmem:[%s2 + $0x1c0] sm:$0xff]
  %v570 = vld [vmem:[%s2 + $0x1c8] sm:$0xff]
  %v571 = vld [vmem:[%s2 + $0x1d0] sm:$0xff]
  %v572 = vld [vmem:[%s2 + $0x1d8] sm:$0xff]
  %v573 = vld [vmem:[%s2 + $0x1e0] sm:$0xff]
  %v574 = vld [vmem:[%s2 + $0x1e8] sm:$0xff]
  %v575 = vld [vmem:[%s2 + $0x1f0] sm:$0xff]
  %v576 = vld [vmem:[%s2 + $0x1f8] sm:$0xff]
  %v577 = vld [vmem:[%s2 + $0x200] sm:$0xff]
  %v578 = vld [vmem:[%s2 + $0x208] sm:$0xff]
  %v579 = vld [vmem:[%s2 + $0x210] sm:$0xff]
  %v580 = vld [vmem:[%s2 + $0x218] sm:$0xff]
  %v581 = vld [vmem:[%s2 + $0x220] sm:$0xff]
  %v582 = vld [vmem:[%s2 + $0x228] sm:$0xff]
  %v583 = vld [vmem:[%s2 + $0x230] sm:$0xff]
  %v584 = vld [vmem:[%s2 + $0x238] sm:$0xff]
  %v585 = vld [vmem:[%s2 + $0x240] sm:$0xff]
  %v586 = vld [vmem:[%s2 + $0x248] sm:$0xff]
  %v587 = vld [vmem:[%s2 + $0x250] sm:$0xff]
  %v588 = vld [vmem:[%s2 + $0x258] sm:$0xff]
  %v589 = vld [vmem:[%s2 + $0x260] sm:$0xff]
  %v590 = vld [vmem:[%s2 + $0x268] sm:$0xff]
  %v591 = vld [vmem:[%s2 + $0x270] sm:$0xff]
  %v592 = vld [vmem:[%s2 + $0x278] sm:$0xff]
  %v593 = vld [vmem:[%s2 + $0x280] sm:$0xff]
  %v594 = vld [vmem:[%s2 + $0x288] sm:$0xff]
  %v595 = vld [vmem:[%s2 + $0x290] sm:$0xff]
  %v596 = vld [vmem:[%s2 + $0x298] sm:$0xff]
  %v597 = vld [vmem:[%s2 + $0x2a0] sm:$0xff]
  %v598 = vld [vmem:[%s2 + $0x2a8] sm:$0xff]
  %v599 = vld [vmem:[%s2 + $0x2b0] sm:$0xff]
  %v600 = vld [vmem:[%s2 + $0x2b8] sm:$0xff]
  %v601 = vld [vmem:[%s2 + $0x2c0] sm:$0xff]
  %v602 = vld [vmem:[%s2 + $0x2c8] sm:$0xff]
  %v603 = vld [vmem:[%s2 + $0x2d0] sm:$0xff]
  %v604 = vld [vmem:[%s2 + $0x2d8] sm:$0xff]
  %v605 = vld [vmem:[%s2 + $0x2e0] sm:$0xff]
  %v606 = vld [vmem:[%s2 + $0x2e8] sm:$0xff]
  %v607 = vld [vmem:[%s2 + $0x2f0] sm:$0xff]
  %v608 = vld [vmem:[%s2 + $0x2f8] sm:$0xff]
  %v609 = vld [vmem:[%s2 + $0x300] sm:$0x3f]
  %v610 = vld [vmem:[%s2 + $0x308] sm:$0x3f]
  %v611 = vld [vmem:[%s2 + $0x310] sm:$0x3f]
  %v612 = vld [vmem:[%s2 + $0x318] sm:$0x3f]
  %v613 = vld [vmem:[%s2 + $0x320] sm:$0x3f]
  %v614 = vld [vmem:[%s2 + $0x328] sm:$0x3f]
  %v615 = vld [vmem:[%s2 + $0x330] sm:$0x3f]
  %v616 = vld [vmem:[%s2 + $0x338] sm:$0x3f]
  %v618 = vsel %vm180, %v609, 0
  %v621 = vsel %vm180, %v610, 0
  %v624 = vsel %vm180, %v611, 0
  %v627 = vsel %vm180, %v612, 0
  %v630 = vsel %vm180, %v613, 0
  %v633 = vsel %vm180, %v614, 0
  %v636 = vsel %vm180, %v615, 0
  %v639 = vsel %vm180, %v616, 0
  %641 = vmatprep.subr.mxu0 0.0
  %642 = vmatpush1.msra.mxu0 0.0
  %643 = vmatprep.subr.mxu0 0.0
  %644 = vmatpush1.msra.mxu0 0.0
  %645 = vmatprep.subr.mxu0 0.0
  %646 = vmatpush1.msra.mxu0 0.0
  %647 = vmatprep.subr.mxu0 %v621
  %648 = vmatpush1.msra.mxu0 %v618
  %649 = vmatprep.subr.mxu0 %v602
  %650 = vmatpush1.msra.mxu0 %v601
  %651 = vmatprep.subr.mxu0 %v594
  %652 = vmatpush1.msra.mxu0 %v593
  %653 = vmatprep.subr.mxu0 %v586
  %654 = vmatpush1.msra.mxu0 %v585
  %655 = vmatprep.subr.mxu0 %v578
  %656 = vmatpush1.msra.mxu0 %v577
  %657 = vmatprep.subr.mxu0 %v570
  %658 = vmatpush1.msra.mxu0 %v569
  %659 = vmatprep.subr.mxu0 %v562
  %660 = vmatpush1.msra.mxu0 %v561
  %661 = vmatprep.subr.mxu0 %v554
  %662 = vmatpush1.msra.mxu0 %v553
  %663 = vmatprep.subr.mxu0 %v546
  %664 = vmatpush1.msra.mxu0 %v545
  %665 = vmatprep.subr.mxu0 %v538
  %666 = vmatpush1.msra.mxu0 %v537
  %667 = vmatprep.subr.mxu0 %v530
  %668 = vmatpush1.msra.mxu0 %v529
  %669 = vmatprep.subr.mxu0 %v522
  %670 = vmatpush1.msra.mxu0 %v521
  %671 = vmatprep.subr.mxu0 %v514
  %672 = vmatpush1.msra.mxu0 %v513
  %673 = vmatprep.subr.mxu0 0.0
  %674 = vmatpush2.msra.mxu0 0.0
  %675 = vmatprep.subr.mxu0 0.0
  %676 = vmatpush2.msra.mxu0 0.0
  %677 = vmatprep.subr.mxu0 0.0
  %678 = vmatpush2.msra.mxu0 0.0
  %679 = vmatprep.subr.mxu0 0.0
  %680 = vmatpush2.msra.mxu0 0.0
  %681 = vmatprep.subr.mxu0 0.0
  %682 = vmatpush2.msra.mxu0 0.0
  %683 = vmatprep.subr.mxu0 0.0
  %684 = vmatpush2.msra.mxu0 0.0
  %685 = vmatprep.subr.mxu0 0.0
  %686 = vmatpush2.msra.mxu0 0.0
  %687 = vmatprep.subr.mxu0 0.0
  %688 = vmatpush2.msra.mxu0 0.0
  %689 = vmatprep.subr.mxu0 0.0
  %690 = vmatpush2.msra.mxu0 0.0
  %691 = vmatprep.subr.mxu0 0.0
  %692 = vmatpush2.msra.mxu0 0.0
  %693 = vmatprep.subr.mxu0 0.0
  %694 = vmatpush2.msra.mxu0 0.0
  %695 = vmatprep.subr.mxu0 0.0
  %696 = vmatpush2.msra.mxu0 0.0
  %697 = vmatprep.subr.mxu0 0.0
  %698 = vmatpush2.msra.mxu0 0.0
  %699 = vmatprep.subr.mxu0 0.0
  %700 = vmatpush2.msra.mxu0 0.0
  %701 = vmatprep.subr.mxu0 0.0
  %702 = vmatpush2.msra.mxu0 0.0
  %703 = vmatprep.subr.mxu0 0.0
  %704 = vmatpush2.msra.mxu0 0.0
  %705 = vmatprep.mubr.f32.mxu0 0.0
  %706 = vmatmul.mubr.f32.gmra.mxu0 %v175
  %v707 = vpop.f32.mrf.mxu0
  %v708 = vadd.f32 %v136, %v707
  %v709 = vpop.f32.mrf.mxu0
  %v710 = vadd.f32 %v140, %v709
  %711 = vmatprep.mubr.f32.mxu0 0.0
  %712 = vmatmul.mubr.f32.gmra.mxu0 %v178
  %v713 = vpop.f32.mrf.mxu0
  %v714 = vadd.f32 %v136, %v713
  %v715 = vpop.f32.mrf.mxu0
  %v716 = vadd.f32 %v140, %v715
  %717 = vdwg.mxu0
  %718 = vmatprep.subr.mxu0 0.0
  %719 = vmatpush1.msra.mxu0 0.0
  %720 = vmatprep.subr.mxu0 0.0
  %721 = vmatpush1.msra.mxu0 0.0
  %722 = vmatprep.subr.mxu0 0.0
  %723 = vmatpush1.msra.mxu0 0.0
  %724 = vmatprep.subr.mxu0 %v627
  %725 = vmatpush1.msra.mxu0 %v624
  %726 = vmatprep.subr.mxu0 %v604
  %727 = vmatpush1.msra.mxu0 %v603
  %728 = vmatprep.subr.mxu0 %v596
  %729 = vmatpush1.msra.mxu0 %v595
  %730 = vmatprep.subr.mxu0 %v588
  %731 = vmatpush1.msra.mxu0 %v587
  %732 = vmatprep.subr.mxu0 %v580
  %733 = vmatpush1.msra.mxu0 %v579
  %734 = vmatprep.subr.mxu0 %v572
  %735 = vmatpush1.msra.mxu0 %v571
  %736 = vmatprep.subr.mxu0 %v564
  %737 = vmatpush1.msra.mxu0 %v563
  %738 = vmatprep.subr.mxu0 %v556
  %739 = vmatpush1.msra.mxu0 %v555
  %740 = vmatprep.subr.mxu0 %v548
  %741 = vmatpush1.msra.mxu0 %v547
  %742 = vmatprep.subr.mxu0 %v540
  %743 = vmatpush1.msra.mxu0 %v539
  %744 = vmatprep.subr.mxu0 %v532
  %745 = vmatpush1.msra.mxu0 %v531
  %746 = vmatprep.subr.mxu0 %v524
  %747 = vmatpush1.msra.mxu0 %v523
  %748 = vmatprep.subr.mxu0 %v516
  %749 = vmatpush1.msra.mxu0 %v515
  %750 = vmatprep.subr.mxu0 0.0
  %751 = vmatpush2.msra.mxu0 0.0
  %752 = vmatprep.subr.mxu0 0.0
  %753 = vmatpush2.msra.mxu0 0.0
  %754 = vmatprep.subr.mxu0 0.0
  %755 = vmatpush2.msra.mxu0 0.0
  %756 = vmatprep.subr.mxu0 0.0
  %757 = vmatpush2.msra.mxu0 0.0
  %758 = vmatprep.subr.mxu0 0.0
  %759 = vmatpush2.msra.mxu0 0.0
  %760 = vmatprep.subr.mxu0 0.0
  %761 = vmatpush2.msra.mxu0 0.0
  %762 = vmatprep.subr.mxu0 0.0
  %763 = vmatpush2.msra.mxu0 0.0
  %764 = vmatprep.subr.mxu0 0.0
  %765 = vmatpush2.msra.mxu0 0.0
  %766 = vmatprep.subr.mxu0 0.0
  %767 = vmatpush2.msra.mxu0 0.0
  %768 = vmatprep.subr.mxu0 0.0
  %769 = vmatpush2.msra.mxu0 0.0
  %770 = vmatprep.subr.mxu0 0.0
  %771 = vmatpush2.msra.mxu0 0.0
  %772 = vmatprep.subr.mxu0 0.0
  %773 = vmatpush2.msra.mxu0 0.0
  %774 = vmatprep.subr.mxu0 0.0
  %775 = vmatpush2.msra.mxu0 0.0
  %776 = vmatprep.subr.mxu0 0.0
  %777 = vmatpush2.msra.mxu0 0.0
  %778 = vmatprep.subr.mxu0 0.0
  %779 = vmatpush2.msra.mxu0 0.0
  %780 = vmatprep.subr.mxu0 0.0
  %781 = vmatpush2.msra.mxu0 0.0
  %782 = vmatprep.mubr.f32.mxu0 0.0
  %783 = vmatmul.mubr.f32.gmra.mxu0 %v175
  %v784 = vpop.f32.mrf.mxu0
  %v785 = vadd.f32 %v144, %v784
  %v786 = vpop.f32.mrf.mxu0
  %v787 = vadd.f32 %v148, %v786
  %788 = vmatprep.mubr.f32.mxu0 0.0
  %789 = vmatmul.mubr.f32.gmra.mxu0 %v178
  %v790 = vpop.f32.mrf.mxu0
  %v791 = vadd.f32 %v144, %v790
  %v792 = vpop.f32.mrf.mxu0
  %v793 = vadd.f32 %v148, %v792
  %794 = vdwg.mxu0
  %795 = vmatprep.subr.mxu0 0.0
  %796 = vmatpush1.msra.mxu0 0.0
  %797 = vmatprep.subr.mxu0 0.0
  %798 = vmatpush1.msra.mxu0 0.0
  %799 = vmatprep.subr.mxu0 0.0
  %800 = vmatpush1.msra.mxu0 0.0
  %801 = vmatprep.subr.mxu0 %v633
  %802 = vmatpush1.msra.mxu0 %v630
  %803 = vmatprep.subr.mxu0 %v606
  %804 = vmatpush1.msra.mxu0 %v605
  %805 = vmatprep.subr.mxu0 %v598
  %806 = vmatpush1.msra.mxu0 %v597
  %807 = vmatprep.subr.mxu0 %v590
  %808 = vmatpush1.msra.mxu0 %v589
  %809 = vmatprep.subr.mxu0 %v582
  %810 = vmatpush1.msra.mxu0 %v581
  %811 = vmatprep.subr.mxu0 %v574
  %812 = vmatpush1.msra.mxu0 %v573
  %813 = vmatprep.subr.mxu0 %v566
  %814 = vmatpush1.msra.mxu0 %v565
  %815 = vmatprep.subr.mxu0 %v558
  %816 = vmatpush1.msra.mxu0 %v557
  %817 = vmatprep.subr.mxu0 %v550
  %818 = vmatpush1.msra.mxu0 %v549
  %819 = vmatprep.subr.mxu0 %v542
  %820 = vmatpush1.msra.mxu0 %v541
  %821 = vmatprep.subr.mxu0 %v534
  %822 = vmatpush1.msra.mxu0 %v533
  %823 = vmatprep.subr.mxu0 %v526
  %824 = vmatpush1.msra.mxu0 %v525
  %825 = vmatprep.subr.mxu0 %v518
  %826 = vmatpush1.msra.mxu0 %v517
  %827 = vmatprep.subr.mxu0 0.0
  %828 = vmatpush2.msra.mxu0 0.0
  %829 = vmatprep.subr.mxu0 0.0
  %830 = vmatpush2.msra.mxu0 0.0
  %831 = vmatprep.subr.mxu0 0.0
  %832 = vmatpush2.msra.mxu0 0.0
  %833 = vmatprep.subr.mxu0 0.0
  %834 = vmatpush2.msra.mxu0 0.0
  %835 = vmatprep.subr.mxu0 0.0
  %836 = vmatpush2.msra.mxu0 0.0
  %837 = vmatprep.subr.mxu0 0.0
  %838 = vmatpush2.msra.mxu0 0.0
  %839 = vmatprep.subr.mxu0 0.0
  %840 = vmatpush2.msra.mxu0 0.0
  %841 = vmatprep.subr.mxu0 0.0
  %842 = vmatpush2.msra.mxu0 0.0
  %843 = vmatprep.subr.mxu0 0.0
  %844 = vmatpush2.msra.mxu0 0.0
  %845 = vmatprep.subr.mxu0 0.0
  %846 = vmatpush2.msra.mxu0 0.0
  %847 = vmatprep.subr.mxu0 0.0
  %848 = vmatpush2.msra.mxu0 0.0
  %849 = vmatprep.subr.mxu0 0.0
  %850 = vmatpush2.msra.mxu0 0.0
  %851 = vmatprep.subr.mxu0 0.0
  %852 = vmatpush2.msra.mxu0 0.0
  %853 = vmatprep.subr.mxu0 0.0
  %854 = vmatpush2.msra.mxu0 0.0
  %855 = vmatprep.subr.mxu0 0.0
  %856 = vmatpush2.msra.mxu0 0.0
  %857 = vmatprep.subr.mxu0 0.0
  %858 = vmatpush2.msra.mxu0 0.0
  %859 = vmatprep.mubr.f32.mxu0 0.0
  %860 = vmatmul.mubr.f32.gmra.mxu0 %v175
  %v861 = vpop.f32.mrf.mxu0
  %v862 = vadd.f32 %v152, %v861
  %v863 = vpop.f32.mrf.mxu0
  %v864 = vadd.f32 %v156, %v863
  %865 = vmatprep.mubr.f32.mxu0 0.0
  %866 = vmatmul.mubr.f32.gmra.mxu0 %v178
  %v867 = vpop.f32.mrf.mxu0
  %v868 = vadd.f32 %v152, %v867
  %v869 = vpop.f32.mrf.mxu0
  %v870 = vadd.f32 %v156, %v869
  %871 = vdwg.mxu0
  %872 = vmatprep.subr.mxu0 0.0
  %873 = vmatpush1.msra.mxu0 0.0
  %874 = vmatprep.subr.mxu0 0.0
  %875 = vmatpush1.msra.mxu0 0.0
  %876 = vmatprep.subr.mxu0 0.0
  %877 = vmatpush1.msra.mxu0 0.0
  %878 = vmatprep.subr.mxu0 %v639
  %879 = vmatpush1.msra.mxu0 %v636
  %880 = vmatprep.subr.mxu0 %v608
  %881 = vmatpush1.msra.mxu0 %v607
  %882 = vmatprep.subr.mxu0 %v600
  %883 = vmatpush1.msra.mxu0 %v599
  %884 = vmatprep.subr.mxu0 %v592
  %885 = vmatpush1.msra.mxu0 %v591
  %886 = vmatprep.subr.mxu0 %v584
  %887 = vmatpush1.msra.mxu0 %v583
  %888 = vmatprep.subr.mxu0 %v576
  %889 = vmatpush1.msra.mxu0 %v575
  %890 = vmatprep.subr.mxu0 %v568
  %891 = vmatpush1.msra.mxu0 %v567
  %892 = vmatprep.subr.mxu0 %v560
  %893 = vmatpush1.msra.mxu0 %v559
  %894 = vmatprep.subr.mxu0 %v552
  %895 = vmatpush1.msra.mxu0 %v551
  %896 = vmatprep.subr.mxu0 %v544
  %897 = vmatpush1.msra.mxu0 %v543
  %898 = vmatprep.subr.mxu0 %v536
  %899 = vmatpush1.msra.mxu0 %v535
  %900 = vmatprep.subr.mxu0 %v528
  %901 = vmatpush1.msra.mxu0 %v527
  %902 = vmatprep.subr.mxu0 %v520
  %903 = vmatpush1.msra.mxu0 %v519
  %904 = vmatprep.subr.mxu0 0.0
  %905 = vmatpush2.msra.mxu0 0.0
  %906 = vmatprep.subr.mxu0 0.0
  %907 = vmatpush2.msra.mxu0 0.0
  %908 = vmatprep.subr.mxu0 0.0
  %909 = vmatpush2.msra.mxu0 0.0
  %910 = vmatprep.subr.mxu0 0.0
  %911 = vmatpush2.msra.mxu0 0.0
  %912 = vmatprep.subr.mxu0 0.0
  %913 = vmatpush2.msra.mxu0 0.0
  %914 = vmatprep.subr.mxu0 0.0
  %915 = vmatpush2.msra.mxu0 0.0
  %916 = vmatprep.subr.mxu0 0.0
  %917 = vmatpush2.msra.mxu0 0.0
  %918 = vmatprep.subr.mxu0 0.0
  %919 = vmatpush2.msra.mxu0 0.0
  %920 = vmatprep.subr.mxu0 0.0
  %921 = vmatpush2.msra.mxu0 0.0
  %922 = vmatprep.subr.mxu0 0.0
  %923 = vmatpush2.msra.mxu0 0.0
  %924 = vmatprep.subr.mxu0 0.0
  %925 = vmatpush2.msra.mxu0 0.0
  %926 = vmatprep.subr.mxu0 0.0
  %927 = vmatpush2.msra.mxu0 0.0
  %928 = vmatprep.subr.mxu0 0.0
  %929 = vmatpush2.msra.mxu0 0.0
  %930 = vmatprep.subr.mxu0 0.0
  %931 = vmatpush2.msra.mxu0 0.0
  %932 = vmatprep.subr.mxu0 0.0
  %933 = vmatpush2.msra.mxu0 0.0
  %934 = vmatprep.subr.mxu0 0.0
  %935 = vmatpush2.msra.mxu0 0.0
  %936 = vmatprep.mubr.f32.mxu0 0.0
  %937 = vmatmul.mubr.f32.gmra.mxu0 %v175
  %v938 = vpop.f32.mrf.mxu0
  %v939 = vadd.f32 %v160, %v938
  %v940 = vpop.f32.mrf.mxu0
  %v941 = vadd.f32 %v164, %v940
  %942 = vmatprep.mubr.f32.mxu0 0.0
  %943 = vmatmul.mubr.f32.gmra.mxu0 %v178
  %v944 = vpop.f32.mrf.mxu0
  %v945 = vadd.f32 %v160, %v944
  %v946 = vpop.f32.mrf.mxu0
  %v947 = vadd.f32 %v164, %v946
  %948 = vdwg.mxu0
  %v949 = vmax.f32 %v272, 0.0
  %v950 = vmax.f32 %v274, 0.0
  %v951 = vmax.f32 %v349, 0.0
  %v952 = vmax.f32 %v351, 0.0
  %v953 = vmax.f32 %v426, 0.0
  %v954 = vmax.f32 %v428, 0.0
  %v955 = vmax.f32 %v503, 0.0
  %v956 = vmax.f32 %v505, 0.0
  %v957 = vmax.f32 %v278, 0.0
  %v958 = vmax.f32 %v280, 0.0
  %v959 = vmax.f32 %v355, 0.0
  %v960 = vmax.f32 %v357, 0.0
  %v961 = vmax.f32 %v432, 0.0
  %v962 = vmax.f32 %v434, 0.0
  %v963 = vmax.f32 %v509, 0.0
  %v964 = vmax.f32 %v511, 0.0
  %v965 = vmax.f32 %v708, 0.0
  %v966 = vmax.f32 %v710, 0.0
  %v967 = vmax.f32 %v785, 0.0
  %v968 = vmax.f32 %v787, 0.0
  %v969 = vmax.f32 %v862, 0.0
  %v970 = vmax.f32 %v864, 0.0
  %v971 = vmax.f32 %v939, 0.0
  %v972 = vmax.f32 %v941, 0.0
  %v973 = vmax.f32 %v714, 0.0
  %v974 = vmax.f32 %v716, 0.0
  %v975 = vmax.f32 %v791, 0.0
  %v976 = vmax.f32 %v793, 0.0
  %v977 = vmax.f32 %v868, 0.0
  %v978 = vmax.f32 %v870, 0.0
  %v979 = vmax.f32 %v945, 0.0
  %v980 = vmax.f32 %v947, 0.0
  %v981 = vmax.f32 %v949, %v965
  %v982 = vmax.f32 %v950, %v966
  %v983 = vmax.f32 %v951, %v967
  %v984 = vmax.f32 %v952, %v968
  %v985 = vmax.f32 %v953, %v969
  %v986 = vmax.f32 %v954, %v970
  %v987 = vmax.f32 %v955, %v971
  %v988 = vmax.f32 %v956, %v972
  %v989 = vmax.f32 %v957, %v973
  %v990 = vmax.f32 %v958, %v974
  %v991 = vmax.f32 %v959, %v975
  %v992 = vmax.f32 %v960, %v976
  %v993 = vmax.f32 %v961, %v977
  %v994 = vmax.f32 %v962, %v978
  %v995 = vmax.f32 %v963, %v979
  %v996 = vmax.f32 %v964, %v980
  %v997 = vld [vmem:[%s4] sm:$0xff]
  %v998 = vld [vmem:[%s4 + $0x8] sm:$0xff]
  %v999 = vld [vmem:[%s4 + $0x10] sm:$0xff]
  %v1000 = vld [vmem:[%s4 + $0x18] sm:$0xff]
  %v1001 = vld [vmem:[%s4 + $0x20] sm:$0xff]
  %v1002 = vld [vmem:[%s4 + $0x28] sm:$0xff]
  %v1003 = vld [vmem:[%s4 + $0x30] sm:$0xff]
  %v1004 = vld [vmem:[%s4 + $0x38] sm:$0xff]
  %v1005 = vld [vmem:[%s4 + $0x40] sm:$0xff]
  %v1006 = vld [vmem:[%s4 + $0x48] sm:$0xff]
  %v1007 = vld [vmem:[%s4 + $0x50] sm:$0xff]
  %v1008 = vld [vmem:[%s4 + $0x58] sm:$0xff]
  %v1009 = vld [vmem:[%s4 + $0x60] sm:$0xff]
  %v1010 = vld [vmem:[%s4 + $0x68] sm:$0xff]
  %v1011 = vld [vmem:[%s4 + $0x70] sm:$0xff]
  %v1012 = vld [vmem:[%s4 + $0x78] sm:$0xff]
  %v1013 = vld [vmem:[%s4 + $0x80] sm:$0xff]
  %v1014 = vld [vmem:[%s4 + $0x88] sm:$0xff]
  %v1015 = vld [vmem:[%s4 + $0x90] sm:$0xff]
  %v1016 = vld [vmem:[%s4 + $0x98] sm:$0xff]
  %v1017 = vld [vmem:[%s4 + $0xa0] sm:$0xff]
  %v1018 = vld [vmem:[%s4 + $0xa8] sm:$0xff]
  %v1019 = vld [vmem:[%s4 + $0xb0] sm:$0xff]
  %v1020 = vld [vmem:[%s4 + $0xb8] sm:$0xff]
  %v1021 = vld [vmem:[%s4 + $0xc0] sm:$0xff]
  %v1022 = vld [vmem:[%s4 + $0xc8] sm:$0xff]
  %v1023 = vld [vmem:[%s4 + $0xd0] sm:$0xff]
  %v1024 = vld [vmem:[%s4 + $0xd8] sm:$0xff]
  %v1025 = vld [vmem:[%s4 + $0xe0] sm:$0xff]
  %v1026 = vld [vmem:[%s4 + $0xe8] sm:$0xff]
  %v1027 = vld [vmem:[%s4 + $0xf0] sm:$0xff]
  %v1028 = vld [vmem:[%s4 + $0xf8] sm:$0xff]
  %v1029 = vld [vmem:[%s4 + $0x100] sm:$0xff]
  %v1030 = vld [vmem:[%s4 + $0x108] sm:$0xff]
  %v1031 = vld [vmem:[%s4 + $0x110] sm:$0xff]
  %v1032 = vld [vmem:[%s4 + $0x118] sm:$0xff]
  %v1033 = vld [vmem:[%s4 + $0x120] sm:$0xff]
  %v1034 = vld [vmem:[%s4 + $0x128] sm:$0xff]
  %v1035 = vld [vmem:[%s4 + $0x130] sm:$0xff]
  %v1036 = vld [vmem:[%s4 + $0x138] sm:$0xff]
  %v1037 = vld [vmem:[%s4 + $0x140] sm:$0xff]
  %v1038 = vld [vmem:[%s4 + $0x148] sm:$0xff]
  %v1039 = vld [vmem:[%s4 + $0x150] sm:$0xff]
  %v1040 = vld [vmem:[%s4 + $0x158] sm:$0xff]
  %v1041 = vld [vmem:[%s4 + $0x160] sm:$0xff]
  %v1042 = vld [vmem:[%s4 + $0x168] sm:$0xff]
  %v1043 = vld [vmem:[%s4 + $0x170] sm:$0xff]
  %v1044 = vld [vmem:[%s4 + $0x178] sm:$0xff]
  %v1045 = vld [vmem:[%s4 + $0x180] sm:$0xff]
  %v1046 = vld [vmem:[%s4 + $0x188] sm:$0xff]
  %v1047 = vld [vmem:[%s4 + $0x190] sm:$0xff]
  %v1048 = vld [vmem:[%s4 + $0x198] sm:$0xff]
  %v1049 = vld [vmem:[%s4 + $0x1a0] sm:$0xff]
  %v1050 = vld [vmem:[%s4 + $0x1a8] sm:$0xff]
  %v1051 = vld [vmem:[%s4 + $0x1b0] sm:$0xff]
  %v1052 = vld [vmem:[%s4 + $0x1b8] sm:$0xff]
  %v1053 = vld [vmem:[%s4 + $0x1c0] sm:$0xff]
  %v1054 = vld [vmem:[%s4 + $0x1c8] sm:$0xff]
  %v1055 = vld [vmem:[%s4 + $0x1d0] sm:$0xff]
  %v1056 = vld [vmem:[%s4 + $0x1d8] sm:$0xff]
  %v1057 = vld [vmem:[%s4 + $0x1e0] sm:$0xff]
  %v1058 = vld [vmem:[%s4 + $0x1e8] sm:$0xff]
  %v1059 = vld [vmem:[%s4 + $0x1f0] sm:$0xff]
  %v1060 = vld [vmem:[%s4 + $0x1f8] sm:$0xff]
  %v1061 = vld [vmem:[%s4 + $0x200] sm:$0xff]
  %v1062 = vld [vmem:[%s4 + $0x208] sm:$0xff]
  %v1063 = vld [vmem:[%s4 + $0x210] sm:$0xff]
  %v1064 = vld [vmem:[%s4 + $0x218] sm:$0xff]
  %v1065 = vld [vmem:[%s4 + $0x220] sm:$0xff]
  %v1066 = vld [vmem:[%s4 + $0x228] sm:$0xff]
  %v1067 = vld [vmem:[%s4 + $0x230] sm:$0xff]
  %v1068 = vld [vmem:[%s4 + $0x238] sm:$0xff]
  %v1069 = vld [vmem:[%s4 + $0x240] sm:$0xff]
  %v1070 = vld [vmem:[%s4 + $0x248] sm:$0xff]
  %v1071 = vld [vmem:[%s4 + $0x250] sm:$0xff]
  %v1072 = vld [vmem:[%s4 + $0x258] sm:$0xff]
  %v1073 = vld [vmem:[%s4 + $0x260] sm:$0xff]
  %v1074 = vld [vmem:[%s4 + $0x268] sm:$0xff]
  %v1075 = vld [vmem:[%s4 + $0x270] sm:$0xff]
  %v1076 = vld [vmem:[%s4 + $0x278] sm:$0xff]
  %v1077 = vld [vmem:[%s4 + $0x280] sm:$0xff]
  %v1078 = vld [vmem:[%s4 + $0x288] sm:$0xff]
  %v1079 = vld [vmem:[%s4 + $0x290] sm:$0xff]
  %v1080 = vld [vmem:[%s4 + $0x298] sm:$0xff]
  %v1081 = vld [vmem:[%s4 + $0x2a0] sm:$0xff]
  %v1082 = vld [vmem:[%s4 + $0x2a8] sm:$0xff]
  %v1083 = vld [vmem:[%s4 + $0x2b0] sm:$0xff]
  %v1084 = vld [vmem:[%s4 + $0x2b8] sm:$0xff]
  %v1085 = vld [vmem:[%s4 + $0x2c0] sm:$0xff]
  %v1086 = vld [vmem:[%s4 + $0x2c8] sm:$0xff]
  %v1087 = vld [vmem:[%s4 + $0x2d0] sm:$0xff]
  %v1088 = vld [vmem:[%s4 + $0x2d8] sm:$0xff]
  %v1089 = vld [vmem:[%s4 + $0x2e0] sm:$0xff]
  %v1090 = vld [vmem:[%s4 + $0x2e8] sm:$0xff]
  %v1091 = vld [vmem:[%s4 + $0x2f0] sm:$0xff]
  %v1092 = vld [vmem:[%s4 + $0x2f8] sm:$0xff]
  %v1093 = vld [vmem:[%s4 + $0x300] sm:$0xff]
  %v1094 = vld [vmem:[%s4 + $0x308] sm:$0xff]
  %v1095 = vld [vmem:[%s4 + $0x310] sm:$0xff]
  %v1096 = vld [vmem:[%s4 + $0x318] sm:$0xff]
  %v1097 = vld [vmem:[%s4 + $0x320] sm:$0xff]
  %v1098 = vld [vmem:[%s4 + $0x328] sm:$0xff]
  %v1099 = vld [vmem:[%s4 + $0x330] sm:$0xff]
  %v1100 = vld [vmem:[%s4 + $0x338] sm:$0xff]
  %v1101 = vld [vmem:[%s4 + $0x340] sm:$0xff]
  %v1102 = vld [vmem:[%s4 + $0x348] sm:$0xff]
  %v1103 = vld [vmem:[%s4 + $0x350] sm:$0xff]
  %v1104 = vld [vmem:[%s4 + $0x358] sm:$0xff]
  %v1105 = vld [vmem:[%s4 + $0x360] sm:$0xff]
  %v1106 = vld [vmem:[%s4 + $0x368] sm:$0xff]
  %v1107 = vld [vmem:[%s4 + $0x370] sm:$0xff]
  %v1108 = vld [vmem:[%s4 + $0x378] sm:$0xff]
  %v1109 = vld [vmem:[%s4 + $0x380] sm:$0xff]
  %v1110 = vld [vmem:[%s4 + $0x388] sm:$0xff]
  %v1111 = vld [vmem:[%s4 + $0x390] sm:$0xff]
  %v1112 = vld [vmem:[%s4 + $0x398] sm:$0xff]
  %v1113 = vld [vmem:[%s4 + $0x3a0] sm:$0xff]
  %v1114 = vld [vmem:[%s4 + $0x3a8] sm:$0xff]
  %v1115 = vld [vmem:[%s4 + $0x3b0] sm:$0xff]
  %v1116 = vld [vmem:[%s4 + $0x3b8] sm:$0xff]
  %v1117 = vld [vmem:[%s4 + $0x3c0] sm:$0xff]
  %v1118 = vld [vmem:[%s4 + $0x3c8] sm:$0xff]
  %v1119 = vld [vmem:[%s4 + $0x3d0] sm:$0xff]
  %v1120 = vld [vmem:[%s4 + $0x3d8] sm:$0xff]
  %v1121 = vld [vmem:[%s4 + $0x3e0] sm:$0xff]
  %v1122 = vld [vmem:[%s4 + $0x3e8] sm:$0xff]
  %v1123 = vld [vmem:[%s4 + $0x3f0] sm:$0xff]
  %v1124 = vld [vmem:[%s4 + $0x3f8] sm:$0xff]
  %v1125 = vld [vmem:[%s4 + $0x400] sm:$0xff]
  %v1126 = vld [vmem:[%s4 + $0x408] sm:$0xff]
  %v1127 = vld [vmem:[%s4 + $0x410] sm:$0xff]
  %v1128 = vld [vmem:[%s4 + $0x418] sm:$0xff]
  %v1129 = vld [vmem:[%s4 + $0x420] sm:$0xff]
  %v1130 = vld [vmem:[%s4 + $0x428] sm:$0xff]
  %v1131 = vld [vmem:[%s4 + $0x430] sm:$0xff]
  %v1132 = vld [vmem:[%s4 + $0x438] sm:$0xff]
  %v1133 = vld [vmem:[%s4 + $0x440] sm:$0xff]
  %v1134 = vld [vmem:[%s4 + $0x448] sm:$0xff]
  %v1135 = vld [vmem:[%s4 + $0x450] sm:$0xff]
  %v1136 = vld [vmem:[%s4 + $0x458] sm:$0xff]
  %v1137 = vld [vmem:[%s4 + $0x460] sm:$0xff]
  %v1138 = vld [vmem:[%s4 + $0x468] sm:$0xff]
  %v1139 = vld [vmem:[%s4 + $0x470] sm:$0xff]
  %v1140 = vld [vmem:[%s4 + $0x478] sm:$0xff]
  %v1141 = vld [vmem:[%s4 + $0x480] sm:$0xff]
  %v1142 = vld [vmem:[%s4 + $0x488] sm:$0xff]
  %v1143 = vld [vmem:[%s4 + $0x490] sm:$0xff]
  %v1144 = vld [vmem:[%s4 + $0x498] sm:$0xff]
  %v1145 = vld [vmem:[%s4 + $0x4a0] sm:$0xff]
  %v1146 = vld [vmem:[%s4 + $0x4a8] sm:$0xff]
  %v1147 = vld [vmem:[%s4 + $0x4b0] sm:$0xff]
  %v1148 = vld [vmem:[%s4 + $0x4b8] sm:$0xff]
  %v1149 = vld [vmem:[%s4 + $0x4c0] sm:$0xff]
  %v1150 = vld [vmem:[%s4 + $0x4c8] sm:$0xff]
  %v1151 = vld [vmem:[%s4 + $0x4d0] sm:$0xff]
  %v1152 = vld [vmem:[%s4 + $0x4d8] sm:$0xff]
  %v1153 = vld [vmem:[%s4 + $0x4e0] sm:$0xff]
  %v1154 = vld [vmem:[%s4 + $0x4e8] sm:$0xff]
  %v1155 = vld [vmem:[%s4 + $0x4f0] sm:$0xff]
  %v1156 = vld [vmem:[%s4 + $0x4f8] sm:$0xff]
  %v1157 = vld [vmem:[%s4 + $0x500] sm:$0xff]
  %v1158 = vld [vmem:[%s4 + $0x508] sm:$0xff]
  %v1159 = vld [vmem:[%s4 + $0x510] sm:$0xff]
  %v1160 = vld [vmem:[%s4 + $0x518] sm:$0xff]
  %v1161 = vld [vmem:[%s4 + $0x520] sm:$0xff]
  %v1162 = vld [vmem:[%s4 + $0x528] sm:$0xff]
  %v1163 = vld [vmem:[%s4 + $0x530] sm:$0xff]
  %v1164 = vld [vmem:[%s4 + $0x538] sm:$0xff]
  %v1165 = vld [vmem:[%s4 + $0x540] sm:$0xff]
  %v1166 = vld [vmem:[%s4 + $0x548] sm:$0xff]
  %v1167 = vld [vmem:[%s4 + $0x550] sm:$0xff]
  %v1168 = vld [vmem:[%s4 + $0x558] sm:$0xff]
  %v1169 = vld [vmem:[%s4 + $0x560] sm:$0xff]
  %v1170 = vld [vmem:[%s4 + $0x568] sm:$0xff]
  %v1171 = vld [vmem:[%s4 + $0x570] sm:$0xff]
  %v1172 = vld [vmem:[%s4 + $0x578] sm:$0xff]
  %v1173 = vld [vmem:[%s4 + $0x580] sm:$0xff]
  %v1174 = vld [vmem:[%s4 + $0x588] sm:$0xff]
  %v1175 = vld [vmem:[%s4 + $0x590] sm:$0xff]
  %v1176 = vld [vmem:[%s4 + $0x598] sm:$0xff]
  %v1177 = vld [vmem:[%s4 + $0x5a0] sm:$0xff]
  %v1178 = vld [vmem:[%s4 + $0x5a8] sm:$0xff]
  %v1179 = vld [vmem:[%s4 + $0x5b0] sm:$0xff]
  %v1180 = vld [vmem:[%s4 + $0x5b8] sm:$0xff]
  %v1181 = vld [vmem:[%s4 + $0x5c0] sm:$0xff]
  %v1182 = vld [vmem:[%s4 + $0x5c8] sm:$0xff]
  %v1183 = vld [vmem:[%s4 + $0x5d0] sm:$0xff]
  %v1184 = vld [vmem:[%s4 + $0x5d8] sm:$0xff]
  %v1185 = vld [vmem:[%s4 + $0x5e0] sm:$0xff]
  %v1186 = vld [vmem:[%s4 + $0x5e8] sm:$0xff]
  %v1187 = vld [vmem:[%s4 + $0x5f0] sm:$0xff]
  %v1188 = vld [vmem:[%s4 + $0x5f8] sm:$0xff]
  %v1189 = vld [vmem:[%s4 + $0x600] sm:$0xff]
  %v1190 = vld [vmem:[%s4 + $0x608] sm:$0xff]
  %v1191 = vld [vmem:[%s4 + $0x610] sm:$0xff]
  %v1192 = vld [vmem:[%s4 + $0x618] sm:$0xff]
  %v1193 = vld [vmem:[%s4 + $0x620] sm:$0xff]
  %v1194 = vld [vmem:[%s4 + $0x628] sm:$0xff]
  %v1195 = vld [vmem:[%s4 + $0x630] sm:$0xff]
  %v1196 = vld [vmem:[%s4 + $0x638] sm:$0xff]
  %v1197 = vld [vmem:[%s4 + $0x640] sm:$0xff]
  %v1198 = vld [vmem:[%s4 + $0x648] sm:$0xff]
  %v1199 = vld [vmem:[%s4 + $0x650] sm:$0xff]
  %v1200 = vld [vmem:[%s4 + $0x658] sm:$0xff]
  %v1201 = vld [vmem:[%s4 + $0x660] sm:$0xff]
  %v1202 = vld [vmem:[%s4 + $0x668] sm:$0xff]
  %v1203 = vld [vmem:[%s4 + $0x670] sm:$0xff]
  %v1204 = vld [vmem:[%s4 + $0x678] sm:$0xff]
  %v1205 = vld [vmem:[%s4 + $0x680] sm:$0xff]
  %v1206 = vld [vmem:[%s4 + $0x688] sm:$0xff]
  %v1207 = vld [vmem:[%s4 + $0x690] sm:$0xff]
  %v1208 = vld [vmem:[%s4 + $0x698] sm:$0xff]
  %v1209 = vld [vmem:[%s4 + $0x6a0] sm:$0xff]
  %v1210 = vld [vmem:[%s4 + $0x6a8] sm:$0xff]
  %v1211 = vld [vmem:[%s4 + $0x6b0] sm:$0xff]
  %v1212 = vld [vmem:[%s4 + $0x6b8] sm:$0xff]
  %v1213 = vld [vmem:[%s4 + $0x6c0] sm:$0xff]
  %v1214 = vld [vmem:[%s4 + $0x6c8] sm:$0xff]
  %v1215 = vld [vmem:[%s4 + $0x6d0] sm:$0xff]
  %v1216 = vld [vmem:[%s4 + $0x6d8] sm:$0xff]
  %v1217 = vld [vmem:[%s4 + $0x6e0] sm:$0xff]
  %v1218 = vld [vmem:[%s4 + $0x6e8] sm:$0xff]
  %v1219 = vld [vmem:[%s4 + $0x6f0] sm:$0xff]
  %v1220 = vld [vmem:[%s4 + $0x6f8] sm:$0xff]
  %v1221 = vld [vmem:[%s4 + $0x700] sm:$0xff]
  %v1222 = vld [vmem:[%s4 + $0x708] sm:$0xff]
  %v1223 = vld [vmem:[%s4 + $0x710] sm:$0xff]
  %v1224 = vld [vmem:[%s4 + $0x718] sm:$0xff]
  %v1225 = vld [vmem:[%s4 + $0x720] sm:$0xff]
  %v1226 = vld [vmem:[%s4 + $0x728] sm:$0xff]
  %v1227 = vld [vmem:[%s4 + $0x730] sm:$0xff]
  %v1228 = vld [vmem:[%s4 + $0x738] sm:$0xff]
  %v1229 = vld [vmem:[%s4 + $0x740] sm:$0xff]
  %v1230 = vld [vmem:[%s4 + $0x748] sm:$0xff]
  %v1231 = vld [vmem:[%s4 + $0x750] sm:$0xff]
  %v1232 = vld [vmem:[%s4 + $0x758] sm:$0xff]
  %v1233 = vld [vmem:[%s4 + $0x760] sm:$0xff]
  %v1234 = vld [vmem:[%s4 + $0x768] sm:$0xff]
  %v1235 = vld [vmem:[%s4 + $0x770] sm:$0xff]
  %v1236 = vld [vmem:[%s4 + $0x778] sm:$0xff]
  %v1237 = vld [vmem:[%s4 + $0x780] sm:$0xff]
  %v1238 = vld [vmem:[%s4 + $0x788] sm:$0xff]
  %v1239 = vld [vmem:[%s4 + $0x790] sm:$0xff]
  %v1240 = vld [vmem:[%s4 + $0x798] sm:$0xff]
  %v1241 = vld [vmem:[%s4 + $0x7a0] sm:$0xff]
  %v1242 = vld [vmem:[%s4 + $0x7a8] sm:$0xff]
  %v1243 = vld [vmem:[%s4 + $0x7b0] sm:$0xff]
  %v1244 = vld [vmem:[%s4 + $0x7b8] sm:$0xff]
  %v1245 = vld [vmem:[%s4 + $0x7c0] sm:$0xff]
  %v1246 = vld [vmem:[%s4 + $0x7c8] sm:$0xff]
  %v1247 = vld [vmem:[%s4 + $0x7d0] sm:$0xff]
  %v1248 = vld [vmem:[%s4 + $0x7d8] sm:$0xff]
  %v1249 = vld [vmem:[%s4 + $0x7e0] sm:$0xff]
  %v1250 = vld [vmem:[%s4 + $0x7e8] sm:$0xff]
  %v1251 = vld [vmem:[%s4 + $0x7f0] sm:$0xff]
  %v1252 = vld [vmem:[%s4 + $0x7f8] sm:$0xff]
  %v1253 = vld [vmem:[%s4 + $0x800] sm:$0xff]
  %v1254 = vld [vmem:[%s4 + $0x808] sm:$0xff]
  %v1255 = vld [vmem:[%s4 + $0x810] sm:$0xff]
  %v1256 = vld [vmem:[%s4 + $0x818] sm:$0xff]
  %v1257 = vld [vmem:[%s4 + $0x820] sm:$0xff]
  %v1258 = vld [vmem:[%s4 + $0x828] sm:$0xff]
  %v1259 = vld [vmem:[%s4 + $0x830] sm:$0xff]
  %v1260 = vld [vmem:[%s4 + $0x838] sm:$0xff]
  %v1261 = vld [vmem:[%s4 + $0x840] sm:$0xff]
  %v1262 = vld [vmem:[%s4 + $0x848] sm:$0xff]
  %v1263 = vld [vmem:[%s4 + $0x850] sm:$0xff]
  %v1264 = vld [vmem:[%s4 + $0x858] sm:$0xff]
  %v1265 = vld [vmem:[%s4 + $0x860] sm:$0xff]
  %v1266 = vld [vmem:[%s4 + $0x868] sm:$0xff]
  %v1267 = vld [vmem:[%s4 + $0x870] sm:$0xff]
  %v1268 = vld [vmem:[%s4 + $0x878] sm:$0xff]
  %v1269 = vld [vmem:[%s4 + $0x880] sm:$0xff]
  %v1270 = vld [vmem:[%s4 + $0x888] sm:$0xff]
  %v1271 = vld [vmem:[%s4 + $0x890] sm:$0xff]
  %v1272 = vld [vmem:[%s4 + $0x898] sm:$0xff]
  %v1273 = vld [vmem:[%s4 + $0x8a0] sm:$0xff]
  %v1274 = vld [vmem:[%s4 + $0x8a8] sm:$0xff]
  %v1275 = vld [vmem:[%s4 + $0x8b0] sm:$0xff]
  %v1276 = vld [vmem:[%s4 + $0x8b8] sm:$0xff]
  %v1277 = vld [vmem:[%s4 + $0x8c0] sm:$0xff]
  %v1278 = vld [vmem:[%s4 + $0x8c8] sm:$0xff]
  %v1279 = vld [vmem:[%s4 + $0x8d0] sm:$0xff]
  %v1280 = vld [vmem:[%s4 + $0x8d8] sm:$0xff]
  %v1281 = vld [vmem:[%s4 + $0x8e0] sm:$0xff]
  %v1282 = vld [vmem:[%s4 + $0x8e8] sm:$0xff]
  %v1283 = vld [vmem:[%s4 + $0x8f0] sm:$0xff]
  %v1284 = vld [vmem:[%s4 + $0x8f8] sm:$0xff]
  %v1285 = vld [vmem:[%s4 + $0x900] sm:$0xff]
  %v1286 = vld [vmem:[%s4 + $0x908] sm:$0xff]
  %v1287 = vld [vmem:[%s4 + $0x910] sm:$0xff]
  %v1288 = vld [vmem:[%s4 + $0x918] sm:$0xff]
  %v1289 = vld [vmem:[%s4 + $0x920] sm:$0xff]
  %v1290 = vld [vmem:[%s4 + $0x928] sm:$0xff]
  %v1291 = vld [vmem:[%s4 + $0x930] sm:$0xff]
  %v1292 = vld [vmem:[%s4 + $0x938] sm:$0xff]
  %v1293 = vld [vmem:[%s4 + $0x940] sm:$0xff]
  %v1294 = vld [vmem:[%s4 + $0x948] sm:$0xff]
  %v1295 = vld [vmem:[%s4 + $0x950] sm:$0xff]
  %v1296 = vld [vmem:[%s4 + $0x958] sm:$0xff]
  %v1297 = vld [vmem:[%s4 + $0x960] sm:$0xff]
  %v1298 = vld [vmem:[%s4 + $0x968] sm:$0xff]
  %v1299 = vld [vmem:[%s4 + $0x970] sm:$0xff]
  %v1300 = vld [vmem:[%s4 + $0x978] sm:$0xff]
  %v1301 = vld [vmem:[%s4 + $0x980] sm:$0xff]
  %v1302 = vld [vmem:[%s4 + $0x988] sm:$0xff]
  %v1303 = vld [vmem:[%s4 + $0x990] sm:$0xff]
  %v1304 = vld [vmem:[%s4 + $0x998] sm:$0xff]
  %v1305 = vld [vmem:[%s4 + $0x9a0] sm:$0xff]
  %v1306 = vld [vmem:[%s4 + $0x9a8] sm:$0xff]
  %v1307 = vld [vmem:[%s4 + $0x9b0] sm:$0xff]
  %v1308 = vld [vmem:[%s4 + $0x9b8] sm:$0xff]
  %v1309 = vld [vmem:[%s4 + $0x9c0] sm:$0xff]
  %v1310 = vld [vmem:[%s4 + $0x9c8] sm:$0xff]
  %v1311 = vld [vmem:[%s4 + $0x9d0] sm:$0xff]
  %v1312 = vld [vmem:[%s4 + $0x9d8] sm:$0xff]
  %v1313 = vld [vmem:[%s4 + $0x9e0] sm:$0xff]
  %v1314 = vld [vmem:[%s4 + $0x9e8] sm:$0xff]
  %v1315 = vld [vmem:[%s4 + $0x9f0] sm:$0xff]
  %v1316 = vld [vmem:[%s4 + $0x9f8] sm:$0xff]
  %v1317 = vld [vmem:[%s4 + $0xa00] sm:$0xff]
  %v1318 = vld [vmem:[%s4 + $0xa08] sm:$0xff]
  %v1319 = vld [vmem:[%s4 + $0xa10] sm:$0xff]
  %v1320 = vld [vmem:[%s4 + $0xa18] sm:$0xff]
  %v1321 = vld [vmem:[%s4 + $0xa20] sm:$0xff]
  %v1322 = vld [vmem:[%s4 + $0xa28] sm:$0xff]
  %v1323 = vld [vmem:[%s4 + $0xa30] sm:$0xff]
  %v1324 = vld [vmem:[%s4 + $0xa38] sm:$0xff]
  %v1325 = vld [vmem:[%s4 + $0xa40] sm:$0xff]
  %v1326 = vld [vmem:[%s4 + $0xa48] sm:$0xff]
  %v1327 = vld [vmem:[%s4 + $0xa50] sm:$0xff]
  %v1328 = vld [vmem:[%s4 + $0xa58] sm:$0xff]
  %v1329 = vld [vmem:[%s4 + $0xa60] sm:$0xff]
  %v1330 = vld [vmem:[%s4 + $0xa68] sm:$0xff]
  %v1331 = vld [vmem:[%s4 + $0xa70] sm:$0xff]
  %v1332 = vld [vmem:[%s4 + $0xa78] sm:$0xff]
  %v1333 = vld [vmem:[%s4 + $0xa80] sm:$0xff]
  %v1334 = vld [vmem:[%s4 + $0xa88] sm:$0xff]
  %v1335 = vld [vmem:[%s4 + $0xa90] sm:$0xff]
  %v1336 = vld [vmem:[%s4 + $0xa98] sm:$0xff]
  %v1337 = vld [vmem:[%s4 + $0xaa0] sm:$0xff]
  %v1338 = vld [vmem:[%s4 + $0xaa8] sm:$0xff]
  %v1339 = vld [vmem:[%s4 + $0xab0] sm:$0xff]
  %v1340 = vld [vmem:[%s4 + $0xab8] sm:$0xff]
  %v1341 = vld [vmem:[%s4 + $0xac0] sm:$0xff]
  %v1342 = vld [vmem:[%s4 + $0xac8] sm:$0xff]
  %v1343 = vld [vmem:[%s4 + $0xad0] sm:$0xff]
  %v1344 = vld [vmem:[%s4 + $0xad8] sm:$0xff]
  %v1345 = vld [vmem:[%s4 + $0xae0] sm:$0xff]
  %v1346 = vld [vmem:[%s4 + $0xae8] sm:$0xff]
  %v1347 = vld [vmem:[%s4 + $0xaf0] sm:$0xff]
  %v1348 = vld [vmem:[%s4 + $0xaf8] sm:$0xff]
  %v1349 = vld [vmem:[%s4 + $0xb00] sm:$0xff]
  %v1350 = vld [vmem:[%s4 + $0xb08] sm:$0xff]
  %v1351 = vld [vmem:[%s4 + $0xb10] sm:$0xff]
  %v1352 = vld [vmem:[%s4 + $0xb18] sm:$0xff]
  %v1353 = vld [vmem:[%s4 + $0xb20] sm:$0xff]
  %v1354 = vld [vmem:[%s4 + $0xb28] sm:$0xff]
  %v1355 = vld [vmem:[%s4 + $0xb30] sm:$0xff]
  %v1356 = vld [vmem:[%s4 + $0xb38] sm:$0xff]
  %v1357 = vld [vmem:[%s4 + $0xb40] sm:$0xff]
  %v1358 = vld [vmem:[%s4 + $0xb48] sm:$0xff]
  %v1359 = vld [vmem:[%s4 + $0xb50] sm:$0xff]
  %v1360 = vld [vmem:[%s4 + $0xb58] sm:$0xff]
  %v1361 = vld [vmem:[%s4 + $0xb60] sm:$0xff]
  %v1362 = vld [vmem:[%s4 + $0xb68] sm:$0xff]
  %v1363 = vld [vmem:[%s4 + $0xb70] sm:$0xff]
  %v1364 = vld [vmem:[%s4 + $0xb78] sm:$0xff]
  %v1365 = vld [vmem:[%s4 + $0xb80] sm:$0xff]
  %v1366 = vld [vmem:[%s4 + $0xb88] sm:$0xff]
  %v1367 = vld [vmem:[%s4 + $0xb90] sm:$0xff]
  %v1368 = vld [vmem:[%s4 + $0xb98] sm:$0xff]
  %v1369 = vld [vmem:[%s4 + $0xba0] sm:$0xff]
  %v1370 = vld [vmem:[%s4 + $0xba8] sm:$0xff]
  %v1371 = vld [vmem:[%s4 + $0xbb0] sm:$0xff]
  %v1372 = vld [vmem:[%s4 + $0xbb8] sm:$0xff]
  %v1373 = vld [vmem:[%s4 + $0xbc0] sm:$0xff]
  %v1374 = vld [vmem:[%s4 + $0xbc8] sm:$0xff]
  %v1375 = vld [vmem:[%s4 + $0xbd0] sm:$0xff]
  %v1376 = vld [vmem:[%s4 + $0xbd8] sm:$0xff]
  %v1377 = vld [vmem:[%s4 + $0xbe0] sm:$0xff]
  %v1378 = vld [vmem:[%s4 + $0xbe8] sm:$0xff]
  %v1379 = vld [vmem:[%s4 + $0xbf0] sm:$0xff]
  %v1380 = vld [vmem:[%s4 + $0xbf8] sm:$0xff]
  %v1381 = vld [vmem:[%s4 + $0xc00] sm:$0xff]
  %v1382 = vld [vmem:[%s4 + $0xc08] sm:$0xff]
  %v1383 = vld [vmem:[%s4 + $0xc10] sm:$0xff]
  %v1384 = vld [vmem:[%s4 + $0xc18] sm:$0xff]
  %v1385 = vld [vmem:[%s4 + $0xc20] sm:$0xff]
  %v1386 = vld [vmem:[%s4 + $0xc28] sm:$0xff]
  %v1387 = vld [vmem:[%s4 + $0xc30] sm:$0xff]
  %v1388 = vld [vmem:[%s4 + $0xc38] sm:$0xff]
  %v1389 = vld [vmem:[%s4 + $0xc40] sm:$0xff]
  %v1390 = vld [vmem:[%s4 + $0xc48] sm:$0xff]
  %v1391 = vld [vmem:[%s4 + $0xc50] sm:$0xff]
  %v1392 = vld [vmem:[%s4 + $0xc58] sm:$0xff]
  %v1393 = vld [vmem:[%s4 + $0xc60] sm:$0xff]
  %v1394 = vld [vmem:[%s4 + $0xc68] sm:$0xff]
  %v1395 = vld [vmem:[%s4 + $0xc70] sm:$0xff]
  %v1396 = vld [vmem:[%s4 + $0xc78] sm:$0xff]
  %v1397 = vld [vmem:[%s4 + $0xc80] sm:$0xff]
  %v1398 = vld [vmem:[%s4 + $0xc88] sm:$0xff]
  %v1399 = vld [vmem:[%s4 + $0xc90] sm:$0xff]
  %v1400 = vld [vmem:[%s4 + $0xc98] sm:$0xff]
  %v1401 = vld [vmem:[%s4 + $0xca0] sm:$0xff]
  %v1402 = vld [vmem:[%s4 + $0xca8] sm:$0xff]
  %v1403 = vld [vmem:[%s4 + $0xcb0] sm:$0xff]
  %v1404 = vld [vmem:[%s4 + $0xcb8] sm:$0xff]
  %v1405 = vld [vmem:[%s4 + $0xcc0] sm:$0xff]
  %v1406 = vld [vmem:[%s4 + $0xcc8] sm:$0xff]
  %v1407 = vld [vmem:[%s4 + $0xcd0] sm:$0xff]
  %v1408 = vld [vmem:[%s4 + $0xcd8] sm:$0xff]
  %v1409 = vld [vmem:[%s4 + $0xce0] sm:$0xff]
  %v1410 = vld [vmem:[%s4 + $0xce8] sm:$0xff]
  %v1411 = vld [vmem:[%s4 + $0xcf0] sm:$0xff]
  %v1412 = vld [vmem:[%s4 + $0xcf8] sm:$0xff]
  %v1413 = vld [vmem:[%s4 + $0xd00] sm:$0xff]
  %v1414 = vld [vmem:[%s4 + $0xd08] sm:$0xff]
  %v1415 = vld [vmem:[%s4 + $0xd10] sm:$0xff]
  %v1416 = vld [vmem:[%s4 + $0xd18] sm:$0xff]
  %v1417 = vld [vmem:[%s4 + $0xd20] sm:$0xff]
  %v1418 = vld [vmem:[%s4 + $0xd28] sm:$0xff]
  %v1419 = vld [vmem:[%s4 + $0xd30] sm:$0xff]
  %v1420 = vld [vmem:[%s4 + $0xd38] sm:$0xff]
  %v1421 = vld [vmem:[%s4 + $0xd40] sm:$0xff]
  %v1422 = vld [vmem:[%s4 + $0xd48] sm:$0xff]
  %v1423 = vld [vmem:[%s4 + $0xd50] sm:$0xff]
  %v1424 = vld [vmem:[%s4 + $0xd58] sm:$0xff]
  %v1425 = vld [vmem:[%s4 + $0xd60] sm:$0xff]
  %v1426 = vld [vmem:[%s4 + $0xd68] sm:$0xff]
  %v1427 = vld [vmem:[%s4 + $0xd70] sm:$0xff]
  %v1428 = vld [vmem:[%s4 + $0xd78] sm:$0xff]
  %v1429 = vld [vmem:[%s4 + $0xd80] sm:$0xff]
  %v1430 = vld [vmem:[%s4 + $0xd88] sm:$0xff]
  %v1431 = vld [vmem:[%s4 + $0xd90] sm:$0xff]
  %v1432 = vld [vmem:[%s4 + $0xd98] sm:$0xff]
  %v1433 = vld [vmem:[%s4 + $0xda0] sm:$0xff]
  %v1434 = vld [vmem:[%s4 + $0xda8] sm:$0xff]
  %v1435 = vld [vmem:[%s4 + $0xdb0] sm:$0xff]
  %v1436 = vld [vmem:[%s4 + $0xdb8] sm:$0xff]
  %v1437 = vld [vmem:[%s4 + $0xdc0] sm:$0xff]
  %v1438 = vld [vmem:[%s4 + $0xdc8] sm:$0xff]
  %v1439 = vld [vmem:[%s4 + $0xdd0] sm:$0xff]
  %v1440 = vld [vmem:[%s4 + $0xdd8] sm:$0xff]
  %v1441 = vld [vmem:[%s4 + $0xde0] sm:$0xff]
  %v1442 = vld [vmem:[%s4 + $0xde8] sm:$0xff]
  %v1443 = vld [vmem:[%s4 + $0xdf0] sm:$0xff]
  %v1444 = vld [vmem:[%s4 + $0xdf8] sm:$0xff]
  %v1445 = vld [vmem:[%s4 + $0xe00] sm:$0xff]
  %v1446 = vld [vmem:[%s4 + $0xe08] sm:$0xff]
  %v1447 = vld [vmem:[%s4 + $0xe10] sm:$0xff]
  %v1448 = vld [vmem:[%s4 + $0xe18] sm:$0xff]
  %v1449 = vld [vmem:[%s4 + $0xe20] sm:$0xff]
  %v1450 = vld [vmem:[%s4 + $0xe28] sm:$0xff]
  %v1451 = vld [vmem:[%s4 + $0xe30] sm:$0xff]
  %v1452 = vld [vmem:[%s4 + $0xe38] sm:$0xff]
  %v1453 = vld [vmem:[%s4 + $0xe40] sm:$0xff]
  %v1454 = vld [vmem:[%s4 + $0xe48] sm:$0xff]
  %v1455 = vld [vmem:[%s4 + $0xe50] sm:$0xff]
  %v1456 = vld [vmem:[%s4 + $0xe58] sm:$0xff]
  %v1457 = vld [vmem:[%s4 + $0xe60] sm:$0xff]
  %v1458 = vld [vmem:[%s4 + $0xe68] sm:$0xff]
  %v1459 = vld [vmem:[%s4 + $0xe70] sm:$0xff]
  %v1460 = vld [vmem:[%s4 + $0xe78] sm:$0xff]
  %v1461 = vld [vmem:[%s4 + $0xe80] sm:$0xff]
  %v1462 = vld [vmem:[%s4 + $0xe88] sm:$0xff]
  %v1463 = vld [vmem:[%s4 + $0xe90] sm:$0xff]
  %v1464 = vld [vmem:[%s4 + $0xe98] sm:$0xff]
  %v1465 = vld [vmem:[%s4 + $0xea0] sm:$0xff]
  %v1466 = vld [vmem:[%s4 + $0xea8] sm:$0xff]
  %v1467 = vld [vmem:[%s4 + $0xeb0] sm:$0xff]
  %v1468 = vld [vmem:[%s4 + $0xeb8] sm:$0xff]
  %v1469 = vld [vmem:[%s4 + $0xec0] sm:$0xff]
  %v1470 = vld [vmem:[%s4 + $0xec8] sm:$0xff]
  %v1471 = vld [vmem:[%s4 + $0xed0] sm:$0xff]
  %v1472 = vld [vmem:[%s4 + $0xed8] sm:$0xff]
  %v1473 = vld [vmem:[%s4 + $0xee0] sm:$0xff]
  %v1474 = vld [vmem:[%s4 + $0xee8] sm:$0xff]
  %v1475 = vld [vmem:[%s4 + $0xef0] sm:$0xff]
  %v1476 = vld [vmem:[%s4 + $0xef8] sm:$0xff]
  %v1477 = vld [vmem:[%s4 + $0xf00] sm:$0xff]
  %v1478 = vld [vmem:[%s4 + $0xf08] sm:$0xff]
  %v1479 = vld [vmem:[%s4 + $0xf10] sm:$0xff]
  %v1480 = vld [vmem:[%s4 + $0xf18] sm:$0xff]
  %v1481 = vld [vmem:[%s4 + $0xf20] sm:$0xff]
  %v1482 = vld [vmem:[%s4 + $0xf28] sm:$0xff]
  %v1483 = vld [vmem:[%s4 + $0xf30] sm:$0xff]
  %v1484 = vld [vmem:[%s4 + $0xf38] sm:$0xff]
  %v1485 = vld [vmem:[%s4 + $0xf40] sm:$0xff]
  %v1486 = vld [vmem:[%s4 + $0xf48] sm:$0xff]
  %v1487 = vld [vmem:[%s4 + $0xf50] sm:$0xff]
  %v1488 = vld [vmem:[%s4 + $0xf58] sm:$0xff]
  %v1489 = vld [vmem:[%s4 + $0xf60] sm:$0xff]
  %v1490 = vld [vmem:[%s4 + $0xf68] sm:$0xff]
  %v1491 = vld [vmem:[%s4 + $0xf70] sm:$0xff]
  %v1492 = vld [vmem:[%s4 + $0xf78] sm:$0xff]
  %v1493 = vld [vmem:[%s4 + $0xf80] sm:$0xff]
  %v1494 = vld [vmem:[%s4 + $0xf88] sm:$0xff]
  %v1495 = vld [vmem:[%s4 + $0xf90] sm:$0xff]
  %v1496 = vld [vmem:[%s4 + $0xf98] sm:$0xff]
  %v1497 = vld [vmem:[%s4 + $0xfa0] sm:$0xff]
  %v1498 = vld [vmem:[%s4 + $0xfa8] sm:$0xff]
  %v1499 = vld [vmem:[%s4 + $0xfb0] sm:$0xff]
  %v1500 = vld [vmem:[%s4 + $0xfb8] sm:$0xff]
  %v1501 = vld [vmem:[%s4 + $0xfc0] sm:$0xff]
  %v1502 = vld [vmem:[%s4 + $0xfc8] sm:$0xff]
  %v1503 = vld [vmem:[%s4 + $0xfd0] sm:$0xff]
  %v1504 = vld [vmem:[%s4 + $0xfd8] sm:$0xff]
  %v1505 = vld [vmem:[%s4 + $0xfe0] sm:$0xff]
  %v1506 = vld [vmem:[%s4 + $0xfe8] sm:$0xff]
  %v1507 = vld [vmem:[%s4 + $0xff0] sm:$0xff]
  %v1508 = vld [vmem:[%s4 + $0xff8] sm:$0xff]
  %v1509 = vld [vmem:[%s4 + $0x1000] sm:$0xff]
  %v1510 = vld [vmem:[%s4 + $0x1008] sm:$0xff]
  %v1511 = vld [vmem:[%s4 + $0x1010] sm:$0xff]
  %v1512 = vld [vmem:[%s4 + $0x1018] sm:$0xff]
  %v1513 = vld [vmem:[%s4 + $0x1020] sm:$0xff]
  %v1514 = vld [vmem:[%s4 + $0x1028] sm:$0xff]
  %v1515 = vld [vmem:[%s4 + $0x1030] sm:$0xff]
  %v1516 = vld [vmem:[%s4 + $0x1038] sm:$0xff]
  %v1517 = vld [vmem:[%s4 + $0x1040] sm:$0xff]
  %v1518 = vld [vmem:[%s4 + $0x1048] sm:$0xff]
  %v1519 = vld [vmem:[%s4 + $0x1050] sm:$0xff]
  %v1520 = vld [vmem:[%s4 + $0x1058] sm:$0xff]
  %v1521 = vld [vmem:[%s4 + $0x1060] sm:$0xff]
  %v1522 = vld [vmem:[%s4 + $0x1068] sm:$0xff]
  %v1523 = vld [vmem:[%s4 + $0x1070] sm:$0xff]
  %v1524 = vld [vmem:[%s4 + $0x1078] sm:$0xff]
  %v1525 = vld [vmem:[%s4 + $0x1080] sm:$0xff]
  %v1526 = vld [vmem:[%s4 + $0x1088] sm:$0xff]
  %v1527 = vld [vmem:[%s4 + $0x1090] sm:$0xff]
  %v1528 = vld [vmem:[%s4 + $0x1098] sm:$0xff]
  %v1529 = vld [vmem:[%s4 + $0x10a0] sm:$0xff]
  %v1530 = vld [vmem:[%s4 + $0x10a8] sm:$0xff]
  %v1531 = vld [vmem:[%s4 + $0x10b0] sm:$0xff]
  %v1532 = vld [vmem:[%s4 + $0x10b8] sm:$0xff]
  %v1533 = vld [vmem:[%s4 + $0x10c0] sm:$0xff]
  %v1534 = vld [vmem:[%s4 + $0x10c8] sm:$0xff]
  %v1535 = vld [vmem:[%s4 + $0x10d0] sm:$0xff]
  %v1536 = vld [vmem:[%s4 + $0x10d8] sm:$0xff]
  %v1537 = vld [vmem:[%s4 + $0x10e0] sm:$0xff]
  %v1538 = vld [vmem:[%s4 + $0x10e8] sm:$0xff]
  %v1539 = vld [vmem:[%s4 + $0x10f0] sm:$0xff]
  %v1540 = vld [vmem:[%s4 + $0x10f8] sm:$0xff]
  %v1541 = vld [vmem:[%s4 + $0x1100] sm:$0xff]
  %v1542 = vld [vmem:[%s4 + $0x1108] sm:$0xff]
  %v1543 = vld [vmem:[%s4 + $0x1110] sm:$0xff]
  %v1544 = vld [vmem:[%s4 + $0x1118] sm:$0xff]
  %v1545 = vld [vmem:[%s4 + $0x1120] sm:$0xff]
  %v1546 = vld [vmem:[%s4 + $0x1128] sm:$0xff]
  %v1547 = vld [vmem:[%s4 + $0x1130] sm:$0xff]
  %v1548 = vld [vmem:[%s4 + $0x1138] sm:$0xff]
  %v1549 = vld [vmem:[%s4 + $0x1140] sm:$0xff]
  %v1550 = vld [vmem:[%s4 + $0x1148] sm:$0xff]
  %v1551 = vld [vmem:[%s4 + $0x1150] sm:$0xff]
  %v1552 = vld [vmem:[%s4 + $0x1158] sm:$0xff]
  %v1553 = vld [vmem:[%s4 + $0x1160] sm:$0xff]
  %v1554 = vld [vmem:[%s4 + $0x1168] sm:$0xff]
  %v1555 = vld [vmem:[%s4 + $0x1170] sm:$0xff]
  %v1556 = vld [vmem:[%s4 + $0x1178] sm:$0xff]
  %v1557 = vld [vmem:[%s4 + $0x1180] sm:$0xff]
  %v1558 = vld [vmem:[%s4 + $0x1188] sm:$0xff]
  %v1559 = vld [vmem:[%s4 + $0x1190] sm:$0xff]
  %v1560 = vld [vmem:[%s4 + $0x1198] sm:$0xff]
  %v1561 = vld [vmem:[%s4 + $0x11a0] sm:$0xff]
  %v1562 = vld [vmem:[%s4 + $0x11a8] sm:$0xff]
  %v1563 = vld [vmem:[%s4 + $0x11b0] sm:$0xff]
  %v1564 = vld [vmem:[%s4 + $0x11b8] sm:$0xff]
  %v1565 = vld [vmem:[%s4 + $0x11c0] sm:$0xff]
  %v1566 = vld [vmem:[%s4 + $0x11c8] sm:$0xff]
  %v1567 = vld [vmem:[%s4 + $0x11d0] sm:$0xff]
  %v1568 = vld [vmem:[%s4 + $0x11d8] sm:$0xff]
  %v1569 = vld [vmem:[%s4 + $0x11e0] sm:$0xff]
  %v1570 = vld [vmem:[%s4 + $0x11e8] sm:$0xff]
  %v1571 = vld [vmem:[%s4 + $0x11f0] sm:$0xff]
  %v1572 = vld [vmem:[%s4 + $0x11f8] sm:$0xff]
  %v1573 = vld [vmem:[%s4 + $0x1200] sm:$0xff]
  %v1574 = vld [vmem:[%s4 + $0x1208] sm:$0xff]
  %v1575 = vld [vmem:[%s4 + $0x1210] sm:$0xff]
  %v1576 = vld [vmem:[%s4 + $0x1218] sm:$0xff]
  %v1577 = vld [vmem:[%s4 + $0x1220] sm:$0xff]
  %v1578 = vld [vmem:[%s4 + $0x1228] sm:$0xff]
  %v1579 = vld [vmem:[%s4 + $0x1230] sm:$0xff]
  %v1580 = vld [vmem:[%s4 + $0x1238] sm:$0xff]
  %v1581 = vld [vmem:[%s4 + $0x1240] sm:$0xff]
  %v1582 = vld [vmem:[%s4 + $0x1248] sm:$0xff]
  %v1583 = vld [vmem:[%s4 + $0x1250] sm:$0xff]
  %v1584 = vld [vmem:[%s4 + $0x1258] sm:$0xff]
  %v1585 = vld [vmem:[%s4 + $0x1260] sm:$0xff]
  %v1586 = vld [vmem:[%s4 + $0x1268] sm:$0xff]
  %v1587 = vld [vmem:[%s4 + $0x1270] sm:$0xff]
  %v1588 = vld [vmem:[%s4 + $0x1278] sm:$0xff]
  %v1589 = vld [vmem:[%s4 + $0x1280] sm:$0xff]
  %v1590 = vld [vmem:[%s4 + $0x1288] sm:$0xff]
  %v1591 = vld [vmem:[%s4 + $0x1290] sm:$0xff]
  %v1592 = vld [vmem:[%s4 + $0x1298] sm:$0xff]
  %v1593 = vld [vmem:[%s4 + $0x12a0] sm:$0xff]
  %v1594 = vld [vmem:[%s4 + $0x12a8] sm:$0xff]
  %v1595 = vld [vmem:[%s4 + $0x12b0] sm:$0xff]
  %v1596 = vld [vmem:[%s4 + $0x12b8] sm:$0xff]
  %v1597 = vld [vmem:[%s4 + $0x12c0] sm:$0xff]
  %v1598 = vld [vmem:[%s4 + $0x12c8] sm:$0xff]
  %v1599 = vld [vmem:[%s4 + $0x12d0] sm:$0xff]
  %v1600 = vld [vmem:[%s4 + $0x12d8] sm:$0xff]
  %v1601 = vld [vmem:[%s4 + $0x12e0] sm:$0xff]
  %v1602 = vld [vmem:[%s4 + $0x12e8] sm:$0xff]
  %v1603 = vld [vmem:[%s4 + $0x12f0] sm:$0xff]
  %v1604 = vld [vmem:[%s4 + $0x12f8] sm:$0xff]
  %v1605 = vld [vmem:[%s4 + $0x1300] sm:$0xff]
  %v1606 = vld [vmem:[%s4 + $0x1308] sm:$0xff]
  %v1607 = vld [vmem:[%s4 + $0x1310] sm:$0xff]
  %v1608 = vld [vmem:[%s4 + $0x1318] sm:$0xff]
  %v1609 = vld [vmem:[%s4 + $0x1320] sm:$0xff]
  %v1610 = vld [vmem:[%s4 + $0x1328] sm:$0xff]
  %v1611 = vld [vmem:[%s4 + $0x1330] sm:$0xff]
  %v1612 = vld [vmem:[%s4 + $0x1338] sm:$0xff]
  %v1613 = vld [vmem:[%s4 + $0x1340] sm:$0xff]
  %v1614 = vld [vmem:[%s4 + $0x1348] sm:$0xff]
  %v1615 = vld [vmem:[%s4 + $0x1350] sm:$0xff]
  %v1616 = vld [vmem:[%s4 + $0x1358] sm:$0xff]
  %v1617 = vld [vmem:[%s4 + $0x1360] sm:$0xff]
  %v1618 = vld [vmem:[%s4 + $0x1368] sm:$0xff]
  %v1619 = vld [vmem:[%s4 + $0x1370] sm:$0xff]
  %v1620 = vld [vmem:[%s4 + $0x1378] sm:$0xff]
  %v1621 = vld [vmem:[%s4 + $0x1380] sm:$0xff]
  %v1622 = vld [vmem:[%s4 + $0x1388] sm:$0xff]
  %v1623 = vld [vmem:[%s4 + $0x1390] sm:$0xff]
  %v1624 = vld [vmem:[%s4 + $0x1398] sm:$0xff]
  %v1625 = vld [vmem:[%s4 + $0x13a0] sm:$0xff]
  %v1626 = vld [vmem:[%s4 + $0x13a8] sm:$0xff]
  %v1627 = vld [vmem:[%s4 + $0x13b0] sm:$0xff]
  %v1628 = vld [vmem:[%s4 + $0x13b8] sm:$0xff]
  %v1629 = vld [vmem:[%s4 + $0x13c0] sm:$0xff]
  %v1630 = vld [vmem:[%s4 + $0x13c8] sm:$0xff]
  %v1631 = vld [vmem:[%s4 + $0x13d0] sm:$0xff]
  %v1632 = vld [vmem:[%s4 + $0x13d8] sm:$0xff]
  %v1633 = vld [vmem:[%s4 + $0x13e0] sm:$0xff]
  %v1634 = vld [vmem:[%s4 + $0x13e8] sm:$0xff]
  %v1635 = vld [vmem:[%s4 + $0x13f0] sm:$0xff]
  %v1636 = vld [vmem:[%s4 + $0x13f8] sm:$0xff]
  %v1637 = vld [vmem:[%s4 + $0x1400] sm:$0xff]
  %v1638 = vld [vmem:[%s4 + $0x1408] sm:$0xff]
  %v1639 = vld [vmem:[%s4 + $0x1410] sm:$0xff]
  %v1640 = vld [vmem:[%s4 + $0x1418] sm:$0xff]
  %v1641 = vld [vmem:[%s4 + $0x1420] sm:$0xff]
  %v1642 = vld [vmem:[%s4 + $0x1428] sm:$0xff]
  %v1643 = vld [vmem:[%s4 + $0x1430] sm:$0xff]
  %v1644 = vld [vmem:[%s4 + $0x1438] sm:$0xff]
  %v1645 = vld [vmem:[%s4 + $0x1440] sm:$0xff]
  %v1646 = vld [vmem:[%s4 + $0x1448] sm:$0xff]
  %v1647 = vld [vmem:[%s4 + $0x1450] sm:$0xff]
  %v1648 = vld [vmem:[%s4 + $0x1458] sm:$0xff]
  %v1649 = vld [vmem:[%s4 + $0x1460] sm:$0xff]
  %v1650 = vld [vmem:[%s4 + $0x1468] sm:$0xff]
  %v1651 = vld [vmem:[%s4 + $0x1470] sm:$0xff]
  %v1652 = vld [vmem:[%s4 + $0x1478] sm:$0xff]
  %v1653 = vld [vmem:[%s4 + $0x1480] sm:$0xff]
  %v1654 = vld [vmem:[%s4 + $0x1488] sm:$0xff]
  %v1655 = vld [vmem:[%s4 + $0x1490] sm:$0xff]
  %v1656 = vld [vmem:[%s4 + $0x1498] sm:$0xff]
  %v1657 = vld [vmem:[%s4 + $0x14a0] sm:$0xff]
  %v1658 = vld [vmem:[%s4 + $0x14a8] sm:$0xff]
  %v1659 = vld [vmem:[%s4 + $0x14b0] sm:$0xff]
  %v1660 = vld [vmem:[%s4 + $0x14b8] sm:$0xff]
  %v1661 = vld [vmem:[%s4 + $0x14c0] sm:$0xff]
  %v1662 = vld [vmem:[%s4 + $0x14c8] sm:$0xff]
  %v1663 = vld [vmem:[%s4 + $0x14d0] sm:$0xff]
  %v1664 = vld [vmem:[%s4 + $0x14d8] sm:$0xff]
  %v1665 = vld [vmem:[%s4 + $0x14e0] sm:$0xff]
  %v1666 = vld [vmem:[%s4 + $0x14e8] sm:$0xff]
  %v1667 = vld [vmem:[%s4 + $0x14f0] sm:$0xff]
  %v1668 = vld [vmem:[%s4 + $0x14f8] sm:$0xff]
  %v1669 = vld [vmem:[%s4 + $0x1500] sm:$0xff]
  %v1670 = vld [vmem:[%s4 + $0x1508] sm:$0xff]
  %v1671 = vld [vmem:[%s4 + $0x1510] sm:$0xff]
  %v1672 = vld [vmem:[%s4 + $0x1518] sm:$0xff]
  %v1673 = vld [vmem:[%s4 + $0x1520] sm:$0xff]
  %v1674 = vld [vmem:[%s4 + $0x1528] sm:$0xff]
  %v1675 = vld [vmem:[%s4 + $0x1530] sm:$0xff]
  %v1676 = vld [vmem:[%s4 + $0x1538] sm:$0xff]
  %v1677 = vld [vmem:[%s4 + $0x1540] sm:$0xff]
  %v1678 = vld [vmem:[%s4 + $0x1548] sm:$0xff]
  %v1679 = vld [vmem:[%s4 + $0x1550] sm:$0xff]
  %v1680 = vld [vmem:[%s4 + $0x1558] sm:$0xff]
  %v1681 = vld [vmem:[%s4 + $0x1560] sm:$0xff]
  %v1682 = vld [vmem:[%s4 + $0x1568] sm:$0xff]
  %v1683 = vld [vmem:[%s4 + $0x1570] sm:$0xff]
  %v1684 = vld [vmem:[%s4 + $0x1578] sm:$0xff]
  %v1685 = vld [vmem:[%s4 + $0x1580] sm:$0xff]
  %v1686 = vld [vmem:[%s4 + $0x1588] sm:$0xff]
  %v1687 = vld [vmem:[%s4 + $0x1590] sm:$0xff]
  %v1688 = vld [vmem:[%s4 + $0x1598] sm:$0xff]
  %v1689 = vld [vmem:[%s4 + $0x15a0] sm:$0xff]
  %v1690 = vld [vmem:[%s4 + $0x15a8] sm:$0xff]
  %v1691 = vld [vmem:[%s4 + $0x15b0] sm:$0xff]
  %v1692 = vld [vmem:[%s4 + $0x15b8] sm:$0xff]
  %v1693 = vld [vmem:[%s4 + $0x15c0] sm:$0xff]
  %v1694 = vld [vmem:[%s4 + $0x15c8] sm:$0xff]
  %v1695 = vld [vmem:[%s4 + $0x15d0] sm:$0xff]
  %v1696 = vld [vmem:[%s4 + $0x15d8] sm:$0xff]
  %v1697 = vld [vmem:[%s4 + $0x15e0] sm:$0xff]
  %v1698 = vld [vmem:[%s4 + $0x15e8] sm:$0xff]
  %v1699 = vld [vmem:[%s4 + $0x15f0] sm:$0xff]
  %v1700 = vld [vmem:[%s4 + $0x15f8] sm:$0xff]
  %v1701 = vld [vmem:[%s4 + $0x1600] sm:$0xff]
  %v1702 = vld [vmem:[%s4 + $0x1608] sm:$0xff]
  %v1703 = vld [vmem:[%s4 + $0x1610] sm:$0xff]
  %v1704 = vld [vmem:[%s4 + $0x1618] sm:$0xff]
  %v1705 = vld [vmem:[%s4 + $0x1620] sm:$0xff]
  %v1706 = vld [vmem:[%s4 + $0x1628] sm:$0xff]
  %v1707 = vld [vmem:[%s4 + $0x1630] sm:$0xff]
  %v1708 = vld [vmem:[%s4 + $0x1638] sm:$0xff]
  %v1709 = vld [vmem:[%s4 + $0x1640] sm:$0xff]
  %v1710 = vld [vmem:[%s4 + $0x1648] sm:$0xff]
  %v1711 = vld [vmem:[%s4 + $0x1650] sm:$0xff]
  %v1712 = vld [vmem:[%s4 + $0x1658] sm:$0xff]
  %v1713 = vld [vmem:[%s4 + $0x1660] sm:$0xff]
  %v1714 = vld [vmem:[%s4 + $0x1668] sm:$0xff]
  %v1715 = vld [vmem:[%s4 + $0x1670] sm:$0xff]
  %v1716 = vld [vmem:[%s4 + $0x1678] sm:$0xff]
  %v1717 = vld [vmem:[%s4 + $0x1680] sm:$0xff]
  %v1718 = vld [vmem:[%s4 + $0x1688] sm:$0xff]
  %v1719 = vld [vmem:[%s4 + $0x1690] sm:$0xff]
  %v1720 = vld [vmem:[%s4 + $0x1698] sm:$0xff]
  %v1721 = vld [vmem:[%s4 + $0x16a0] sm:$0xff]
  %v1722 = vld [vmem:[%s4 + $0x16a8] sm:$0xff]
  %v1723 = vld [vmem:[%s4 + $0x16b0] sm:$0xff]
  %v1724 = vld [vmem:[%s4 + $0x16b8] sm:$0xff]
  %v1725 = vld [vmem:[%s4 + $0x16c0] sm:$0xff]
  %v1726 = vld [vmem:[%s4 + $0x16c8] sm:$0xff]
  %v1727 = vld [vmem:[%s4 + $0x16d0] sm:$0xff]
  %v1728 = vld [vmem:[%s4 + $0x16d8] sm:$0xff]
  %v1729 = vld [vmem:[%s4 + $0x16e0] sm:$0xff]
  %v1730 = vld [vmem:[%s4 + $0x16e8] sm:$0xff]
  %v1731 = vld [vmem:[%s4 + $0x16f0] sm:$0xff]
  %v1732 = vld [vmem:[%s4 + $0x16f8] sm:$0xff]
  %v1733 = vld [vmem:[%s4 + $0x1700] sm:$0xff]
  %v1734 = vld [vmem:[%s4 + $0x1708] sm:$0xff]
  %v1735 = vld [vmem:[%s4 + $0x1710] sm:$0xff]
  %v1736 = vld [vmem:[%s4 + $0x1718] sm:$0xff]
  %v1737 = vld [vmem:[%s4 + $0x1720] sm:$0xff]
  %v1738 = vld [vmem:[%s4 + $0x1728] sm:$0xff]
  %v1739 = vld [vmem:[%s4 + $0x1730] sm:$0xff]
  %v1740 = vld [vmem:[%s4 + $0x1738] sm:$0xff]
  %v1741 = vld [vmem:[%s4 + $0x1740] sm:$0xff]
  %v1742 = vld [vmem:[%s4 + $0x1748] sm:$0xff]
  %v1743 = vld [vmem:[%s4 + $0x1750] sm:$0xff]
  %v1744 = vld [vmem:[%s4 + $0x1758] sm:$0xff]
  %v1745 = vld [vmem:[%s4 + $0x1760] sm:$0xff]
  %v1746 = vld [vmem:[%s4 + $0x1768] sm:$0xff]
  %v1747 = vld [vmem:[%s4 + $0x1770] sm:$0xff]
  %v1748 = vld [vmem:[%s4 + $0x1778] sm:$0xff]
  %v1749 = vld [vmem:[%s4 + $0x1780] sm:$0xff]
  %v1750 = vld [vmem:[%s4 + $0x1788] sm:$0xff]
  %v1751 = vld [vmem:[%s4 + $0x1790] sm:$0xff]
  %v1752 = vld [vmem:[%s4 + $0x1798] sm:$0xff]
  %v1753 = vld [vmem:[%s4 + $0x17a0] sm:$0xff]
  %v1754 = vld [vmem:[%s4 + $0x17a8] sm:$0xff]
  %v1755 = vld [vmem:[%s4 + $0x17b0] sm:$0xff]
  %v1756 = vld [vmem:[%s4 + $0x17b8] sm:$0xff]
  %v1757 = vld [vmem:[%s4 + $0x17c0] sm:$0xff]
  %v1758 = vld [vmem:[%s4 + $0x17c8] sm:$0xff]
  %v1759 = vld [vmem:[%s4 + $0x17d0] sm:$0xff]
  %v1760 = vld [vmem:[%s4 + $0x17d8] sm:$0xff]
  %v1761 = vld [vmem:[%s4 + $0x17e0] sm:$0xff]
  %v1762 = vld [vmem:[%s4 + $0x17e8] sm:$0xff]
  %v1763 = vld [vmem:[%s4 + $0x17f0] sm:$0xff]
  %v1764 = vld [vmem:[%s4 + $0x17f8] sm:$0xff]
  %v1765 = vld [vmem:[%s4 + $0x1800] sm:$0xff]
  %v1766 = vld [vmem:[%s4 + $0x1808] sm:$0xff]
  %v1767 = vld [vmem:[%s4 + $0x1810] sm:$0xff]
  %v1768 = vld [vmem:[%s4 + $0x1818] sm:$0xff]
  %v1769 = vld [vmem:[%s4 + $0x1820] sm:$0xff]
  %v1770 = vld [vmem:[%s4 + $0x1828] sm:$0xff]
  %v1771 = vld [vmem:[%s4 + $0x1830] sm:$0xff]
  %v1772 = vld [vmem:[%s4 + $0x1838] sm:$0xff]
  %v1773 = vld [vmem:[%s4 + $0x1840] sm:$0xff]
  %v1774 = vld [vmem:[%s4 + $0x1848] sm:$0xff]
  %v1775 = vld [vmem:[%s4 + $0x1850] sm:$0xff]
  %v1776 = vld [vmem:[%s4 + $0x1858] sm:$0xff]
  %v1777 = vld [vmem:[%s4 + $0x1860] sm:$0xff]
  %v1778 = vld [vmem:[%s4 + $0x1868] sm:$0xff]
  %v1779 = vld [vmem:[%s4 + $0x1870] sm:$0xff]
  %v1780 = vld [vmem:[%s4 + $0x1878] sm:$0xff]
  %v1781 = vld [vmem:[%s4 + $0x1880] sm:$0xff]
  %v1782 = vld [vmem:[%s4 + $0x1888] sm:$0xff]
  %v1783 = vld [vmem:[%s4 + $0x1890] sm:$0xff]
  %v1784 = vld [vmem:[%s4 + $0x1898] sm:$0xff]
  %v1785 = vld [vmem:[%s4 + $0x18a0] sm:$0xff]
  %v1786 = vld [vmem:[%s4 + $0x18a8] sm:$0xff]
  %v1787 = vld [vmem:[%s4 + $0x18b0] sm:$0xff]
  %v1788 = vld [vmem:[%s4 + $0x18b8] sm:$0xff]
  %v1789 = vld [vmem:[%s4 + $0x18c0] sm:$0xff]
  %v1790 = vld [vmem:[%s4 + $0x18c8] sm:$0xff]
  %v1791 = vld [vmem:[%s4 + $0x18d0] sm:$0xff]
  %v1792 = vld [vmem:[%s4 + $0x18d8] sm:$0xff]
  %v1793 = vld [vmem:[%s4 + $0x18e0] sm:$0xff]
  %v1794 = vld [vmem:[%s4 + $0x18e8] sm:$0xff]
  %v1795 = vld [vmem:[%s4 + $0x18f0] sm:$0xff]
  %v1796 = vld [vmem:[%s4 + $0x18f8] sm:$0xff]
  %v1797 = vld [vmem:[%s4 + $0x1900] sm:$0xff]
  %v1798 = vld [vmem:[%s4 + $0x1908] sm:$0xff]
  %v1799 = vld [vmem:[%s4 + $0x1910] sm:$0xff]
  %v1800 = vld [vmem:[%s4 + $0x1918] sm:$0xff]
  %v1801 = vld [vmem:[%s4 + $0x1920] sm:$0xff]
  %v1802 = vld [vmem:[%s4 + $0x1928] sm:$0xff]
  %v1803 = vld [vmem:[%s4 + $0x1930] sm:$0xff]
  %v1804 = vld [vmem:[%s4 + $0x1938] sm:$0xff]
  %v1805 = vld [vmem:[%s4 + $0x1940] sm:$0xff]
  %v1806 = vld [vmem:[%s4 + $0x1948] sm:$0xff]
  %v1807 = vld [vmem:[%s4 + $0x1950] sm:$0xff]
  %v1808 = vld [vmem:[%s4 + $0x1958] sm:$0xff]
  %v1809 = vld [vmem:[%s4 + $0x1960] sm:$0xff]
  %v1810 = vld [vmem:[%s4 + $0x1968] sm:$0xff]
  %v1811 = vld [vmem:[%s4 + $0x1970] sm:$0xff]
  %v1812 = vld [vmem:[%s4 + $0x1978] sm:$0xff]
  %v1813 = vld [vmem:[%s4 + $0x1980] sm:$0xff]
  %v1814 = vld [vmem:[%s4 + $0x1988] sm:$0xff]
  %v1815 = vld [vmem:[%s4 + $0x1990] sm:$0xff]
  %v1816 = vld [vmem:[%s4 + $0x1998] sm:$0xff]
  %v1817 = vld [vmem:[%s4 + $0x19a0] sm:$0xff]
  %v1818 = vld [vmem:[%s4 + $0x19a8] sm:$0xff]
  %v1819 = vld [vmem:[%s4 + $0x19b0] sm:$0xff]
  %v1820 = vld [vmem:[%s4 + $0x19b8] sm:$0xff]
  %v1821 = vld [vmem:[%s4 + $0x19c0] sm:$0xff]
  %v1822 = vld [vmem:[%s4 + $0x19c8] sm:$0xff]
  %v1823 = vld [vmem:[%s4 + $0x19d0] sm:$0xff]
  %v1824 = vld [vmem:[%s4 + $0x19d8] sm:$0xff]
  %v1825 = vld [vmem:[%s4 + $0x19e0] sm:$0xff]
  %v1826 = vld [vmem:[%s4 + $0x19e8] sm:$0xff]
  %v1827 = vld [vmem:[%s4 + $0x19f0] sm:$0xff]
  %v1828 = vld [vmem:[%s4 + $0x19f8] sm:$0xff]
  %v1829 = vld [vmem:[%s4 + $0x1a00] sm:$0xff]
  %v1830 = vld [vmem:[%s4 + $0x1a08] sm:$0xff]
  %v1831 = vld [vmem:[%s4 + $0x1a10] sm:$0xff]
  %v1832 = vld [vmem:[%s4 + $0x1a18] sm:$0xff]
  %v1833 = vld [vmem:[%s4 + $0x1a20] sm:$0xff]
  %v1834 = vld [vmem:[%s4 + $0x1a28] sm:$0xff]
  %v1835 = vld [vmem:[%s4 + $0x1a30] sm:$0xff]
  %v1836 = vld [vmem:[%s4 + $0x1a38] sm:$0xff]
  %v1837 = vld [vmem:[%s4 + $0x1a40] sm:$0xff]
  %v1838 = vld [vmem:[%s4 + $0x1a48] sm:$0xff]
  %v1839 = vld [vmem:[%s4 + $0x1a50] sm:$0xff]
  %v1840 = vld [vmem:[%s4 + $0x1a58] sm:$0xff]
  %v1841 = vld [vmem:[%s4 + $0x1a60] sm:$0xff]
  %v1842 = vld [vmem:[%s4 + $0x1a68] sm:$0xff]
  %v1843 = vld [vmem:[%s4 + $0x1a70] sm:$0xff]
  %v1844 = vld [vmem:[%s4 + $0x1a78] sm:$0xff]
  %v1845 = vld [vmem:[%s4 + $0x1a80] sm:$0xff]
  %v1846 = vld [vmem:[%s4 + $0x1a88] sm:$0xff]
  %v1847 = vld [vmem:[%s4 + $0x1a90] sm:$0xff]
  %v1848 = vld [vmem:[%s4 + $0x1a98] sm:$0xff]
  %v1849 = vld [vmem:[%s4 + $0x1aa0] sm:$0xff]
  %v1850 = vld [vmem:[%s4 + $0x1aa8] sm:$0xff]
  %v1851 = vld [vmem:[%s4 + $0x1ab0] sm:$0xff]
  %v1852 = vld [vmem:[%s4 + $0x1ab8] sm:$0xff]
  %v1853 = vld [vmem:[%s4 + $0x1ac0] sm:$0xff]
  %v1854 = vld [vmem:[%s4 + $0x1ac8] sm:$0xff]
  %v1855 = vld [vmem:[%s4 + $0x1ad0] sm:$0xff]
  %v1856 = vld [vmem:[%s4 + $0x1ad8] sm:$0xff]
  %v1857 = vld [vmem:[%s4 + $0x1ae0] sm:$0xff]
  %v1858 = vld [vmem:[%s4 + $0x1ae8] sm:$0xff]
  %v1859 = vld [vmem:[%s4 + $0x1af0] sm:$0xff]
  %v1860 = vld [vmem:[%s4 + $0x1af8] sm:$0xff]
  %v1861 = vld [vmem:[%s4 + $0x1b00] sm:$0xff]
  %v1862 = vld [vmem:[%s4 + $0x1b08] sm:$0xff]
  %v1863 = vld [vmem:[%s4 + $0x1b10] sm:$0xff]
  %v1864 = vld [vmem:[%s4 + $0x1b18] sm:$0xff]
  %v1865 = vld [vmem:[%s4 + $0x1b20] sm:$0xff]
  %v1866 = vld [vmem:[%s4 + $0x1b28] sm:$0xff]
  %v1867 = vld [vmem:[%s4 + $0x1b30] sm:$0xff]
  %v1868 = vld [vmem:[%s4 + $0x1b38] sm:$0xff]
  %v1869 = vld [vmem:[%s4 + $0x1b40] sm:$0xff]
  %v1870 = vld [vmem:[%s4 + $0x1b48] sm:$0xff]
  %v1871 = vld [vmem:[%s4 + $0x1b50] sm:$0xff]
  %v1872 = vld [vmem:[%s4 + $0x1b58] sm:$0xff]
  %v1873 = vld [vmem:[%s4 + $0x1b60] sm:$0xff]
  %v1874 = vld [vmem:[%s4 + $0x1b68] sm:$0xff]
  %v1875 = vld [vmem:[%s4 + $0x1b70] sm:$0xff]
  %v1876 = vld [vmem:[%s4 + $0x1b78] sm:$0xff]
  %v1877 = vld [vmem:[%s4 + $0x1b80] sm:$0xff]
  %v1878 = vld [vmem:[%s4 + $0x1b88] sm:$0xff]
  %v1879 = vld [vmem:[%s4 + $0x1b90] sm:$0xff]
  %v1880 = vld [vmem:[%s4 + $0x1b98] sm:$0xff]
  %v1881 = vld [vmem:[%s4 + $0x1ba0] sm:$0xff]
  %v1882 = vld [vmem:[%s4 + $0x1ba8] sm:$0xff]
  %v1883 = vld [vmem:[%s4 + $0x1bb0] sm:$0xff]
  %v1884 = vld [vmem:[%s4 + $0x1bb8] sm:$0xff]
  %v1885 = vld [vmem:[%s4 + $0x1bc0] sm:$0xff]
  %v1886 = vld [vmem:[%s4 + $0x1bc8] sm:$0xff]
  %v1887 = vld [vmem:[%s4 + $0x1bd0] sm:$0xff]
  %v1888 = vld [vmem:[%s4 + $0x1bd8] sm:$0xff]
  %v1889 = vld [vmem:[%s4 + $0x1be0] sm:$0xff]
  %v1890 = vld [vmem:[%s4 + $0x1be8] sm:$0xff]
  %v1891 = vld [vmem:[%s4 + $0x1bf0] sm:$0xff]
  %v1892 = vld [vmem:[%s4 + $0x1bf8] sm:$0xff]
  %v1893 = vld [vmem:[%s4 + $0x1c00] sm:$0xff]
  %v1894 = vld [vmem:[%s4 + $0x1c08] sm:$0xff]
  %v1895 = vld [vmem:[%s4 + $0x1c10] sm:$0xff]
  %v1896 = vld [vmem:[%s4 + $0x1c18] sm:$0xff]
  %v1897 = vld [vmem:[%s4 + $0x1c20] sm:$0xff]
  %v1898 = vld [vmem:[%s4 + $0x1c28] sm:$0xff]
  %v1899 = vld [vmem:[%s4 + $0x1c30] sm:$0xff]
  %v1900 = vld [vmem:[%s4 + $0x1c38] sm:$0xff]
  %v1901 = vld [vmem:[%s4 + $0x1c40] sm:$0xff]
  %v1902 = vld [vmem:[%s4 + $0x1c48] sm:$0xff]
  %v1903 = vld [vmem:[%s4 + $0x1c50] sm:$0xff]
  %v1904 = vld [vmem:[%s4 + $0x1c58] sm:$0xff]
  %v1905 = vld [vmem:[%s4 + $0x1c60] sm:$0xff]
  %v1906 = vld [vmem:[%s4 + $0x1c68] sm:$0xff]
  %v1907 = vld [vmem:[%s4 + $0x1c70] sm:$0xff]
  %v1908 = vld [vmem:[%s4 + $0x1c78] sm:$0xff]
  %v1909 = vld [vmem:[%s4 + $0x1c80] sm:$0xff]
  %v1910 = vld [vmem:[%s4 + $0x1c88] sm:$0xff]
  %v1911 = vld [vmem:[%s4 + $0x1c90] sm:$0xff]
  %v1912 = vld [vmem:[%s4 + $0x1c98] sm:$0xff]
  %v1913 = vld [vmem:[%s4 + $0x1ca0] sm:$0xff]
  %v1914 = vld [vmem:[%s4 + $0x1ca8] sm:$0xff]
  %v1915 = vld [vmem:[%s4 + $0x1cb0] sm:$0xff]
  %v1916 = vld [vmem:[%s4 + $0x1cb8] sm:$0xff]
  %v1917 = vld [vmem:[%s4 + $0x1cc0] sm:$0xff]
  %v1918 = vld [vmem:[%s4 + $0x1cc8] sm:$0xff]
  %v1919 = vld [vmem:[%s4 + $0x1cd0] sm:$0xff]
  %v1920 = vld [vmem:[%s4 + $0x1cd8] sm:$0xff]
  %v1921 = vld [vmem:[%s4 + $0x1ce0] sm:$0xff]
  %v1922 = vld [vmem:[%s4 + $0x1ce8] sm:$0xff]
  %v1923 = vld [vmem:[%s4 + $0x1cf0] sm:$0xff]
  %v1924 = vld [vmem:[%s4 + $0x1cf8] sm:$0xff]
  %v1925 = vld [vmem:[%s4 + $0x1d00] sm:$0xff]
  %v1926 = vld [vmem:[%s4 + $0x1d08] sm:$0xff]
  %v1927 = vld [vmem:[%s4 + $0x1d10] sm:$0xff]
  %v1928 = vld [vmem:[%s4 + $0x1d18] sm:$0xff]
  %v1929 = vld [vmem:[%s4 + $0x1d20] sm:$0xff]
  %v1930 = vld [vmem:[%s4 + $0x1d28] sm:$0xff]
  %v1931 = vld [vmem:[%s4 + $0x1d30] sm:$0xff]
  %v1932 = vld [vmem:[%s4 + $0x1d38] sm:$0xff]
  %v1933 = vld [vmem:[%s4 + $0x1d40] sm:$0xff]
  %v1934 = vld [vmem:[%s4 + $0x1d48] sm:$0xff]
  %v1935 = vld [vmem:[%s4 + $0x1d50] sm:$0xff]
  %v1936 = vld [vmem:[%s4 + $0x1d58] sm:$0xff]
  %v1937 = vld [vmem:[%s4 + $0x1d60] sm:$0xff]
  %v1938 = vld [vmem:[%s4 + $0x1d68] sm:$0xff]
  %v1939 = vld [vmem:[%s4 + $0x1d70] sm:$0xff]
  %v1940 = vld [vmem:[%s4 + $0x1d78] sm:$0xff]
  %v1941 = vld [vmem:[%s4 + $0x1d80] sm:$0xff]
  %v1942 = vld [vmem:[%s4 + $0x1d88] sm:$0xff]
  %v1943 = vld [vmem:[%s4 + $0x1d90] sm:$0xff]
  %v1944 = vld [vmem:[%s4 + $0x1d98] sm:$0xff]
  %v1945 = vld [vmem:[%s4 + $0x1da0] sm:$0xff]
  %v1946 = vld [vmem:[%s4 + $0x1da8] sm:$0xff]
  %v1947 = vld [vmem:[%s4 + $0x1db0] sm:$0xff]
  %v1948 = vld [vmem:[%s4 + $0x1db8] sm:$0xff]
  %v1949 = vld [vmem:[%s4 + $0x1dc0] sm:$0xff]
  %v1950 = vld [vmem:[%s4 + $0x1dc8] sm:$0xff]
  %v1951 = vld [vmem:[%s4 + $0x1dd0] sm:$0xff]
  %v1952 = vld [vmem:[%s4 + $0x1dd8] sm:$0xff]
  %v1953 = vld [vmem:[%s4 + $0x1de0] sm:$0xff]
  %v1954 = vld [vmem:[%s4 + $0x1de8] sm:$0xff]
  %v1955 = vld [vmem:[%s4 + $0x1df0] sm:$0xff]
  %v1956 = vld [vmem:[%s4 + $0x1df8] sm:$0xff]
  %v1957 = vld [vmem:[%s4 + $0x1e00] sm:$0xff]
  %v1958 = vld [vmem:[%s4 + $0x1e08] sm:$0xff]
  %v1959 = vld [vmem:[%s4 + $0x1e10] sm:$0xff]
  %v1960 = vld [vmem:[%s4 + $0x1e18] sm:$0xff]
  %v1961 = vld [vmem:[%s4 + $0x1e20] sm:$0xff]
  %v1962 = vld [vmem:[%s4 + $0x1e28] sm:$0xff]
  %v1963 = vld [vmem:[%s4 + $0x1e30] sm:$0xff]
  %v1964 = vld [vmem:[%s4 + $0x1e38] sm:$0xff]
  %v1965 = vld [vmem:[%s4 + $0x1e40] sm:$0xff]
  %v1966 = vld [vmem:[%s4 + $0x1e48] sm:$0xff]
  %v1967 = vld [vmem:[%s4 + $0x1e50] sm:$0xff]
  %v1968 = vld [vmem:[%s4 + $0x1e58] sm:$0xff]
  %v1969 = vld [vmem:[%s4 + $0x1e60] sm:$0xff]
  %v1970 = vld [vmem:[%s4 + $0x1e68] sm:$0xff]
  %v1971 = vld [vmem:[%s4 + $0x1e70] sm:$0xff]
  %v1972 = vld [vmem:[%s4 + $0x1e78] sm:$0xff]
  %v1973 = vld [vmem:[%s4 + $0x1e80] sm:$0xff]
  %v1974 = vld [vmem:[%s4 + $0x1e88] sm:$0xff]
  %v1975 = vld [vmem:[%s4 + $0x1e90] sm:$0xff]
  %v1976 = vld [vmem:[%s4 + $0x1e98] sm:$0xff]
  %v1977 = vld [vmem:[%s4 + $0x1ea0] sm:$0xff]
  %v1978 = vld [vmem:[%s4 + $0x1ea8] sm:$0xff]
  %v1979 = vld [vmem:[%s4 + $0x1eb0] sm:$0xff]
  %v1980 = vld [vmem:[%s4 + $0x1eb8] sm:$0xff]
  %v1981 = vld [vmem:[%s4 + $0x1ec0] sm:$0xff]
  %v1982 = vld [vmem:[%s4 + $0x1ec8] sm:$0xff]
  %v1983 = vld [vmem:[%s4 + $0x1ed0] sm:$0xff]
  %v1984 = vld [vmem:[%s4 + $0x1ed8] sm:$0xff]
  %v1985 = vld [vmem:[%s4 + $0x1ee0] sm:$0xff]
  %v1986 = vld [vmem:[%s4 + $0x1ee8] sm:$0xff]
  %v1987 = vld [vmem:[%s4 + $0x1ef0] sm:$0xff]
  %v1988 = vld [vmem:[%s4 + $0x1ef8] sm:$0xff]
  %v1989 = vld [vmem:[%s4 + $0x1f00] sm:$0xff]
  %v1990 = vld [vmem:[%s4 + $0x1f08] sm:$0xff]
  %v1991 = vld [vmem:[%s4 + $0x1f10] sm:$0xff]
  %v1992 = vld [vmem:[%s4 + $0x1f18] sm:$0xff]
  %v1993 = vld [vmem:[%s4 + $0x1f20] sm:$0xff]
  %v1994 = vld [vmem:[%s4 + $0x1f28] sm:$0xff]
  %v1995 = vld [vmem:[%s4 + $0x1f30] sm:$0xff]
  %v1996 = vld [vmem:[%s4 + $0x1f38] sm:$0xff]
  %v1997 = vld [vmem:[%s4 + $0x1f40] sm:$0xff]
  %v1998 = vld [vmem:[%s4 + $0x1f48] sm:$0xff]
  %v1999 = vld [vmem:[%s4 + $0x1f50] sm:$0xff]
  %v2000 = vld [vmem:[%s4 + $0x1f58] sm:$0xff]
  %v2001 = vld [vmem:[%s4 + $0x1f60] sm:$0xff]
  %v2002 = vld [vmem:[%s4 + $0x1f68] sm:$0xff]
  %v2003 = vld [vmem:[%s4 + $0x1f70] sm:$0xff]
  %v2004 = vld [vmem:[%s4 + $0x1f78] sm:$0xff]
  %v2005 = vld [vmem:[%s4 + $0x1f80] sm:$0xff]
  %v2006 = vld [vmem:[%s4 + $0x1f88] sm:$0xff]
  %v2007 = vld [vmem:[%s4 + $0x1f90] sm:$0xff]
  %v2008 = vld [vmem:[%s4 + $0x1f98] sm:$0xff]
  %v2009 = vld [vmem:[%s4 + $0x1fa0] sm:$0xff]
  %v2010 = vld [vmem:[%s4 + $0x1fa8] sm:$0xff]
  %v2011 = vld [vmem:[%s4 + $0x1fb0] sm:$0xff]
  %v2012 = vld [vmem:[%s4 + $0x1fb8] sm:$0xff]
  %v2013 = vld [vmem:[%s4 + $0x1fc0] sm:$0xff]
  %v2014 = vld [vmem:[%s4 + $0x1fc8] sm:$0xff]
  %v2015 = vld [vmem:[%s4 + $0x1fd0] sm:$0xff]
  %v2016 = vld [vmem:[%s4 + $0x1fd8] sm:$0xff]
  %v2017 = vld [vmem:[%s4 + $0x1fe0] sm:$0xff]
  %v2018 = vld [vmem:[%s4 + $0x1fe8] sm:$0xff]
  %v2019 = vld [vmem:[%s4 + $0x1ff0] sm:$0xff]
  %v2020 = vld [vmem:[%s4 + $0x1ff8] sm:$0xff]
  %v2021 = vld [vmem:[%s5] sm:$0xff]
  %v2023 = vlaneseq
  %v2024 = vshrl.u32 %v2023, 7
  %v2025 = vsub.s32 0, %v2024
  %v2026 = vrot.slane %v2021, %v2025
  %v2027 = vlaneseq
  %v2028 = vshrl.u32 %v2027, 7
  %v2029 = vsub.s32 1, %v2028
  %v2030 = vrot.slane %v2021, %v2029
  %v2031 = vlaneseq
  %v2032 = vshrl.u32 %v2031, 7
  %v2033 = vsub.s32 2, %v2032
  %v2034 = vrot.slane %v2021, %v2033
  %v2035 = vlaneseq
  %v2036 = vshrl.u32 %v2035, 7
  %v2037 = vsub.s32 3, %v2036
  %v2038 = vrot.slane %v2021, %v2037
  %v2039 = vlaneseq
  %v2040 = vshrl.u32 %v2039, 7
  %v2041 = vsub.s32 4, %v2040
  %v2042 = vrot.slane %v2021, %v2041
  %v2043 = vlaneseq
  %v2044 = vshrl.u32 %v2043, 7
  %v2045 = vsub.s32 5, %v2044
  %v2046 = vrot.slane %v2021, %v2045
  %v2047 = vlaneseq
  %v2048 = vshrl.u32 %v2047, 7
  %v2049 = vsub.s32 6, %v2048
  %v2050 = vrot.slane %v2021, %v2049
  %v2051 = vlaneseq
  %v2052 = vshrl.u32 %v2051, 7
  %v2053 = vsub.s32 7, %v2052
  %v2054 = vrot.slane %v2021, %v2053
  %2063 = vmatprep.subr.mxu0 %v1118
  %2064 = vmatpush1.msra.mxu0 %v1117
  %2065 = vmatprep.subr.mxu0 %v1110
  %2066 = vmatpush1.msra.mxu0 %v1109
  %2067 = vmatprep.subr.mxu0 %v1102
  %2068 = vmatpush1.msra.mxu0 %v1101
  %2069 = vmatprep.subr.mxu0 %v1094
  %2070 = vmatpush1.msra.mxu0 %v1093
  %2071 = vmatprep.subr.mxu0 %v1086
  %2072 = vmatpush1.msra.mxu0 %v1085
  %2073 = vmatprep.subr.mxu0 %v1078
  %2074 = vmatpush1.msra.mxu0 %v1077
  %2075 = vmatprep.subr.mxu0 %v1070
  %2076 = vmatpush1.msra.mxu0 %v1069
  %2077 = vmatprep.subr.mxu0 %v1062
  %2078 = vmatpush1.msra.mxu0 %v1061
  %2079 = vmatprep.subr.mxu0 %v1054
  %2080 = vmatpush1.msra.mxu0 %v1053
  %2081 = vmatprep.subr.mxu0 %v1046
  %2082 = vmatpush1.msra.mxu0 %v1045
  %2083 = vmatprep.subr.mxu0 %v1038
  %2084 = vmatpush1.msra.mxu0 %v1037
  %2085 = vmatprep.subr.mxu0 %v1030
  %2086 = vmatpush1.msra.mxu0 %v1029
  %2087 = vmatprep.subr.mxu0 %v1022
  %2088 = vmatpush1.msra.mxu0 %v1021
  %2089 = vmatprep.subr.mxu0 %v1014
  %2090 = vmatpush1.msra.mxu0 %v1013
  %2091 = vmatprep.subr.mxu0 %v1006
  %2092 = vmatpush1.msra.mxu0 %v1005
  %2093 = vmatprep.subr.mxu0 %v998
  %2094 = vmatpush1.msra.mxu0 %v997
  %2095 = vmatprep.subr.mxu0 %v1246
  %2096 = vmatpush2.msra.mxu0 %v1245
  %2097 = vmatprep.subr.mxu0 %v1238
  %2098 = vmatpush2.msra.mxu0 %v1237
  %2099 = vmatprep.subr.mxu0 %v1230
  %2100 = vmatpush2.msra.mxu0 %v1229
  %2101 = vmatprep.subr.mxu0 %v1222
  %2102 = vmatpush2.msra.mxu0 %v1221
  %2103 = vmatprep.subr.mxu0 %v1214
  %2104 = vmatpush2.msra.mxu0 %v1213
  %2105 = vmatprep.subr.mxu0 %v1206
  %2106 = vmatpush2.msra.mxu0 %v1205
  %2107 = vmatprep.subr.mxu0 %v1198
  %2108 = vmatpush2.msra.mxu0 %v1197
  %2109 = vmatprep.subr.mxu0 %v1190
  %2110 = vmatpush2.msra.mxu0 %v1189
  %2111 = vmatprep.subr.mxu0 %v1182
  %2112 = vmatpush2.msra.mxu0 %v1181
  %2113 = vmatprep.subr.mxu0 %v1174
  %2114 = vmatpush2.msra.mxu0 %v1173
  %2115 = vmatprep.subr.mxu0 %v1166
  %2116 = vmatpush2.msra.mxu0 %v1165
  %2117 = vmatprep.subr.mxu0 %v1158
  %2118 = vmatpush2.msra.mxu0 %v1157
  %2119 = vmatprep.subr.mxu0 %v1150
  %2120 = vmatpush2.msra.mxu0 %v1149
  %2121 = vmatprep.subr.mxu0 %v1142
  %2122 = vmatpush2.msra.mxu0 %v1141
  %2123 = vmatprep.subr.mxu0 %v1134
  %2124 = vmatpush2.msra.mxu0 %v1133
  %2125 = vmatprep.subr.mxu0 %v1126
  %2126 = vmatpush2.msra.mxu0 %v1125
  %2127 = vmatprep.mubr.f32.mxu0 %v982
  %2128 = vmatmul.mubr.f32.gmra.mxu0 %v981
  %v2129 = vpop.f32.mrf.mxu0
  %v2130 = vadd.f32 %v2026, %v2129
  %v2131 = vpop.f32.mrf.mxu0
  %v2132 = vadd.f32 %v2030, %v2131
  %2133 = vmatprep.mubr.f32.mxu0 %v990
  %2134 = vmatmul.mubr.f32.gmra.mxu0 %v989
  %v2135 = vpop.f32.mrf.mxu0
  %v2136 = vadd.f32 %v2026, %v2135
  %v2137 = vpop.f32.mrf.mxu0
  %v2138 = vadd.f32 %v2030, %v2137
  %2139 = vdwg.mxu0
  %2140 = vmatprep.subr.mxu0 %v1374
  %2141 = vmatpush1.msra.mxu0 %v1373
  %2142 = vmatprep.subr.mxu0 %v1366
  %2143 = vmatpush1.msra.mxu0 %v1365
  %2144 = vmatprep.subr.mxu0 %v1358
  %2145 = vmatpush1.msra.mxu0 %v1357
  %2146 = vmatprep.subr.mxu0 %v1350
  %2147 = vmatpush1.msra.mxu0 %v1349
  %2148 = vmatprep.subr.mxu0 %v1342
  %2149 = vmatpush1.msra.mxu0 %v1341
  %2150 = vmatprep.subr.mxu0 %v1334
  %2151 = vmatpush1.msra.mxu0 %v1333
  %2152 = vmatprep.subr.mxu0 %v1326
  %2153 = vmatpush1.msra.mxu0 %v1325
  %2154 = vmatprep.subr.mxu0 %v1318
  %2155 = vmatpush1.msra.mxu0 %v1317
  %2156 = vmatprep.subr.mxu0 %v1310
  %2157 = vmatpush1.msra.mxu0 %v1309
  %2158 = vmatprep.subr.mxu0 %v1302
  %2159 = vmatpush1.msra.mxu0 %v1301
  %2160 = vmatprep.subr.mxu0 %v1294
  %2161 = vmatpush1.msra.mxu0 %v1293
  %2162 = vmatprep.subr.mxu0 %v1286
  %2163 = vmatpush1.msra.mxu0 %v1285
  %2164 = vmatprep.subr.mxu0 %v1278
  %2165 = vmatpush1.msra.mxu0 %v1277
  %2166 = vmatprep.subr.mxu0 %v1270
  %2167 = vmatpush1.msra.mxu0 %v1269
  %2168 = vmatprep.subr.mxu0 %v1262
  %2169 = vmatpush1.msra.mxu0 %v1261
  %2170 = vmatprep.subr.mxu0 %v1254
  %2171 = vmatpush1.msra.mxu0 %v1253
  %2172 = vmatprep.subr.mxu0 %v1502
  %2173 = vmatpush2.msra.mxu0 %v1501
  %2174 = vmatprep.subr.mxu0 %v1494
  %2175 = vmatpush2.msra.mxu0 %v1493
  %2176 = vmatprep.subr.mxu0 %v1486
  %2177 = vmatpush2.msra.mxu0 %v1485
  %2178 = vmatprep.subr.mxu0 %v1478
  %2179 = vmatpush2.msra.mxu0 %v1477
  %2180 = vmatprep.subr.mxu0 %v1470
  %2181 = vmatpush2.msra.mxu0 %v1469
  %2182 = vmatprep.subr.mxu0 %v1462
  %2183 = vmatpush2.msra.mxu0 %v1461
  %2184 = vmatprep.subr.mxu0 %v1454
  %2185 = vmatpush2.msra.mxu0 %v1453
  %2186 = vmatprep.subr.mxu0 %v1446
  %2187 = vmatpush2.msra.mxu0 %v1445
  %2188 = vmatprep.subr.mxu0 %v1438
  %2189 = vmatpush2.msra.mxu0 %v1437
  %2190 = vmatprep.subr.mxu0 %v1430
  %2191 = vmatpush2.msra.mxu0 %v1429
  %2192 = vmatprep.subr.mxu0 %v1422
  %2193 = vmatpush2.msra.mxu0 %v1421
  %2194 = vmatprep.subr.mxu0 %v1414
  %2195 = vmatpush2.msra.mxu0 %v1413
  %2196 = vmatprep.subr.mxu0 %v1406
  %2197 = vmatpush2.msra.mxu0 %v1405
  %2198 = vmatprep.subr.mxu0 %v1398
  %2199 = vmatpush2.msra.mxu0 %v1397
  %2200 = vmatprep.subr.mxu0 %v1390
  %2201 = vmatpush2.msra.mxu0 %v1389
  %2202 = vmatprep.subr.mxu0 %v1382
  %2203 = vmatpush2.msra.mxu0 %v1381
  %2204 = vmatprep.mubr.f32.mxu0 %v984
  %2205 = vmatmul.mubr.f32.gmra.mxu0 %v983
  %v2206 = vpop.f32.mrf.mxu0
  %v2207 = vadd.f32 %v2130, %v2206
  %v2208 = vpop.f32.mrf.mxu0
  %v2209 = vadd.f32 %v2132, %v2208
  %2210 = vmatprep.mubr.f32.mxu0 %v992
  %2211 = vmatmul.mubr.f32.gmra.mxu0 %v991
  %v2212 = vpop.f32.mrf.mxu0
  %v2213 = vadd.f32 %v2136, %v2212
  %v2214 = vpop.f32.mrf.mxu0
  %v2215 = vadd.f32 %v2138, %v2214
  %2216 = vdwg.mxu0
  %2217 = vmatprep.subr.mxu0 %v1630
  %2218 = vmatpush1.msra.mxu0 %v1629
  %2219 = vmatprep.subr.mxu0 %v1622
  %2220 = vmatpush1.msra.mxu0 %v1621
  %2221 = vmatprep.subr.mxu0 %v1614
  %2222 = vmatpush1.msra.mxu0 %v1613
  %2223 = vmatprep.subr.mxu0 %v1606
  %2224 = vmatpush1.msra.mxu0 %v1605
  %2225 = vmatprep.subr.mxu0 %v1598
  %2226 = vmatpush1.msra.mxu0 %v1597
  %2227 = vmatprep.subr.mxu0 %v1590
  %2228 = vmatpush1.msra.mxu0 %v1589
  %2229 = vmatprep.subr.mxu0 %v1582
  %2230 = vmatpush1.msra.mxu0 %v1581
  %2231 = vmatprep.subr.mxu0 %v1574
  %2232 = vmatpush1.msra.mxu0 %v1573
  %2233 = vmatprep.subr.mxu0 %v1566
  %2234 = vmatpush1.msra.mxu0 %v1565
  %2235 = vmatprep.subr.mxu0 %v1558
  %2236 = vmatpush1.msra.mxu0 %v1557
  %2237 = vmatprep.subr.mxu0 %v1550
  %2238 = vmatpush1.msra.mxu0 %v1549
  %2239 = vmatprep.subr.mxu0 %v1542
  %2240 = vmatpush1.msra.mxu0 %v1541
  %2241 = vmatprep.subr.mxu0 %v1534
  %2242 = vmatpush1.msra.mxu0 %v1533
  %2243 = vmatprep.subr.mxu0 %v1526
  %2244 = vmatpush1.msra.mxu0 %v1525
  %2245 = vmatprep.subr.mxu0 %v1518
  %2246 = vmatpush1.msra.mxu0 %v1517
  %2247 = vmatprep.subr.mxu0 %v1510
  %2248 = vmatpush1.msra.mxu0 %v1509
  %2249 = vmatprep.subr.mxu0 %v1758
  %2250 = vmatpush2.msra.mxu0 %v1757
  %2251 = vmatprep.subr.mxu0 %v1750
  %2252 = vmatpush2.msra.mxu0 %v1749
  %2253 = vmatprep.subr.mxu0 %v1742
  %2254 = vmatpush2.msra.mxu0 %v1741
  %2255 = vmatprep.subr.mxu0 %v1734
  %2256 = vmatpush2.msra.mxu0 %v1733
  %2257 = vmatprep.subr.mxu0 %v1726
  %2258 = vmatpush2.msra.mxu0 %v1725
  %2259 = vmatprep.subr.mxu0 %v1718
  %2260 = vmatpush2.msra.mxu0 %v1717
  %2261 = vmatprep.subr.mxu0 %v1710
  %2262 = vmatpush2.msra.mxu0 %v1709
  %2263 = vmatprep.subr.mxu0 %v1702
  %2264 = vmatpush2.msra.mxu0 %v1701
  %2265 = vmatprep.subr.mxu0 %v1694
  %2266 = vmatpush2.msra.mxu0 %v1693
  %2267 = vmatprep.subr.mxu0 %v1686
  %2268 = vmatpush2.msra.mxu0 %v1685
  %2269 = vmatprep.subr.mxu0 %v1678
  %2270 = vmatpush2.msra.mxu0 %v1677
  %2271 = vmatprep.subr.mxu0 %v1670
  %2272 = vmatpush2.msra.mxu0 %v1669
  %2273 = vmatprep.subr.mxu0 %v1662
  %2274 = vmatpush2.msra.mxu0 %v1661
  %2275 = vmatprep.subr.mxu0 %v1654
  %2276 = vmatpush2.msra.mxu0 %v1653
  %2277 = vmatprep.subr.mxu0 %v1646
  %2278 = vmatpush2.msra.mxu0 %v1645
  %2279 = vmatprep.subr.mxu0 %v1638
  %2280 = vmatpush2.msra.mxu0 %v1637
  %2281 = vmatprep.mubr.f32.mxu0 %v986
  %2282 = vmatmul.mubr.f32.gmra.mxu0 %v985
  %v2283 = vpop.f32.mrf.mxu0
  %v2284 = vadd.f32 %v2207, %v2283
  %v2285 = vpop.f32.mrf.mxu0
  %v2286 = vadd.f32 %v2209, %v2285
  %2287 = vmatprep.mubr.f32.mxu0 %v994
  %2288 = vmatmul.mubr.f32.gmra.mxu0 %v993
  %v2289 = vpop.f32.mrf.mxu0
  %v2290 = vadd.f32 %v2213, %v2289
  %v2291 = vpop.f32.mrf.mxu0
  %v2292 = vadd.f32 %v2215, %v2291
  %2293 = vdwg.mxu0
  %2294 = vmatprep.subr.mxu0 %v1886
  %2295 = vmatpush1.msra.mxu0 %v1885
  %2296 = vmatprep.subr.mxu0 %v1878
  %2297 = vmatpush1.msra.mxu0 %v1877
  %2298 = vmatprep.subr.mxu0 %v1870
  %2299 = vmatpush1.msra.mxu0 %v1869
  %2300 = vmatprep.subr.mxu0 %v1862
  %2301 = vmatpush1.msra.mxu0 %v1861
  %2302 = vmatprep.subr.mxu0 %v1854
  %2303 = vmatpush1.msra.mxu0 %v1853
  %2304 = vmatprep.subr.mxu0 %v1846
  %2305 = vmatpush1.msra.mxu0 %v1845
  %2306 = vmatprep.subr.mxu0 %v1838
  %2307 = vmatpush1.msra.mxu0 %v1837
  %2308 = vmatprep.subr.mxu0 %v1830
  %2309 = vmatpush1.msra.mxu0 %v1829
  %2310 = vmatprep.subr.mxu0 %v1822
  %2311 = vmatpush1.msra.mxu0 %v1821
  %2312 = vmatprep.subr.mxu0 %v1814
  %2313 = vmatpush1.msra.mxu0 %v1813
  %2314 = vmatprep.subr.mxu0 %v1806
  %2315 = vmatpush1.msra.mxu0 %v1805
  %2316 = vmatprep.subr.mxu0 %v1798
  %2317 = vmatpush1.msra.mxu0 %v1797
  %2318 = vmatprep.subr.mxu0 %v1790
  %2319 = vmatpush1.msra.mxu0 %v1789
  %2320 = vmatprep.subr.mxu0 %v1782
  %2321 = vmatpush1.msra.mxu0 %v1781
  %2322 = vmatprep.subr.mxu0 %v1774
  %2323 = vmatpush1.msra.mxu0 %v1773
  %2324 = vmatprep.subr.mxu0 %v1766
  %2325 = vmatpush1.msra.mxu0 %v1765
  %2326 = vmatprep.subr.mxu0 %v2014
  %2327 = vmatpush2.msra.mxu0 %v2013
  %2328 = vmatprep.subr.mxu0 %v2006
  %2329 = vmatpush2.msra.mxu0 %v2005
  %2330 = vmatprep.subr.mxu0 %v1998
  %2331 = vmatpush2.msra.mxu0 %v1997
  %2332 = vmatprep.subr.mxu0 %v1990
  %2333 = vmatpush2.msra.mxu0 %v1989
  %2334 = vmatprep.subr.mxu0 %v1982
  %2335 = vmatpush2.msra.mxu0 %v1981
  %2336 = vmatprep.subr.mxu0 %v1974
  %2337 = vmatpush2.msra.mxu0 %v1973
  %2338 = vmatprep.subr.mxu0 %v1966
  %2339 = vmatpush2.msra.mxu0 %v1965
  %2340 = vmatprep.subr.mxu0 %v1958
  %2341 = vmatpush2.msra.mxu0 %v1957
  %2342 = vmatprep.subr.mxu0 %v1950
  %2343 = vmatpush2.msra.mxu0 %v1949
  %2344 = vmatprep.subr.mxu0 %v1942
  %2345 = vmatpush2.msra.mxu0 %v1941
  %2346 = vmatprep.subr.mxu0 %v1934
  %2347 = vmatpush2.msra.mxu0 %v1933
  %2348 = vmatprep.subr.mxu0 %v1926
  %2349 = vmatpush2.msra.mxu0 %v1925
  %2350 = vmatprep.subr.mxu0 %v1918
  %2351 = vmatpush2.msra.mxu0 %v1917
  %2352 = vmatprep.subr.mxu0 %v1910
  %2353 = vmatpush2.msra.mxu0 %v1909
  %2354 = vmatprep.subr.mxu0 %v1902
  %2355 = vmatpush2.msra.mxu0 %v1901
  %2356 = vmatprep.subr.mxu0 %v1894
  %2357 = vmatpush2.msra.mxu0 %v1893
  %2358 = vmatprep.mubr.f32.mxu0 %v988
  %2359 = vmatmul.mubr.f32.gmra.mxu0 %v987
  %v2360 = vpop.f32.mrf.mxu0
  %v2361 = vadd.f32 %v2284, %v2360
  %v2362 = vpop.f32.mrf.mxu0
  %v2363 = vadd.f32 %v2286, %v2362
  %2364 = vmatprep.mubr.f32.mxu0 %v996
  %2365 = vmatmul.mubr.f32.gmra.mxu0 %v995
  %v2366 = vpop.f32.mrf.mxu0
  %v2367 = vadd.f32 %v2290, %v2366
  %v2368 = vpop.f32.mrf.mxu0
  %v2369 = vadd.f32 %v2292, %v2368
  %2370 = vdwg.mxu0
  %2371 = vmatprep.subr.mxu0 %v1120
  %2372 = vmatpush1.msra.mxu0 %v1119
  %2373 = vmatprep.subr.mxu0 %v1112
  %2374 = vmatpush1.msra.mxu0 %v1111
  %2375 = vmatprep.subr.mxu0 %v1104
  %2376 = vmatpush1.msra.mxu0 %v1103
  %2377 = vmatprep.subr.mxu0 %v1096
  %2378 = vmatpush1.msra.mxu0 %v1095
  %2379 = vmatprep.subr.mxu0 %v1088
  %2380 = vmatpush1.msra.mxu0 %v1087
  %2381 = vmatprep.subr.mxu0 %v1080
  %2382 = vmatpush1.msra.mxu0 %v1079
  %2383 = vmatprep.subr.mxu0 %v1072
  %2384 = vmatpush1.msra.mxu0 %v1071
  %2385 = vmatprep.subr.mxu0 %v1064
  %2386 = vmatpush1.msra.mxu0 %v1063
  %2387 = vmatprep.subr.mxu0 %v1056
  %2388 = vmatpush1.msra.mxu0 %v1055
  %2389 = vmatprep.subr.mxu0 %v1048
  %2390 = vmatpush1.msra.mxu0 %v1047
  %2391 = vmatprep.subr.mxu0 %v1040
  %2392 = vmatpush1.msra.mxu0 %v1039
  %2393 = vmatprep.subr.mxu0 %v1032
  %2394 = vmatpush1.msra.mxu0 %v1031
  %2395 = vmatprep.subr.mxu0 %v1024
  %2396 = vmatpush1.msra.mxu0 %v1023
  %2397 = vmatprep.subr.mxu0 %v1016
  %2398 = vmatpush1.msra.mxu0 %v1015
  %2399 = vmatprep.subr.mxu0 %v1008
  %2400 = vmatpush1.msra.mxu0 %v1007
  %2401 = vmatprep.subr.mxu0 %v1000
  %2402 = vmatpush1.msra.mxu0 %v999
  %2403 = vmatprep.subr.mxu0 %v1248
  %2404 = vmatpush2.msra.mxu0 %v1247
  %2405 = vmatprep.subr.mxu0 %v1240
  %2406 = vmatpush2.msra.mxu0 %v1239
  %2407 = vmatprep.subr.mxu0 %v1232
  %2408 = vmatpush2.msra.mxu0 %v1231
  %2409 = vmatprep.subr.mxu0 %v1224
  %2410 = vmatpush2.msra.mxu0 %v1223
  %2411 = vmatprep.subr.mxu0 %v1216
  %2412 = vmatpush2.msra.mxu0 %v1215
  %2413 = vmatprep.subr.mxu0 %v1208
  %2414 = vmatpush2.msra.mxu0 %v1207
  %2415 = vmatprep.subr.mxu0 %v1200
  %2416 = vmatpush2.msra.mxu0 %v1199
  %2417 = vmatprep.subr.mxu0 %v1192
  %2418 = vmatpush2.msra.mxu0 %v1191
  %2419 = vmatprep.subr.mxu0 %v1184
  %2420 = vmatpush2.msra.mxu0 %v1183
  %2421 = vmatprep.subr.mxu0 %v1176
  %2422 = vmatpush2.msra.mxu0 %v1175
  %2423 = vmatprep.subr.mxu0 %v1168
  %2424 = vmatpush2.msra.mxu0 %v1167
  %2425 = vmatprep.subr.mxu0 %v1160
  %2426 = vmatpush2.msra.mxu0 %v1159
  %2427 = vmatprep.subr.mxu0 %v1152
  %2428 = vmatpush2.msra.mxu0 %v1151
  %2429 = vmatprep.subr.mxu0 %v1144
  %2430 = vmatpush2.msra.mxu0 %v1143
  %2431 = vmatprep.subr.mxu0 %v1136
  %2432 = vmatpush2.msra.mxu0 %v1135
  %2433 = vmatprep.subr.mxu0 %v1128
  %2434 = vmatpush2.msra.mxu0 %v1127
  %2435 = vmatprep.mubr.f32.mxu0 %v982
  %2436 = vmatmul.mubr.f32.gmra.mxu0 %v981
  %v2437 = vpop.f32.mrf.mxu0
  %v2438 = vadd.f32 %v2034, %v2437
  %v2439 = vpop.f32.mrf.mxu0
  %v2440 = vadd.f32 %v2038, %v2439
  %2441 = vmatprep.mubr.f32.mxu0 %v990
  %2442 = vmatmul.mubr.f32.gmra.mxu0 %v989
  %v2443 = vpop.f32.mrf.mxu0
  %v2444 = vadd.f32 %v2034, %v2443
  %v2445 = vpop.f32.mrf.mxu0
  %v2446 = vadd.f32 %v2038, %v2445
  %2447 = vdwg.mxu0
  %2448 = vmatprep.subr.mxu0 %v1376
  %2449 = vmatpush1.msra.mxu0 %v1375
  %2450 = vmatprep.subr.mxu0 %v1368
  %2451 = vmatpush1.msra.mxu0 %v1367
  %2452 = vmatprep.subr.mxu0 %v1360
  %2453 = vmatpush1.msra.mxu0 %v1359
  %2454 = vmatprep.subr.mxu0 %v1352
  %2455 = vmatpush1.msra.mxu0 %v1351
  %2456 = vmatprep.subr.mxu0 %v1344
  %2457 = vmatpush1.msra.mxu0 %v1343
  %2458 = vmatprep.subr.mxu0 %v1336
  %2459 = vmatpush1.msra.mxu0 %v1335
  %2460 = vmatprep.subr.mxu0 %v1328
  %2461 = vmatpush1.msra.mxu0 %v1327
  %2462 = vmatprep.subr.mxu0 %v1320
  %2463 = vmatpush1.msra.mxu0 %v1319
  %2464 = vmatprep.subr.mxu0 %v1312
  %2465 = vmatpush1.msra.mxu0 %v1311
  %2466 = vmatprep.subr.mxu0 %v1304
  %2467 = vmatpush1.msra.mxu0 %v1303
  %2468 = vmatprep.subr.mxu0 %v1296
  %2469 = vmatpush1.msra.mxu0 %v1295
  %2470 = vmatprep.subr.mxu0 %v1288
  %2471 = vmatpush1.msra.mxu0 %v1287
  %2472 = vmatprep.subr.mxu0 %v1280
  %2473 = vmatpush1.msra.mxu0 %v1279
  %2474 = vmatprep.subr.mxu0 %v1272
  %2475 = vmatpush1.msra.mxu0 %v1271
  %2476 = vmatprep.subr.mxu0 %v1264
  %2477 = vmatpush1.msra.mxu0 %v1263
  %2478 = vmatprep.subr.mxu0 %v1256
  %2479 = vmatpush1.msra.mxu0 %v1255
  %2480 = vmatprep.subr.mxu0 %v1504
  %2481 = vmatpush2.msra.mxu0 %v1503
  %2482 = vmatprep.subr.mxu0 %v1496
  %2483 = vmatpush2.msra.mxu0 %v1495
  %2484 = vmatprep.subr.mxu0 %v1488
  %2485 = vmatpush2.msra.mxu0 %v1487
  %2486 = vmatprep.subr.mxu0 %v1480
  %2487 = vmatpush2.msra.mxu0 %v1479
  %2488 = vmatprep.subr.mxu0 %v1472
  %2489 = vmatpush2.msra.mxu0 %v1471
  %2490 = vmatprep.subr.mxu0 %v1464
  %2491 = vmatpush2.msra.mxu0 %v1463
  %2492 = vmatprep.subr.mxu0 %v1456
  %2493 = vmatpush2.msra.mxu0 %v1455
  %2494 = vmatprep.subr.mxu0 %v1448
  %2495 = vmatpush2.msra.mxu0 %v1447
  %2496 = vmatprep.subr.mxu0 %v1440
  %2497 = vmatpush2.msra.mxu0 %v1439
  %2498 = vmatprep.subr.mxu0 %v1432
  %2499 = vmatpush2.msra.mxu0 %v1431
  %2500 = vmatprep.subr.mxu0 %v1424
  %2501 = vmatpush2.msra.mxu0 %v1423
  %2502 = vmatprep.subr.mxu0 %v1416
  %2503 = vmatpush2.msra.mxu0 %v1415
  %2504 = vmatprep.subr.mxu0 %v1408
  %2505 = vmatpush2.msra.mxu0 %v1407
  %2506 = vmatprep.subr.mxu0 %v1400
  %2507 = vmatpush2.msra.mxu0 %v1399
  %2508 = vmatprep.subr.mxu0 %v1392
  %2509 = vmatpush2.msra.mxu0 %v1391
  %2510 = vmatprep.subr.mxu0 %v1384
  %2511 = vmatpush2.msra.mxu0 %v1383
  %2512 = vmatprep.mubr.f32.mxu0 %v984
  %2513 = vmatmul.mubr.f32.gmra.mxu0 %v983
  %v2514 = vpop.f32.mrf.mxu0
  %v2515 = vadd.f32 %v2438, %v2514
  %v2516 = vpop.f32.mrf.mxu0
  %v2517 = vadd.f32 %v2440, %v2516
  %2518 = vmatprep.mubr.f32.mxu0 %v992
  %2519 = vmatmul.mubr.f32.gmra.mxu0 %v991
  %v2520 = vpop.f32.mrf.mxu0
  %v2521 = vadd.f32 %v2444, %v2520
  %v2522 = vpop.f32.mrf.mxu0
  %v2523 = vadd.f32 %v2446, %v2522
  %2524 = vdwg.mxu0
  %2525 = vmatprep.subr.mxu0 %v1632
  %2526 = vmatpush1.msra.mxu0 %v1631
  %2527 = vmatprep.subr.mxu0 %v1624
  %2528 = vmatpush1.msra.mxu0 %v1623
  %2529 = vmatprep.subr.mxu0 %v1616
  %2530 = vmatpush1.msra.mxu0 %v1615
  %2531 = vmatprep.subr.mxu0 %v1608
  %2532 = vmatpush1.msra.mxu0 %v1607
  %2533 = vmatprep.subr.mxu0 %v1600
  %2534 = vmatpush1.msra.mxu0 %v1599
  %2535 = vmatprep.subr.mxu0 %v1592
  %2536 = vmatpush1.msra.mxu0 %v1591
  %2537 = vmatprep.subr.mxu0 %v1584
  %2538 = vmatpush1.msra.mxu0 %v1583
  %2539 = vmatprep.subr.mxu0 %v1576
  %2540 = vmatpush1.msra.mxu0 %v1575
  %2541 = vmatprep.subr.mxu0 %v1568
  %2542 = vmatpush1.msra.mxu0 %v1567
  %2543 = vmatprep.subr.mxu0 %v1560
  %2544 = vmatpush1.msra.mxu0 %v1559
  %2545 = vmatprep.subr.mxu0 %v1552
  %2546 = vmatpush1.msra.mxu0 %v1551
  %2547 = vmatprep.subr.mxu0 %v1544
  %2548 = vmatpush1.msra.mxu0 %v1543
  %2549 = vmatprep.subr.mxu0 %v1536
  %2550 = vmatpush1.msra.mxu0 %v1535
  %2551 = vmatprep.subr.mxu0 %v1528
  %2552 = vmatpush1.msra.mxu0 %v1527
  %2553 = vmatprep.subr.mxu0 %v1520
  %2554 = vmatpush1.msra.mxu0 %v1519
  %2555 = vmatprep.subr.mxu0 %v1512
  %2556 = vmatpush1.msra.mxu0 %v1511
  %2557 = vmatprep.subr.mxu0 %v1760
  %2558 = vmatpush2.msra.mxu0 %v1759
  %2559 = vmatprep.subr.mxu0 %v1752
  %2560 = vmatpush2.msra.mxu0 %v1751
  %2561 = vmatprep.subr.mxu0 %v1744
  %2562 = vmatpush2.msra.mxu0 %v1743
  %2563 = vmatprep.subr.mxu0 %v1736
  %2564 = vmatpush2.msra.mxu0 %v1735
  %2565 = vmatprep.subr.mxu0 %v1728
  %2566 = vmatpush2.msra.mxu0 %v1727
  %2567 = vmatprep.subr.mxu0 %v1720
  %2568 = vmatpush2.msra.mxu0 %v1719
  %2569 = vmatprep.subr.mxu0 %v1712
  %2570 = vmatpush2.msra.mxu0 %v1711
  %2571 = vmatprep.subr.mxu0 %v1704
  %2572 = vmatpush2.msra.mxu0 %v1703
  %2573 = vmatprep.subr.mxu0 %v1696
  %2574 = vmatpush2.msra.mxu0 %v1695
  %2575 = vmatprep.subr.mxu0 %v1688
  %2576 = vmatpush2.msra.mxu0 %v1687
  %2577 = vmatprep.subr.mxu0 %v1680
  %2578 = vmatpush2.msra.mxu0 %v1679
  %2579 = vmatprep.subr.mxu0 %v1672
  %2580 = vmatpush2.msra.mxu0 %v1671
  %2581 = vmatprep.subr.mxu0 %v1664
  %2582 = vmatpush2.msra.mxu0 %v1663
  %2583 = vmatprep.subr.mxu0 %v1656
  %2584 = vmatpush2.msra.mxu0 %v1655
  %2585 = vmatprep.subr.mxu0 %v1648
  %2586 = vmatpush2.msra.mxu0 %v1647
  %2587 = vmatprep.subr.mxu0 %v1640
  %2588 = vmatpush2.msra.mxu0 %v1639
  %2589 = vmatprep.mubr.f32.mxu0 %v986
  %2590 = vmatmul.mubr.f32.gmra.mxu0 %v985
  %v2591 = vpop.f32.mrf.mxu0
  %v2592 = vadd.f32 %v2515, %v2591
  %v2593 = vpop.f32.mrf.mxu0
  %v2594 = vadd.f32 %v2517, %v2593
  %2595 = vmatprep.mubr.f32.mxu0 %v994
  %2596 = vmatmul.mubr.f32.gmra.mxu0 %v993
  %v2597 = vpop.f32.mrf.mxu0
  %v2598 = vadd.f32 %v2521, %v2597
  %v2599 = vpop.f32.mrf.mxu0
  %v2600 = vadd.f32 %v2523, %v2599
  %2601 = vdwg.mxu0
  %2602 = vmatprep.subr.mxu0 %v1888
  %2603 = vmatpush1.msra.mxu0 %v1887
  %2604 = vmatprep.subr.mxu0 %v1880
  %2605 = vmatpush1.msra.mxu0 %v1879
  %2606 = vmatprep.subr.mxu0 %v1872
  %2607 = vmatpush1.msra.mxu0 %v1871
  %2608 = vmatprep.subr.mxu0 %v1864
  %2609 = vmatpush1.msra.mxu0 %v1863
  %2610 = vmatprep.subr.mxu0 %v1856
  %2611 = vmatpush1.msra.mxu0 %v1855
  %2612 = vmatprep.subr.mxu0 %v1848
  %2613 = vmatpush1.msra.mxu0 %v1847
  %2614 = vmatprep.subr.mxu0 %v1840
  %2615 = vmatpush1.msra.mxu0 %v1839
  %2616 = vmatprep.subr.mxu0 %v1832
  %2617 = vmatpush1.msra.mxu0 %v1831
  %2618 = vmatprep.subr.mxu0 %v1824
  %2619 = vmatpush1.msra.mxu0 %v1823
  %2620 = vmatprep.subr.mxu0 %v1816
  %2621 = vmatpush1.msra.mxu0 %v1815
  %2622 = vmatprep.subr.mxu0 %v1808
  %2623 = vmatpush1.msra.mxu0 %v1807
  %2624 = vmatprep.subr.mxu0 %v1800
  %2625 = vmatpush1.msra.mxu0 %v1799
  %2626 = vmatprep.subr.mxu0 %v1792
  %2627 = vmatpush1.msra.mxu0 %v1791
  %2628 = vmatprep.subr.mxu0 %v1784
  %2629 = vmatpush1.msra.mxu0 %v1783
  %2630 = vmatprep.subr.mxu0 %v1776
  %2631 = vmatpush1.msra.mxu0 %v1775
  %2632 = vmatprep.subr.mxu0 %v1768
  %2633 = vmatpush1.msra.mxu0 %v1767
  %2634 = vmatprep.subr.mxu0 %v2016
  %2635 = vmatpush2.msra.mxu0 %v2015
  %2636 = vmatprep.subr.mxu0 %v2008
  %2637 = vmatpush2.msra.mxu0 %v2007
  %2638 = vmatprep.subr.mxu0 %v2000
  %2639 = vmatpush2.msra.mxu0 %v1999
  %2640 = vmatprep.subr.mxu0 %v1992
  %2641 = vmatpush2.msra.mxu0 %v1991
  %2642 = vmatprep.subr.mxu0 %v1984
  %2643 = vmatpush2.msra.mxu0 %v1983
  %2644 = vmatprep.subr.mxu0 %v1976
  %2645 = vmatpush2.msra.mxu0 %v1975
  %2646 = vmatprep.subr.mxu0 %v1968
  %2647 = vmatpush2.msra.mxu0 %v1967
  %2648 = vmatprep.subr.mxu0 %v1960
  %2649 = vmatpush2.msra.mxu0 %v1959
  %2650 = vmatprep.subr.mxu0 %v1952
  %2651 = vmatpush2.msra.mxu0 %v1951
  %2652 = vmatprep.subr.mxu0 %v1944
  %2653 = vmatpush2.msra.mxu0 %v1943
  %2654 = vmatprep.subr.mxu0 %v1936
  %2655 = vmatpush2.msra.mxu0 %v1935
  %2656 = vmatprep.subr.mxu0 %v1928
  %2657 = vmatpush2.msra.mxu0 %v1927
  %2658 = vmatprep.subr.mxu0 %v1920
  %2659 = vmatpush2.msra.mxu0 %v1919
  %2660 = vmatprep.subr.mxu0 %v1912
  %2661 = vmatpush2.msra.mxu0 %v1911
  %2662 = vmatprep.subr.mxu0 %v1904
  %2663 = vmatpush2.msra.mxu0 %v1903
  %2664 = vmatprep.subr.mxu0 %v1896
  %2665 = vmatpush2.msra.mxu0 %v1895
  %2666 = vmatprep.mubr.f32.mxu0 %v988
  %2667 = vmatmul.mubr.f32.gmra.mxu0 %v987
  %v2668 = vpop.f32.mrf.mxu0
  %v2669 = vadd.f32 %v2592, %v2668
  %v2670 = vpop.f32.mrf.mxu0
  %v2671 = vadd.f32 %v2594, %v2670
  %2672 = vmatprep.mubr.f32.mxu0 %v996
  %2673 = vmatmul.mubr.f32.gmra.mxu0 %v995
  %v2674 = vpop.f32.mrf.mxu0
  %v2675 = vadd.f32 %v2598, %v2674
  %v2676 = vpop.f32.mrf.mxu0
  %v2677 = vadd.f32 %v2600, %v2676
  %2678 = vdwg.mxu0
  %2679 = vmatprep.subr.mxu0 %v1122
  %2680 = vmatpush1.msra.mxu0 %v1121
  %2681 = vmatprep.subr.mxu0 %v1114
  %2682 = vmatpush1.msra.mxu0 %v1113
  %2683 = vmatprep.subr.mxu0 %v1106
  %2684 = vmatpush1.msra.mxu0 %v1105
  %2685 = vmatprep.subr.mxu0 %v1098
  %2686 = vmatpush1.msra.mxu0 %v1097
  %2687 = vmatprep.subr.mxu0 %v1090
  %2688 = vmatpush1.msra.mxu0 %v1089
  %2689 = vmatprep.subr.mxu0 %v1082
  %2690 = vmatpush1.msra.mxu0 %v1081
  %2691 = vmatprep.subr.mxu0 %v1074
  %2692 = vmatpush1.msra.mxu0 %v1073
  %2693 = vmatprep.subr.mxu0 %v1066
  %2694 = vmatpush1.msra.mxu0 %v1065
  %2695 = vmatprep.subr.mxu0 %v1058
  %2696 = vmatpush1.msra.mxu0 %v1057
  %2697 = vmatprep.subr.mxu0 %v1050
  %2698 = vmatpush1.msra.mxu0 %v1049
  %2699 = vmatprep.subr.mxu0 %v1042
  %2700 = vmatpush1.msra.mxu0 %v1041
  %2701 = vmatprep.subr.mxu0 %v1034
  %2702 = vmatpush1.msra.mxu0 %v1033
  %2703 = vmatprep.subr.mxu0 %v1026
  %2704 = vmatpush1.msra.mxu0 %v1025
  %2705 = vmatprep.subr.mxu0 %v1018
  %2706 = vmatpush1.msra.mxu0 %v1017
  %2707 = vmatprep.subr.mxu0 %v1010
  %2708 = vmatpush1.msra.mxu0 %v1009
  %2709 = vmatprep.subr.mxu0 %v1002
  %2710 = vmatpush1.msra.mxu0 %v1001
  %2711 = vmatprep.subr.mxu0 %v1250
  %2712 = vmatpush2.msra.mxu0 %v1249
  %2713 = vmatprep.subr.mxu0 %v1242
  %2714 = vmatpush2.msra.mxu0 %v1241
  %2715 = vmatprep.subr.mxu0 %v1234
  %2716 = vmatpush2.msra.mxu0 %v1233
  %2717 = vmatprep.subr.mxu0 %v1226
  %2718 = vmatpush2.msra.mxu0 %v1225
  %2719 = vmatprep.subr.mxu0 %v1218
  %2720 = vmatpush2.msra.mxu0 %v1217
  %2721 = vmatprep.subr.mxu0 %v1210
  %2722 = vmatpush2.msra.mxu0 %v1209
  %2723 = vmatprep.subr.mxu0 %v1202
  %2724 = vmatpush2.msra.mxu0 %v1201
  %2725 = vmatprep.subr.mxu0 %v1194
  %2726 = vmatpush2.msra.mxu0 %v1193
  %2727 = vmatprep.subr.mxu0 %v1186
  %2728 = vmatpush2.msra.mxu0 %v1185
  %2729 = vmatprep.subr.mxu0 %v1178
  %2730 = vmatpush2.msra.mxu0 %v1177
  %2731 = vmatprep.subr.mxu0 %v1170
  %2732 = vmatpush2.msra.mxu0 %v1169
  %2733 = vmatprep.subr.mxu0 %v1162
  %2734 = vmatpush2.msra.mxu0 %v1161
  %2735 = vmatprep.subr.mxu0 %v1154
  %2736 = vmatpush2.msra.mxu0 %v1153
  %2737 = vmatprep.subr.mxu0 %v1146
  %2738 = vmatpush2.msra.mxu0 %v1145
  %2739 = vmatprep.subr.mxu0 %v1138
  %2740 = vmatpush2.msra.mxu0 %v1137
  %2741 = vmatprep.subr.mxu0 %v1130
  %2742 = vmatpush2.msra.mxu0 %v1129
  %2743 = vmatprep.mubr.f32.mxu0 %v982
  %2744 = vmatmul.mubr.f32.gmra.mxu0 %v981
  %v2745 = vpop.f32.mrf.mxu0
  %v2746 = vadd.f32 %v2042, %v2745
  %v2747 = vpop.f32.mrf.mxu0
  %v2748 = vadd.f32 %v2046, %v2747
  %2749 = vmatprep.mubr.f32.mxu0 %v990
  %2750 = vmatmul.mubr.f32.gmra.mxu0 %v989
  %v2751 = vpop.f32.mrf.mxu0
  %v2752 = vadd.f32 %v2042, %v2751
  %v2753 = vpop.f32.mrf.mxu0
  %v2754 = vadd.f32 %v2046, %v2753
  %2755 = vdwg.mxu0
  %2756 = vmatprep.subr.mxu0 %v1378
  %2757 = vmatpush1.msra.mxu0 %v1377
  %2758 = vmatprep.subr.mxu0 %v1370
  %2759 = vmatpush1.msra.mxu0 %v1369
  %2760 = vmatprep.subr.mxu0 %v1362
  %2761 = vmatpush1.msra.mxu0 %v1361
  %2762 = vmatprep.subr.mxu0 %v1354
  %2763 = vmatpush1.msra.mxu0 %v1353
  %2764 = vmatprep.subr.mxu0 %v1346
  %2765 = vmatpush1.msra.mxu0 %v1345
  %2766 = vmatprep.subr.mxu0 %v1338
  %2767 = vmatpush1.msra.mxu0 %v1337
  %2768 = vmatprep.subr.mxu0 %v1330
  %2769 = vmatpush1.msra.mxu0 %v1329
  %2770 = vmatprep.subr.mxu0 %v1322
  %2771 = vmatpush1.msra.mxu0 %v1321
  %2772 = vmatprep.subr.mxu0 %v1314
  %2773 = vmatpush1.msra.mxu0 %v1313
  %2774 = vmatprep.subr.mxu0 %v1306
  %2775 = vmatpush1.msra.mxu0 %v1305
  %2776 = vmatprep.subr.mxu0 %v1298
  %2777 = vmatpush1.msra.mxu0 %v1297
  %2778 = vmatprep.subr.mxu0 %v1290
  %2779 = vmatpush1.msra.mxu0 %v1289
  %2780 = vmatprep.subr.mxu0 %v1282
  %2781 = vmatpush1.msra.mxu0 %v1281
  %2782 = vmatprep.subr.mxu0 %v1274
  %2783 = vmatpush1.msra.mxu0 %v1273
  %2784 = vmatprep.subr.mxu0 %v1266
  %2785 = vmatpush1.msra.mxu0 %v1265
  %2786 = vmatprep.subr.mxu0 %v1258
  %2787 = vmatpush1.msra.mxu0 %v1257
  %2788 = vmatprep.subr.mxu0 %v1506
  %2789 = vmatpush2.msra.mxu0 %v1505
  %2790 = vmatprep.subr.mxu0 %v1498
  %2791 = vmatpush2.msra.mxu0 %v1497
  %2792 = vmatprep.subr.mxu0 %v1490
  %2793 = vmatpush2.msra.mxu0 %v1489
  %2794 = vmatprep.subr.mxu0 %v1482
  %2795 = vmatpush2.msra.mxu0 %v1481
  %2796 = vmatprep.subr.mxu0 %v1474
  %2797 = vmatpush2.msra.mxu0 %v1473
  %2798 = vmatprep.subr.mxu0 %v1466
  %2799 = vmatpush2.msra.mxu0 %v1465
  %2800 = vmatprep.subr.mxu0 %v1458
  %2801 = vmatpush2.msra.mxu0 %v1457
  %2802 = vmatprep.subr.mxu0 %v1450
  %2803 = vmatpush2.msra.mxu0 %v1449
  %2804 = vmatprep.subr.mxu0 %v1442
  %2805 = vmatpush2.msra.mxu0 %v1441
  %2806 = vmatprep.subr.mxu0 %v1434
  %2807 = vmatpush2.msra.mxu0 %v1433
  %2808 = vmatprep.subr.mxu0 %v1426
  %2809 = vmatpush2.msra.mxu0 %v1425
  %2810 = vmatprep.subr.mxu0 %v1418
  %2811 = vmatpush2.msra.mxu0 %v1417
  %2812 = vmatprep.subr.mxu0 %v1410
  %2813 = vmatpush2.msra.mxu0 %v1409
  %2814 = vmatprep.subr.mxu0 %v1402
  %2815 = vmatpush2.msra.mxu0 %v1401
  %2816 = vmatprep.subr.mxu0 %v1394
  %2817 = vmatpush2.msra.mxu0 %v1393
  %2818 = vmatprep.subr.mxu0 %v1386
  %2819 = vmatpush2.msra.mxu0 %v1385
  %2820 = vmatprep.mubr.f32.mxu0 %v984
  %2821 = vmatmul.mubr.f32.gmra.mxu0 %v983
  %v2822 = vpop.f32.mrf.mxu0
  %v2823 = vadd.f32 %v2746, %v2822
  %v2824 = vpop.f32.mrf.mxu0
  %v2825 = vadd.f32 %v2748, %v2824
  %2826 = vmatprep.mubr.f32.mxu0 %v992
  %2827 = vmatmul.mubr.f32.gmra.mxu0 %v991
  %v2828 = vpop.f32.mrf.mxu0
  %v2829 = vadd.f32 %v2752, %v2828
  %v2830 = vpop.f32.mrf.mxu0
  %v2831 = vadd.f32 %v2754, %v2830
  %2832 = vdwg.mxu0
  %2833 = vmatprep.subr.mxu0 %v1634
  %2834 = vmatpush1.msra.mxu0 %v1633
  %2835 = vmatprep.subr.mxu0 %v1626
  %2836 = vmatpush1.msra.mxu0 %v1625
  %2837 = vmatprep.subr.mxu0 %v1618
  %2838 = vmatpush1.msra.mxu0 %v1617
  %2839 = vmatprep.subr.mxu0 %v1610
  %2840 = vmatpush1.msra.mxu0 %v1609
  %2841 = vmatprep.subr.mxu0 %v1602
  %2842 = vmatpush1.msra.mxu0 %v1601
  %2843 = vmatprep.subr.mxu0 %v1594
  %2844 = vmatpush1.msra.mxu0 %v1593
  %2845 = vmatprep.subr.mxu0 %v1586
  %2846 = vmatpush1.msra.mxu0 %v1585
  %2847 = vmatprep.subr.mxu0 %v1578
  %2848 = vmatpush1.msra.mxu0 %v1577
  %2849 = vmatprep.subr.mxu0 %v1570
  %2850 = vmatpush1.msra.mxu0 %v1569
  %2851 = vmatprep.subr.mxu0 %v1562
  %2852 = vmatpush1.msra.mxu0 %v1561
  %2853 = vmatprep.subr.mxu0 %v1554
  %2854 = vmatpush1.msra.mxu0 %v1553
  %2855 = vmatprep.subr.mxu0 %v1546
  %2856 = vmatpush1.msra.mxu0 %v1545
  %2857 = vmatprep.subr.mxu0 %v1538
  %2858 = vmatpush1.msra.mxu0 %v1537
  %2859 = vmatprep.subr.mxu0 %v1530
  %2860 = vmatpush1.msra.mxu0 %v1529
  %2861 = vmatprep.subr.mxu0 %v1522
  %2862 = vmatpush1.msra.mxu0 %v1521
  %2863 = vmatprep.subr.mxu0 %v1514
  %2864 = vmatpush1.msra.mxu0 %v1513
  %2865 = vmatprep.subr.mxu0 %v1762
  %2866 = vmatpush2.msra.mxu0 %v1761
  %2867 = vmatprep.subr.mxu0 %v1754
  %2868 = vmatpush2.msra.mxu0 %v1753
  %2869 = vmatprep.subr.mxu0 %v1746
  %2870 = vmatpush2.msra.mxu0 %v1745
  %2871 = vmatprep.subr.mxu0 %v1738
  %2872 = vmatpush2.msra.mxu0 %v1737
  %2873 = vmatprep.subr.mxu0 %v1730
  %2874 = vmatpush2.msra.mxu0 %v1729
  %2875 = vmatprep.subr.mxu0 %v1722
  %2876 = vmatpush2.msra.mxu0 %v1721
  %2877 = vmatprep.subr.mxu0 %v1714
  %2878 = vmatpush2.msra.mxu0 %v1713
  %2879 = vmatprep.subr.mxu0 %v1706
  %2880 = vmatpush2.msra.mxu0 %v1705
  %2881 = vmatprep.subr.mxu0 %v1698
  %2882 = vmatpush2.msra.mxu0 %v1697
  %2883 = vmatprep.subr.mxu0 %v1690
  %2884 = vmatpush2.msra.mxu0 %v1689
  %2885 = vmatprep.subr.mxu0 %v1682
  %2886 = vmatpush2.msra.mxu0 %v1681
  %2887 = vmatprep.subr.mxu0 %v1674
  %2888 = vmatpush2.msra.mxu0 %v1673
  %2889 = vmatprep.subr.mxu0 %v1666
  %2890 = vmatpush2.msra.mxu0 %v1665
  %2891 = vmatprep.subr.mxu0 %v1658
  %2892 = vmatpush2.msra.mxu0 %v1657
  %2893 = vmatprep.subr.mxu0 %v1650
  %2894 = vmatpush2.msra.mxu0 %v1649
  %2895 = vmatprep.subr.mxu0 %v1642
  %2896 = vmatpush2.msra.mxu0 %v1641
  %2897 = vmatprep.mubr.f32.mxu0 %v986
  %2898 = vmatmul.mubr.f32.gmra.mxu0 %v985
  %v2899 = vpop.f32.mrf.mxu0
  %v2900 = vadd.f32 %v2823, %v2899
  %v2901 = vpop.f32.mrf.mxu0
  %v2902 = vadd.f32 %v2825, %v2901
  %2903 = vmatprep.mubr.f32.mxu0 %v994
  %2904 = vmatmul.mubr.f32.gmra.mxu0 %v993
  %v2905 = vpop.f32.mrf.mxu0
  %v2906 = vadd.f32 %v2829, %v2905
  %v2907 = vpop.f32.mrf.mxu0
  %v2908 = vadd.f32 %v2831, %v2907
  %2909 = vdwg.mxu0
  %2910 = vmatprep.subr.mxu0 %v1890
  %2911 = vmatpush1.msra.mxu0 %v1889
  %2912 = vmatprep.subr.mxu0 %v1882
  %2913 = vmatpush1.msra.mxu0 %v1881
  %2914 = vmatprep.subr.mxu0 %v1874
  %2915 = vmatpush1.msra.mxu0 %v1873
  %2916 = vmatprep.subr.mxu0 %v1866
  %2917 = vmatpush1.msra.mxu0 %v1865
  %2918 = vmatprep.subr.mxu0 %v1858
  %2919 = vmatpush1.msra.mxu0 %v1857
  %2920 = vmatprep.subr.mxu0 %v1850
  %2921 = vmatpush1.msra.mxu0 %v1849
  %2922 = vmatprep.subr.mxu0 %v1842
  %2923 = vmatpush1.msra.mxu0 %v1841
  %2924 = vmatprep.subr.mxu0 %v1834
  %2925 = vmatpush1.msra.mxu0 %v1833
  %2926 = vmatprep.subr.mxu0 %v1826
  %2927 = vmatpush1.msra.mxu0 %v1825
  %2928 = vmatprep.subr.mxu0 %v1818
  %2929 = vmatpush1.msra.mxu0 %v1817
  %2930 = vmatprep.subr.mxu0 %v1810
  %2931 = vmatpush1.msra.mxu0 %v1809
  %2932 = vmatprep.subr.mxu0 %v1802
  %2933 = vmatpush1.msra.mxu0 %v1801
  %2934 = vmatprep.subr.mxu0 %v1794
  %2935 = vmatpush1.msra.mxu0 %v1793
  %2936 = vmatprep.subr.mxu0 %v1786
  %2937 = vmatpush1.msra.mxu0 %v1785
  %2938 = vmatprep.subr.mxu0 %v1778
  %2939 = vmatpush1.msra.mxu0 %v1777
  %2940 = vmatprep.subr.mxu0 %v1770
  %2941 = vmatpush1.msra.mxu0 %v1769
  %2942 = vmatprep.subr.mxu0 %v2018
  %2943 = vmatpush2.msra.mxu0 %v2017
  %2944 = vmatprep.subr.mxu0 %v2010
  %2945 = vmatpush2.msra.mxu0 %v2009
  %2946 = vmatprep.subr.mxu0 %v2002
  %2947 = vmatpush2.msra.mxu0 %v2001
  %2948 = vmatprep.subr.mxu0 %v1994
  %2949 = vmatpush2.msra.mxu0 %v1993
  %2950 = vmatprep.subr.mxu0 %v1986
  %2951 = vmatpush2.msra.mxu0 %v1985
  %2952 = vmatprep.subr.mxu0 %v1978
  %2953 = vmatpush2.msra.mxu0 %v1977
  %2954 = vmatprep.subr.mxu0 %v1970
  %2955 = vmatpush2.msra.mxu0 %v1969
  %2956 = vmatprep.subr.mxu0 %v1962
  %2957 = vmatpush2.msra.mxu0 %v1961
  %2958 = vmatprep.subr.mxu0 %v1954
  %2959 = vmatpush2.msra.mxu0 %v1953
  %2960 = vmatprep.subr.mxu0 %v1946
  %2961 = vmatpush2.msra.mxu0 %v1945
  %2962 = vmatprep.subr.mxu0 %v1938
  %2963 = vmatpush2.msra.mxu0 %v1937
  %2964 = vmatprep.subr.mxu0 %v1930
  %2965 = vmatpush2.msra.mxu0 %v1929
  %2966 = vmatprep.subr.mxu0 %v1922
  %2967 = vmatpush2.msra.mxu0 %v1921
  %2968 = vmatprep.subr.mxu0 %v1914
  %2969 = vmatpush2.msra.mxu0 %v1913
  %2970 = vmatprep.subr.mxu0 %v1906
  %2971 = vmatpush2.msra.mxu0 %v1905
  %2972 = vmatprep.subr.mxu0 %v1898
  %2973 = vmatpush2.msra.mxu0 %v1897
  %2974 = vmatprep.mubr.f32.mxu0 %v988
  %2975 = vmatmul.mubr.f32.gmra.mxu0 %v987
  %v2976 = vpop.f32.mrf.mxu0
  %v2977 = vadd.f32 %v2900, %v2976
  %v2978 = vpop.f32.mrf.mxu0
  %v2979 = vadd.f32 %v2902, %v2978
  %2980 = vmatprep.mubr.f32.mxu0 %v996
  %2981 = vmatmul.mubr.f32.gmra.mxu0 %v995
  %v2982 = vpop.f32.mrf.mxu0
  %v2983 = vadd.f32 %v2906, %v2982
  %v2984 = vpop.f32.mrf.mxu0
  %v2985 = vadd.f32 %v2908, %v2984
  %2986 = vdwg.mxu0
  %2987 = vmatprep.subr.mxu0 %v1124
  %2988 = vmatpush1.msra.mxu0 %v1123
  %2989 = vmatprep.subr.mxu0 %v1116
  %2990 = vmatpush1.msra.mxu0 %v1115
  %2991 = vmatprep.subr.mxu0 %v1108
  %2992 = vmatpush1.msra.mxu0 %v1107
  %2993 = vmatprep.subr.mxu0 %v1100
  %2994 = vmatpush1.msra.mxu0 %v1099
  %2995 = vmatprep.subr.mxu0 %v1092
  %2996 = vmatpush1.msra.mxu0 %v1091
  %2997 = vmatprep.subr.mxu0 %v1084
  %2998 = vmatpush1.msra.mxu0 %v1083
  %2999 = vmatprep.subr.mxu0 %v1076
  %3000 = vmatpush1.msra.mxu0 %v1075
  %3001 = vmatprep.subr.mxu0 %v1068
  %3002 = vmatpush1.msra.mxu0 %v1067
  %3003 = vmatprep.subr.mxu0 %v1060
  %3004 = vmatpush1.msra.mxu0 %v1059
  %3005 = vmatprep.subr.mxu0 %v1052
  %3006 = vmatpush1.msra.mxu0 %v1051
  %3007 = vmatprep.subr.mxu0 %v1044
  %3008 = vmatpush1.msra.mxu0 %v1043
  %3009 = vmatprep.subr.mxu0 %v1036
  %3010 = vmatpush1.msra.mxu0 %v1035
  %3011 = vmatprep.subr.mxu0 %v1028
  %3012 = vmatpush1.msra.mxu0 %v1027
  %3013 = vmatprep.subr.mxu0 %v1020
  %3014 = vmatpush1.msra.mxu0 %v1019
  %3015 = vmatprep.subr.mxu0 %v1012
  %3016 = vmatpush1.msra.mxu0 %v1011
  %3017 = vmatprep.subr.mxu0 %v1004
  %3018 = vmatpush1.msra.mxu0 %v1003
  %3019 = vmatprep.subr.mxu0 %v1252
  %3020 = vmatpush2.msra.mxu0 %v1251
  %3021 = vmatprep.subr.mxu0 %v1244
  %3022 = vmatpush2.msra.mxu0 %v1243
  %3023 = vmatprep.subr.mxu0 %v1236
  %3024 = vmatpush2.msra.mxu0 %v1235
  %3025 = vmatprep.subr.mxu0 %v1228
  %3026 = vmatpush2.msra.mxu0 %v1227
  %3027 = vmatprep.subr.mxu0 %v1220
  %3028 = vmatpush2.msra.mxu0 %v1219
  %3029 = vmatprep.subr.mxu0 %v1212
  %3030 = vmatpush2.msra.mxu0 %v1211
  %3031 = vmatprep.subr.mxu0 %v1204
  %3032 = vmatpush2.msra.mxu0 %v1203
  %3033 = vmatprep.subr.mxu0 %v1196
  %3034 = vmatpush2.msra.mxu0 %v1195
  %3035 = vmatprep.subr.mxu0 %v1188
  %3036 = vmatpush2.msra.mxu0 %v1187
  %3037 = vmatprep.subr.mxu0 %v1180
  %3038 = vmatpush2.msra.mxu0 %v1179
  %3039 = vmatprep.subr.mxu0 %v1172
  %3040 = vmatpush2.msra.mxu0 %v1171
  %3041 = vmatprep.subr.mxu0 %v1164
  %3042 = vmatpush2.msra.mxu0 %v1163
  %3043 = vmatprep.subr.mxu0 %v1156
  %3044 = vmatpush2.msra.mxu0 %v1155
  %3045 = vmatprep.subr.mxu0 %v1148
  %3046 = vmatpush2.msra.mxu0 %v1147
  %3047 = vmatprep.subr.mxu0 %v1140
  %3048 = vmatpush2.msra.mxu0 %v1139
  %3049 = vmatprep.subr.mxu0 %v1132
  %3050 = vmatpush2.msra.mxu0 %v1131
  %3051 = vmatprep.mubr.f32.mxu0 %v982
  %3052 = vmatmul.mubr.f32.gmra.mxu0 %v981
  %v3053 = vpop.f32.mrf.mxu0
  %v3054 = vadd.f32 %v2050, %v3053
  %v3055 = vpop.f32.mrf.mxu0
  %v3056 = vadd.f32 %v2054, %v3055
  %3057 = vmatprep.mubr.f32.mxu0 %v990
  %3058 = vmatmul.mubr.f32.gmra.mxu0 %v989
  %v3059 = vpop.f32.mrf.mxu0
  %v3060 = vadd.f32 %v2050, %v3059
  %v3061 = vpop.f32.mrf.mxu0
  %v3062 = vadd.f32 %v2054, %v3061
  %3063 = vdwg.mxu0
  %3064 = vmatprep.subr.mxu0 %v1380
  %3065 = vmatpush1.msra.mxu0 %v1379
  %3066 = vmatprep.subr.mxu0 %v1372
  %3067 = vmatpush1.msra.mxu0 %v1371
  %3068 = vmatprep.subr.mxu0 %v1364
  %3069 = vmatpush1.msra.mxu0 %v1363
  %3070 = vmatprep.subr.mxu0 %v1356
  %3071 = vmatpush1.msra.mxu0 %v1355
  %3072 = vmatprep.subr.mxu0 %v1348
  %3073 = vmatpush1.msra.mxu0 %v1347
  %3074 = vmatprep.subr.mxu0 %v1340
  %3075 = vmatpush1.msra.mxu0 %v1339
  %3076 = vmatprep.subr.mxu0 %v1332
  %3077 = vmatpush1.msra.mxu0 %v1331
  %3078 = vmatprep.subr.mxu0 %v1324
  %3079 = vmatpush1.msra.mxu0 %v1323
  %3080 = vmatprep.subr.mxu0 %v1316
  %3081 = vmatpush1.msra.mxu0 %v1315
  %3082 = vmatprep.subr.mxu0 %v1308
  %3083 = vmatpush1.msra.mxu0 %v1307
  %3084 = vmatprep.subr.mxu0 %v1300
  %3085 = vmatpush1.msra.mxu0 %v1299
  %3086 = vmatprep.subr.mxu0 %v1292
  %3087 = vmatpush1.msra.mxu0 %v1291
  %3088 = vmatprep.subr.mxu0 %v1284
  %3089 = vmatpush1.msra.mxu0 %v1283
  %3090 = vmatprep.subr.mxu0 %v1276
  %3091 = vmatpush1.msra.mxu0 %v1275
  %3092 = vmatprep.subr.mxu0 %v1268
  %3093 = vmatpush1.msra.mxu0 %v1267
  %3094 = vmatprep.subr.mxu0 %v1260
  %3095 = vmatpush1.msra.mxu0 %v1259
  %3096 = vmatprep.subr.mxu0 %v1508
  %3097 = vmatpush2.msra.mxu0 %v1507
  %3098 = vmatprep.subr.mxu0 %v1500
  %3099 = vmatpush2.msra.mxu0 %v1499
  %3100 = vmatprep.subr.mxu0 %v1492
  %3101 = vmatpush2.msra.mxu0 %v1491
  %3102 = vmatprep.subr.mxu0 %v1484
  %3103 = vmatpush2.msra.mxu0 %v1483
  %3104 = vmatprep.subr.mxu0 %v1476
  %3105 = vmatpush2.msra.mxu0 %v1475
  %3106 = vmatprep.subr.mxu0 %v1468
  %3107 = vmatpush2.msra.mxu0 %v1467
  %3108 = vmatprep.subr.mxu0 %v1460
  %3109 = vmatpush2.msra.mxu0 %v1459
  %3110 = vmatprep.subr.mxu0 %v1452
  %3111 = vmatpush2.msra.mxu0 %v1451
  %3112 = vmatprep.subr.mxu0 %v1444
  %3113 = vmatpush2.msra.mxu0 %v1443
  %3114 = vmatprep.subr.mxu0 %v1436
  %3115 = vmatpush2.msra.mxu0 %v1435
  %3116 = vmatprep.subr.mxu0 %v1428
  %3117 = vmatpush2.msra.mxu0 %v1427
  %3118 = vmatprep.subr.mxu0 %v1420
  %3119 = vmatpush2.msra.mxu0 %v1419
  %3120 = vmatprep.subr.mxu0 %v1412
  %3121 = vmatpush2.msra.mxu0 %v1411
  %3122 = vmatprep.subr.mxu0 %v1404
  %3123 = vmatpush2.msra.mxu0 %v1403
  %3124 = vmatprep.subr.mxu0 %v1396
  %3125 = vmatpush2.msra.mxu0 %v1395
  %3126 = vmatprep.subr.mxu0 %v1388
  %3127 = vmatpush2.msra.mxu0 %v1387
  %3128 = vmatprep.mubr.f32.mxu0 %v984
  %3129 = vmatmul.mubr.f32.gmra.mxu0 %v983
  %v3130 = vpop.f32.mrf.mxu0
  %v3131 = vadd.f32 %v3054, %v3130
  %v3132 = vpop.f32.mrf.mxu0
  %v3133 = vadd.f32 %v3056, %v3132
  %3134 = vmatprep.mubr.f32.mxu0 %v992
  %3135 = vmatmul.mubr.f32.gmra.mxu0 %v991
  %v3136 = vpop.f32.mrf.mxu0
  %v3137 = vadd.f32 %v3060, %v3136
  %v3138 = vpop.f32.mrf.mxu0
  %v3139 = vadd.f32 %v3062, %v3138
  %3140 = vdwg.mxu0
  %3141 = vmatprep.subr.mxu0 %v1636
  %3142 = vmatpush1.msra.mxu0 %v1635
  %3143 = vmatprep.subr.mxu0 %v1628
  %3144 = vmatpush1.msra.mxu0 %v1627
  %3145 = vmatprep.subr.mxu0 %v1620
  %3146 = vmatpush1.msra.mxu0 %v1619
  %3147 = vmatprep.subr.mxu0 %v1612
  %3148 = vmatpush1.msra.mxu0 %v1611
  %3149 = vmatprep.subr.mxu0 %v1604
  %3150 = vmatpush1.msra.mxu0 %v1603
  %3151 = vmatprep.subr.mxu0 %v1596
  %3152 = vmatpush1.msra.mxu0 %v1595
  %3153 = vmatprep.subr.mxu0 %v1588
  %3154 = vmatpush1.msra.mxu0 %v1587
  %3155 = vmatprep.subr.mxu0 %v1580
  %3156 = vmatpush1.msra.mxu0 %v1579
  %3157 = vmatprep.subr.mxu0 %v1572
  %3158 = vmatpush1.msra.mxu0 %v1571
  %3159 = vmatprep.subr.mxu0 %v1564
  %3160 = vmatpush1.msra.mxu0 %v1563
  %3161 = vmatprep.subr.mxu0 %v1556
  %3162 = vmatpush1.msra.mxu0 %v1555
  %3163 = vmatprep.subr.mxu0 %v1548
  %3164 = vmatpush1.msra.mxu0 %v1547
  %3165 = vmatprep.subr.mxu0 %v1540
  %3166 = vmatpush1.msra.mxu0 %v1539
  %3167 = vmatprep.subr.mxu0 %v1532
  %3168 = vmatpush1.msra.mxu0 %v1531
  %3169 = vmatprep.subr.mxu0 %v1524
  %3170 = vmatpush1.msra.mxu0 %v1523
  %3171 = vmatprep.subr.mxu0 %v1516
  %3172 = vmatpush1.msra.mxu0 %v1515
  %3173 = vmatprep.subr.mxu0 %v1764
  %3174 = vmatpush2.msra.mxu0 %v1763
  %3175 = vmatprep.subr.mxu0 %v1756
  %3176 = vmatpush2.msra.mxu0 %v1755
  %3177 = vmatprep.subr.mxu0 %v1748
  %3178 = vmatpush2.msra.mxu0 %v1747
  %3179 = vmatprep.subr.mxu0 %v1740
  %3180 = vmatpush2.msra.mxu0 %v1739
  %3181 = vmatprep.subr.mxu0 %v1732
  %3182 = vmatpush2.msra.mxu0 %v1731
  %3183 = vmatprep.subr.mxu0 %v1724
  %3184 = vmatpush2.msra.mxu0 %v1723
  %3185 = vmatprep.subr.mxu0 %v1716
  %3186 = vmatpush2.msra.mxu0 %v1715
  %3187 = vmatprep.subr.mxu0 %v1708
  %3188 = vmatpush2.msra.mxu0 %v1707
  %3189 = vmatprep.subr.mxu0 %v1700
  %3190 = vmatpush2.msra.mxu0 %v1699
  %3191 = vmatprep.subr.mxu0 %v1692
  %3192 = vmatpush2.msra.mxu0 %v1691
  %3193 = vmatprep.subr.mxu0 %v1684
  %3194 = vmatpush2.msra.mxu0 %v1683
  %3195 = vmatprep.subr.mxu0 %v1676
  %3196 = vmatpush2.msra.mxu0 %v1675
  %3197 = vmatprep.subr.mxu0 %v1668
  %3198 = vmatpush2.msra.mxu0 %v1667
  %3199 = vmatprep.subr.mxu0 %v1660
  %3200 = vmatpush2.msra.mxu0 %v1659
  %3201 = vmatprep.subr.mxu0 %v1652
  %3202 = vmatpush2.msra.mxu0 %v1651
  %3203 = vmatprep.subr.mxu0 %v1644
  %3204 = vmatpush2.msra.mxu0 %v1643
  %3205 = vmatprep.mubr.f32.mxu0 %v986
  %3206 = vmatmul.mubr.f32.gmra.mxu0 %v985
  %v3207 = vpop.f32.mrf.mxu0
  %v3208 = vadd.f32 %v3131, %v3207
  %v3209 = vpop.f32.mrf.mxu0
  %v3210 = vadd.f32 %v3133, %v3209
  %3211 = vmatprep.mubr.f32.mxu0 %v994
  %3212 = vmatmul.mubr.f32.gmra.mxu0 %v993
  %v3213 = vpop.f32.mrf.mxu0
  %v3214 = vadd.f32 %v3137, %v3213
  %v3215 = vpop.f32.mrf.mxu0
  %v3216 = vadd.f32 %v3139, %v3215
  %3217 = vdwg.mxu0
  %3218 = vmatprep.subr.mxu0 %v1892
  %3219 = vmatpush1.msra.mxu0 %v1891
  %3220 = vmatprep.subr.mxu0 %v1884
  %3221 = vmatpush1.msra.mxu0 %v1883
  %3222 = vmatprep.subr.mxu0 %v1876
  %3223 = vmatpush1.msra.mxu0 %v1875
  %3224 = vmatprep.subr.mxu0 %v1868
  %3225 = vmatpush1.msra.mxu0 %v1867
  %3226 = vmatprep.subr.mxu0 %v1860
  %3227 = vmatpush1.msra.mxu0 %v1859
  %3228 = vmatprep.subr.mxu0 %v1852
  %3229 = vmatpush1.msra.mxu0 %v1851
  %3230 = vmatprep.subr.mxu0 %v1844
  %3231 = vmatpush1.msra.mxu0 %v1843
  %3232 = vmatprep.subr.mxu0 %v1836
  %3233 = vmatpush1.msra.mxu0 %v1835
  %3234 = vmatprep.subr.mxu0 %v1828
  %3235 = vmatpush1.msra.mxu0 %v1827
  %3236 = vmatprep.subr.mxu0 %v1820
  %3237 = vmatpush1.msra.mxu0 %v1819
  %3238 = vmatprep.subr.mxu0 %v1812
  %3239 = vmatpush1.msra.mxu0 %v1811
  %3240 = vmatprep.subr.mxu0 %v1804
  %3241 = vmatpush1.msra.mxu0 %v1803
  %3242 = vmatprep.subr.mxu0 %v1796
  %3243 = vmatpush1.msra.mxu0 %v1795
  %3244 = vmatprep.subr.mxu0 %v1788
  %3245 = vmatpush1.msra.mxu0 %v1787
  %3246 = vmatprep.subr.mxu0 %v1780
  %3247 = vmatpush1.msra.mxu0 %v1779
  %3248 = vmatprep.subr.mxu0 %v1772
  %3249 = vmatpush1.msra.mxu0 %v1771
  %3250 = vmatprep.subr.mxu0 %v2020
  %3251 = vmatpush2.msra.mxu0 %v2019
  %3252 = vmatprep.subr.mxu0 %v2012
  %3253 = vmatpush2.msra.mxu0 %v2011
  %3254 = vmatprep.subr.mxu0 %v2004
  %3255 = vmatpush2.msra.mxu0 %v2003
  %3256 = vmatprep.subr.mxu0 %v1996
  %3257 = vmatpush2.msra.mxu0 %v1995
  %3258 = vmatprep.subr.mxu0 %v1988
  %3259 = vmatpush2.msra.mxu0 %v1987
  %3260 = vmatprep.subr.mxu0 %v1980
  %3261 = vmatpush2.msra.mxu0 %v1979
  %3262 = vmatprep.subr.mxu0 %v1972
  %3263 = vmatpush2.msra.mxu0 %v1971
  %3264 = vmatprep.subr.mxu0 %v1964
  %3265 = vmatpush2.msra.mxu0 %v1963
  %3266 = vmatprep.subr.mxu0 %v1956
  %3267 = vmatpush2.msra.mxu0 %v1955
  %3268 = vmatprep.subr.mxu0 %v1948
  %3269 = vmatpush2.msra.mxu0 %v1947
  %3270 = vmatprep.subr.mxu0 %v1940
  %3271 = vmatpush2.msra.mxu0 %v1939
  %3272 = vmatprep.subr.mxu0 %v1932
  %3273 = vmatpush2.msra.mxu0 %v1931
  %3274 = vmatprep.subr.mxu0 %v1924
  %3275 = vmatpush2.msra.mxu0 %v1923
  %3276 = vmatprep.subr.mxu0 %v1916
  %3277 = vmatpush2.msra.mxu0 %v1915
  %3278 = vmatprep.subr.mxu0 %v1908
  %3279 = vmatpush2.msra.mxu0 %v1907
  %3280 = vmatprep.subr.mxu0 %v1900
  %3281 = vmatpush2.msra.mxu0 %v1899
  %3282 = vmatprep.mubr.f32.mxu0 %v988
  %3283 = vmatmul.mubr.f32.gmra.mxu0 %v987
  %v3284 = vpop.f32.mrf.mxu0
  %v3285 = vadd.f32 %v3208, %v3284
  %v3286 = vpop.f32.mrf.mxu0
  %v3287 = vadd.f32 %v3210, %v3286
  %3288 = vmatprep.mubr.f32.mxu0 %v996
  %3289 = vmatmul.mubr.f32.gmra.mxu0 %v995
  %v3290 = vpop.f32.mrf.mxu0
  %v3291 = vadd.f32 %v3214, %v3290
  %v3292 = vpop.f32.mrf.mxu0
  %v3293 = vadd.f32 %v3216, %v3292
  %3294 = vdwg.mxu0
  %3295 = vst [vmem:[%s6] sm:$0xff] %v2361
  %3296 = vst [vmem:[%s6 + $0x8] sm:$0xff] %v2363
  %3297 = vst [vmem:[%s6 + $0x10] sm:$0xff] %v2669
  %3298 = vst [vmem:[%s6 + $0x18] sm:$0xff] %v2671
  %3299 = vst [vmem:[%s6 + $0x20] sm:$0xff] %v2367
  %3300 = vst [vmem:[%s6 + $0x28] sm:$0xff] %v2369
  %3301 = vst [vmem:[%s6 + $0x30] sm:$0xff] %v2675
  %3302 = vst [vmem:[%s6 + $0x38] sm:$0xff] %v2677
  %3303 = vst [vmem:[%s7] sm:$0xff] %v2977
  %3304 = vst [vmem:[%s7 + $0x8] sm:$0xff] %v2979
  %3305 = vst [vmem:[%s7 + $0x10] sm:$0xff] %v3285
  %3306 = vst [vmem:[%s7 + $0x18] sm:$0xff] %v3287
  %3307 = vst [vmem:[%s7 + $0x20] sm:$0xff] %v2983
  %3308 = vst [vmem:[%s7 + $0x28] sm:$0xff] %v2985
  %3309 = vst [vmem:[%s7 + $0x30] sm:$0xff] %v3291
  %3310 = vst [vmem:[%s7 + $0x38] sm:$0xff] %v3293
  // Predicated region
  $region26: #{ocr_forward.3} parent=0 // pred_check
    _
  $region27: #{ocr_forward.3} parent=0 // pred_check_branch
    %3312 = sbr.rel (0) target = $region29
  $region28: #{ocr_forward.3} parent=0 // pred_region
    _
  $region29: #{ocr_forward.3} parent=0 // pred_fallthru
    _
  // Predicated region
  $region30: #{ocr_forward.3} parent=0 // pred_check
    _
  $region31: #{ocr_forward.3} parent=0 // pred_check_branch
    %3314 = sbr.rel (0) target = $region33
  $region32: #{ocr_forward.3} parent=0 // pred_region
    _
  $region33: #{ocr_forward.3} parent=0 // pred_fallthru
    _
  // Predicated region
  $region34: #{ocr_forward.3} parent=0 // pred_check
    _
  $region35: #{ocr_forward.3} parent=0 // pred_check_branch
    %3316 = sbr.rel (0) target = $region37
  $region36: #{ocr_forward.3} parent=0 // pred_region
    _
  $region37: #{ocr_forward.3} parent=0 // pred_fallthru
    _
  // Predicated region
  $region38: #{ocr_forward.3} parent=0 // pred_check
    _
  $region39: #{ocr_forward.3} parent=0 // pred_check_branch
    %3318 = sbr.rel (0) target = $region41
  $region40: #{ocr_forward.3} parent=0 // pred_region
    _
  $region41: #{ocr_forward.3} parent=0 // pred_fallthru
    _

// kernel: ocr_forward.5
$region0: #{ocr_forward.5}
  #allocation0 [shape = 'u32[]', space=smem, size = 0x4, offset = 0x4, fixed_abs, tag = 'smem constant byte address 0x4 - core index']
  #allocation1 [shape = 'u32[144,128]{1,0:T(1,128)}', space=vmem, size = 0x12000, scoped, tag = 'internal scratch']
  %s0 = inlined_call_operand.vmem [shape: f32[16,128], index: 0, kind: input, shape index: {}]
  %s1 = inlined_call_operand.vmem [shape: f32[16,128], index: 1, kind: input, shape index: {}]
  %s2 = inlined_call_operand.vmem [shape: f32[128,128], index: 2, kind: input, shape index: {}]
  %s3 = inlined_call_operand.vmem [shape: f32[128,128], index: 3, kind: input, shape index: {}]
  %s4 = inlined_call_operand.vmem [shape: f32[1,128], index: 4, kind: input, shape index: {}]
  %s5 = inlined_call_operand.hbm [shape: f32[16,128], index: 5, kind: output, shape index: {}]
  %s6 = sld [smem:[#allocation0]]
  $region30: #{ocr_forward.5} parent=0
    _
  %s8 = ssub.s32 1, %s6
  %s9 = scalar_select 0, %s8, %s6
  $region1: #{ocr_forward.5} parent=0
    #allocation2 [shape = 'u8[8192]{0}', space=vmem, size = 0x2000, scoped, tag = 'output window, operand 0, single buffered']
    #allocation3 [shape = 's32[1]{0}', space=sflag, size = 0x4, scoped, tag = 'scoped memory for ocr_forward.5']
    %10 = vsyncpa [#allocation3], 0
    // Predicated region
    $region2: #{ocr_forward.5} parent=1 // pred_check
      _
    $region3: #{ocr_forward.5} parent=1 // pred_check_branch
      %12 = sbr.rel (0) target = $region5
    $region4: #{ocr_forward.5} parent=1 // pred_region
      _
    $region5: #{ocr_forward.5} parent=1 // pred_fallthru
      _
    // Predicated region
    $region6: #{ocr_forward.5} parent=1 // pred_check
      _
    $region7: #{ocr_forward.5} parent=1 // pred_check_branch
      %14 = sbr.rel (0) target = $region9
    $region8: #{ocr_forward.5} parent=1 // pred_region
      _
    $region9: #{ocr_forward.5} parent=1 // pred_fallthru
      _
    // Predicated region
    $region10: #{ocr_forward.5} parent=1 // pred_check
      _
    $region11: #{ocr_forward.5} parent=1 // pred_check_branch
      %16 = sbr.rel (0) target = $region13
    $region12: #{ocr_forward.5} parent=1 // pred_region
      _
    $region13: #{ocr_forward.5} parent=1 // pred_fallthru
      _
    // Predicated region
    $region14: #{ocr_forward.5} parent=1 // pred_check
      _
    $region15: #{ocr_forward.5} parent=1 // pred_check_branch
      %18 = sbr.rel (0) target = $region17
    $region16: #{ocr_forward.5} parent=1 // pred_region
      _
    $region17: #{ocr_forward.5} parent=1 // pred_fallthru
      _
    // Predicated region
    $region18: #{ocr_forward.5} parent=1 // pred_check
      _
    $region19: #{ocr_forward.5} parent=1 // pred_check_branch
      %20 = sbr.rel (0) target = $region21
    $region20: #{ocr_forward.5} parent=1 // pred_region
      _
    $region21: #{ocr_forward.5} parent=1 // pred_fallthru
      _
    %v21 = vld [vmem:[%s0] sm:$0xff]
    %v22 = vld [vmem:[%s0 + $0x8] sm:$0xff]
    %v23 = vld [vmem:[%s2] sm:$0xff]
    %v24 = vld [vmem:[%s2 + $0x8] sm:$0xff]
    %v25 = vld [vmem:[%s2 + $0x10] sm:$0xff]
    %v26 = vld [vmem:[%s2 + $0x18] sm:$0xff]
    %v27 = vld [vmem:[%s2 + $0x20] sm:$0xff]
    %v28 = vld [vmem:[%s2 + $0x28] sm:$0xff]
    %v29 = vld [vmem:[%s2 + $0x30] sm:$0xff]
    %v30 = vld [vmem:[%s2 + $0x38] sm:$0xff]
    %v31 = vld [vmem:[%s2 + $0x40] sm:$0xff]
    %v32 = vld [vmem:[%s2 + $0x48] sm:$0xff]
    %v33 = vld [vmem:[%s2 + $0x50] sm:$0xff]
    %v34 = vld [vmem:[%s2 + $0x58] sm:$0xff]
    %v35 = vld [vmem:[%s2 + $0x60] sm:$0xff]
    %v36 = vld [vmem:[%s2 + $0x68] sm:$0xff]
    %v37 = vld [vmem:[%s2 + $0x70] sm:$0xff]
    %v38 = vld [vmem:[%s2 + $0x78] sm:$0xff]
    %v39 = vld [vmem:[%s1] sm:$0xff]
    %v40 = vld [vmem:[%s1 + $0x8] sm:$0xff]
    %v41 = vld [vmem:[%s3] sm:$0xff]
    %v42 = vld [vmem:[%s3 + $0x8] sm:$0xff]
    %v43 = vld [vmem:[%s3 + $0x10] sm:$0xff]
    %v44 = vld [vmem:[%s3 + $0x18] sm:$0xff]
    %v45 = vld [vmem:[%s3 + $0x20] sm:$0xff]
    %v46 = vld [vmem:[%s3 + $0x28] sm:$0xff]
    %v47 = vld [vmem:[%s3 + $0x30] sm:$0xff]
    %v48 = vld [vmem:[%s3 + $0x38] sm:$0xff]
    %v49 = vld [vmem:[%s3 + $0x40] sm:$0xff]
    %v50 = vld [vmem:[%s3 + $0x48] sm:$0xff]
    %v51 = vld [vmem:[%s3 + $0x50] sm:$0xff]
    %v52 = vld [vmem:[%s3 + $0x58] sm:$0xff]
    %v53 = vld [vmem:[%s3 + $0x60] sm:$0xff]
    %v54 = vld [vmem:[%s3 + $0x68] sm:$0xff]
    %v55 = vld [vmem:[%s3 + $0x70] sm:$0xff]
    %v56 = vld [vmem:[%s3 + $0x78] sm:$0xff]
    %57 = vmatprep.subr.mxu0 0.0
    %58 = vmatpush1.msra.mxu0 %v56
    %59 = vmatprep.subr.mxu0 0.0
    %60 = vmatpush1.msra.mxu0 %v55
    %61 = vmatprep.subr.mxu0 0.0
    %62 = vmatpush1.msra.mxu0 %v54
    %63 = vmatprep.subr.mxu0 0.0
    %64 = vmatpush1.msra.mxu0 %v53
    %65 = vmatprep.subr.mxu0 0.0
    %66 = vmatpush1.msra.mxu0 %v52
    %67 = vmatprep.subr.mxu0 0.0
    %68 = vmatpush1.msra.mxu0 %v51
    %69 = vmatprep.subr.mxu0 0.0
    %70 = vmatpush1.msra.mxu0 %v50
    %71 = vmatprep.subr.mxu0 0.0
    %72 = vmatpush1.msra.mxu0 %v49
    %73 = vmatprep.subr.mxu0 0.0
    %74 = vmatpush1.msra.mxu0 %v48
    %75 = vmatprep.subr.mxu0 0.0
    %76 = vmatpush1.msra.mxu0 %v47
    %77 = vmatprep.subr.mxu0 0.0
    %78 = vmatpush1.msra.mxu0 %v46
    %79 = vmatprep.subr.mxu0 0.0
    %80 = vmatpush1.msra.mxu0 %v45
    %81 = vmatprep.subr.mxu0 0.0
    %82 = vmatpush1.msra.mxu0 %v44
    %83 = vmatprep.subr.mxu0 0.0
    %84 = vmatpush1.msra.mxu0 %v43
    %85 = vmatprep.subr.mxu0 0.0
    %86 = vmatpush1.msra.mxu0 %v42
    %87 = vmatprep.subr.mxu0 0.0
    %88 = vmatpush1.msra.mxu0 %v41
    %89 = vmatprep.subr.mxu0 0.0
    %90 = vmatpush2.msra.mxu0 0.0
    %91 = vmatprep.subr.mxu0 0.0
    %92 = vmatpush2.msra.mxu0 0.0
    %93 = vmatprep.subr.mxu0 0.0
    %94 = vmatpush2.msra.mxu0 0.0
    %95 = vmatprep.subr.mxu0 0.0
    %96 = vmatpush2.msra.mxu0 0.0
    %97 = vmatprep.subr.mxu0 0.0
    %98 = vmatpush2.msra.mxu0 0.0
    %99 = vmatprep.subr.mxu0 0.0
    %100 = vmatpush2.msra.mxu0 0.0
    %101 = vmatprep.subr.mxu0 0.0
    %102 = vmatpush2.msra.mxu0 0.0
    %103 = vmatprep.subr.mxu0 0.0
    %104 = vmatpush2.msra.mxu0 0.0
    %105 = vmatprep.subr.mxu0 0.0
    %106 = vmatpush2.msra.mxu0 0.0
    %107 = vmatprep.subr.mxu0 0.0
    %108 = vmatpush2.msra.mxu0 0.0
    %109 = vmatprep.subr.mxu0 0.0
    %110 = vmatpush2.msra.mxu0 0.0
    %111 = vmatprep.subr.mxu0 0.0
    %112 = vmatpush2.msra.mxu0 0.0
    %113 = vmatprep.subr.mxu0 0.0
    %114 = vmatpush2.msra.mxu0 0.0
    %115 = vmatprep.subr.mxu0 0.0
    %116 = vmatpush2.msra.mxu0 0.0
    %117 = vmatprep.subr.mxu0 0.0
    %118 = vmatpush2.msra.mxu0 0.0
    %119 = vmatprep.subr.mxu0 0.0
    %120 = vmatpush2.msra.mxu0 0.0
    %121 = vmatprep.mubr.f32.mxu0 0.0
    %122 = vmatmul.mubr.f32.gmra.mxu0 %v39
    %v123 = vpop.f32.mrf.mxu0
    %v124 = vadd.f32 0.0, %v123
    %v125 = vpop.f32.mrf.mxu0
    %126 = vmatprep.mubr.f32.mxu0 0.0
    %127 = vmatmul.mubr.f32.gmra.mxu0 %v40
    %v128 = vpop.f32.mrf.mxu0
    %v129 = vadd.f32 0.0, %v128
    %v130 = vpop.f32.mrf.mxu0
    %131 = vdwg.mxu0
    %132 = vmatprep.subr.mxu0 0.0
    %133 = vmatpush1.msra.mxu0 %v38
    %134 = vmatprep.subr.mxu0 0.0
    %135 = vmatpush1.msra.mxu0 %v37
    %136 = vmatprep.subr.mxu0 0.0
    %137 = vmatpush1.msra.mxu0 %v36
    %138 = vmatprep.subr.mxu0 0.0
    %139 = vmatpush1.msra.mxu0 %v35
    %140 = vmatprep.subr.mxu0 0.0
    %141 = vmatpush1.msra.mxu0 %v34
    %142 = vmatprep.subr.mxu0 0.0
    %143 = vmatpush1.msra.mxu0 %v33
    %144 = vmatprep.subr.mxu0 0.0
    %145 = vmatpush1.msra.mxu0 %v32
    %146 = vmatprep.subr.mxu0 0.0
    %147 = vmatpush1.msra.mxu0 %v31
    %148 = vmatprep.subr.mxu0 0.0
    %149 = vmatpush1.msra.mxu0 %v30
    %150 = vmatprep.subr.mxu0 0.0
    %151 = vmatpush1.msra.mxu0 %v29
    %152 = vmatprep.subr.mxu0 0.0
    %153 = vmatpush1.msra.mxu0 %v28
    %154 = vmatprep.subr.mxu0 0.0
    %155 = vmatpush1.msra.mxu0 %v27
    %156 = vmatprep.subr.mxu0 0.0
    %157 = vmatpush1.msra.mxu0 %v26
    %158 = vmatprep.subr.mxu0 0.0
    %159 = vmatpush1.msra.mxu0 %v25
    %160 = vmatprep.subr.mxu0 0.0
    %161 = vmatpush1.msra.mxu0 %v24
    %162 = vmatprep.subr.mxu0 0.0
    %163 = vmatpush1.msra.mxu0 %v23
    %164 = vmatprep.subr.mxu0 0.0
    %165 = vmatpush2.msra.mxu0 0.0
    %166 = vmatprep.subr.mxu0 0.0
    %167 = vmatpush2.msra.mxu0 0.0
    %168 = vmatprep.subr.mxu0 0.0
    %169 = vmatpush2.msra.mxu0 0.0
    %170 = vmatprep.subr.mxu0 0.0
    %171 = vmatpush2.msra.mxu0 0.0
    %172 = vmatprep.subr.mxu0 0.0
    %173 = vmatpush2.msra.mxu0 0.0
    %174 = vmatprep.subr.mxu0 0.0
    %175 = vmatpush2.msra.mxu0 0.0
    %176 = vmatprep.subr.mxu0 0.0
    %177 = vmatpush2.msra.mxu0 0.0
    %178 = vmatprep.subr.mxu0 0.0
    %179 = vmatpush2.msra.mxu0 0.0
    %180 = vmatprep.subr.mxu0 0.0
    %181 = vmatpush2.msra.mxu0 0.0
    %182 = vmatprep.subr.mxu0 0.0
    %183 = vmatpush2.msra.mxu0 0.0
    %184 = vmatprep.subr.mxu0 0.0
    %185 = vmatpush2.msra.mxu0 0.0
    %186 = vmatprep.subr.mxu0 0.0
    %187 = vmatpush2.msra.mxu0 0.0
    %188 = vmatprep.subr.mxu0 0.0
    %189 = vmatpush2.msra.mxu0 0.0
    %190 = vmatprep.subr.mxu0 0.0
    %191 = vmatpush2.msra.mxu0 0.0
    %192 = vmatprep.subr.mxu0 0.0
    %193 = vmatpush2.msra.mxu0 0.0
    %194 = vmatprep.subr.mxu0 0.0
    %195 = vmatpush2.msra.mxu0 0.0
    %196 = vmatprep.mubr.f32.mxu0 0.0
    %197 = vmatmul.mubr.f32.gmra.mxu0 %v21
    %v198 = vpop.f32.mrf.mxu0
    %v199 = vadd.f32 %v124, %v198
    %v200 = vpop.f32.mrf.mxu0
    %201 = vmatprep.mubr.f32.mxu0 0.0
    %202 = vmatmul.mubr.f32.gmra.mxu0 %v22
    %v203 = vpop.f32.mrf.mxu0
    %v204 = vadd.f32 %v129, %v203
    %v205 = vpop.f32.mrf.mxu0
    %206 = vdwg.mxu0
    %v207 = vld [vmem:[%s4] sm:$0x1]
    %v209 = vlaneseq
    %v210 = vshrl.u32 %v209, 7
    %v211 = vsub.s32 0, %v210
    %v212 = vrot.slane %v207, %v211
    %v214 = vadd.f32 %v199, %v212
    %v215 = vadd.f32 %v204, %v212
    %216 = vmax.xlane.f32.xlu0 %v214
    %v217 = vpop.xlane.xlu0 %216
    %218 = vmax.xlane.f32.xlu0 %v215
    %v219 = vpop.xlane.xlu0 %218
    %v220 = vsub.f32 %v214, %v217
    %v221 = vsub.f32 %v215, %v219
    %v222 = vmul.f32 %v220, 1.442695
    %v223 = vpow.pop %v222
    %v224 = vmul.f32 %v221, 1.442695
    %v225 = vpow.pop %v224
    %226 = vadd.xlane.f32.xlu0 %v223
    %v227 = vpop.xlane.xlu0 %226
    %228 = vadd.xlane.f32.xlu0 %v225
    %v229 = vpop.xlane.xlu0 %228
    %v230 = vlog2.pop %v227
    %v231 = vmul.f32 %v230, 0.6931472
    %v232 = vlog2.pop %v229
    %v233 = vmul.f32 %v232, 0.6931472
    %v234 = vadd.f32 %v217, %v231
    %v235 = vadd.f32 %v219, %v233
    %v236 = vsub.f32 %v214, %v234
    %v237 = vsub.f32 %v215, %v235
    %238 = vst [vmem:[#allocation2] sm:$0xff] %v236
    %239 = vst [vmem:[#allocation2 + $0x8] sm:$0xff] %v237
    // Predicated region
    $region22: #{ocr_forward.5} parent=1 // pred_check
      _
    $region23: #{ocr_forward.5} parent=1 // pred_check_branch
      %241 = sbr.rel (0) target = $region25
    $region24: #{ocr_forward.5} parent=1 // pred_region
      %s243 = ssub.s32 256, 256
      %244 = vsyncadd [#allocation3], %s243
      %s245 = sshll.u32 [#allocation2], 4
      %s246 = int_to_ptr.vmem [resolvable:$true] %s245
      %251 = dma.vmem_to_hbm [thread:$0]  %s246, 256, %s5, [#allocation3], 128, 128, 8
    $region25: #{ocr_forward.5} parent=1 // pred_fallthru
      _
    // Predicated region
    $region26: #{ocr_forward.5} parent=1 // pred_check
      _
    $region27: #{ocr_forward.5} parent=1 // pred_check_branch
      %253 = sbr.rel (0) target = $region29
    $region28: #{ocr_forward.5} parent=1 // pred_region
      %254 = dma.done [#allocation3], 256
    $region29: #{ocr_forward.5} parent=1 // pred_fallthru
      _
    %255 = vsyncpa [#allocation3], 1

// kernel: ocr_forward.4
$region0: #{ocr_forward.4}
  #allocation0 [shape = 'u32[]', space=smem, size = 0x4, offset = 0x4, fixed_abs, tag = 'smem constant byte address 0x4 - core index']
  #allocation1 [shape = 'u32[144,128]{1,0:T(1,128)}', space=vmem, size = 0x12000, scoped, tag = 'internal scratch']
  #allocation2 [shape = 'f32[2,128]{1,0:T(2,128)}', space=vmem, size = 0x400, scoped, tag = 'scratch operand']
  #allocation3 [shape = 'f32[2,128]{1,0:T(2,128)}', space=vmem, size = 0x400, scoped, tag = 'scratch operand']
  #allocation4 [shape = 'f32[2,128]{1,0:T(2,128)}', space=vmem, size = 0x400, scoped, tag = 'scratch operand']
  #allocation5 [shape = 'f32[2,128]{1,0:T(2,128)}', space=vmem, size = 0x400, scoped, tag = 'scratch operand']
  %s0 = inlined_call_operand.vmem [shape: f32[8,2,512], index: 0, kind: input, shape index: {}]
  %s1 = inlined_call_operand.vmem [shape: f32[8,2,512], index: 1, kind: input, shape index: {}]
  %s2 = inlined_call_operand.vmem [shape: f32[128,512], index: 2, kind: input, shape index: {}]
  %s3 = inlined_call_operand.vmem [shape: f32[128,512], index: 3, kind: input, shape index: {}]
  %s4 = inlined_call_operand.vmem [shape: f32[8,2,128], index: 4, kind: output, shape index: {0}]
  %s5 = inlined_call_operand.vmem [shape: f32[8,2,128], index: 5, kind: output, shape index: {1}]
  %6 = xla_tuple %s4, %s5
  %s7 = sld [smem:[#allocation0]]
  $region38: #{ocr_forward.4} parent=0
    _
  %s9 = ssub.s32 1, %s7
  %s10 = scalar_select 0, %s9, %s7
  // Predicated region
  $region2: #{ocr_forward.4} parent=0 // pred_check
    _
  $region3: #{ocr_forward.4} parent=0 // pred_check_branch
    %12 = sbr.rel (0) target = $region5
  $region4: #{ocr_forward.4} parent=0 // pred_region
    _
  $region5: #{ocr_forward.4} parent=0 // pred_fallthru
    _
  // Predicated region
  $region6: #{ocr_forward.4} parent=0 // pred_check
    _
  $region7: #{ocr_forward.4} parent=0 // pred_check_branch
    %14 = sbr.rel (0) target = $region9
  $region8: #{ocr_forward.4} parent=0 // pred_region
    %s15 = ssub.s32 0, 0
    %s16 = smul.u32 8, %s15
    %p17 = scmp.lt.s32.totalorder %s16, 7
    %s18 = scalar_select %p17, %s16, 7
    %s19 = smul.addr %s18, 4
    %s20 = smul.addr %s19, 2
    %s21 = scalar_lea.vmem %s1, %s20
    %s22 = ssub.s32 0, 0
    %s23 = smul.u32 8, %s22
  $region9: #{ocr_forward.4} parent=0 // pred_fallthru
    _
  // Predicated region
  $region10: #{ocr_forward.4} parent=0 // pred_check
    _
  $region11: #{ocr_forward.4} parent=0 // pred_check_branch
    %25 = sbr.rel (0) target = $region13
  $region12: #{ocr_forward.4} parent=0 // pred_region
    _
  $region13: #{ocr_forward.4} parent=0 // pred_fallthru
    _
  // Predicated region
  $region14: #{ocr_forward.4} parent=0 // pred_check
    _
  $region15: #{ocr_forward.4} parent=0 // pred_check_branch
    %27 = sbr.rel (0) target = $region17
  $region16: #{ocr_forward.4} parent=0 // pred_region
    _
  $region17: #{ocr_forward.4} parent=0 // pred_fallthru
    _
  %s28 = ssub.s32 0, 0
  %s29 = smul.u32 8, %s28
  %p30 = scmp.lt.s32.totalorder %s29, 7
  %s31 = scalar_select %p30, %s29, 7
  %s32 = smul.addr %s31, 4
  %s33 = smul.addr %s32, 2
  %s34 = scalar_lea.vmem %s1, %s33
  %s35 = ssub.s32 0, 0
  %s36 = smul.u32 8, %s35
  %p37 = scmp.lt.s32.totalorder %s36, 7
  %s38 = scalar_select %p37, %s36, 7
  %s39 = smul.addr %s38, 2
  %s40 = scalar_lea.vmem %s5, %s39
  %s41 = ssub.s32 0, 0
  %s42 = smul.u32 8, %s41
  %p43 = scmp.lt.s32.totalorder %s42, 7
  %s44 = scalar_select %p43, %s42, 7
  %s45 = smul.addr %s44, 4
  %s46 = smul.addr %s45, 2
  %s47 = scalar_lea.vmem %s1, %s46
  %s48 = ssub.s32 0, 0
  %s49 = smul.u32 8, %s48
  %s50 = ssub.s32 0, 0
  %s51 = smul.u32 8, %s50
  %p52 = scmp.lt.s32.totalorder %s51, 7
  %s53 = scalar_select %p52, %s51, 7
  %s54 = smul.addr %s53, 2
  %s55 = scalar_lea.vmem %s5, %s54
  %s56 = ssub.s32 0, 0
  %s57 = smul.u32 8, %s56
  %p58 = scmp.eq.s32.totalorder 0, 0
  // Predicated region
  $region18: #{ocr_forward.4} parent=0 // pred_check
    %p59 = pneg %p58
  $region19: #{ocr_forward.4} parent=0 // pred_check_branch
    %61 = sbr.rel (%p59) target = $region21
  $region20: #{ocr_forward.4} parent=0 // pred_region
    %62 = vst [vmem:[#allocation2] sm:$0x3] 0.0
    %63 = vst [vmem:[#allocation3] sm:$0x3] 0.0
    %64 = vst [vmem:[#allocation4] sm:$0x3] 0.0
    %65 = vst [vmem:[#allocation5] sm:$0x3] 0.0
  $region21: #{ocr_forward.4} parent=0 // pred_fallthru
    _
  %v66 = vld [vmem:[#allocation2] sm:$0x3]
  %v67 = vld [vmem:[%s2] sm:$0xff]
  %v68 = vld [vmem:[%s2 + $0x8] sm:$0xff]
  %v69 = vld [vmem:[%s2 + $0x10] sm:$0xff]
  %v70 = vld [vmem:[%s2 + $0x18] sm:$0xff]
  %v71 = vld [vmem:[%s2 + $0x20] sm:$0xff]
  %v72 = vld [vmem:[%s2 + $0x28] sm:$0xff]
  %v73 = vld [vmem:[%s2 + $0x30] sm:$0xff]
  %v74 = vld [vmem:[%s2 + $0x38] sm:$0xff]
  %v75 = vld [vmem:[%s2 + $0x40] sm:$0xff]
  %v76 = vld [vmem:[%s2 + $0x48] sm:$0xff]
  %v77 = vld [vmem:[%s2 + $0x50] sm:$0xff]
  %v78 = vld [vmem:[%s2 + $0x58] sm:$0xff]
  %v79 = vld [vmem:[%s2 + $0x60] sm:$0xff]
  %v80 = vld [vmem:[%s2 + $0x68] sm:$0xff]
  %v81 = vld [vmem:[%s2 + $0x70] sm:$0xff]
  %v82 = vld [vmem:[%s2 + $0x78] sm:$0xff]
  %v83 = vld [vmem:[%s2 + $0x80] sm:$0xff]
  %v84 = vld [vmem:[%s2 + $0x88] sm:$0xff]
  %v85 = vld [vmem:[%s2 + $0x90] sm:$0xff]
  %v86 = vld [vmem:[%s2 + $0x98] sm:$0xff]
  %v87 = vld [vmem:[%s2 + $0xa0] sm:$0xff]
  %v88 = vld [vmem:[%s2 + $0xa8] sm:$0xff]
  %v89 = vld [vmem:[%s2 + $0xb0] sm:$0xff]
  %v90 = vld [vmem:[%s2 + $0xb8] sm:$0xff]
  %v91 = vld [vmem:[%s2 + $0xc0] sm:$0xff]
  %v92 = vld [vmem:[%s2 + $0xc8] sm:$0xff]
  %v93 = vld [vmem:[%s2 + $0xd0] sm:$0xff]
  %v94 = vld [vmem:[%s2 + $0xd8] sm:$0xff]
  %v95 = vld [vmem:[%s2 + $0xe0] sm:$0xff]
  %v96 = vld [vmem:[%s2 + $0xe8] sm:$0xff]
  %v97 = vld [vmem:[%s2 + $0xf0] sm:$0xff]
  %v98 = vld [vmem:[%s2 + $0xf8] sm:$0xff]
  %v99 = vld [vmem:[%s2 + $0x100] sm:$0xff]
  %v100 = vld [vmem:[%s2 + $0x108] sm:$0xff]
  %v101 = vld [vmem:[%s2 + $0x110] sm:$0xff]
  %v102 = vld [vmem:[%s2 + $0x118] sm:$0xff]
  %v103 = vld [vmem:[%s2 + $0x120] sm:$0xff]
  %v104 = vld [vmem:[%s2 + $0x128] sm:$0xff]
  %v105 = vld [vmem:[%s2 + $0x130] sm:$0xff]
  %v106 = vld [vmem:[%s2 + $0x138] sm:$0xff]
  %v107 = vld [vmem:[%s2 + $0x140] sm:$0xff]
  %v108 = vld [vmem:[%s2 + $0x148] sm:$0xff]
  %v109 = vld [vmem:[%s2 + $0x150] sm:$0xff]
  %v110 = vld [vmem:[%s2 + $0x158] sm:$0xff]
  %v111 = vld [vmem:[%s2 + $0x160] sm:$0xff]
  %v112 = vld [vmem:[%s2 + $0x168] sm:$0xff]
  %v113 = vld [vmem:[%s2 + $0x170] sm:$0xff]
  %v114 = vld [vmem:[%s2 + $0x178] sm:$0xff]
  %v115 = vld [vmem:[%s2 + $0x180] sm:$0xff]
  %v116 = vld [vmem:[%s2 + $0x188] sm:$0xff]
  %v117 = vld [vmem:[%s2 + $0x190] sm:$0xff]
  %v118 = vld [vmem:[%s2 + $0x198] sm:$0xff]
  %v119 = vld [vmem:[%s2 + $0x1a0] sm:$0xff]
  %v120 = vld [vmem:[%s2 + $0x1a8] sm:$0xff]
  %v121 = vld [vmem:[%s2 + $0x1b0] sm:$0xff]
  %v122 = vld [vmem:[%s2 + $0x1b8] sm:$0xff]
  %v123 = vld [vmem:[%s2 + $0x1c0] sm:$0xff]
  %v124 = vld [vmem:[%s2 + $0x1c8] sm:$0xff]
  %v125 = vld [vmem:[%s2 + $0x1d0] sm:$0xff]
  %v126 = vld [vmem:[%s2 + $0x1d8] sm:$0xff]
  %v127 = vld [vmem:[%s2 + $0x1e0] sm:$0xff]
  %v128 = vld [vmem:[%s2 + $0x1e8] sm:$0xff]
  %v129 = vld [vmem:[%s2 + $0x1f0] sm:$0xff]
  %v130 = vld [vmem:[%s2 + $0x1f8] sm:$0xff]
  %131 = vmatprep.subr.mxu0 %v128
  %132 = vmatpush1.msra.mxu0 %v127
  %133 = vmatprep.subr.mxu0 %v124
  %134 = vmatpush1.msra.mxu0 %v123
  %135 = vmatprep.subr.mxu0 %v120
  %136 = vmatpush1.msra.mxu0 %v119
  %137 = vmatprep.subr.mxu0 %v116
  %138 = vmatpush1.msra.mxu0 %v115
  %139 = vmatprep.subr.mxu0 %v112
  %140 = vmatpush1.msra.mxu0 %v111
  %141 = vmatprep.subr.mxu0 %v108
  %142 = vmatpush1.msra.mxu0 %v107
  %143 = vmatprep.subr.mxu0 %v104
  %144 = vmatpush1.msra.mxu0 %v103
  %145 = vmatprep.subr.mxu0 %v100
  %146 = vmatpush1.msra.mxu0 %v99
  %147 = vmatprep.subr.mxu0 %v96
  %148 = vmatpush1.msra.mxu0 %v95
  %149 = vmatprep.subr.mxu0 %v92
  %150 = vmatpush1.msra.mxu0 %v91
  %151 = vmatprep.subr.mxu0 %v88
  %152 = vmatpush1.msra.mxu0 %v87
  %153 = vmatprep.subr.mxu0 %v84
  %154 = vmatpush1.msra.mxu0 %v83
  %155 = vmatprep.subr.mxu0 %v80
  %156 = vmatpush1.msra.mxu0 %v79
  %157 = vmatprep.subr.mxu0 %v76
  %158 = vmatpush1.msra.mxu0 %v75
  %159 = vmatprep.subr.mxu0 %v72
  %160 = vmatpush1.msra.mxu0 %v71
  %161 = vmatprep.subr.mxu0 %v68
  %162 = vmatpush1.msra.mxu0 %v67
  %163 = vmatprep.subr.mxu0 0.0
  %164 = vmatpush2.msra.mxu0 0.0
  %165 = vmatprep.subr.mxu0 0.0
  %166 = vmatpush2.msra.mxu0 0.0
  %167 = vmatprep.subr.mxu0 0.0
  %168 = vmatpush2.msra.mxu0 0.0
  %169 = vmatprep.subr.mxu0 0.0
  %170 = vmatpush2.msra.mxu0 0.0
  %171 = vmatprep.subr.mxu0 0.0
  %172 = vmatpush2.msra.mxu0 0.0
  %173 = vmatprep.subr.mxu0 0.0
  %174 = vmatpush2.msra.mxu0 0.0
  %175 = vmatprep.subr.mxu0 0.0
  %176 = vmatpush2.msra.mxu0 0.0
  %177 = vmatprep.subr.mxu0 0.0
  %178 = vmatpush2.msra.mxu0 0.0
  %179 = vmatprep.subr.mxu0 0.0
  %180 = vmatpush2.msra.mxu0 0.0
  %181 = vmatprep.subr.mxu0 0.0
  %182 = vmatpush2.msra.mxu0 0.0
  %183 = vmatprep.subr.mxu0 0.0
  %184 = vmatpush2.msra.mxu0 0.0
  %185 = vmatprep.subr.mxu0 0.0
  %186 = vmatpush2.msra.mxu0 0.0
  %187 = vmatprep.subr.mxu0 0.0
  %188 = vmatpush2.msra.mxu0 0.0
  %189 = vmatprep.subr.mxu0 0.0
  %190 = vmatpush2.msra.mxu0 0.0
  %191 = vmatprep.subr.mxu0 0.0
  %192 = vmatpush2.msra.mxu0 0.0
  %193 = vmatprep.subr.mxu0 0.0
  %194 = vmatpush2.msra.mxu0 0.0
  %195 = vmatprep.mubr.f32.mxu0 0.0
  %196 = vmatmul.mubr.f32.gmra.mxu0 %v66
  %v197 = vpop.f32.mrf.mxu0
  %v198 = vadd.f32 0.0, %v197
  %v199 = vpop.f32.mrf.mxu0
  %v200 = vadd.f32 0.0, %v199
  %201 = vdwg.mxu0
  %202 = vmatprep.subr.mxu0 %v130
  %203 = vmatpush1.msra.mxu0 %v129
  %204 = vmatprep.subr.mxu0 %v126
  %205 = vmatpush1.msra.mxu0 %v125
  %206 = vmatprep.subr.mxu0 %v122
  %207 = vmatpush1.msra.mxu0 %v121
  %208 = vmatprep.subr.mxu0 %v118
  %209 = vmatpush1.msra.mxu0 %v117
  %210 = vmatprep.subr.mxu0 %v114
  %211 = vmatpush1.msra.mxu0 %v113
  %212 = vmatprep.subr.mxu0 %v110
  %213 = vmatpush1.msra.mxu0 %v109
  %214 = vmatprep.subr.mxu0 %v106
  %215 = vmatpush1.msra.mxu0 %v105
  %216 = vmatprep.subr.mxu0 %v102
  %217 = vmatpush1.msra.mxu0 %v101
  %218 = vmatprep.subr.mxu0 %v98
  %219 = vmatpush1.msra.mxu0 %v97
  %220 = vmatprep.subr.mxu0 %v94
  %221 = vmatpush1.msra.mxu0 %v93
  %222 = vmatprep.subr.mxu0 %v90
  %223 = vmatpush1.msra.mxu0 %v89
  %224 = vmatprep.subr.mxu0 %v86
  %225 = vmatpush1.msra.mxu0 %v85
  %226 = vmatprep.subr.mxu0 %v82
  %227 = vmatpush1.msra.mxu0 %v81
  %228 = vmatprep.subr.mxu0 %v78
  %229 = vmatpush1.msra.mxu0 %v77
  %230 = vmatprep.subr.mxu0 %v74
  %231 = vmatpush1.msra.mxu0 %v73
  %232 = vmatprep.subr.mxu0 %v70
  %233 = vmatpush1.msra.mxu0 %v69
  %234 = vmatprep.subr.mxu0 0.0
  %235 = vmatpush2.msra.mxu0 0.0
  %236 = vmatprep.subr.mxu0 0.0
  %237 = vmatpush2.msra.mxu0 0.0
  %238 = vmatprep.subr.mxu0 0.0
  %239 = vmatpush2.msra.mxu0 0.0
  %240 = vmatprep.subr.mxu0 0.0
  %241 = vmatpush2.msra.mxu0 0.0
  %242 = vmatprep.subr.mxu0 0.0
  %243 = vmatpush2.msra.mxu0 0.0
  %244 = vmatprep.subr.mxu0 0.0
  %245 = vmatpush2.msra.mxu0 0.0
  %246 = vmatprep.subr.mxu0 0.0
  %247 = vmatpush2.msra.mxu0 0.0
  %248 = vmatprep.subr.mxu0 0.0
  %249 = vmatpush2.msra.mxu0 0.0
  %250 = vmatprep.subr.mxu0 0.0
  %251 = vmatpush2.msra.mxu0 0.0
  %252 = vmatprep.subr.mxu0 0.0
  %253 = vmatpush2.msra.mxu0 0.0
  %254 = vmatprep.subr.mxu0 0.0
  %255 = vmatpush2.msra.mxu0 0.0
  %256 = vmatprep.subr.mxu0 0.0
  %257 = vmatpush2.msra.mxu0 0.0
  %258 = vmatprep.subr.mxu0 0.0
  %259 = vmatpush2.msra.mxu0 0.0
  %260 = vmatprep.subr.mxu0 0.0
  %261 = vmatpush2.msra.mxu0 0.0
  %262 = vmatprep.subr.mxu0 0.0
  %263 = vmatpush2.msra.mxu0 0.0
  %264 = vmatprep.subr.mxu0 0.0
  %265 = vmatpush2.msra.mxu0 0.0
  %266 = vmatprep.mubr.f32.mxu0 0.0
  %267 = vmatmul.mubr.f32.gmra.mxu0 %v66
  %v268 = vpop.f32.mrf.mxu0
  %v269 = vadd.f32 0.0, %v268
  %v270 = vpop.f32.mrf.mxu0
  %v271 = vadd.f32 0.0, %v270
  %272 = vdwg.mxu0
  %v273 = vld [vmem:[#allocation4] sm:$0x3]
  %v274 = vld [vmem:[%s3] sm:$0xff]
  %v275 = vld [vmem:[%s3 + $0x8] sm:$0xff]
  %v276 = vld [vmem:[%s3 + $0x10] sm:$0xff]
  %v277 = vld [vmem:[%s3 + $0x18] sm:$0xff]
  %v278 = vld [vmem:[%s3 + $0x20] sm:$0xff]
  %v279 = vld [vmem:[%s3 + $0x28] sm:$0xff]
  %v280 = vld [vmem:[%s3 + $0x30] sm:$0xff]
  %v281 = vld [vmem:[%s3 + $0x38] sm:$0xff]
  %v282 = vld [vmem:[%s3 + $0x40] sm:$0xff]
  %v283 = vld [vmem:[%s3 + $0x48] sm:$0xff]
  %v284 = vld [vmem:[%s3 + $0x50] sm:$0xff]
  %v285 = vld [vmem:[%s3 + $0x58] sm:$0xff]
  %v286 = vld [vmem:[%s3 + $0x60] sm:$0xff]
  %v287 = vld [vmem:[%s3 + $0x68] sm:$0xff]
  %v288 = vld [vmem:[%s3 + $0x70] sm:$0xff]
  %v289 = vld [vmem:[%s3 + $0x78] sm:$0xff]
  %v290 = vld [vmem:[%s3 + $0x80] sm:$0xff]
  %v291 = vld [vmem:[%s3 + $0x88] sm:$0xff]
  %v292 = vld [vmem:[%s3 + $0x90] sm:$0xff]
  %v293 = vld [vmem:[%s3 + $0x98] sm:$0xff]
  %v294 = vld [vmem:[%s3 + $0xa0] sm:$0xff]
  %v295 = vld [vmem:[%s3 + $0xa8] sm:$0xff]
  %v296 = vld [vmem:[%s3 + $0xb0] sm:$0xff]
  %v297 = vld [vmem:[%s3 + $0xb8] sm:$0xff]
  %v298 = vld [vmem:[%s3 + $0xc0] sm:$0xff]
  %v299 = vld [vmem:[%s3 + $0xc8] sm:$0xff]
  %v300 = vld [vmem:[%s3 + $0xd0] sm:$0xff]
  %v301 = vld [vmem:[%s3 + $0xd8] sm:$0xff]
  %v302 = vld [vmem:[%s3 + $0xe0] sm:$0xff]
  %v303 = vld [vmem:[%s3 + $0xe8] sm:$0xff]
  %v304 = vld [vmem:[%s3 + $0xf0] sm:$0xff]
  %v305 = vld [vmem:[%s3 + $0xf8] sm:$0xff]
  %v306 = vld [vmem:[%s3 + $0x100] sm:$0xff]
  %v307 = vld [vmem:[%s3 + $0x108] sm:$0xff]
  %v308 = vld [vmem:[%s3 + $0x110] sm:$0xff]
  %v309 = vld [vmem:[%s3 + $0x118] sm:$0xff]
  %v310 = vld [vmem:[%s3 + $0x120] sm:$0xff]
  %v311 = vld [vmem:[%s3 + $0x128] sm:$0xff]
  %v312 = vld [vmem:[%s3 + $0x130] sm:$0xff]
  %v313 = vld [vmem:[%s3 + $0x138] sm:$0xff]
  %v314 = vld [vmem:[%s3 + $0x140] sm:$0xff]
  %v315 = vld [vmem:[%s3 + $0x148] sm:$0xff]
  %v316 = vld [vmem:[%s3 + $0x150] sm:$0xff]
  %v317 = vld [vmem:[%s3 + $0x158] sm:$0xff]
  %v318 = vld [vmem:[%s3 + $0x160] sm:$0xff]
  %v319 = vld [vmem:[%s3 + $0x168] sm:$0xff]
  %v320 = vld [vmem:[%s3 + $0x170] sm:$0xff]
  %v321 = vld [vmem:[%s3 + $0x178] sm:$0xff]
  %v322 = vld [vmem:[%s3 + $0x180] sm:$0xff]
  %v323 = vld [vmem:[%s3 + $0x188] sm:$0xff]
  %v324 = vld [vmem:[%s3 + $0x190] sm:$0xff]
  %v325 = vld [vmem:[%s3 + $0x198] sm:$0xff]
  %v326 = vld [vmem:[%s3 + $0x1a0] sm:$0xff]
  %v327 = vld [vmem:[%s3 + $0x1a8] sm:$0xff]
  %v328 = vld [vmem:[%s3 + $0x1b0] sm:$0xff]
  %v329 = vld [vmem:[%s3 + $0x1b8] sm:$0xff]
  %v330 = vld [vmem:[%s3 + $0x1c0] sm:$0xff]
  %v331 = vld [vmem:[%s3 + $0x1c8] sm:$0xff]
  %v332 = vld [vmem:[%s3 + $0x1d0] sm:$0xff]
  %v333 = vld [vmem:[%s3 + $0x1d8] sm:$0xff]
  %v334 = vld [vmem:[%s3 + $0x1e0] sm:$0xff]
  %v335 = vld [vmem:[%s3 + $0x1e8] sm:$0xff]
  %v336 = vld [vmem:[%s3 + $0x1f0] sm:$0xff]
  %v337 = vld [vmem:[%s3 + $0x1f8] sm:$0xff]
  %338 = vmatprep.subr.mxu0 %v335
  %339 = vmatpush1.msra.mxu0 %v334
  %340 = vmatprep.subr.mxu0 %v331
  %341 = vmatpush1.msra.mxu0 %v330
  %342 = vmatprep.subr.mxu0 %v327
  %343 = vmatpush1.msra.mxu0 %v326
  %344 = vmatprep.subr.mxu0 %v323
  %345 = vmatpush1.msra.mxu0 %v322
  %346 = vmatprep.subr.mxu0 %v319
  %347 = vmatpush1.msra.mxu0 %v318
  %348 = vmatprep.subr.mxu0 %v315
  %349 = vmatpush1.msra.mxu0 %v314
  %350 = vmatprep.subr.mxu0 %v311
  %351 = vmatpush1.msra.mxu0 %v310
  %352 = vmatprep.subr.mxu0 %v307
  %353 = vmatpush1.msra.mxu0 %v306
  %354 = vmatprep.subr.mxu0 %v303
  %355 = vmatpush1.msra.mxu0 %v302
  %356 = vmatprep.subr.mxu0 %v299
  %357 = vmatpush1.msra.mxu0 %v298
  %358 = vmatprep.subr.mxu0 %v295
  %359 = vmatpush1.msra.mxu0 %v294
  %360 = vmatprep.subr.mxu0 %v291
  %361 = vmatpush1.msra.mxu0 %v290
  %362 = vmatprep.subr.mxu0 %v287
  %363 = vmatpush1.msra.mxu0 %v286
  %364 = vmatprep.subr.mxu0 %v283
  %365 = vmatpush1.msra.mxu0 %v282
  %366 = vmatprep.subr.mxu0 %v279
  %367 = vmatpush1.msra.mxu0 %v278
  %368 = vmatprep.subr.mxu0 %v275
  %369 = vmatpush1.msra.mxu0 %v274
  %370 = vmatprep.subr.mxu0 0.0
  %371 = vmatpush2.msra.mxu0 0.0
  %372 = vmatprep.subr.mxu0 0.0
  %373 = vmatpush2.msra.mxu0 0.0
  %374 = vmatprep.subr.mxu0 0.0
  %375 = vmatpush2.msra.mxu0 0.0
  %376 = vmatprep.subr.mxu0 0.0
  %377 = vmatpush2.msra.mxu0 0.0
  %378 = vmatprep.subr.mxu0 0.0
  %379 = vmatpush2.msra.mxu0 0.0
  %380 = vmatprep.subr.mxu0 0.0
  %381 = vmatpush2.msra.mxu0 0.0
  %382 = vmatprep.subr.mxu0 0.0
  %383 = vmatpush2.msra.mxu0 0.0
  %384 = vmatprep.subr.mxu0 0.0
  %385 = vmatpush2.msra.mxu0 0.0
  %386 = vmatprep.subr.mxu0 0.0
  %387 = vmatpush2.msra.mxu0 0.0
  %388 = vmatprep.subr.mxu0 0.0
  %389 = vmatpush2.msra.mxu0 0.0
  %390 = vmatprep.subr.mxu0 0.0
  %391 = vmatpush2.msra.mxu0 0.0
  %392 = vmatprep.subr.mxu0 0.0
  %393 = vmatpush2.msra.mxu0 0.0
  %394 = vmatprep.subr.mxu0 0.0
  %395 = vmatpush2.msra.mxu0 0.0
  %396 = vmatprep.subr.mxu0 0.0
  %397 = vmatpush2.msra.mxu0 0.0
  %398 = vmatprep.subr.mxu0 0.0
  %399 = vmatpush2.msra.mxu0 0.0
  %400 = vmatprep.subr.mxu0 0.0
  %401 = vmatpush2.msra.mxu0 0.0
  %402 = vmatprep.mubr.f32.mxu0 0.0
  %403 = vmatmul.mubr.f32.gmra.mxu0 %v273
  %v404 = vpop.f32.mrf.mxu0
  %v405 = vadd.f32 0.0, %v404
  %v406 = vpop.f32.mrf.mxu0
  %v407 = vadd.f32 0.0, %v406
  %408 = vdwg.mxu0
  %409 = vmatprep.subr.mxu0 %v337
  %410 = vmatpush1.msra.mxu0 %v336
  %411 = vmatprep.subr.mxu0 %v333
  %412 = vmatpush1.msra.mxu0 %v332
  %413 = vmatprep.subr.mxu0 %v329
  %414 = vmatpush1.msra.mxu0 %v328
  %415 = vmatprep.subr.mxu0 %v325
  %416 = vmatpush1.msra.mxu0 %v324
  %417 = vmatprep.subr.mxu0 %v321
  %418 = vmatpush1.msra.mxu0 %v320
  %419 = vmatprep.subr.mxu0 %v317
  %420 = vmatpush1.msra.mxu0 %v316
  %421 = vmatprep.subr.mxu0 %v313
  %422 = vmatpush1.msra.mxu0 %v312
  %423 = vmatprep.subr.mxu0 %v309
  %424 = vmatpush1.msra.mxu0 %v308
  %425 = vmatprep.subr.mxu0 %v305
  %426 = vmatpush1.msra.mxu0 %v304
  %427 = vmatprep.subr.mxu0 %v301
  %428 = vmatpush1.msra.mxu0 %v300
  %429 = vmatprep.subr.mxu0 %v297
  %430 = vmatpush1.msra.mxu0 %v296
  %431 = vmatprep.subr.mxu0 %v293
  %432 = vmatpush1.msra.mxu0 %v292
  %433 = vmatprep.subr.mxu0 %v289
  %434 = vmatpush1.msra.mxu0 %v288
  %435 = vmatprep.subr.mxu0 %v285
  %436 = vmatpush1.msra.mxu0 %v284
  %437 = vmatprep.subr.mxu0 %v281
  %438 = vmatpush1.msra.mxu0 %v280
  %439 = vmatprep.subr.mxu0 %v277
  %440 = vmatpush1.msra.mxu0 %v276
  %441 = vmatprep.subr.mxu0 0.0
  %442 = vmatpush2.msra.mxu0 0.0
  %443 = vmatprep.subr.mxu0 0.0
  %444 = vmatpush2.msra.mxu0 0.0
  %445 = vmatprep.subr.mxu0 0.0
  %446 = vmatpush2.msra.mxu0 0.0
  %447 = vmatprep.subr.mxu0 0.0
  %448 = vmatpush2.msra.mxu0 0.0
  %449 = vmatprep.subr.mxu0 0.0
  %450 = vmatpush2.msra.mxu0 0.0
  %451 = vmatprep.subr.mxu0 0.0
  %452 = vmatpush2.msra.mxu0 0.0
  %453 = vmatprep.subr.mxu0 0.0
  %454 = vmatpush2.msra.mxu0 0.0
  %455 = vmatprep.subr.mxu0 0.0
  %456 = vmatpush2.msra.mxu0 0.0
  %457 = vmatprep.subr.mxu0 0.0
  %458 = vmatpush2.msra.mxu0 0.0
  %459 = vmatprep.subr.mxu0 0.0
  %460 = vmatpush2.msra.mxu0 0.0
  %461 = vmatprep.subr.mxu0 0.0
  %462 = vmatpush2.msra.mxu0 0.0
  %463 = vmatprep.subr.mxu0 0.0
  %464 = vmatpush2.msra.mxu0 0.0
  %465 = vmatprep.subr.mxu0 0.0
  %466 = vmatpush2.msra.mxu0 0.0
  %467 = vmatprep.subr.mxu0 0.0
  %468 = vmatpush2.msra.mxu0 0.0
  %469 = vmatprep.subr.mxu0 0.0
  %470 = vmatpush2.msra.mxu0 0.0
  %471 = vmatprep.subr.mxu0 0.0
  %472 = vmatpush2.msra.mxu0 0.0
  %473 = vmatprep.mubr.f32.mxu0 0.0
  %474 = vmatmul.mubr.f32.gmra.mxu0 %v273
  %v475 = vpop.f32.mrf.mxu0
  %v476 = vadd.f32 0.0, %v475
  %v477 = vpop.f32.mrf.mxu0
  %v478 = vadd.f32 0.0, %v477
  %479 = vdwg.mxu0
  %v480 = vld [vmem:[%s0] sm:$0xff]
  %v485 = vcombine.low %v198, %v200
  %v486 = vcombine.low %v269, %v271
  %v488 = vunpack.c.l.s4 1983009808
  %v489 = vunpack.c.0.s8 %v488
  %v490 = vlaneseq
  %v491 = vshrl.u32 %v490, 7
  %v492 = vsub.s32 %v489, %v491
  %v493 = vrot.slane %v485, %v492
  %v495 = vunpack.c.l.s4 1983009808
  %v496 = vunpack.c.0.s8 %v495
  %v497 = vlaneseq
  %v498 = vshrl.u32 %v497, 7
  %v499 = vsub.s32 %v496, %v498
  %v500 = vrot.slane %v486, %v499
  %v501 = vcombine.low %v493, %v500
  %v503 = vadd.f32 %v480, %v501
  %v504 = vld [vmem:[#allocation3] sm:$0x3]
  %v505 = vmul.f32 %v503, 0.5
  %v506 = vtanh.pop %v505
  %v507 = vadd.f32 %v506, 1.0
  %v508 = vmul.f32 %v507, 0.5
  %v510 = vrot.slane %v503, 2
  %v512 = vmul.f32 %v510, 0.5
  %v513 = vtanh.pop %v512
  %v514 = vadd.f32 %v513, 1.0
  %v515 = vmul.f32 %v514, 0.5
  %v516 = vrot.slane %v503, 4
  %v518 = vtanh.pop %v516
  %v519 = vrot.slane %v503, 6
  %v521 = vmul.f32 %v519, 0.5
  %v522 = vtanh.pop %v521
  %v523 = vadd.f32 %v522, 1.0
  %v524 = vmul.f32 %v523, 0.5
  %v525 = vmul.f32 %v515, %v504
  %v526 = vmul.f32 %v508, %v518
  %v527 = vadd.f32 %v525, %v526
  %v528 = vtanh.pop %v527
  %v529 = vmul.f32 %v524, %v528
  %s530 = scalar_lea.vmem %s47, 56
  %v531 = vld [vmem:[%s530] sm:$0xff]
  %v536 = vcombine.low %v405, %v407
  %v537 = vcombine.low %v476, %v478
  %v539 = vunpack.c.l.s4 1983009808
  %v540 = vunpack.c.0.s8 %v539
  %v541 = vlaneseq
  %v542 = vshrl.u32 %v541, 7
  %v543 = vsub.s32 %v540, %v542
  %v544 = vrot.slane %v536, %v543
  %v546 = vunpack.c.l.s4 1983009808
  %v547 = vunpack.c.0.s8 %v546
  %v548 = vlaneseq
  %v549 = vshrl.u32 %v548, 7
  %v550 = vsub.s32 %v547, %v549
  %v551 = vrot.slane %v537, %v550
  %v552 = vcombine.low %v544, %v551
  %v554 = vadd.f32 %v531, %v552
  %v555 = vld [vmem:[#allocation5] sm:$0x3]
  %v556 = vmul.f32 %v554, 0.5
  %v557 = vtanh.pop %v556
  %v558 = vadd.f32 %v557, 1.0
  %v559 = vmul.f32 %v558, 0.5
  %v561 = vrot.slane %v554, 2
  %v563 = vmul.f32 %v561, 0.5
  %v564 = vtanh.pop %v563
  %v565 = vadd.f32 %v564, 1.0
  %v566 = vmul.f32 %v565, 0.5
  %v567 = vrot.slane %v554, 4
  %v569 = vtanh.pop %v567
  %v570 = vrot.slane %v554, 6
  %v572 = vmul.f32 %v570, 0.5
  %v573 = vtanh.pop %v572
  %v574 = vadd.f32 %v573, 1.0
  %v575 = vmul.f32 %v574, 0.5
  %v576 = vmul.f32 %v566, %v555
  %v577 = vmul.f32 %v559, %v569
  %v578 = vadd.f32 %v576, %v577
  %v579 = vtanh.pop %v578
  %v580 = vmul.f32 %v575, %v579
  %581 = vst [vmem:[#allocation2] sm:$0x3] %v529
  %582 = vst [vmem:[#allocation3] sm:$0x3] %v527
  %583 = vst [vmem:[#allocation4] sm:$0x3] %v580
  %584 = vst [vmem:[#allocation5] sm:$0x3] %v578
  %585 = vst [vmem:[%s4] sm:$0x3] %v529
  %s586 = scalar_lea.vmem %s55, 14
  %587 = vst [vmem:[%s586] sm:$0x3] %v580
  %v588 = vld [vmem:[#allocation2] sm:$0x3]
  %v589 = vld [vmem:[%s2] sm:$0xff]
  %v590 = vld [vmem:[%s2 + $0x8] sm:$0xff]
  %v591 = vld [vmem:[%s2 + $0x10] sm:$0xff]
  %v592 = vld [vmem:[%s2 + $0x18] sm:$0xff]
  %v593 = vld [vmem:[%s2 + $0x20] sm:$0xff]
  %v594 = vld [vmem:[%s2 + $0x28] sm:$0xff]
  %v595 = vld [vmem:[%s2 + $0x30] sm:$0xff]
  %v596 = vld [vmem:[%s2 + $0x38] sm:$0xff]
  %v597 = vld [vmem:[%s2 + $0x40] sm:$0xff]
  %v598 = vld [vmem:[%s2 + $0x48] sm:$0xff]
  %v599 = vld [vmem:[%s2 + $0x50] sm:$0xff]
  %v600 = vld [vmem:[%s2 + $0x58] sm:$0xff]
  %v601 = vld [vmem:[%s2 + $0x60] sm:$0xff]
  %v602 = vld [vmem:[%s2 + $0x68] sm:$0xff]
  %v603 = vld [vmem:[%s2 + $0x70] sm:$0xff]
  %v604 = vld [vmem:[%s2 + $0x78] sm:$0xff]
  %v605 = vld [vmem:[%s2 + $0x80] sm:$0xff]
  %v606 = vld [vmem:[%s2 + $0x88] sm:$0xff]
  %v607 = vld [vmem:[%s2 + $0x90] sm:$0xff]
  %v608 = vld [vmem:[%s2 + $0x98] sm:$0xff]
  %v609 = vld [vmem:[%s2 + $0xa0] sm:$0xff]
  %v610 = vld [vmem:[%s2 + $0xa8] sm:$0xff]
  %v611 = vld [vmem:[%s2 + $0xb0] sm:$0xff]
  %v612 = vld [vmem:[%s2 + $0xb8] sm:$0xff]
  %v613 = vld [vmem:[%s2 + $0xc0] sm:$0xff]
  %v614 = vld [vmem:[%s2 + $0xc8] sm:$0xff]
  %v615 = vld [vmem:[%s2 + $0xd0] sm:$0xff]
  %v616 = vld [vmem:[%s2 + $0xd8] sm:$0xff]
  %v617 = vld [vmem:[%s2 + $0xe0] sm:$0xff]
  %v618 = vld [vmem:[%s2 + $0xe8] sm:$0xff]
  %v619 = vld [vmem:[%s2 + $0xf0] sm:$0xff]
  %v620 = vld [vmem:[%s2 + $0xf8] sm:$0xff]
  %v621 = vld [vmem:[%s2 + $0x100] sm:$0xff]
  %v622 = vld [vmem:[%s2 + $0x108] sm:$0xff]
  %v623 = vld [vmem:[%s2 + $0x110] sm:$0xff]
  %v624 = vld [vmem:[%s2 + $0x118] sm:$0xff]
  %v625 = vld [vmem:[%s2 + $0x120] sm:$0xff]
  %v626 = vld [vmem:[%s2 + $0x128] sm:$0xff]
  %v627 = vld [vmem:[%s2 + $0x130] sm:$0xff]
  %v628 = vld [vmem:[%s2 + $0x138] sm:$0xff]
  %v629 = vld [vmem:[%s2 + $0x140] sm:$0xff]
  %v630 = vld [vmem:[%s2 + $0x148] sm:$0xff]
  %v631 = vld [vmem:[%s2 + $0x150] sm:$0xff]
  %v632 = vld [vmem:[%s2 + $0x158] sm:$0xff]
  %v633 = vld [vmem:[%s2 + $0x160] sm:$0xff]
  %v634 = vld [vmem:[%s2 + $0x168] sm:$0xff]
  %v635 = vld [vmem:[%s2 + $0x170] sm:$0xff]
  %v636 = vld [vmem:[%s2 + $0x178] sm:$0xff]
  %v637 = vld [vmem:[%s2 + $0x180] sm:$0xff]
  %v638 = vld [vmem:[%s2 + $0x188] sm:$0xff]
  %v639 = vld [vmem:[%s2 + $0x190] sm:$0xff]
  %v640 = vld [vmem:[%s2 + $0x198] sm:$0xff]
  %v641 = vld [vmem:[%s2 + $0x1a0] sm:$0xff]
  %v642 = vld [vmem:[%s2 + $0x1a8] sm:$0xff]
  %v643 = vld [vmem:[%s2 + $0x1b0] sm:$0xff]
  %v644 = vld [vmem:[%s2 + $0x1b8] sm:$0xff]
  %v645 = vld [vmem:[%s2 + $0x1c0] sm:$0xff]
  %v646 = vld [vmem:[%s2 + $0x1c8] sm:$0xff]
  %v647 = vld [vmem:[%s2 + $0x1d0] sm:$0xff]
  %v648 = vld [vmem:[%s2 + $0x1d8] sm:$0xff]
  %v649 = vld [vmem:[%s2 + $0x1e0] sm:$0xff]
  %v650 = vld [vmem:[%s2 + $0x1e8] sm:$0xff]
  %v651 = vld [vmem:[%s2 + $0x1f0] sm:$0xff]
  %v652 = vld [vmem:[%s2 + $0x1f8] sm:$0xff]
  %653 = vmatprep.subr.mxu0 %v650
  %654 = vmatpush1.msra.mxu0 %v649
  %655 = vmatprep.subr.mxu0 %v646
  %656 = vmatpush1.msra.mxu0 %v645
  %657 = vmatprep.subr.mxu0 %v642
  %658 = vmatpush1.msra.mxu0 %v641
  %659 = vmatprep.subr.mxu0 %v638
  %660 = vmatpush1.msra.mxu0 %v637
  %661 = vmatprep.subr.mxu0 %v634
  %662 = vmatpush1.msra.mxu0 %v633
  %663 = vmatprep.subr.mxu0 %v630
  %664 = vmatpush1.msra.mxu0 %v629
  %665 = vmatprep.subr.mxu0 %v626
  %666 = vmatpush1.msra.mxu0 %v625
  %667 = vmatprep.subr.mxu0 %v622
  %668 = vmatpush1.msra.mxu0 %v621
  %669 = vmatprep.subr.mxu0 %v618
  %670 = vmatpush1.msra.mxu0 %v617
  %671 = vmatprep.subr.mxu0 %v614
  %672 = vmatpush1.msra.mxu0 %v613
  %673 = vmatprep.subr.mxu0 %v610
  %674 = vmatpush1.msra.mxu0 %v609
  %675 = vmatprep.subr.mxu0 %v606
  %676 = vmatpush1.msra.mxu0 %v605
  %677 = vmatprep.subr.mxu0 %v602
  %678 = vmatpush1.msra.mxu0 %v601
  %679 = vmatprep.subr.mxu0 %v598
  %680 = vmatpush1.msra.mxu0 %v597
  %681 = vmatprep.subr.mxu0 %v594
  %682 = vmatpush1.msra.mxu0 %v593
  %683 = vmatprep.subr.mxu0 %v590
  %684 = vmatpush1.msra.mxu0 %v589
  %685 = vmatprep.subr.mxu0 0.0
  %686 = vmatpush2.msra.mxu0 0.0
  %687 = vmatprep.subr.mxu0 0.0
  %688 = vmatpush2.msra.mxu0 0.0
  %689 = vmatprep.subr.mxu0 0.0
  %690 = vmatpush2.msra.mxu0 0.0
  %691 = vmatprep.subr.mxu0 0.0
  %692 = vmatpush2.msra.mxu0 0.0
  %693 = vmatprep.subr.mxu0 0.0
  %694 = vmatpush2.msra.mxu0 0.0
  %695 = vmatprep.subr.mxu0 0.0
  %696 = vmatpush2.msra.mxu0 0.0
  %697 = vmatprep.subr.mxu0 0.0
  %698 = vmatpush2.msra.mxu0 0.0
  %699 = vmatprep.subr.mxu0 0.0
  %700 = vmatpush2.msra.mxu0 0.0
  %701 = vmatprep.subr.mxu0 0.0
  %702 = vmatpush2.msra.mxu0 0.0
  %703 = vmatprep.subr.mxu0 0.0
  %704 = vmatpush2.msra.mxu0 0.0
  %705 = vmatprep.subr.mxu0 0.0
  %706 = vmatpush2.msra.mxu0 0.0
  %707 = vmatprep.subr.mxu0 0.0
  %708 = vmatpush2.msra.mxu0 0.0
  %709 = vmatprep.subr.mxu0 0.0
  %710 = vmatpush2.msra.mxu0 0.0
  %711 = vmatprep.subr.mxu0 0.0
  %712 = vmatpush2.msra.mxu0 0.0
  %713 = vmatprep.subr.mxu0 0.0
  %714 = vmatpush2.msra.mxu0 0.0
  %715 = vmatprep.subr.mxu0 0.0
  %716 = vmatpush2.msra.mxu0 0.0
  %717 = vmatprep.mubr.f32.mxu0 0.0
  %718 = vmatmul.mubr.f32.gmra.mxu0 %v588
  %v719 = vpop.f32.mrf.mxu0
  %v720 = vadd.f32 0.0, %v719
  %v721 = vpop.f32.mrf.mxu0
  %v722 = vadd.f32 0.0, %v721
  %723 = vdwg.mxu0
  %724 = vmatprep.subr.mxu0 %v652
  %725 = vmatpush1.msra.mxu0 %v651
  %726 = vmatprep.subr.mxu0 %v648
  %727 = vmatpush1.msra.mxu0 %v647
  %728 = vmatprep.subr.mxu0 %v644
  %729 = vmatpush1.msra.mxu0 %v643
  %730 = vmatprep.subr.mxu0 %v640
  %731 = vmatpush1.msra.mxu0 %v639
  %732 = vmatprep.subr.mxu0 %v636
  %733 = vmatpush1.msra.mxu0 %v635
  %734 = vmatprep.subr.mxu0 %v632
  %735 = vmatpush1.msra.mxu0 %v631
  %736 = vmatprep.subr.mxu0 %v628
  %737 = vmatpush1.msra.mxu0 %v627
  %738 = vmatprep.subr.mxu0 %v624
  %739 = vmatpush1.msra.mxu0 %v623
  %740 = vmatprep.subr.mxu0 %v620
  %741 = vmatpush1.msra.mxu0 %v619
  %742 = vmatprep.subr.mxu0 %v616
  %743 = vmatpush1.msra.mxu0 %v615
  %744 = vmatprep.subr.mxu0 %v612
  %745 = vmatpush1.msra.mxu0 %v611
  %746 = vmatprep.subr.mxu0 %v608
  %747 = vmatpush1.msra.mxu0 %v607
  %748 = vmatprep.subr.mxu0 %v604
  %749 = vmatpush1.msra.mxu0 %v603
  %750 = vmatprep.subr.mxu0 %v600
  %751 = vmatpush1.msra.mxu0 %v599
  %752 = vmatprep.subr.mxu0 %v596
  %753 = vmatpush1.msra.mxu0 %v595
  %754 = vmatprep.subr.mxu0 %v592
  %755 = vmatpush1.msra.mxu0 %v591
  %756 = vmatprep.subr.mxu0 0.0
  %757 = vmatpush2.msra.mxu0 0.0
  %758 = vmatprep.subr.mxu0 0.0
  %759 = vmatpush2.msra.mxu0 0.0
  %760 = vmatprep.subr.mxu0 0.0
  %761 = vmatpush2.msra.mxu0 0.0
  %762 = vmatprep.subr.mxu0 0.0
  %763 = vmatpush2.msra.mxu0 0.0
  %764 = vmatprep.subr.mxu0 0.0
  %765 = vmatpush2.msra.mxu0 0.0
  %766 = vmatprep.subr.mxu0 0.0
  %767 = vmatpush2.msra.mxu0 0.0
  %768 = vmatprep.subr.mxu0 0.0
  %769 = vmatpush2.msra.mxu0 0.0
  %770 = vmatprep.subr.mxu0 0.0
  %771 = vmatpush2.msra.mxu0 0.0
  %772 = vmatprep.subr.mxu0 0.0
  %773 = vmatpush2.msra.mxu0 0.0
  %774 = vmatprep.subr.mxu0 0.0
  %775 = vmatpush2.msra.mxu0 0.0
  %776 = vmatprep.subr.mxu0 0.0
  %777 = vmatpush2.msra.mxu0 0.0
  %778 = vmatprep.subr.mxu0 0.0
  %779 = vmatpush2.msra.mxu0 0.0
  %780 = vmatprep.subr.mxu0 0.0
  %781 = vmatpush2.msra.mxu0 0.0
  %782 = vmatprep.subr.mxu0 0.0
  %783 = vmatpush2.msra.mxu0 0.0
  %784 = vmatprep.subr.mxu0 0.0
  %785 = vmatpush2.msra.mxu0 0.0
  %786 = vmatprep.subr.mxu0 0.0
  %787 = vmatpush2.msra.mxu0 0.0
  %788 = vmatprep.mubr.f32.mxu0 0.0
  %789 = vmatmul.mubr.f32.gmra.mxu0 %v588
  %v790 = vpop.f32.mrf.mxu0
  %v791 = vadd.f32 0.0, %v790
  %v792 = vpop.f32.mrf.mxu0
  %v793 = vadd.f32 0.0, %v792
  %794 = vdwg.mxu0
  %v795 = vld [vmem:[#allocation4] sm:$0x3]
  %v796 = vld [vmem:[%s3] sm:$0xff]
  %v797 = vld [vmem:[%s3 + $0x8] sm:$0xff]
  %v798 = vld [vmem:[%s3 + $0x10] sm:$0xff]
  %v799 = vld [vmem:[%s3 + $0x18] sm:$0xff]
  %v800 = vld [vmem:[%s3 + $0x20] sm:$0xff]
  %v801 = vld [vmem:[%s3 + $0x28] sm:$0xff]
  %v802 = vld [vmem:[%s3 + $0x30] sm:$0xff]
  %v803 = vld [vmem:[%s3 + $0x38] sm:$0xff]
  %v804 = vld [vmem:[%s3 + $0x40] sm:$0xff]
  %v805 = vld [vmem:[%s3 + $0x48] sm:$0xff]
  %v806 = vld [vmem:[%s3 + $0x50] sm:$0xff]
  %v807 = vld [vmem:[%s3 + $0x58] sm:$0xff]
  %v808 = vld [vmem:[%s3 + $0x60] sm:$0xff]
  %v809 = vld [vmem:[%s3 + $0x68] sm:$0xff]
  %v810 = vld [vmem:[%s3 + $0x70] sm:$0xff]
  %v811 = vld [vmem:[%s3 + $0x78] sm:$0xff]
  %v812 = vld [vmem:[%s3 + $0x80] sm:$0xff]
  %v813 = vld [vmem:[%s3 + $0x88] sm:$0xff]
  %v814 = vld [vmem:[%s3 + $0x90] sm:$0xff]
  %v815 = vld [vmem:[%s3 + $0x98] sm:$0xff]
  %v816 = vld [vmem:[%s3 + $0xa0] sm:$0xff]
  %v817 = vld [vmem:[%s3 + $0xa8] sm:$0xff]
  %v818 = vld [vmem:[%s3 + $0xb0] sm:$0xff]
  %v819 = vld [vmem:[%s3 + $0xb8] sm:$0xff]
  %v820 = vld [vmem:[%s3 + $0xc0] sm:$0xff]
  %v821 = vld [vmem:[%s3 + $0xc8] sm:$0xff]
  %v822 = vld [vmem:[%s3 + $0xd0] sm:$0xff]
  %v823 = vld [vmem:[%s3 + $0xd8] sm:$0xff]
  %v824 = vld [vmem:[%s3 + $0xe0] sm:$0xff]
  %v825 = vld [vmem:[%s3 + $0xe8] sm:$0xff]
  %v826 = vld [vmem:[%s3 + $0xf0] sm:$0xff]
  %v827 = vld [vmem:[%s3 + $0xf8] sm:$0xff]
  %v828 = vld [vmem:[%s3 + $0x100] sm:$0xff]
  %v829 = vld [vmem:[%s3 + $0x108] sm:$0xff]
  %v830 = vld [vmem:[%s3 + $0x110] sm:$0xff]
  %v831 = vld [vmem:[%s3 + $0x118] sm:$0xff]
  %v832 = vld [vmem:[%s3 + $0x120] sm:$0xff]
  %v833 = vld [vmem:[%s3 + $0x128] sm:$0xff]
  %v834 = vld [vmem:[%s3 + $0x130] sm:$0xff]
  %v835 = vld [vmem:[%s3 + $0x138] sm:$0xff]
  %v836 = vld [vmem:[%s3 + $0x140] sm:$0xff]
  %v837 = vld [vmem:[%s3 + $0x148] sm:$0xff]
  %v838 = vld [vmem:[%s3 + $0x150] sm:$0xff]
  %v839 = vld [vmem:[%s3 + $0x158] sm:$0xff]
  %v840 = vld [vmem:[%s3 + $0x160] sm:$0xff]
  %v841 = vld [vmem:[%s3 + $0x168] sm:$0xff]
  %v842 = vld [vmem:[%s3 + $0x170] sm:$0xff]
  %v843 = vld [vmem:[%s3 + $0x178] sm:$0xff]
  %v844 = vld [vmem:[%s3 + $0x180] sm:$0xff]
  %v845 = vld [vmem:[%s3 + $0x188] sm:$0xff]
  %v846 = vld [vmem:[%s3 + $0x190] sm:$0xff]
  %v847 = vld [vmem:[%s3 + $0x198] sm:$0xff]
  %v848 = vld [vmem:[%s3 + $0x1a0] sm:$0xff]
  %v849 = vld [vmem:[%s3 + $0x1a8] sm:$0xff]
  %v850 = vld [vmem:[%s3 + $0x1b0] sm:$0xff]
  %v851 = vld [vmem:[%s3 + $0x1b8] sm:$0xff]
  %v852 = vld [vmem:[%s3 + $0x1c0] sm:$0xff]
  %v853 = vld [vmem:[%s3 + $0x1c8] sm:$0xff]
  %v854 = vld [vmem:[%s3 + $0x1d0] sm:$0xff]
  %v855 = vld [vmem:[%s3 + $0x1d8] sm:$0xff]
  %v856 = vld [vmem:[%s3 + $0x1e0] sm:$0xff]
  %v857 = vld [vmem:[%s3 + $0x1e8] sm:$0xff]
  %v858 = vld [vmem:[%s3 + $0x1f0] sm:$0xff]
  %v859 = vld [vmem:[%s3 + $0x1f8] sm:$0xff]
  %860 = vmatprep.subr.mxu0 %v857
  %861 = vmatpush1.msra.mxu0 %v856
  %862 = vmatprep.subr.mxu0 %v853
  %863 = vmatpush1.msra.mxu0 %v852
  %864 = vmatprep.subr.mxu0 %v849
  %865 = vmatpush1.msra.mxu0 %v848
  %866 = vmatprep.subr.mxu0 %v845
  %867 = vmatpush1.msra.mxu0 %v844
  %868 = vmatprep.subr.mxu0 %v841
  %869 = vmatpush1.msra.mxu0 %v840
  %870 = vmatprep.subr.mxu0 %v837
  %871 = vmatpush1.msra.mxu0 %v836
  %872 = vmatprep.subr.mxu0 %v833
  %873 = vmatpush1.msra.mxu0 %v832
  %874 = vmatprep.subr.mxu0 %v829
  %875 = vmatpush1.msra.mxu0 %v828
  %876 = vmatprep.subr.mxu0 %v825
  %877 = vmatpush1.msra.mxu0 %v824
  %878 = vmatprep.subr.mxu0 %v821
  %879 = vmatpush1.msra.mxu0 %v820
  %880 = vmatprep.subr.mxu0 %v817
  %881 = vmatpush1.msra.mxu0 %v816
  %882 = vmatprep.subr.mxu0 %v813
  %883 = vmatpush1.msra.mxu0 %v812
  %884 = vmatprep.subr.mxu0 %v809
  %885 = vmatpush1.msra.mxu0 %v808
  %886 = vmatprep.subr.mxu0 %v805
  %887 = vmatpush1.msra.mxu0 %v804
  %888 = vmatprep.subr.mxu0 %v801
  %889 = vmatpush1.msra.mxu0 %v800
  %890 = vmatprep.subr.mxu0 %v797
  %891 = vmatpush1.msra.mxu0 %v796
  %892 = vmatprep.subr.mxu0 0.0
  %893 = vmatpush2.msra.mxu0 0.0
  %894 = vmatprep.subr.mxu0 0.0
  %895 = vmatpush2.msra.mxu0 0.0
  %896 = vmatprep.subr.mxu0 0.0
  %897 = vmatpush2.msra.mxu0 0.0
  %898 = vmatprep.subr.mxu0 0.0
  %899 = vmatpush2.msra.mxu0 0.0
  %900 = vmatprep.subr.mxu0 0.0
  %901 = vmatpush2.msra.mxu0 0.0
  %902 = vmatprep.subr.mxu0 0.0
  %903 = vmatpush2.msra.mxu0 0.0
  %904 = vmatprep.subr.mxu0 0.0
  %905 = vmatpush2.msra.mxu0 0.0
  %906 = vmatprep.subr.mxu0 0.0
  %907 = vmatpush2.msra.mxu0 0.0
  %908 = vmatprep.subr.mxu0 0.0
  %909 = vmatpush2.msra.mxu0 0.0
  %910 = vmatprep.subr.mxu0 0.0
  %911 = vmatpush2.msra.mxu0 0.0
  %912 = vmatprep.subr.mxu0 0.0
  %913 = vmatpush2.msra.mxu0 0.0
  %914 = vmatprep.subr.mxu0 0.0
  %915 = vmatpush2.msra.mxu0 0.0
  %916 = vmatprep.subr.mxu0 0.0
  %917 = vmatpush2.msra.mxu0 0.0
  %918 = vmatprep.subr.mxu0 0.0
  %919 = vmatpush2.msra.mxu0 0.0
  %920 = vmatprep.subr.mxu0 0.0
  %921 = vmatpush2.msra.mxu0 0.0
  %922 = vmatprep.subr.mxu0 0.0
  %923 = vmatpush2.msra.mxu0 0.0
  %924 = vmatprep.mubr.f32.mxu0 0.0
  %925 = vmatmul.mubr.f32.gmra.mxu0 %v795
  %v926 = vpop.f32.mrf.mxu0
  %v927 = vadd.f32 0.0, %v926
  %v928 = vpop.f32.mrf.mxu0
  %v929 = vadd.f32 0.0, %v928
  %930 = vdwg.mxu0
  %931 = vmatprep.subr.mxu0 %v859
  %932 = vmatpush1.msra.mxu0 %v858
  %933 = vmatprep.subr.mxu0 %v855
  %934 = vmatpush1.msra.mxu0 %v854
  %935 = vmatprep.subr.mxu0 %v851
  %936 = vmatpush1.msra.mxu0 %v850
  %937 = vmatprep.subr.mxu0 %v847
  %938 = vmatpush1.msra.mxu0 %v846
  %939 = vmatprep.subr.mxu0 %v843
  %940 = vmatpush1.msra.mxu0 %v842
  %941 = vmatprep.subr.mxu0 %v839
  %942 = vmatpush1.msra.mxu0 %v838
  %943 = vmatprep.subr.mxu0 %v835
  %944 = vmatpush1.msra.mxu0 %v834
  %945 = vmatprep.subr.mxu0 %v831
  %946 = vmatpush1.msra.mxu0 %v830
  %947 = vmatprep.subr.mxu0 %v827
  %948 = vmatpush1.msra.mxu0 %v826
  %949 = vmatprep.subr.mxu0 %v823
  %950 = vmatpush1.msra.mxu0 %v822
  %951 = vmatprep.subr.mxu0 %v819
  %952 = vmatpush1.msra.mxu0 %v818
  %953 = vmatprep.subr.mxu0 %v815
  %954 = vmatpush1.msra.mxu0 %v814
  %955 = vmatprep.subr.mxu0 %v811
  %956 = vmatpush1.msra.mxu0 %v810
  %957 = vmatprep.subr.mxu0 %v807
  %958 = vmatpush1.msra.mxu0 %v806
  %959 = vmatprep.subr.mxu0 %v803
  %960 = vmatpush1.msra.mxu0 %v802
  %961 = vmatprep.subr.mxu0 %v799
  %962 = vmatpush1.msra.mxu0 %v798
  %963 = vmatprep.subr.mxu0 0.0
  %964 = vmatpush2.msra.mxu0 0.0
  %965 = vmatprep.subr.mxu0 0.0
  %966 = vmatpush2.msra.mxu0 0.0
  %967 = vmatprep.subr.mxu0 0.0
  %968 = vmatpush2.msra.mxu0 0.0
  %969 = vmatprep.subr.mxu0 0.0
  %970 = vmatpush2.msra.mxu0 0.0
  %971 = vmatprep.subr.mxu0 0.0
  %972 = vmatpush2.msra.mxu0 0.0
  %973 = vmatprep.subr.mxu0 0.0
  %974 = vmatpush2.msra.mxu0 0.0
  %975 = vmatprep.subr.mxu0 0.0
  %976 = vmatpush2.msra.mxu0 0.0
  %977 = vmatprep.subr.mxu0 0.0
  %978 = vmatpush2.msra.mxu0 0.0
  %979 = vmatprep.subr.mxu0 0.0
  %980 = vmatpush2.msra.mxu0 0.0
  %981 = vmatprep.subr.mxu0 0.0
  %982 = vmatpush2.msra.mxu0 0.0
  %983 = vmatprep.subr.mxu0 0.0
  %984 = vmatpush2.msra.mxu0 0.0
  %985 = vmatprep.subr.mxu0 0.0
  %986 = vmatpush2.msra.mxu0 0.0
  %987 = vmatprep.subr.mxu0 0.0
  %988 = vmatpush2.msra.mxu0 0.0
  %989 = vmatprep.subr.mxu0 0.0
  %990 = vmatpush2.msra.mxu0 0.0
  %991 = vmatprep.subr.mxu0 0.0
  %992 = vmatpush2.msra.mxu0 0.0
  %993 = vmatprep.subr.mxu0 0.0
  %994 = vmatpush2.msra.mxu0 0.0
  %995 = vmatprep.mubr.f32.mxu0 0.0
  %996 = vmatmul.mubr.f32.gmra.mxu0 %v795
  %v997 = vpop.f32.mrf.mxu0
  %v998 = vadd.f32 0.0, %v997
  %v999 = vpop.f32.mrf.mxu0
  %v1000 = vadd.f32 0.0, %v999
  %1001 = vdwg.mxu0
  %s1002 = scalar_lea.vmem %s0, 8
  %v1003 = vld [vmem:[%s1002] sm:$0xff]
  %v1008 = vcombine.low %v720, %v722
  %v1009 = vcombine.low %v791, %v793
  %v1011 = vunpack.c.l.s4 1983009808
  %v1012 = vunpack.c.0.s8 %v1011
  %v1013 = vlaneseq
  %v1014 = vshrl.u32 %v1013, 7
  %v1015 = vsub.s32 %v1012, %v1014
  %v1016 = vrot.slane %v1008, %v1015
  %v1018 = vunpack.c.l.s4 1983009808
  %v1019 = vunpack.c.0.s8 %v1018
  %v1020 = vlaneseq
  %v1021 = vshrl.u32 %v1020, 7
  %v1022 = vsub.s32 %v1019, %v1021
  %v1023 = vrot.slane %v1009, %v1022
  %v1024 = vcombine.low %v1016, %v1023
  %v1026 = vadd.f32 %v1003, %v1024
  %v1027 = vld [vmem:[#allocation3] sm:$0x3]
  %v1028 = vmul.f32 %v1026, 0.5
  %v1029 = vtanh.pop %v1028
  %v1030 = vadd.f32 %v1029, 1.0
  %v1031 = vmul.f32 %v1030, 0.5
  %v1033 = vrot.slane %v1026, 2
  %v1035 = vmul.f32 %v1033, 0.5
  %v1036 = vtanh.pop %v1035
  %v1037 = vadd.f32 %v1036, 1.0
  %v1038 = vmul.f32 %v1037, 0.5
  %v1039 = vrot.slane %v1026, 4
  %v1041 = vtanh.pop %v1039
  %v1042 = vrot.slane %v1026, 6
  %v1044 = vmul.f32 %v1042, 0.5
  %v1045 = vtanh.pop %v1044
  %v1046 = vadd.f32 %v1045, 1.0
  %v1047 = vmul.f32 %v1046, 0.5
  %v1048 = vmul.f32 %v1038, %v1027
  %v1049 = vmul.f32 %v1031, %v1041
  %v1050 = vadd.f32 %v1048, %v1049
  %v1051 = vtanh.pop %v1050
  %v1052 = vmul.f32 %v1047, %v1051
  %s1053 = scalar_lea.vmem %s47, 48
  %v1054 = vld [vmem:[%s1053] sm:$0xff]
  %v1059 = vcombine.low %v927, %v929
  %v1060 = vcombine.low %v998, %v1000
  %v1062 = vunpack.c.l.s4 1983009808
  %v1063 = vunpack.c.0.s8 %v1062
  %v1064 = vlaneseq
  %v1065 = vshrl.u32 %v1064, 7
  %v1066 = vsub.s32 %v1063, %v1065
  %v1067 = vrot.slane %v1059, %v1066
  %v1069 = vunpack.c.l.s4 1983009808
  %v1070 = vunpack.c.0.s8 %v1069
  %v1071 = vlaneseq
  %v1072 = vshrl.u32 %v1071, 7
  %v1073 = vsub.s32 %v1070, %v1072
  %v1074 = vrot.slane %v1060, %v1073
  %v1075 = vcombine.low %v1067, %v1074
  %v1077 = vadd.f32 %v1054, %v1075
  %v1078 = vld [vmem:[#allocation5] sm:$0x3]
  %v1079 = vmul.f32 %v1077, 0.5
  %v1080 = vtanh.pop %v1079
  %v1081 = vadd.f32 %v1080, 1.0
  %v1082 = vmul.f32 %v1081, 0.5
  %v1084 = vrot.slane %v1077, 2
  %v1086 = vmul.f32 %v1084, 0.5
  %v1087 = vtanh.pop %v1086
  %v1088 = vadd.f32 %v1087, 1.0
  %v1089 = vmul.f32 %v1088, 0.5
  %v1090 = vrot.slane %v1077, 4
  %v1092 = vtanh.pop %v1090
  %v1093 = vrot.slane %v1077, 6
  %v1095 = vmul.f32 %v1093, 0.5
  %v1096 = vtanh.pop %v1095
  %v1097 = vadd.f32 %v1096, 1.0
  %v1098 = vmul.f32 %v1097, 0.5
  %v1099 = vmul.f32 %v1089, %v1078
  %v1100 = vmul.f32 %v1082, %v1092
  %v1101 = vadd.f32 %v1099, %v1100
  %v1102 = vtanh.pop %v1101
  %v1103 = vmul.f32 %v1098, %v1102
  %1104 = vst [vmem:[#allocation2] sm:$0x3] %v1052
  %1105 = vst [vmem:[#allocation3] sm:$0x3] %v1050
  %1106 = vst [vmem:[#allocation4] sm:$0x3] %v1103
  %1107 = vst [vmem:[#allocation5] sm:$0x3] %v1101
  %s1108 = scalar_lea.vmem %s4, 2
  %1109 = vst [vmem:[%s1108] sm:$0x3] %v1052
  %s1110 = scalar_lea.vmem %s55, 12
  %1111 = vst [vmem:[%s1110] sm:$0x3] %v1103
  %v1112 = vld [vmem:[#allocation2] sm:$0x3]
  %v1113 = vld [vmem:[%s2] sm:$0xff]
  %v1114 = vld [vmem:[%s2 + $0x8] sm:$0xff]
  %v1115 = vld [vmem:[%s2 + $0x10] sm:$0xff]
  %v1116 = vld [vmem:[%s2 + $0x18] sm:$0xff]
  %v1117 = vld [vmem:[%s2 + $0x20] sm:$0xff]
  %v1118 = vld [vmem:[%s2 + $0x28] sm:$0xff]
  %v1119 = vld [vmem:[%s2 + $0x30] sm:$0xff]
  %v1120 = vld [vmem:[%s2 + $0x38] sm:$0xff]
  %v1121 = vld [vmem:[%s2 + $0x40] sm:$0xff]
  %v1122 = vld [vmem:[%s2 + $0x48] sm:$0xff]
  %v1123 = vld [vmem:[%s2 + $0x50] sm:$0xff]
  %v1124 = vld [vmem:[%s2 + $0x58] sm:$0xff]
  %v1125 = vld [vmem:[%s2 + $0x60] sm:$0xff]
  %v1126 = vld [vmem:[%s2 + $0x68] sm:$0xff]
  %v1127 = vld [vmem:[%s2 + $0x70] sm:$0xff]
  %v1128 = vld [vmem:[%s2 + $0x78] sm:$0xff]
  %v1129 = vld [vmem:[%s2 + $0x80] sm:$0xff]
  %v1130 = vld [vmem:[%s2 + $0x88] sm:$0xff]
  %v1131 = vld [vmem:[%s2 + $0x90] sm:$0xff]
  %v1132 = vld [vmem:[%s2 + $0x98] sm:$0xff]
  %v1133 = vld [vmem:[%s2 + $0xa0] sm:$0xff]
  %v1134 = vld [vmem:[%s2 + $0xa8] sm:$0xff]
  %v1135 = vld [vmem:[%s2 + $0xb0] sm:$0xff]
  %v1136 = vld [vmem:[%s2 + $0xb8] sm:$0xff]
  %v1137 = vld [vmem:[%s2 + $0xc0] sm:$0xff]
  %v1138 = vld [vmem:[%s2 + $0xc8] sm:$0xff]
  %v1139 = vld [vmem:[%s2 + $0xd0] sm:$0xff]
  %v1140 = vld [vmem:[%s2 + $0xd8] sm:$0xff]
  %v1141 = vld [vmem:[%s2 + $0xe0] sm:$0xff]
  %v1142 = vld [vmem:[%s2 + $0xe8] sm:$0xff]
  %v1143 = vld [vmem:[%s2 + $0xf0] sm:$0xff]
  %v1144 = vld [vmem:[%s2 + $0xf8] sm:$0xff]
  %v1145 = vld [vmem:[%s2 + $0x100] sm:$0xff]
  %v1146 = vld [vmem:[%s2 + $0x108] sm:$0xff]
  %v1147 = vld [vmem:[%s2 + $0x110] sm:$0xff]
  %v1148 = vld [vmem:[%s2 + $0x118] sm:$0xff]
  %v1149 = vld [vmem:[%s2 + $0x120] sm:$0xff]
  %v1150 = vld [vmem:[%s2 + $0x128] sm:$0xff]
  %v1151 = vld [vmem:[%s2 + $0x130] sm:$0xff]
  %v1152 = vld [vmem:[%s2 + $0x138] sm:$0xff]
  %v1153 = vld [vmem:[%s2 + $0x140] sm:$0xff]
  %v1154 = vld [vmem:[%s2 + $0x148] sm:$0xff]
  %v1155 = vld [vmem:[%s2 + $0x150] sm:$0xff]
  %v1156 = vld [vmem:[%s2 + $0x158] sm:$0xff]
  %v1157 = vld [vmem:[%s2 + $0x160] sm:$0xff]
  %v1158 = vld [vmem:[%s2 + $0x168] sm:$0xff]
  %v1159 = vld [vmem:[%s2 + $0x170] sm:$0xff]
  %v1160 = vld [vmem:[%s2 + $0x178] sm:$0xff]
  %v1161 = vld [vmem:[%s2 + $0x180] sm:$0xff]
  %v1162 = vld [vmem:[%s2 + $0x188] sm:$0xff]
  %v1163 = vld [vmem:[%s2 + $0x190] sm:$0xff]
  %v1164 = vld [vmem:[%s2 + $0x198] sm:$0xff]
  %v1165 = vld [vmem:[%s2 + $0x1a0] sm:$0xff]
  %v1166 = vld [vmem:[%s2 + $0x1a8] sm:$0xff]
  %v1167 = vld [vmem:[%s2 + $0x1b0] sm:$0xff]
  %v1168 = vld [vmem:[%s2 + $0x1b8] sm:$0xff]
  %v1169 = vld [vmem:[%s2 + $0x1c0] sm:$0xff]
  %v1170 = vld [vmem:[%s2 + $0x1c8] sm:$0xff]
  %v1171 = vld [vmem:[%s2 + $0x1d0] sm:$0xff]
  %v1172 = vld [vmem:[%s2 + $0x1d8] sm:$0xff]
  %v1173 = vld [vmem:[%s2 + $0x1e0] sm:$0xff]
  %v1174 = vld [vmem:[%s2 + $0x1e8] sm:$0xff]
  %v1175 = vld [vmem:[%s2 + $0x1f0] sm:$0xff]
  %v1176 = vld [vmem:[%s2 + $0x1f8] sm:$0xff]
  %1177 = vmatprep.subr.mxu0 %v1174
  %1178 = vmatpush1.msra.mxu0 %v1173
  %1179 = vmatprep.subr.mxu0 %v1170
  %1180 = vmatpush1.msra.mxu0 %v1169
  %1181 = vmatprep.subr.mxu0 %v1166
  %1182 = vmatpush1.msra.mxu0 %v1165
  %1183 = vmatprep.subr.mxu0 %v1162
  %1184 = vmatpush1.msra.mxu0 %v1161
  %1185 = vmatprep.subr.mxu0 %v1158
  %1186 = vmatpush1.msra.mxu0 %v1157
  %1187 = vmatprep.subr.mxu0 %v1154
  %1188 = vmatpush1.msra.mxu0 %v1153
  %1189 = vmatprep.subr.mxu0 %v1150
  %1190 = vmatpush1.msra.mxu0 %v1149
  %1191 = vmatprep.subr.mxu0 %v1146
  %1192 = vmatpush1.msra.mxu0 %v1145
  %1193 = vmatprep.subr.mxu0 %v1142
  %1194 = vmatpush1.msra.mxu0 %v1141
  %1195 = vmatprep.subr.mxu0 %v1138
  %1196 = vmatpush1.msra.mxu0 %v1137
  %1197 = vmatprep.subr.mxu0 %v1134
  %1198 = vmatpush1.msra.mxu0 %v1133
  %1199 = vmatprep.subr.mxu0 %v1130
  %1200 = vmatpush1.msra.mxu0 %v1129
  %1201 = vmatprep.subr.mxu0 %v1126
  %1202 = vmatpush1.msra.mxu0 %v1125
  %1203 = vmatprep.subr.mxu0 %v1122
  %1204 = vmatpush1.msra.mxu0 %v1121
  %1205 = vmatprep.subr.mxu0 %v1118
  %1206 = vmatpush1.msra.mxu0 %v1117
  %1207 = vmatprep.subr.mxu0 %v1114
  %1208 = vmatpush1.msra.mxu0 %v1113
  %1209 = vmatprep.subr.mxu0 0.0
  %1210 = vmatpush2.msra.mxu0 0.0
  %1211 = vmatprep.subr.mxu0 0.0
  %1212 = vmatpush2.msra.mxu0 0.0
  %1213 = vmatprep.subr.mxu0 0.0
  %1214 = vmatpush2.msra.mxu0 0.0
  %1215 = vmatprep.subr.mxu0 0.0
  %1216 = vmatpush2.msra.mxu0 0.0
  %1217 = vmatprep.subr.mxu0 0.0
  %1218 = vmatpush2.msra.mxu0 0.0
  %1219 = vmatprep.subr.mxu0 0.0
  %1220 = vmatpush2.msra.mxu0 0.0
  %1221 = vmatprep.subr.mxu0 0.0
  %1222 = vmatpush2.msra.mxu0 0.0
  %1223 = vmatprep.subr.mxu0 0.0
  %1224 = vmatpush2.msra.mxu0 0.0
  %1225 = vmatprep.subr.mxu0 0.0
  %1226 = vmatpush2.msra.mxu0 0.0
  %1227 = vmatprep.subr.mxu0 0.0
  %1228 = vmatpush2.msra.mxu0 0.0
  %1229 = vmatprep.subr.mxu0 0.0
  %1230 = vmatpush2.msra.mxu0 0.0
  %1231 = vmatprep.subr.mxu0 0.0
  %1232 = vmatpush2.msra.mxu0 0.0
  %1233 = vmatprep.subr.mxu0 0.0
  %1234 = vmatpush2.msra.mxu0 0.0
  %1235 = vmatprep.subr.mxu0 0.0
  %1236 = vmatpush2.msra.mxu0 0.0
  %1237 = vmatprep.subr.mxu0 0.0
  %1238 = vmatpush2.msra.mxu0 0.0
  %1239 = vmatprep.subr.mxu0 0.0
  %1240 = vmatpush2.msra.mxu0 0.0
  %1241 = vmatprep.mubr.f32.mxu0 0.0
  %1242 = vmatmul.mubr.f32.gmra.mxu0 %v1112
  %v1243 = vpop.f32.mrf.mxu0
  %v1244 = vadd.f32 0.0, %v1243
  %v1245 = vpop.f32.mrf.mxu0
  %v1246 = vadd.f32 0.0, %v1245
  %1247 = vdwg.mxu0
  %1248 = vmatprep.subr.mxu0 %v1176
  %1249 = vmatpush1.msra.mxu0 %v1175
  %1250 = vmatprep.subr.mxu0 %v1172
  %1251 = vmatpush1.msra.mxu0 %v1171
  %1252 = vmatprep.subr.mxu0 %v1168
  %1253 = vmatpush1.msra.mxu0 %v1167
  %1254 = vmatprep.subr.mxu0 %v1164
  %1255 = vmatpush1.msra.mxu0 %v1163
  %1256 = vmatprep.subr.mxu0 %v1160
  %1257 = vmatpush1.msra.mxu0 %v1159
  %1258 = vmatprep.subr.mxu0 %v1156
  %1259 = vmatpush1.msra.mxu0 %v1155
  %1260 = vmatprep.subr.mxu0 %v1152
  %1261 = vmatpush1.msra.mxu0 %v1151
  %1262 = vmatprep.subr.mxu0 %v1148
  %1263 = vmatpush1.msra.mxu0 %v1147
  %1264 = vmatprep.subr.mxu0 %v1144
  %1265 = vmatpush1.msra.mxu0 %v1143
  %1266 = vmatprep.subr.mxu0 %v1140
  %1267 = vmatpush1.msra.mxu0 %v1139
  %1268 = vmatprep.subr.mxu0 %v1136
  %1269 = vmatpush1.msra.mxu0 %v1135
  %1270 = vmatprep.subr.mxu0 %v1132
  %1271 = vmatpush1.msra.mxu0 %v1131
  %1272 = vmatprep.subr.mxu0 %v1128
  %1273 = vmatpush1.msra.mxu0 %v1127
  %1274 = vmatprep.subr.mxu0 %v1124
  %1275 = vmatpush1.msra.mxu0 %v1123
  %1276 = vmatprep.subr.mxu0 %v1120
  %1277 = vmatpush1.msra.mxu0 %v1119
  %1278 = vmatprep.subr.mxu0 %v1116
  %1279 = vmatpush1.msra.mxu0 %v1115
  %1280 = vmatprep.subr.mxu0 0.0
  %1281 = vmatpush2.msra.mxu0 0.0
  %1282 = vmatprep.subr.mxu0 0.0
  %1283 = vmatpush2.msra.mxu0 0.0
  %1284 = vmatprep.subr.mxu0 0.0
  %1285 = vmatpush2.msra.mxu0 0.0
  %1286 = vmatprep.subr.mxu0 0.0
  %1287 = vmatpush2.msra.mxu0 0.0
  %1288 = vmatprep.subr.mxu0 0.0
  %1289 = vmatpush2.msra.mxu0 0.0
  %1290 = vmatprep.subr.mxu0 0.0
  %1291 = vmatpush2.msra.mxu0 0.0
  %1292 = vmatprep.subr.mxu0 0.0
  %1293 = vmatpush2.msra.mxu0 0.0
  %1294 = vmatprep.subr.mxu0 0.0
  %1295 = vmatpush2.msra.mxu0 0.0
  %1296 = vmatprep.subr.mxu0 0.0
  %1297 = vmatpush2.msra.mxu0 0.0
  %1298 = vmatprep.subr.mxu0 0.0
  %1299 = vmatpush2.msra.mxu0 0.0
  %1300 = vmatprep.subr.mxu0 0.0
  %1301 = vmatpush2.msra.mxu0 0.0
  %1302 = vmatprep.subr.mxu0 0.0
  %1303 = vmatpush2.msra.mxu0 0.0
  %1304 = vmatprep.subr.mxu0 0.0
  %1305 = vmatpush2.msra.mxu0 0.0
  %1306 = vmatprep.subr.mxu0 0.0
  %1307 = vmatpush2.msra.mxu0 0.0
  %1308 = vmatprep.subr.mxu0 0.0
  %1309 = vmatpush2.msra.mxu0 0.0
  %1310 = vmatprep.subr.mxu0 0.0
  %1311 = vmatpush2.msra.mxu0 0.0
  %1312 = vmatprep.mubr.f32.mxu0 0.0
  %1313 = vmatmul.mubr.f32.gmra.mxu0 %v1112
  %v1314 = vpop.f32.mrf.mxu0
  %v1315 = vadd.f32 0.0, %v1314
  %v1316 = vpop.f32.mrf.mxu0
  %v1317 = vadd.f32 0.0, %v1316
  %1318 = vdwg.mxu0
  %v1319 = vld [vmem:[#allocation4] sm:$0x3]
  %v1320 = vld [vmem:[%s3] sm:$0xff]
  %v1321 = vld [vmem:[%s3 + $0x8] sm:$0xff]
  %v1322 = vld [vmem:[%s3 + $0x10] sm:$0xff]
  %v1323 = vld [vmem:[%s3 + $0x18] sm:$0xff]
  %v1324 = vld [vmem:[%s3 + $0x20] sm:$0xff]
  %v1325 = vld [vmem:[%s3 + $0x28] sm:$0xff]
  %v1326 = vld [vmem:[%s3 + $0x30] sm:$0xff]
  %v1327 = vld [vmem:[%s3 + $0x38] sm:$0xff]
  %v1328 = vld [vmem:[%s3 + $0x40] sm:$0xff]
  %v1329 = vld [vmem:[%s3 + $0x48] sm:$0xff]
  %v1330 = vld [vmem:[%s3 + $0x50] sm:$0xff]
  %v1331 = vld [vmem:[%s3 + $0x58] sm:$0xff]
  %v1332 = vld [vmem:[%s3 + $0x60] sm:$0xff]
  %v1333 = vld [vmem:[%s3 + $0x68] sm:$0xff]
  %v1334 = vld [vmem:[%s3 + $0x70] sm:$0xff]
  %v1335 = vld [vmem:[%s3 + $0x78] sm:$0xff]
  %v1336 = vld [vmem:[%s3 + $0x80] sm:$0xff]
  %v1337 = vld [vmem:[%s3 + $0x88] sm:$0xff]
  %v1338 = vld [vmem:[%s3 + $0x90] sm:$0xff]
  %v1339 = vld [vmem:[%s3 + $0x98] sm:$0xff]
  %v1340 = vld [vmem:[%s3 + $0xa0] sm:$0xff]
  %v1341 = vld [vmem:[%s3 + $0xa8] sm:$0xff]
  %v1342 = vld [vmem:[%s3 + $0xb0] sm:$0xff]
  %v1343 = vld [vmem:[%s3 + $0xb8] sm:$0xff]
  %v1344 = vld [vmem:[%s3 + $0xc0] sm:$0xff]
  %v1345 = vld [vmem:[%s3 + $0xc8] sm:$0xff]
  %v1346 = vld [vmem:[%s3 + $0xd0] sm:$0xff]
  %v1347 = vld [vmem:[%s3 + $0xd8] sm:$0xff]
  %v1348 = vld [vmem:[%s3 + $0xe0] sm:$0xff]
  %v1349 = vld [vmem:[%s3 + $0xe8] sm:$0xff]
  %v1350 = vld [vmem:[%s3 + $0xf0] sm:$0xff]
  %v1351 = vld [vmem:[%s3 + $0xf8] sm:$0xff]
  %v1352 = vld [vmem:[%s3 + $0x100] sm:$0xff]
  %v1353 = vld [vmem:[%s3 + $0x108] sm:$0xff]
  %v1354 = vld [vmem:[%s3 + $0x110] sm:$0xff]
  %v1355 = vld [vmem:[%s3 + $0x118] sm:$0xff]
  %v1356 = vld [vmem:[%s3 + $0x120] sm:$0xff]
  %v1357 = vld [vmem:[%s3 + $0x128] sm:$0xff]
  %v1358 = vld [vmem:[%s3 + $0x130] sm:$0xff]
  %v1359 = vld [vmem:[%s3 + $0x138] sm:$0xff]
  %v1360 = vld [vmem:[%s3 + $0x140] sm:$0xff]
  %v1361 = vld [vmem:[%s3 + $0x148] sm:$0xff]
  %v1362 = vld [vmem:[%s3 + $0x150] sm:$0xff]
  %v1363 = vld [vmem:[%s3 + $0x158] sm:$0xff]
  %v1364 = vld [vmem:[%s3 + $0x160] sm:$0xff]
  %v1365 = vld [vmem:[%s3 + $0x168] sm:$0xff]
  %v1366 = vld [vmem:[%s3 + $0x170] sm:$0xff]
  %v1367 = vld [vmem:[%s3 + $0x178] sm:$0xff]
  %v1368 = vld [vmem:[%s3 + $0x180] sm:$0xff]
  %v1369 = vld [vmem:[%s3 + $0x188] sm:$0xff]
  %v1370 = vld [vmem:[%s3 + $0x190] sm:$0xff]
  %v1371 = vld [vmem:[%s3 + $0x198] sm:$0xff]
  %v1372 = vld [vmem:[%s3 + $0x1a0] sm:$0xff]
  %v1373 = vld [vmem:[%s3 + $0x1a8] sm:$0xff]
  %v1374 = vld [vmem:[%s3 + $0x1b0] sm:$0xff]
  %v1375 = vld [vmem:[%s3 + $0x1b8] sm:$0xff]
  %v1376 = vld [vmem:[%s3 + $0x1c0] sm:$0xff]
  %v1377 = vld [vmem:[%s3 + $0x1c8] sm:$0xff]
  %v1378 = vld [vmem:[%s3 + $0x1d0] sm:$0xff]
  %v1379 = vld [vmem:[%s3 + $0x1d8] sm:$0xff]
  %v1380 = vld [vmem:[%s3 + $0x1e0] sm:$0xff]
  %v1381 = vld [vmem:[%s3 + $0x1e8] sm:$0xff]
  %v1382 = vld [vmem:[%s3 + $0x1f0] sm:$0xff]
  %v1383 = vld [vmem:[%s3 + $0x1f8] sm:$0xff]
  %1384 = vmatprep.subr.mxu0 %v1381
  %1385 = vmatpush1.msra.mxu0 %v1380
  %1386 = vmatprep.subr.mxu0 %v1377
  %1387 = vmatpush1.msra.mxu0 %v1376
  %1388 = vmatprep.subr.mxu0 %v1373
  %1389 = vmatpush1.msra.mxu0 %v1372
  %1390 = vmatprep.subr.mxu0 %v1369
  %1391 = vmatpush1.msra.mxu0 %v1368
  %1392 = vmatprep.subr.mxu0 %v1365
  %1393 = vmatpush1.msra.mxu0 %v1364
  %1394 = vmatprep.subr.mxu0 %v1361
  %1395 = vmatpush1.msra.mxu0 %v1360
  %1396 = vmatprep.subr.mxu0 %v1357
  %1397 = vmatpush1.msra.mxu0 %v1356
  %1398 = vmatprep.subr.mxu0 %v1353
  %1399 = vmatpush1.msra.mxu0 %v1352
  %1400 = vmatprep.subr.mxu0 %v1349
  %1401 = vmatpush1.msra.mxu0 %v1348
  %1402 = vmatprep.subr.mxu0 %v1345
  %1403 = vmatpush1.msra.mxu0 %v1344
  %1404 = vmatprep.subr.mxu0 %v1341
  %1405 = vmatpush1.msra.mxu0 %v1340
  %1406 = vmatprep.subr.mxu0 %v1337
  %1407 = vmatpush1.msra.mxu0 %v1336
  %1408 = vmatprep.subr.mxu0 %v1333
  %1409 = vmatpush1.msra.mxu0 %v1332
  %1410 = vmatprep.subr.mxu0 %v1329
  %1411 = vmatpush1.msra.mxu0 %v1328
  %1412 = vmatprep.subr.mxu0 %v1325
  %1413 = vmatpush1.msra.mxu0 %v1324
  %1414 = vmatprep.subr.mxu0 %v1321
  %1415 = vmatpush1.msra.mxu0 %v1320
  %1416 = vmatprep.subr.mxu0 0.0
  %1417 = vmatpush2.msra.mxu0 0.0
  %1418 = vmatprep.subr.mxu0 0.0
  %1419 = vmatpush2.msra.mxu0 0.0
  %1420 = vmatprep.subr.mxu0 0.0
  %1421 = vmatpush2.msra.mxu0 0.0
  %1422 = vmatprep.subr.mxu0 0.0
  %1423 = vmatpush2.msra.mxu0 0.0
  %1424 = vmatprep.subr.mxu0 0.0
  %1425 = vmatpush2.msra.mxu0 0.0
  %1426 = vmatprep.subr.mxu0 0.0
  %1427 = vmatpush2.msra.mxu0 0.0
  %1428 = vmatprep.subr.mxu0 0.0
  %1429 = vmatpush2.msra.mxu0 0.0
  %1430 = vmatprep.subr.mxu0 0.0
  %1431 = vmatpush2.msra.mxu0 0.0
  %1432 = vmatprep.subr.mxu0 0.0
  %1433 = vmatpush2.msra.mxu0 0.0
  %1434 = vmatprep.subr.mxu0 0.0
  %1435 = vmatpush2.msra.mxu0 0.0
  %1436 = vmatprep.subr.mxu0 0.0
  %1437 = vmatpush2.msra.mxu0 0.0
  %1438 = vmatprep.subr.mxu0 0.0
  %1439 = vmatpush2.msra.mxu0 0.0
  %1440 = vmatprep.subr.mxu0 0.0
  %1441 = vmatpush2.msra.mxu0 0.0
  %1442 = vmatprep.subr.mxu0 0.0
  %1443 = vmatpush2.msra.mxu0 0.0
  %1444 = vmatprep.subr.mxu0 0.0
  %1445 = vmatpush2.msra.mxu0 0.0
  %1446 = vmatprep.subr.mxu0 0.0
  %1447 = vmatpush2.msra.mxu0 0.0
  %1448 = vmatprep.mubr.f32.mxu0 0.0
  %1449 = vmatmul.mubr.f32.gmra.mxu0 %v1319
  %v1450 = vpop.f32.mrf.mxu0
  %v1451 = vadd.f32 0.0, %v1450
  %v1452 = vpop.f32.mrf.mxu0
  %v1453 = vadd.f32 0.0, %v1452
  %1454 = vdwg.mxu0
  %1455 = vmatprep.subr.mxu0 %v1383
  %1456 = vmatpush1.msra.mxu0 %v1382
  %1457 = vmatprep.subr.mxu0 %v1379
  %1458 = vmatpush1.msra.mxu0 %v1378
  %1459 = vmatprep.subr.mxu0 %v1375
  %1460 = vmatpush1.msra.mxu0 %v1374
  %1461 = vmatprep.subr.mxu0 %v1371
  %1462 = vmatpush1.msra.mxu0 %v1370
  %1463 = vmatprep.subr.mxu0 %v1367
  %1464 = vmatpush1.msra.mxu0 %v1366
  %1465 = vmatprep.subr.mxu0 %v1363
  %1466 = vmatpush1.msra.mxu0 %v1362
  %1467 = vmatprep.subr.mxu0 %v1359
  %1468 = vmatpush1.msra.mxu0 %v1358
  %1469 = vmatprep.subr.mxu0 %v1355
  %1470 = vmatpush1.msra.mxu0 %v1354
  %1471 = vmatprep.subr.mxu0 %v1351
  %1472 = vmatpush1.msra.mxu0 %v1350
  %1473 = vmatprep.subr.mxu0 %v1347
  %1474 = vmatpush1.msra.mxu0 %v1346
  %1475 = vmatprep.subr.mxu0 %v1343
  %1476 = vmatpush1.msra.mxu0 %v1342
  %1477 = vmatprep.subr.mxu0 %v1339
  %1478 = vmatpush1.msra.mxu0 %v1338
  %1479 = vmatprep.subr.mxu0 %v1335
  %1480 = vmatpush1.msra.mxu0 %v1334
  %1481 = vmatprep.subr.mxu0 %v1331
  %1482 = vmatpush1.msra.mxu0 %v1330
  %1483 = vmatprep.subr.mxu0 %v1327
  %1484 = vmatpush1.msra.mxu0 %v1326
  %1485 = vmatprep.subr.mxu0 %v1323
  %1486 = vmatpush1.msra.mxu0 %v1322
  %1487 = vmatprep.subr.mxu0 0.0
  %1488 = vmatpush2.msra.mxu0 0.0
  %1489 = vmatprep.subr.mxu0 0.0
  %1490 = vmatpush2.msra.mxu0 0.0
  %1491 = vmatprep.subr.mxu0 0.0
  %1492 = vmatpush2.msra.mxu0 0.0
  %1493 = vmatprep.subr.mxu0 0.0
  %1494 = vmatpush2.msra.mxu0 0.0
  %1495 = vmatprep.subr.mxu0 0.0
  %1496 = vmatpush2.msra.mxu0 0.0
  %1497 = vmatprep.subr.mxu0 0.0
  %1498 = vmatpush2.msra.mxu0 0.0
  %1499 = vmatprep.subr.mxu0 0.0
  %1500 = vmatpush2.msra.mxu0 0.0
  %1501 = vmatprep.subr.mxu0 0.0
  %1502 = vmatpush2.msra.mxu0 0.0
  %1503 = vmatprep.subr.mxu0 0.0
  %1504 = vmatpush2.msra.mxu0 0.0
  %1505 = vmatprep.subr.mxu0 0.0
  %1506 = vmatpush2.msra.mxu0 0.0
  %1507 = vmatprep.subr.mxu0 0.0
  %1508 = vmatpush2.msra.mxu0 0.0
  %1509 = vmatprep.subr.mxu0 0.0
  %1510 = vmatpush2.msra.mxu0 0.0
  %1511 = vmatprep.subr.mxu0 0.0
  %1512 = vmatpush2.msra.mxu0 0.0
  %1513 = vmatprep.subr.mxu0 0.0
  %1514 = vmatpush2.msra.mxu0 0.0
  %1515 = vmatprep.subr.mxu0 0.0
  %1516 = vmatpush2.msra.mxu0 0.0
  %1517 = vmatprep.subr.mxu0 0.0
  %1518 = vmatpush2.msra.mxu0 0.0
  %1519 = vmatprep.mubr.f32.mxu0 0.0
  %1520 = vmatmul.mubr.f32.gmra.mxu0 %v1319
  %v1521 = vpop.f32.mrf.mxu0
  %v1522 = vadd.f32 0.0, %v1521
  %v1523 = vpop.f32.mrf.mxu0
  %v1524 = vadd.f32 0.0, %v1523
  %1525 = vdwg.mxu0
  %s1526 = scalar_lea.vmem %s0, 16
  %v1527 = vld [vmem:[%s1526] sm:$0xff]
  %v1532 = vcombine.low %v1244, %v1246
  %v1533 = vcombine.low %v1315, %v1317
  %v1535 = vunpack.c.l.s4 1983009808
  %v1536 = vunpack.c.0.s8 %v1535
  %v1537 = vlaneseq
  %v1538 = vshrl.u32 %v1537, 7
  %v1539 = vsub.s32 %v1536, %v1538
  %v1540 = vrot.slane %v1532, %v1539
  %v1542 = vunpack.c.l.s4 1983009808
  %v1543 = vunpack.c.0.s8 %v1542
  %v1544 = vlaneseq
  %v1545 = vshrl.u32 %v1544, 7
  %v1546 = vsub.s32 %v1543, %v1545
  %v1547 = vrot.slane %v1533, %v1546
  %v1548 = vcombine.low %v1540, %v1547
  %v1550 = vadd.f32 %v1527, %v1548
  %v1551 = vld [vmem:[#allocation3] sm:$0x3]
  %v1552 = vmul.f32 %v1550, 0.5
  %v1553 = vtanh.pop %v1552
  %v1554 = vadd.f32 %v1553, 1.0
  %v1555 = vmul.f32 %v1554, 0.5
  %v1557 = vrot.slane %v1550, 2
  %v1559 = vmul.f32 %v1557, 0.5
  %v1560 = vtanh.pop %v1559
  %v1561 = vadd.f32 %v1560, 1.0
  %v1562 = vmul.f32 %v1561, 0.5
  %v1563 = vrot.slane %v1550, 4
  %v1565 = vtanh.pop %v1563
  %v1566 = vrot.slane %v1550, 6
  %v1568 = vmul.f32 %v1566, 0.5
  %v1569 = vtanh.pop %v1568
  %v1570 = vadd.f32 %v1569, 1.0
  %v1571 = vmul.f32 %v1570, 0.5
  %v1572 = vmul.f32 %v1562, %v1551
  %v1573 = vmul.f32 %v1555, %v1565
  %v1574 = vadd.f32 %v1572, %v1573
  %v1575 = vtanh.pop %v1574
  %v1576 = vmul.f32 %v1571, %v1575
  %s1577 = scalar_lea.vmem %s47, 40
  %v1578 = vld [vmem:[%s1577] sm:$0xff]
  %v1583 = vcombine.low %v1451, %v1453
  %v1584 = vcombine.low %v1522, %v1524
  %v1586 = vunpack.c.l.s4 1983009808
  %v1587 = vunpack.c.0.s8 %v1586
  %v1588 = vlaneseq
  %v1589 = vshrl.u32 %v1588, 7
  %v1590 = vsub.s32 %v1587, %v1589
  %v1591 = vrot.slane %v1583, %v1590
  %v1593 = vunpack.c.l.s4 1983009808
  %v1594 = vunpack.c.0.s8 %v1593
  %v1595 = vlaneseq
  %v1596 = vshrl.u32 %v1595, 7
  %v1597 = vsub.s32 %v1594, %v1596
  %v1598 = vrot.slane %v1584, %v1597
  %v1599 = vcombine.low %v1591, %v1598
  %v1601 = vadd.f32 %v1578, %v1599
  %v1602 = vld [vmem:[#allocation5] sm:$0x3]
  %v1603 = vmul.f32 %v1601, 0.5
  %v1604 = vtanh.pop %v1603
  %v1605 = vadd.f32 %v1604, 1.0
  %v1606 = vmul.f32 %v1605, 0.5
  %v1608 = vrot.slane %v1601, 2
  %v1610 = vmul.f32 %v1608, 0.5
  %v1611 = vtanh.pop %v1610
  %v1612 = vadd.f32 %v1611, 1.0
  %v1613 = vmul.f32 %v1612, 0.5
  %v1614 = vrot.slane %v1601, 4
  %v1616 = vtanh.pop %v1614
  %v1617 = vrot.slane %v1601, 6
  %v1619 = vmul.f32 %v1617, 0.5
  %v1620 = vtanh.pop %v1619
  %v1621 = vadd.f32 %v1620, 1.0
  %v1622 = vmul.f32 %v1621, 0.5
  %v1623 = vmul.f32 %v1613, %v1602
  %v1624 = vmul.f32 %v1606, %v1616
  %v1625 = vadd.f32 %v1623, %v1624
  %v1626 = vtanh.pop %v1625
  %v1627 = vmul.f32 %v1622, %v1626
  %1628 = vst [vmem:[#allocation2] sm:$0x3] %v1576
  %1629 = vst [vmem:[#allocation3] sm:$0x3] %v1574
  %1630 = vst [vmem:[#allocation4] sm:$0x3] %v1627
  %1631 = vst [vmem:[#allocation5] sm:$0x3] %v1625
  %s1632 = scalar_lea.vmem %s4, 4
  %1633 = vst [vmem:[%s1632] sm:$0x3] %v1576
  %s1634 = scalar_lea.vmem %s55, 10
  %1635 = vst [vmem:[%s1634] sm:$0x3] %v1627
  %v1636 = vld [vmem:[#allocation2] sm:$0x3]
  %v1637 = vld [vmem:[%s2] sm:$0xff]
  %v1638 = vld [vmem:[%s2 + $0x8] sm:$0xff]
  %v1639 = vld [vmem:[%s2 + $0x10] sm:$0xff]
  %v1640 = vld [vmem:[%s2 + $0x18] sm:$0xff]
  %v1641 = vld [vmem:[%s2 + $0x20] sm:$0xff]
  %v1642 = vld [vmem:[%s2 + $0x28] sm:$0xff]
  %v1643 = vld [vmem:[%s2 + $0x30] sm:$0xff]
  %v1644 = vld [vmem:[%s2 + $0x38] sm:$0xff]
  %v1645 = vld [vmem:[%s2 + $0x40] sm:$0xff]
  %v1646 = vld [vmem:[%s2 + $0x48] sm:$0xff]
  %v1647 = vld [vmem:[%s2 + $0x50] sm:$0xff]
  %v1648 = vld [vmem:[%s2 + $0x58] sm:$0xff]
  %v1649 = vld [vmem:[%s2 + $0x60] sm:$0xff]
  %v1650 = vld [vmem:[%s2 + $0x68] sm:$0xff]
  %v1651 = vld [vmem:[%s2 + $0x70] sm:$0xff]
  %v1652 = vld [vmem:[%s2 + $0x78] sm:$0xff]
  %v1653 = vld [vmem:[%s2 + $0x80] sm:$0xff]
  %v1654 = vld [vmem:[%s2 + $0x88] sm:$0xff]
  %v1655 = vld [vmem:[%s2 + $0x90] sm:$0xff]
  %v1656 = vld [vmem:[%s2 + $0x98] sm:$0xff]
  %v1657 = vld [vmem:[%s2 + $0xa0] sm:$0xff]
  %v1658 = vld [vmem:[%s2 + $0xa8] sm:$0xff]
  %v1659 = vld [vmem:[%s2 + $0xb0] sm:$0xff]
  %v1660 = vld [vmem:[%s2 + $0xb8] sm:$0xff]
  %v1661 = vld [vmem:[%s2 + $0xc0] sm:$0xff]
  %v1662 = vld [vmem:[%s2 + $0xc8] sm:$0xff]
  %v1663 = vld [vmem:[%s2 + $0xd0] sm:$0xff]
  %v1664 = vld [vmem:[%s2 + $0xd8] sm:$0xff]
  %v1665 = vld [vmem:[%s2 + $0xe0] sm:$0xff]
  %v1666 = vld [vmem:[%s2 + $0xe8] sm:$0xff]
  %v1667 = vld [vmem:[%s2 + $0xf0] sm:$0xff]
  %v1668 = vld [vmem:[%s2 + $0xf8] sm:$0xff]
  %v1669 = vld [vmem:[%s2 + $0x100] sm:$0xff]
  %v1670 = vld [vmem:[%s2 + $0x108] sm:$0xff]
  %v1671 = vld [vmem:[%s2 + $0x110] sm:$0xff]
  %v1672 = vld [vmem:[%s2 + $0x118] sm:$0xff]
  %v1673 = vld [vmem:[%s2 + $0x120] sm:$0xff]
  %v1674 = vld [vmem:[%s2 + $0x128] sm:$0xff]
  %v1675 = vld [vmem:[%s2 + $0x130] sm:$0xff]
  %v1676 = vld [vmem:[%s2 + $0x138] sm:$0xff]
  %v1677 = vld [vmem:[%s2 + $0x140] sm:$0xff]
  %v1678 = vld [vmem:[%s2 + $0x148] sm:$0xff]
  %v1679 = vld [vmem:[%s2 + $0x150] sm:$0xff]
  %v1680 = vld [vmem:[%s2 + $0x158] sm:$0xff]
  %v1681 = vld [vmem:[%s2 + $0x160] sm:$0xff]
  %v1682 = vld [vmem:[%s2 + $0x168] sm:$0xff]
  %v1683 = vld [vmem:[%s2 + $0x170] sm:$0xff]
  %v1684 = vld [vmem:[%s2 + $0x178] sm:$0xff]
  %v1685 = vld [vmem:[%s2 + $0x180] sm:$0xff]
  %v1686 = vld [vmem:[%s2 + $0x188] sm:$0xff]
  %v1687 = vld [vmem:[%s2 + $0x190] sm:$0xff]
  %v1688 = vld [vmem:[%s2 + $0x198] sm:$0xff]
  %v1689 = vld [vmem:[%s2 + $0x1a0] sm:$0xff]
  %v1690 = vld [vmem:[%s2 + $0x1a8] sm:$0xff]
  %v1691 = vld [vmem:[%s2 + $0x1b0] sm:$0xff]
  %v1692 = vld [vmem:[%s2 + $0x1b8] sm:$0xff]
  %v1693 = vld [vmem:[%s2 + $0x1c0] sm:$0xff]
  %v1694 = vld [vmem:[%s2 + $0x1c8] sm:$0xff]
  %v1695 = vld [vmem:[%s2 + $0x1d0] sm:$0xff]
  %v1696 = vld [vmem:[%s2 + $0x1d8] sm:$0xff]
  %v1697 = vld [vmem:[%s2 + $0x1e0] sm:$0xff]
  %v1698 = vld [vmem:[%s2 + $0x1e8] sm:$0xff]
  %v1699 = vld [vmem:[%s2 + $0x1f0] sm:$0xff]
  %v1700 = vld [vmem:[%s2 + $0x1f8] sm:$0xff]
  %1701 = vmatprep.subr.mxu0 %v1698
  %1702 = vmatpush1.msra.mxu0 %v1697
  %1703 = vmatprep.subr.mxu0 %v1694
  %1704 = vmatpush1.msra.mxu0 %v1693
  %1705 = vmatprep.subr.mxu0 %v1690
  %1706 = vmatpush1.msra.mxu0 %v1689
  %1707 = vmatprep.subr.mxu0 %v1686
  %1708 = vmatpush1.msra.mxu0 %v1685
  %1709 = vmatprep.subr.mxu0 %v1682
  %1710 = vmatpush1.msra.mxu0 %v1681
  %1711 = vmatprep.subr.mxu0 %v1678
  %1712 = vmatpush1.msra.mxu0 %v1677
  %1713 = vmatprep.subr.mxu0 %v1674
  %1714 = vmatpush1.msra.mxu0 %v1673
  %1715 = vmatprep.subr.mxu0 %v1670
  %1716 = vmatpush1.msra.mxu0 %v1669
  %1717 = vmatprep.subr.mxu0 %v1666
  %1718 = vmatpush1.msra.mxu0 %v1665
  %1719 = vmatprep.subr.mxu0 %v1662
  %1720 = vmatpush1.msra.mxu0 %v1661
  %1721 = vmatprep.subr.mxu0 %v1658
  %1722 = vmatpush1.msra.mxu0 %v1657
  %1723 = vmatprep.subr.mxu0 %v1654
  %1724 = vmatpush1.msra.mxu0 %v1653
  %1725 = vmatprep.subr.mxu0 %v1650
  %1726 = vmatpush1.msra.mxu0 %v1649
  %1727 = vmatprep.subr.mxu0 %v1646
  %1728 = vmatpush1.msra.mxu0 %v1645
  %1729 = vmatprep.subr.mxu0 %v1642
  %1730 = vmatpush1.msra.mxu0 %v1641
  %1731 = vmatprep.subr.mxu0 %v1638
  %1732 = vmatpush1.msra.mxu0 %v1637
  %1733 = vmatprep.subr.mxu0 0.0
  %1734 = vmatpush2.msra.mxu0 0.0
  %1735 = vmatprep.subr.mxu0 0.0
  %1736 = vmatpush2.msra.mxu0 0.0
  %1737 = vmatprep.subr.mxu0 0.0
  %1738 = vmatpush2.msra.mxu0 0.0
  %1739 = vmatprep.subr.mxu0 0.0
  %1740 = vmatpush2.msra.mxu0 0.0
  %1741 = vmatprep.subr.mxu0 0.0
  %1742 = vmatpush2.msra.mxu0 0.0
  %1743 = vmatprep.subr.mxu0 0.0
  %1744 = vmatpush2.msra.mxu0 0.0
  %1745 = vmatprep.subr.mxu0 0.0
  %1746 = vmatpush2.msra.mxu0 0.0
  %1747 = vmatprep.subr.mxu0 0.0
  %1748 = vmatpush2.msra.mxu0 0.0
  %1749 = vmatprep.subr.mxu0 0.0
  %1750 = vmatpush2.msra.mxu0 0.0
  %1751 = vmatprep.subr.mxu0 0.0
  %1752 = vmatpush2.msra.mxu0 0.0
  %1753 = vmatprep.subr.mxu0 0.0
  %1754 = vmatpush2.msra.mxu0 0.0
  %1755 = vmatprep.subr.mxu0 0.0
  %1756 = vmatpush2.msra.mxu0 0.0
  %1757 = vmatprep.subr.mxu0 0.0
  %1758 = vmatpush2.msra.mxu0 0.0
  %1759 = vmatprep.subr.mxu0 0.0
  %1760 = vmatpush2.msra.mxu0 0.0
  %1761 = vmatprep.subr.mxu0 0.0
  %1762 = vmatpush2.msra.mxu0 0.0
  %1763 = vmatprep.subr.mxu0 0.0
  %1764 = vmatpush2.msra.mxu0 0.0
  %1765 = vmatprep.mubr.f32.mxu0 0.0
  %1766 = vmatmul.mubr.f32.gmra.mxu0 %v1636
  %v1767 = vpop.f32.mrf.mxu0
  %v1768 = vadd.f32 0.0, %v1767
  %v1769 = vpop.f32.mrf.mxu0
  %v1770 = vadd.f32 0.0, %v1769
  %1771 = vdwg.mxu0
  %1772 = vmatprep.subr.mxu0 %v1700
  %1773 = vmatpush1.msra.mxu0 %v1699
  %1774 = vmatprep.subr.mxu0 %v1696
  %1775 = vmatpush1.msra.mxu0 %v1695
  %1776 = vmatprep.subr.mxu0 %v1692
  %1777 = vmatpush1.msra.mxu0 %v1691
  %1778 = vmatprep.subr.mxu0 %v1688
  %1779 = vmatpush1.msra.mxu0 %v1687
  %1780 = vmatprep.subr.mxu0 %v1684
  %1781 = vmatpush1.msra.mxu0 %v1683
  %1782 = vmatprep.subr.mxu0 %v1680
  %1783 = vmatpush1.msra.mxu0 %v1679
  %1784 = vmatprep.subr.mxu0 %v1676
  %1785 = vmatpush1.msra.mxu0 %v1675
  %1786 = vmatprep.subr.mxu0 %v1672
  %1787 = vmatpush1.msra.mxu0 %v1671
  %1788 = vmatprep.subr.mxu0 %v1668
  %1789 = vmatpush1.msra.mxu0 %v1667
  %1790 = vmatprep.subr.mxu0 %v1664
  %1791 = vmatpush1.msra.mxu0 %v1663
  %1792 = vmatprep.subr.mxu0 %v1660
  %1793 = vmatpush1.msra.mxu0 %v1659
  %1794 = vmatprep.subr.mxu0 %v1656
  %1795 = vmatpush1.msra.mxu0 %v1655
  %1796 = vmatprep.subr.mxu0 %v1652
  %1797 = vmatpush1.msra.mxu0 %v1651
  %1798 = vmatprep.subr.mxu0 %v1648
  %1799 = vmatpush1.msra.mxu0 %v1647
  %1800 = vmatprep.subr.mxu0 %v1644
  %1801 = vmatpush1.msra.mxu0 %v1643
  %1802 = vmatprep.subr.mxu0 %v1640
  %1803 = vmatpush1.msra.mxu0 %v1639
  %1804 = vmatprep.subr.mxu0 0.0
  %1805 = vmatpush2.msra.mxu0 0.0
  %1806 = vmatprep.subr.mxu0 0.0
  %1807 = vmatpush2.msra.mxu0 0.0
  %1808 = vmatprep.subr.mxu0 0.0
  %1809 = vmatpush2.msra.mxu0 0.0
  %1810 = vmatprep.subr.mxu0 0.0
  %1811 = vmatpush2.msra.mxu0 0.0
  %1812 = vmatprep.subr.mxu0 0.0
  %1813 = vmatpush2.msra.mxu0 0.0
  %1814 = vmatprep.subr.mxu0 0.0
  %1815 = vmatpush2.msra.mxu0 0.0
  %1816 = vmatprep.subr.mxu0 0.0
  %1817 = vmatpush2.msra.mxu0 0.0
  %1818 = vmatprep.subr.mxu0 0.0
  %1819 = vmatpush2.msra.mxu0 0.0
  %1820 = vmatprep.subr.mxu0 0.0
  %1821 = vmatpush2.msra.mxu0 0.0
  %1822 = vmatprep.subr.mxu0 0.0
  %1823 = vmatpush2.msra.mxu0 0.0
  %1824 = vmatprep.subr.mxu0 0.0
  %1825 = vmatpush2.msra.mxu0 0.0
  %1826 = vmatprep.subr.mxu0 0.0
  %1827 = vmatpush2.msra.mxu0 0.0
  %1828 = vmatprep.subr.mxu0 0.0
  %1829 = vmatpush2.msra.mxu0 0.0
  %1830 = vmatprep.subr.mxu0 0.0
  %1831 = vmatpush2.msra.mxu0 0.0
  %1832 = vmatprep.subr.mxu0 0.0
  %1833 = vmatpush2.msra.mxu0 0.0
  %1834 = vmatprep.subr.mxu0 0.0
  %1835 = vmatpush2.msra.mxu0 0.0
  %1836 = vmatprep.mubr.f32.mxu0 0.0
  %1837 = vmatmul.mubr.f32.gmra.mxu0 %v1636
  %v1838 = vpop.f32.mrf.mxu0
  %v1839 = vadd.f32 0.0, %v1838
  %v1840 = vpop.f32.mrf.mxu0
  %v1841 = vadd.f32 0.0, %v1840
  %1842 = vdwg.mxu0
  %v1843 = vld [vmem:[#allocation4] sm:$0x3]
  %v1844 = vld [vmem:[%s3] sm:$0xff]
  %v1845 = vld [vmem:[%s3 + $0x8] sm:$0xff]
  %v1846 = vld [vmem:[%s3 + $0x10] sm:$0xff]
  %v1847 = vld [vmem:[%s3 + $0x18] sm:$0xff]
  %v1848 = vld [vmem:[%s3 + $0x20] sm:$0xff]
  %v1849 = vld [vmem:[%s3 + $0x28] sm:$0xff]
  %v1850 = vld [vmem:[%s3 + $0x30] sm:$0xff]
  %v1851 = vld [vmem:[%s3 + $0x38] sm:$0xff]
  %v1852 = vld [vmem:[%s3 + $0x40] sm:$0xff]
  %v1853 = vld [vmem:[%s3 + $0x48] sm:$0xff]
  %v1854 = vld [vmem:[%s3 + $0x50] sm:$0xff]
  %v1855 = vld [vmem:[%s3 + $0x58] sm:$0xff]
  %v1856 = vld [vmem:[%s3 + $0x60] sm:$0xff]
  %v1857 = vld [vmem:[%s3 + $0x68] sm:$0xff]
  %v1858 = vld [vmem:[%s3 + $0x70] sm:$0xff]
  %v1859 = vld [vmem:[%s3 + $0x78] sm:$0xff]
  %v1860 = vld [vmem:[%s3 + $0x80] sm:$0xff]
  %v1861 = vld [vmem:[%s3 + $0x88] sm:$0xff]
  %v1862 = vld [vmem:[%s3 + $0x90] sm:$0xff]
  %v1863 = vld [vmem:[%s3 + $0x98] sm:$0xff]
  %v1864 = vld [vmem:[%s3 + $0xa0] sm:$0xff]
  %v1865 = vld [vmem:[%s3 + $0xa8] sm:$0xff]
  %v1866 = vld [vmem:[%s3 + $0xb0] sm:$0xff]
  %v1867 = vld [vmem:[%s3 + $0xb8] sm:$0xff]
  %v1868 = vld [vmem:[%s3 + $0xc0] sm:$0xff]
  %v1869 = vld [vmem:[%s3 + $0xc8] sm:$0xff]
  %v1870 = vld [vmem:[%s3 + $0xd0] sm:$0xff]
  %v1871 = vld [vmem:[%s3 + $0xd8] sm:$0xff]
  %v1872 = vld [vmem:[%s3 + $0xe0] sm:$0xff]
  %v1873 = vld [vmem:[%s3 + $0xe8] sm:$0xff]
  %v1874 = vld [vmem:[%s3 + $0xf0] sm:$0xff]
  %v1875 = vld [vmem:[%s3 + $0xf8] sm:$0xff]
  %v1876 = vld [vmem:[%s3 + $0x100] sm:$0xff]
  %v1877 = vld [vmem:[%s3 + $0x108] sm:$0xff]
  %v1878 = vld [vmem:[%s3 + $0x110] sm:$0xff]
  %v1879 = vld [vmem:[%s3 + $0x118] sm:$0xff]
  %v1880 = vld [vmem:[%s3 + $0x120] sm:$0xff]
  %v1881 = vld [vmem:[%s3 + $0x128] sm:$0xff]
  %v1882 = vld [vmem:[%s3 + $0x130] sm:$0xff]
  %v1883 = vld [vmem:[%s3 + $0x138] sm:$0xff]
  %v1884 = vld [vmem:[%s3 + $0x140] sm:$0xff]
  %v1885 = vld [vmem:[%s3 + $0x148] sm:$0xff]
  %v1886 = vld [vmem:[%s3 + $0x150] sm:$0xff]
  %v1887 = vld [vmem:[%s3 + $0x158] sm:$0xff]
  %v1888 = vld [vmem:[%s3 + $0x160] sm:$0xff]
  %v1889 = vld [vmem:[%s3 + $0x168] sm:$0xff]
  %v1890 = vld [vmem:[%s3 + $0x170] sm:$0xff]
  %v1891 = vld [vmem:[%s3 + $0x178] sm:$0xff]
  %v1892 = vld [vmem:[%s3 + $0x180] sm:$0xff]
  %v1893 = vld [vmem:[%s3 + $0x188] sm:$0xff]
  %v1894 = vld [vmem:[%s3 + $0x190] sm:$0xff]
  %v1895 = vld [vmem:[%s3 + $0x198] sm:$0xff]
  %v1896 = vld [vmem:[%s3 + $0x1a0] sm:$0xff]
  %v1897 = vld [vmem:[%s3 + $0x1a8] sm:$0xff]
  %v1898 = vld [vmem:[%s3 + $0x1b0] sm:$0xff]
  %v1899 = vld [vmem:[%s3 + $0x1b8] sm:$0xff]
  %v1900 = vld [vmem:[%s3 + $0x1c0] sm:$0xff]
  %v1901 = vld [vmem:[%s3 + $0x1c8] sm:$0xff]
  %v1902 = vld [vmem:[%s3 + $0x1d0] sm:$0xff]
  %v1903 = vld [vmem:[%s3 + $0x1d8] sm:$0xff]
  %v1904 = vld [vmem:[%s3 + $0x1e0] sm:$0xff]
  %v1905 = vld [vmem:[%s3 + $0x1e8] sm:$0xff]
  %v1906 = vld [vmem:[%s3 + $0x1f0] sm:$0xff]
  %v1907 = vld [vmem:[%s3 + $0x1f8] sm:$0xff]
  %1908 = vmatprep.subr.mxu0 %v1905
  %1909 = vmatpush1.msra.mxu0 %v1904
  %1910 = vmatprep.subr.mxu0 %v1901
  %1911 = vmatpush1.msra.mxu0 %v1900
  %1912 = vmatprep.subr.mxu0 %v1897
  %1913 = vmatpush1.msra.mxu0 %v1896
  %1914 = vmatprep.subr.mxu0 %v1893
  %1915 = vmatpush1.msra.mxu0 %v1892
  %1916 = vmatprep.subr.mxu0 %v1889
  %1917 = vmatpush1.msra.mxu0 %v1888
  %1918 = vmatprep.subr.mxu0 %v1885
  %1919 = vmatpush1.msra.mxu0 %v1884
  %1920 = vmatprep.subr.mxu0 %v1881
  %1921 = vmatpush1.msra.mxu0 %v1880
  %1922 = vmatprep.subr.mxu0 %v1877
  %1923 = vmatpush1.msra.mxu0 %v1876
  %1924 = vmatprep.subr.mxu0 %v1873
  %1925 = vmatpush1.msra.mxu0 %v1872
  %1926 = vmatprep.subr.mxu0 %v1869
  %1927 = vmatpush1.msra.mxu0 %v1868
  %1928 = vmatprep.subr.mxu0 %v1865
  %1929 = vmatpush1.msra.mxu0 %v1864
  %1930 = vmatprep.subr.mxu0 %v1861
  %1931 = vmatpush1.msra.mxu0 %v1860
  %1932 = vmatprep.subr.mxu0 %v1857
  %1933 = vmatpush1.msra.mxu0 %v1856
  %1934 = vmatprep.subr.mxu0 %v1853
  %1935 = vmatpush1.msra.mxu0 %v1852
  %1936 = vmatprep.subr.mxu0 %v1849
  %1937 = vmatpush1.msra.mxu0 %v1848
  %1938 = vmatprep.subr.mxu0 %v1845
  %1939 = vmatpush1.msra.mxu0 %v1844
  %1940 = vmatprep.subr.mxu0 0.0
  %1941 = vmatpush2.msra.mxu0 0.0
  %1942 = vmatprep.subr.mxu0 0.0
  %1943 = vmatpush2.msra.mxu0 0.0
  %1944 = vmatprep.subr.mxu0 0.0
  %1945 = vmatpush2.msra.mxu0 0.0
  %1946 = vmatprep.subr.mxu0 0.0
  %1947 = vmatpush2.msra.mxu0 0.0
  %1948 = vmatprep.subr.mxu0 0.0
  %1949 = vmatpush2.msra.mxu0 0.0
  %1950 = vmatprep.subr.mxu0 0.0
  %1951 = vmatpush2.msra.mxu0 0.0
  %1952 = vmatprep.subr.mxu0 0.0
  %1953 = vmatpush2.msra.mxu0 0.0
  %1954 = vmatprep.subr.mxu0 0.0
  %1955 = vmatpush2.msra.mxu0 0.0
  %1956 = vmatprep.subr.mxu0 0.0
  %1957 = vmatpush2.msra.mxu0 0.0
  %1958 = vmatprep.subr.mxu0 0.0
  %1959 = vmatpush2.msra.mxu0 0.0
  %1960 = vmatprep.subr.mxu0 0.0
  %1961 = vmatpush2.msra.mxu0 0.0
  %1962 = vmatprep.subr.mxu0 0.0
  %1963 = vmatpush2.msra.mxu0 0.0
  %1964 = vmatprep.subr.mxu0 0.0
  %1965 = vmatpush2.msra.mxu0 0.0
  %1966 = vmatprep.subr.mxu0 0.0
  %1967 = vmatpush2.msra.mxu0 0.0
  %1968 = vmatprep.subr.mxu0 0.0
  %1969 = vmatpush2.msra.mxu0 0.0
  %1970 = vmatprep.subr.mxu0 0.0
  %1971 = vmatpush2.msra.mxu0 0.0
  %1972 = vmatprep.mubr.f32.mxu0 0.0
  %1973 = vmatmul.mubr.f32.gmra.mxu0 %v1843
  %v1974 = vpop.f32.mrf.mxu0
  %v1975 = vadd.f32 0.0, %v1974
  %v1976 = vpop.f32.mrf.mxu0
  %v1977 = vadd.f32 0.0, %v1976
  %1978 = vdwg.mxu0
  %1979 = vmatprep.subr.mxu0 %v1907
  %1980 = vmatpush1.msra.mxu0 %v1906
  %1981 = vmatprep.subr.mxu0 %v1903
  %1982 = vmatpush1.msra.mxu0 %v1902
  %1983 = vmatprep.subr.mxu0 %v1899
  %1984 = vmatpush1.msra.mxu0 %v1898
  %1985 = vmatprep.subr.mxu0 %v1895
  %1986 = vmatpush1.msra.mxu0 %v1894
  %1987 = vmatprep.subr.mxu0 %v1891
  %1988 = vmatpush1.msra.mxu0 %v1890
  %1989 = vmatprep.subr.mxu0 %v1887
  %1990 = vmatpush1.msra.mxu0 %v1886
  %1991 = vmatprep.subr.mxu0 %v1883
  %1992 = vmatpush1.msra.mxu0 %v1882
  %1993 = vmatprep.subr.mxu0 %v1879
  %1994 = vmatpush1.msra.mxu0 %v1878
  %1995 = vmatprep.subr.mxu0 %v1875
  %1996 = vmatpush1.msra.mxu0 %v1874
  %1997 = vmatprep.subr.mxu0 %v1871
  %1998 = vmatpush1.msra.mxu0 %v1870
  %1999 = vmatprep.subr.mxu0 %v1867
  %2000 = vmatpush1.msra.mxu0 %v1866
  %2001 = vmatprep.subr.mxu0 %v1863
  %2002 = vmatpush1.msra.mxu0 %v1862
  %2003 = vmatprep.subr.mxu0 %v1859
  %2004 = vmatpush1.msra.mxu0 %v1858
  %2005 = vmatprep.subr.mxu0 %v1855
  %2006 = vmatpush1.msra.mxu0 %v1854
  %2007 = vmatprep.subr.mxu0 %v1851
  %2008 = vmatpush1.msra.mxu0 %v1850
  %2009 = vmatprep.subr.mxu0 %v1847
  %2010 = vmatpush1.msra.mxu0 %v1846
  %2011 = vmatprep.subr.mxu0 0.0
  %2012 = vmatpush2.msra.mxu0 0.0
  %2013 = vmatprep.subr.mxu0 0.0
  %2014 = vmatpush2.msra.mxu0 0.0
  %2015 = vmatprep.subr.mxu0 0.0
  %2016 = vmatpush2.msra.mxu0 0.0
  %2017 = vmatprep.subr.mxu0 0.0
  %2018 = vmatpush2.msra.mxu0 0.0
  %2019 = vmatprep.subr.mxu0 0.0
  %2020 = vmatpush2.msra.mxu0 0.0
  %2021 = vmatprep.subr.mxu0 0.0
  %2022 = vmatpush2.msra.mxu0 0.0
  %2023 = vmatprep.subr.mxu0 0.0
  %2024 = vmatpush2.msra.mxu0 0.0
  %2025 = vmatprep.subr.mxu0 0.0
  %2026 = vmatpush2.msra.mxu0 0.0
  %2027 = vmatprep.subr.mxu0 0.0
  %2028 = vmatpush2.msra.mxu0 0.0
  %2029 = vmatprep.subr.mxu0 0.0
  %2030 = vmatpush2.msra.mxu0 0.0
  %2031 = vmatprep.subr.mxu0 0.0
  %2032 = vmatpush2.msra.mxu0 0.0
  %2033 = vmatprep.subr.mxu0 0.0
  %2034 = vmatpush2.msra.mxu0 0.0
  %2035 = vmatprep.subr.mxu0 0.0
  %2036 = vmatpush2.msra.mxu0 0.0
  %2037 = vmatprep.subr.mxu0 0.0
  %2038 = vmatpush2.msra.mxu0 0.0
  %2039 = vmatprep.subr.mxu0 0.0
  %2040 = vmatpush2.msra.mxu0 0.0
  %2041 = vmatprep.subr.mxu0 0.0
  %2042 = vmatpush2.msra.mxu0 0.0
  %2043 = vmatprep.mubr.f32.mxu0 0.0
  %2044 = vmatmul.mubr.f32.gmra.mxu0 %v1843
  %v2045 = vpop.f32.mrf.mxu0
  %v2046 = vadd.f32 0.0, %v2045
  %v2047 = vpop.f32.mrf.mxu0
  %v2048 = vadd.f32 0.0, %v2047
  %2049 = vdwg.mxu0
  %s2050 = scalar_lea.vmem %s0, 24
  %v2051 = vld [vmem:[%s2050] sm:$0xff]
  %v2056 = vcombine.low %v1768, %v1770
  %v2057 = vcombine.low %v1839, %v1841
  %v2059 = vunpack.c.l.s4 1983009808
  %v2060 = vunpack.c.0.s8 %v2059
  %v2061 = vlaneseq
  %v2062 = vshrl.u32 %v2061, 7
  %v2063 = vsub.s32 %v2060, %v2062
  %v2064 = vrot.slane %v2056, %v2063
  %v2066 = vunpack.c.l.s4 1983009808
  %v2067 = vunpack.c.0.s8 %v2066
  %v2068 = vlaneseq
  %v2069 = vshrl.u32 %v2068, 7
  %v2070 = vsub.s32 %v2067, %v2069
  %v2071 = vrot.slane %v2057, %v2070
  %v2072 = vcombine.low %v2064, %v2071
  %v2074 = vadd.f32 %v2051, %v2072
  %v2075 = vld [vmem:[#allocation3] sm:$0x3]
  %v2076 = vmul.f32 %v2074, 0.5
  %v2077 = vtanh.pop %v2076
  %v2078 = vadd.f32 %v2077, 1.0
  %v2079 = vmul.f32 %v2078, 0.5
  %v2081 = vrot.slane %v2074, 2
  %v2083 = vmul.f32 %v2081, 0.5
  %v2084 = vtanh.pop %v2083
  %v2085 = vadd.f32 %v2084, 1.0
  %v2086 = vmul.f32 %v2085, 0.5
  %v2087 = vrot.slane %v2074, 4
  %v2089 = vtanh.pop %v2087
  %v2090 = vrot.slane %v2074, 6
  %v2092 = vmul.f32 %v2090, 0.5
  %v2093 = vtanh.pop %v2092
  %v2094 = vadd.f32 %v2093, 1.0
  %v2095 = vmul.f32 %v2094, 0.5
  %v2096 = vmul.f32 %v2086, %v2075
  %v2097 = vmul.f32 %v2079, %v2089
  %v2098 = vadd.f32 %v2096, %v2097
  %v2099 = vtanh.pop %v2098
  %v2100 = vmul.f32 %v2095, %v2099
  %s2101 = scalar_lea.vmem %s47, 32
  %v2102 = vld [vmem:[%s2101] sm:$0xff]
  %v2107 = vcombine.low %v1975, %v1977
  %v2108 = vcombine.low %v2046, %v2048
  %v2110 = vunpack.c.l.s4 1983009808
  %v2111 = vunpack.c.0.s8 %v2110
  %v2112 = vlaneseq
  %v2113 = vshrl.u32 %v2112, 7
  %v2114 = vsub.s32 %v2111, %v2113
  %v2115 = vrot.slane %v2107, %v2114
  %v2117 = vunpack.c.l.s4 1983009808
  %v2118 = vunpack.c.0.s8 %v2117
  %v2119 = vlaneseq
  %v2120 = vshrl.u32 %v2119, 7
  %v2121 = vsub.s32 %v2118, %v2120
  %v2122 = vrot.slane %v2108, %v2121
  %v2123 = vcombine.low %v2115, %v2122
  %v2125 = vadd.f32 %v2102, %v2123
  %v2126 = vld [vmem:[#allocation5] sm:$0x3]
  %v2127 = vmul.f32 %v2125, 0.5
  %v2128 = vtanh.pop %v2127
  %v2129 = vadd.f32 %v2128, 1.0
  %v2130 = vmul.f32 %v2129, 0.5
  %v2132 = vrot.slane %v2125, 2
  %v2134 = vmul.f32 %v2132, 0.5
  %v2135 = vtanh.pop %v2134
  %v2136 = vadd.f32 %v2135, 1.0
  %v2137 = vmul.f32 %v2136, 0.5
  %v2138 = vrot.slane %v2125, 4
  %v2140 = vtanh.pop %v2138
  %v2141 = vrot.slane %v2125, 6
  %v2143 = vmul.f32 %v2141, 0.5
  %v2144 = vtanh.pop %v2143
  %v2145 = vadd.f32 %v2144, 1.0
  %v2146 = vmul.f32 %v2145, 0.5
  %v2147 = vmul.f32 %v2137, %v2126
  %v2148 = vmul.f32 %v2130, %v2140
  %v2149 = vadd.f32 %v2147, %v2148
  %v2150 = vtanh.pop %v2149
  %v2151 = vmul.f32 %v2146, %v2150
  %2152 = vst [vmem:[#allocation2] sm:$0x3] %v2100
  %2153 = vst [vmem:[#allocation3] sm:$0x3] %v2098
  %2154 = vst [vmem:[#allocation4] sm:$0x3] %v2151
  %2155 = vst [vmem:[#allocation5] sm:$0x3] %v2149
  %s2156 = scalar_lea.vmem %s4, 6
  %2157 = vst [vmem:[%s2156] sm:$0x3] %v2100
  %s2158 = scalar_lea.vmem %s55, 8
  %2159 = vst [vmem:[%s2158] sm:$0x3] %v2151
  %v2160 = vld [vmem:[#allocation2] sm:$0x3]
  %v2161 = vld [vmem:[%s2] sm:$0xff]
  %v2162 = vld [vmem:[%s2 + $0x8] sm:$0xff]
  %v2163 = vld [vmem:[%s2 + $0x10] sm:$0xff]
  %v2164 = vld [vmem:[%s2 + $0x18] sm:$0xff]
  %v2165 = vld [vmem:[%s2 + $0x20] sm:$0xff]
  %v2166 = vld [vmem:[%s2 + $0x28] sm:$0xff]
  %v2167 = vld [vmem:[%s2 + $0x30] sm:$0xff]
  %v2168 = vld [vmem:[%s2 + $0x38] sm:$0xff]
  %v2169 = vld [vmem:[%s2 + $0x40] sm:$0xff]
  %v2170 = vld [vmem:[%s2 + $0x48] sm:$0xff]
  %v2171 = vld [vmem:[%s2 + $0x50] sm:$0xff]
  %v2172 = vld [vmem:[%s2 + $0x58] sm:$0xff]
  %v2173 = vld [vmem:[%s2 + $0x60] sm:$0xff]
  %v2174 = vld [vmem:[%s2 + $0x68] sm:$0xff]
  %v2175 = vld [vmem:[%s2 + $0x70] sm:$0xff]
  %v2176 = vld [vmem:[%s2 + $0x78] sm:$0xff]
  %v2177 = vld [vmem:[%s2 + $0x80] sm:$0xff]
  %v2178 = vld [vmem:[%s2 + $0x88] sm:$0xff]
  %v2179 = vld [vmem:[%s2 + $0x90] sm:$0xff]
  %v2180 = vld [vmem:[%s2 + $0x98] sm:$0xff]
  %v2181 = vld [vmem:[%s2 + $0xa0] sm:$0xff]
  %v2182 = vld [vmem:[%s2 + $0xa8] sm:$0xff]
  %v2183 = vld [vmem:[%s2 + $0xb0] sm:$0xff]
  %v2184 = vld [vmem:[%s2 + $0xb8] sm:$0xff]
  %v2185 = vld [vmem:[%s2 + $0xc0] sm:$0xff]
  %v2186 = vld [vmem:[%s2 + $0xc8] sm:$0xff]
  %v2187 = vld [vmem:[%s2 + $0xd0] sm:$0xff]
  %v2188 = vld [vmem:[%s2 + $0xd8] sm:$0xff]
  %v2189 = vld [vmem:[%s2 + $0xe0] sm:$0xff]
  %v2190 = vld [vmem:[%s2 + $0xe8] sm:$0xff]
  %v2191 = vld [vmem:[%s2 + $0xf0] sm:$0xff]
  %v2192 = vld [vmem:[%s2 + $0xf8] sm:$0xff]
  %v2193 = vld [vmem:[%s2 + $0x100] sm:$0xff]
  %v2194 = vld [vmem:[%s2 + $0x108] sm:$0xff]
  %v2195 = vld [vmem:[%s2 + $0x110] sm:$0xff]
  %v2196 = vld [vmem:[%s2 + $0x118] sm:$0xff]
  %v2197 = vld [vmem:[%s2 + $0x120] sm:$0xff]
  %v2198 = vld [vmem:[%s2 + $0x128] sm:$0xff]
  %v2199 = vld [vmem:[%s2 + $0x130] sm:$0xff]
  %v2200 = vld [vmem:[%s2 + $0x138] sm:$0xff]
  %v2201 = vld [vmem:[%s2 + $0x140] sm:$0xff]
  %v2202 = vld [vmem:[%s2 + $0x148] sm:$0xff]
  %v2203 = vld [vmem:[%s2 + $0x150] sm:$0xff]
  %v2204 = vld [vmem:[%s2 + $0x158] sm:$0xff]
  %v2205 = vld [vmem:[%s2 + $0x160] sm:$0xff]
  %v2206 = vld [vmem:[%s2 + $0x168] sm:$0xff]
  %v2207 = vld [vmem:[%s2 + $0x170] sm:$0xff]
  %v2208 = vld [vmem:[%s2 + $0x178] sm:$0xff]
  %v2209 = vld [vmem:[%s2 + $0x180] sm:$0xff]
  %v2210 = vld [vmem:[%s2 + $0x188] sm:$0xff]
  %v2211 = vld [vmem:[%s2 + $0x190] sm:$0xff]
  %v2212 = vld [vmem:[%s2 + $0x198] sm:$0xff]
  %v2213 = vld [vmem:[%s2 + $0x1a0] sm:$0xff]
  %v2214 = vld [vmem:[%s2 + $0x1a8] sm:$0xff]
  %v2215 = vld [vmem:[%s2 + $0x1b0] sm:$0xff]
  %v2216 = vld [vmem:[%s2 + $0x1b8] sm:$0xff]
  %v2217 = vld [vmem:[%s2 + $0x1c0] sm:$0xff]
  %v2218 = vld [vmem:[%s2 + $0x1c8] sm:$0xff]
  %v2219 = vld [vmem:[%s2 + $0x1d0] sm:$0xff]
  %v2220 = vld [vmem:[%s2 + $0x1d8] sm:$0xff]
  %v2221 = vld [vmem:[%s2 + $0x1e0] sm:$0xff]
  %v2222 = vld [vmem:[%s2 + $0x1e8] sm:$0xff]
  %v2223 = vld [vmem:[%s2 + $0x1f0] sm:$0xff]
  %v2224 = vld [vmem:[%s2 + $0x1f8] sm:$0xff]
  %2225 = vmatprep.subr.mxu0 %v2222
  %2226 = vmatpush1.msra.mxu0 %v2221
  %2227 = vmatprep.subr.mxu0 %v2218
  %2228 = vmatpush1.msra.mxu0 %v2217
  %2229 = vmatprep.subr.mxu0 %v2214
  %2230 = vmatpush1.msra.mxu0 %v2213
  %2231 = vmatprep.subr.mxu0 %v2210
  %2232 = vmatpush1.msra.mxu0 %v2209
  %2233 = vmatprep.subr.mxu0 %v2206
  %2234 = vmatpush1.msra.mxu0 %v2205
  %2235 = vmatprep.subr.mxu0 %v2202
  %2236 = vmatpush1.msra.mxu0 %v2201
  %2237 = vmatprep.subr.mxu0 %v2198
  %2238 = vmatpush1.msra.mxu0 %v2197
  %2239 = vmatprep.subr.mxu0 %v2194
  %2240 = vmatpush1.msra.mxu0 %v2193
  %2241 = vmatprep.subr.mxu0 %v2190
  %2242 = vmatpush1.msra.mxu0 %v2189
  %2243 = vmatprep.subr.mxu0 %v2186
  %2244 = vmatpush1.msra.mxu0 %v2185
  %2245 = vmatprep.subr.mxu0 %v2182
  %2246 = vmatpush1.msra.mxu0 %v2181
  %2247 = vmatprep.subr.mxu0 %v2178
  %2248 = vmatpush1.msra.mxu0 %v2177
  %2249 = vmatprep.subr.mxu0 %v2174
  %2250 = vmatpush1.msra.mxu0 %v2173
  %2251 = vmatprep.subr.mxu0 %v2170
  %2252 = vmatpush1.msra.mxu0 %v2169
  %2253 = vmatprep.subr.mxu0 %v2166
  %2254 = vmatpush1.msra.mxu0 %v2165
  %2255 = vmatprep.subr.mxu0 %v2162
  %2256 = vmatpush1.msra.mxu0 %v2161
  %2257 = vmatprep.subr.mxu0 0.0
  %2258 = vmatpush2.msra.mxu0 0.0
  %2259 = vmatprep.subr.mxu0 0.0
  %2260 = vmatpush2.msra.mxu0 0.0
  %2261 = vmatprep.subr.mxu0 0.0
  %2262 = vmatpush2.msra.mxu0 0.0
  %2263 = vmatprep.subr.mxu0 0.0
  %2264 = vmatpush2.msra.mxu0 0.0
  %2265 = vmatprep.subr.mxu0 0.0
  %2266 = vmatpush2.msra.mxu0 0.0
  %2267 = vmatprep.subr.mxu0 0.0
  %2268 = vmatpush2.msra.mxu0 0.0
  %2269 = vmatprep.subr.mxu0 0.0
  %2270 = vmatpush2.msra.mxu0 0.0
  %2271 = vmatprep.subr.mxu0 0.0
  %2272 = vmatpush2.msra.mxu0 0.0
  %2273 = vmatprep.subr.mxu0 0.0
  %2274 = vmatpush2.msra.mxu0 0.0
  %2275 = vmatprep.subr.mxu0 0.0
  %2276 = vmatpush2.msra.mxu0 0.0
  %2277 = vmatprep.subr.mxu0 0.0
  %2278 = vmatpush2.msra.mxu0 0.0
  %2279 = vmatprep.subr.mxu0 0.0
  %2280 = vmatpush2.msra.mxu0 0.0
  %2281 = vmatprep.subr.mxu0 0.0
  %2282 = vmatpush2.msra.mxu0 0.0
  %2283 = vmatprep.subr.mxu0 0.0
  %2284 = vmatpush2.msra.mxu0 0.0
  %2285 = vmatprep.subr.mxu0 0.0
  %2286 = vmatpush2.msra.mxu0 0.0
  %2287 = vmatprep.subr.mxu0 0.0
  %2288 = vmatpush2.msra.mxu0 0.0
  %2289 = vmatprep.mubr.f32.mxu0 0.0
  %2290 = vmatmul.mubr.f32.gmra.mxu0 %v2160
  %v2291 = vpop.f32.mrf.mxu0
  %v2292 = vadd.f32 0.0, %v2291
  %v2293 = vpop.f32.mrf.mxu0
  %v2294 = vadd.f32 0.0, %v2293
  %2295 = vdwg.mxu0
  %2296 = vmatprep.subr.mxu0 %v2224
  %2297 = vmatpush1.msra.mxu0 %v2223
  %2298 = vmatprep.subr.mxu0 %v2220
  %2299 = vmatpush1.msra.mxu0 %v2219
  %2300 = vmatprep.subr.mxu0 %v2216
  %2301 = vmatpush1.msra.mxu0 %v2215
  %2302 = vmatprep.subr.mxu0 %v2212
  %2303 = vmatpush1.msra.mxu0 %v2211
  %2304 = vmatprep.subr.mxu0 %v2208
  %2305 = vmatpush1.msra.mxu0 %v2207
  %2306 = vmatprep.subr.mxu0 %v2204
  %2307 = vmatpush1.msra.mxu0 %v2203
  %2308 = vmatprep.subr.mxu0 %v2200
  %2309 = vmatpush1.msra.mxu0 %v2199
  %2310 = vmatprep.subr.mxu0 %v2196
  %2311 = vmatpush1.msra.mxu0 %v2195
  %2312 = vmatprep.subr.mxu0 %v2192
  %2313 = vmatpush1.msra.mxu0 %v2191
  %2314 = vmatprep.subr.mxu0 %v2188
  %2315 = vmatpush1.msra.mxu0 %v2187
  %2316 = vmatprep.subr.mxu0 %v2184
  %2317 = vmatpush1.msra.mxu0 %v2183
  %2318 = vmatprep.subr.mxu0 %v2180
  %2319 = vmatpush1.msra.mxu0 %v2179
  %2320 = vmatprep.subr.mxu0 %v2176
  %2321 = vmatpush1.msra.mxu0 %v2175
  %2322 = vmatprep.subr.mxu0 %v2172
  %2323 = vmatpush1.msra.mxu0 %v2171
  %2324 = vmatprep.subr.mxu0 %v2168
  %2325 = vmatpush1.msra.mxu0 %v2167
  %2326 = vmatprep.subr.mxu0 %v2164
  %2327 = vmatpush1.msra.mxu0 %v2163
  %2328 = vmatprep.subr.mxu0 0.0
  %2329 = vmatpush2.msra.mxu0 0.0
  %2330 = vmatprep.subr.mxu0 0.0
  %2331 = vmatpush2.msra.mxu0 0.0
  %2332 = vmatprep.subr.mxu0 0.0
  %2333 = vmatpush2.msra.mxu0 0.0
  %2334 = vmatprep.subr.mxu0 0.0
  %2335 = vmatpush2.msra.mxu0 0.0
  %2336 = vmatprep.subr.mxu0 0.0
  %2337 = vmatpush2.msra.mxu0 0.0
  %2338 = vmatprep.subr.mxu0 0.0
  %2339 = vmatpush2.msra.mxu0 0.0
  %2340 = vmatprep.subr.mxu0 0.0
  %2341 = vmatpush2.msra.mxu0 0.0
  %2342 = vmatprep.subr.mxu0 0.0
  %2343 = vmatpush2.msra.mxu0 0.0
  %2344 = vmatprep.subr.mxu0 0.0
  %2345 = vmatpush2.msra.mxu0 0.0
  %2346 = vmatprep.subr.mxu0 0.0
  %2347 = vmatpush2.msra.mxu0 0.0
  %2348 = vmatprep.subr.mxu0 0.0
  %2349 = vmatpush2.msra.mxu0 0.0
  %2350 = vmatprep.subr.mxu0 0.0
  %2351 = vmatpush2.msra.mxu0 0.0
  %2352 = vmatprep.subr.mxu0 0.0
  %2353 = vmatpush2.msra.mxu0 0.0
  %2354 = vmatprep.subr.mxu0 0.0
  %2355 = vmatpush2.msra.mxu0 0.0
  %2356 = vmatprep.subr.mxu0 0.0
  %2357 = vmatpush2.msra.mxu0 0.0
  %2358 = vmatprep.subr.mxu0 0.0
  %2359 = vmatpush2.msra.mxu0 0.0
  %2360 = vmatprep.mubr.f32.mxu0 0.0
  %2361 = vmatmul.mubr.f32.gmra.mxu0 %v2160
  %v2362 = vpop.f32.mrf.mxu0
  %v2363 = vadd.f32 0.0, %v2362
  %v2364 = vpop.f32.mrf.mxu0
  %v2365 = vadd.f32 0.0, %v2364
  %2366 = vdwg.mxu0
  %v2367 = vld [vmem:[#allocation4] sm:$0x3]
  %v2368 = vld [vmem:[%s3] sm:$0xff]
  %v2369 = vld [vmem:[%s3 + $0x8] sm:$0xff]
  %v2370 = vld [vmem:[%s3 + $0x10] sm:$0xff]
  %v2371 = vld [vmem:[%s3 + $0x18] sm:$0xff]
  %v2372 = vld [vmem:[%s3 + $0x20] sm:$0xff]
  %v2373 = vld [vmem:[%s3 + $0x28] sm:$0xff]
  %v2374 = vld [vmem:[%s3 + $0x30] sm:$0xff]
  %v2375 = vld [vmem:[%s3 + $0x38] sm:$0xff]
  %v2376 = vld [vmem:[%s3 + $0x40] sm:$0xff]
  %v2377 = vld [vmem:[%s3 + $0x48] sm:$0xff]
  %v2378 = vld [vmem:[%s3 + $0x50] sm:$0xff]
  %v2379 = vld [vmem:[%s3 + $0x58] sm:$0xff]
  %v2380 = vld [vmem:[%s3 + $0x60] sm:$0xff]
  %v2381 = vld [vmem:[%s3 + $0x68] sm:$0xff]
  %v2382 = vld [vmem:[%s3 + $0x70] sm:$0xff]
  %v2383 = vld [vmem:[%s3 + $0x78] sm:$0xff]
  %v2384 = vld [vmem:[%s3 + $0x80] sm:$0xff]
  %v2385 = vld [vmem:[%s3 + $0x88] sm:$0xff]
  %v2386 = vld [vmem:[%s3 + $0x90] sm:$0xff]
  %v2387 = vld [vmem:[%s3 + $0x98] sm:$0xff]
  %v2388 = vld [vmem:[%s3 + $0xa0] sm:$0xff]
  %v2389 = vld [vmem:[%s3 + $0xa8] sm:$0xff]
  %v2390 = vld [vmem:[%s3 + $0xb0] sm:$0xff]
  %v2391 = vld [vmem:[%s3 + $0xb8] sm:$0xff]
  %v2392 = vld [vmem:[%s3 + $0xc0] sm:$0xff]
  %v2393 = vld [vmem:[%s3 + $0xc8] sm:$0xff]
  %v2394 = vld [vmem:[%s3 + $0xd0] sm:$0xff]
  %v2395 = vld [vmem:[%s3 + $0xd8] sm:$0xff]
  %v2396 = vld [vmem:[%s3 + $0xe0] sm:$0xff]
  %v2397 = vld [vmem:[%s3 + $0xe8] sm:$0xff]
  %v2398 = vld [vmem:[%s3 + $0xf0] sm:$0xff]
  %v2399 = vld [vmem:[%s3 + $0xf8] sm:$0xff]
  %v2400 = vld [vmem:[%s3 + $0x100] sm:$0xff]
  %v2401 = vld [vmem:[%s3 + $0x108] sm:$0xff]
  %v2402 = vld [vmem:[%s3 + $0x110] sm:$0xff]
  %v2403 = vld [vmem:[%s3 + $0x118] sm:$0xff]
  %v2404 = vld [vmem:[%s3 + $0x120] sm:$0xff]
  %v2405 = vld [vmem:[%s3 + $0x128] sm:$0xff]
  %v2406 = vld [vmem:[%s3 + $0x130] sm:$0xff]
  %v2407 = vld [vmem:[%s3 + $0x138] sm:$0xff]
  %v2408 = vld [vmem:[%s3 + $0x140] sm:$0xff]
  %v2409 = vld [vmem:[%s3 + $0x148] sm:$0xff]
  %v2410 = vld [vmem:[%s3 + $0x150] sm:$0xff]
  %v2411 = vld [vmem:[%s3 + $0x158] sm:$0xff]
  %v2412 = vld [vmem:[%s3 + $0x160] sm:$0xff]
  %v2413 = vld [vmem:[%s3 + $0x168] sm:$0xff]
  %v2414 = vld [vmem:[%s3 + $0x170] sm:$0xff]
  %v2415 = vld [vmem:[%s3 + $0x178] sm:$0xff]
  %v2416 = vld [vmem:[%s3 + $0x180] sm:$0xff]
  %v2417 = vld [vmem:[%s3 + $0x188] sm:$0xff]
  %v2418 = vld [vmem:[%s3 + $0x190] sm:$0xff]
  %v2419 = vld [vmem:[%s3 + $0x198] sm:$0xff]
  %v2420 = vld [vmem:[%s3 + $0x1a0] sm:$0xff]
  %v2421 = vld [vmem:[%s3 + $0x1a8] sm:$0xff]
  %v2422 = vld [vmem:[%s3 + $0x1b0] sm:$0xff]
  %v2423 = vld [vmem:[%s3 + $0x1b8] sm:$0xff]
  %v2424 = vld [vmem:[%s3 + $0x1c0] sm:$0xff]
  %v2425 = vld [vmem:[%s3 + $0x1c8] sm:$0xff]
  %v2426 = vld [vmem:[%s3 + $0x1d0] sm:$0xff]
  %v2427 = vld [vmem:[%s3 + $0x1d8] sm:$0xff]
  %v2428 = vld [vmem:[%s3 + $0x1e0] sm:$0xff]
  %v2429 = vld [vmem:[%s3 + $0x1e8] sm:$0xff]
  %v2430 = vld [vmem:[%s3 + $0x1f0] sm:$0xff]
  %v2431 = vld [vmem:[%s3 + $0x1f8] sm:$0xff]
  %2432 = vmatprep.subr.mxu0 %v2429
  %2433 = vmatpush1.msra.mxu0 %v2428
  %2434 = vmatprep.subr.mxu0 %v2425
  %2435 = vmatpush1.msra.mxu0 %v2424
  %2436 = vmatprep.subr.mxu0 %v2421
  %2437 = vmatpush1.msra.mxu0 %v2420
  %2438 = vmatprep.subr.mxu0 %v2417
  %2439 = vmatpush1.msra.mxu0 %v2416
  %2440 = vmatprep.subr.mxu0 %v2413
  %2441 = vmatpush1.msra.mxu0 %v2412
  %2442 = vmatprep.subr.mxu0 %v2409
  %2443 = vmatpush1.msra.mxu0 %v2408
  %2444 = vmatprep.subr.mxu0 %v2405
  %2445 = vmatpush1.msra.mxu0 %v2404
  %2446 = vmatprep.subr.mxu0 %v2401
  %2447 = vmatpush1.msra.mxu0 %v2400
  %2448 = vmatprep.subr.mxu0 %v2397
  %2449 = vmatpush1.msra.mxu0 %v2396
  %2450 = vmatprep.subr.mxu0 %v2393
  %2451 = vmatpush1.msra.mxu0 %v2392
  %2452 = vmatprep.subr.mxu0 %v2389
  %2453 = vmatpush1.msra.mxu0 %v2388
  %2454 = vmatprep.subr.mxu0 %v2385
  %2455 = vmatpush1.msra.mxu0 %v2384
  %2456 = vmatprep.subr.mxu0 %v2381
  %2457 = vmatpush1.msra.mxu0 %v2380
  %2458 = vmatprep.subr.mxu0 %v2377
  %2459 = vmatpush1.msra.mxu0 %v2376
  %2460 = vmatprep.subr.mxu0 %v2373
  %2461 = vmatpush1.msra.mxu0 %v2372
  %2462 = vmatprep.subr.mxu0 %v2369
  %2463 = vmatpush1.msra.mxu0 %v2368
  %2464 = vmatprep.subr.mxu0 0.0
  %2465 = vmatpush2.msra.mxu0 0.0
  %2466 = vmatprep.subr.mxu0 0.0
  %2467 = vmatpush2.msra.mxu0 0.0
  %2468 = vmatprep.subr.mxu0 0.0
  %2469 = vmatpush2.msra.mxu0 0.0
  %2470 = vmatprep.subr.mxu0 0.0
  %2471 = vmatpush2.msra.mxu0 0.0
  %2472 = vmatprep.subr.mxu0 0.0
  %2473 = vmatpush2.msra.mxu0 0.0
  %2474 = vmatprep.subr.mxu0 0.0
  %2475 = vmatpush2.msra.mxu0 0.0
  %2476 = vmatprep.subr.mxu0 0.0
  %2477 = vmatpush2.msra.mxu0 0.0
  %2478 = vmatprep.subr.mxu0 0.0
  %2479 = vmatpush2.msra.mxu0 0.0
  %2480 = vmatprep.subr.mxu0 0.0
  %2481 = vmatpush2.msra.mxu0 0.0
  %2482 = vmatprep.subr.mxu0 0.0
  %2483 = vmatpush2.msra.mxu0 0.0
  %2484 = vmatprep.subr.mxu0 0.0
  %2485 = vmatpush2.msra.mxu0 0.0
  %2486 = vmatprep.subr.mxu0 0.0
  %2487 = vmatpush2.msra.mxu0 0.0
  %2488 = vmatprep.subr.mxu0 0.0
  %2489 = vmatpush2.msra.mxu0 0.0
  %2490 = vmatprep.subr.mxu0 0.0
  %2491 = vmatpush2.msra.mxu0 0.0
  %2492 = vmatprep.subr.mxu0 0.0
  %2493 = vmatpush2.msra.mxu0 0.0
  %2494 = vmatprep.subr.mxu0 0.0
  %2495 = vmatpush2.msra.mxu0 0.0
  %2496 = vmatprep.mubr.f32.mxu0 0.0
  %2497 = vmatmul.mubr.f32.gmra.mxu0 %v2367
  %v2498 = vpop.f32.mrf.mxu0
  %v2499 = vadd.f32 0.0, %v2498
  %v2500 = vpop.f32.mrf.mxu0
  %v2501 = vadd.f32 0.0, %v2500
  %2502 = vdwg.mxu0
  %2503 = vmatprep.subr.mxu0 %v2431
  %2504 = vmatpush1.msra.mxu0 %v2430
  %2505 = vmatprep.subr.mxu0 %v2427
  %2506 = vmatpush1.msra.mxu0 %v2426
  %2507 = vmatprep.subr.mxu0 %v2423
  %2508 = vmatpush1.msra.mxu0 %v2422
  %2509 = vmatprep.subr.mxu0 %v2419
  %2510 = vmatpush1.msra.mxu0 %v2418
  %2511 = vmatprep.subr.mxu0 %v2415
  %2512 = vmatpush1.msra.mxu0 %v2414
  %2513 = vmatprep.subr.mxu0 %v2411
  %2514 = vmatpush1.msra.mxu0 %v2410
  %2515 = vmatprep.subr.mxu0 %v2407
  %2516 = vmatpush1.msra.mxu0 %v2406
  %2517 = vmatprep.subr.mxu0 %v2403
  %2518 = vmatpush1.msra.mxu0 %v2402
  %2519 = vmatprep.subr.mxu0 %v2399
  %2520 = vmatpush1.msra.mxu0 %v2398
  %2521 = vmatprep.subr.mxu0 %v2395
  %2522 = vmatpush1.msra.mxu0 %v2394
  %2523 = vmatprep.subr.mxu0 %v2391
  %2524 = vmatpush1.msra.mxu0 %v2390
  %2525 = vmatprep.subr.mxu0 %v2387
  %2526 = vmatpush1.msra.mxu0 %v2386
  %2527 = vmatprep.subr.mxu0 %v2383
  %2528 = vmatpush1.msra.mxu0 %v2382
  %2529 = vmatprep.subr.mxu0 %v2379
  %2530 = vmatpush1.msra.mxu0 %v2378
  %2531 = vmatprep.subr.mxu0 %v2375
  %2532 = vmatpush1.msra.mxu0 %v2374
  %2533 = vmatprep.subr.mxu0 %v2371
  %2534 = vmatpush1.msra.mxu0 %v2370
  %2535 = vmatprep.subr.mxu0 0.0
  %2536 = vmatpush2.msra.mxu0 0.0
  %2537 = vmatprep.subr.mxu0 0.0
  %2538 = vmatpush2.msra.mxu0 0.0
  %2539 = vmatprep.subr.mxu0 0.0
  %2540 = vmatpush2.msra.mxu0 0.0
  %2541 = vmatprep.subr.mxu0 0.0
  %2542 = vmatpush2.msra.mxu0 0.0
  %2543 = vmatprep.subr.mxu0 0.0
  %2544 = vmatpush2.msra.mxu0 0.0
  %2545 = vmatprep.subr.mxu0 0.0
  %2546 = vmatpush2.msra.mxu0 0.0
  %2547 = vmatprep.subr.mxu0 0.0
  %2548 = vmatpush2.msra.mxu0 0.0
  %2549 = vmatprep.subr.mxu0 0.0
  %2550 = vmatpush2.msra.mxu0 0.0
  %2551 = vmatprep.subr.mxu0 0.0
  %2552 = vmatpush2.msra.mxu0 0.0
  %2553 = vmatprep.subr.mxu0 0.0
  %2554 = vmatpush2.msra.mxu0 0.0
  %2555 = vmatprep.subr.mxu0 0.0
  %2556 = vmatpush2.msra.mxu0 0.0
  %2557 = vmatprep.subr.mxu0 0.0
  %2558 = vmatpush2.msra.mxu0 0.0
  %2559 = vmatprep.subr.mxu0 0.0
  %2560 = vmatpush2.msra.mxu0 0.0
  %2561 = vmatprep.subr.mxu0 0.0
  %2562 = vmatpush2.msra.mxu0 0.0
  %2563 = vmatprep.subr.mxu0 0.0
  %2564 = vmatpush2.msra.mxu0 0.0
  %2565 = vmatprep.subr.mxu0 0.0
  %2566 = vmatpush2.msra.mxu0 0.0
  %2567 = vmatprep.mubr.f32.mxu0 0.0
  %2568 = vmatmul.mubr.f32.gmra.mxu0 %v2367
  %v2569 = vpop.f32.mrf.mxu0
  %v2570 = vadd.f32 0.0, %v2569
  %v2571 = vpop.f32.mrf.mxu0
  %v2572 = vadd.f32 0.0, %v2571
  %2573 = vdwg.mxu0
  %s2574 = scalar_lea.vmem %s0, 32
  %v2575 = vld [vmem:[%s2574] sm:$0xff]
  %v2580 = vcombine.low %v2292, %v2294
  %v2581 = vcombine.low %v2363, %v2365
  %v2583 = vunpack.c.l.s4 1983009808
  %v2584 = vunpack.c.0.s8 %v2583
  %v2585 = vlaneseq
  %v2586 = vshrl.u32 %v2585, 7
  %v2587 = vsub.s32 %v2584, %v2586
  %v2588 = vrot.slane %v2580, %v2587
  %v2590 = vunpack.c.l.s4 1983009808
  %v2591 = vunpack.c.0.s8 %v2590
  %v2592 = vlaneseq
  %v2593 = vshrl.u32 %v2592, 7
  %v2594 = vsub.s32 %v2591, %v2593
  %v2595 = vrot.slane %v2581, %v2594
  %v2596 = vcombine.low %v2588, %v2595
  %v2598 = vadd.f32 %v2575, %v2596
  %v2599 = vld [vmem:[#allocation3] sm:$0x3]
  %v2600 = vmul.f32 %v2598, 0.5
  %v2601 = vtanh.pop %v2600
  %v2602 = vadd.f32 %v2601, 1.0
  %v2603 = vmul.f32 %v2602, 0.5
  %v2605 = vrot.slane %v2598, 2
  %v2607 = vmul.f32 %v2605, 0.5
  %v2608 = vtanh.pop %v2607
  %v2609 = vadd.f32 %v2608, 1.0
  %v2610 = vmul.f32 %v2609, 0.5
  %v2611 = vrot.slane %v2598, 4
  %v2613 = vtanh.pop %v2611
  %v2614 = vrot.slane %v2598, 6
  %v2616 = vmul.f32 %v2614, 0.5
  %v2617 = vtanh.pop %v2616
  %v2618 = vadd.f32 %v2617, 1.0
  %v2619 = vmul.f32 %v2618, 0.5
  %v2620 = vmul.f32 %v2610, %v2599
  %v2621 = vmul.f32 %v2603, %v2613
  %v2622 = vadd.f32 %v2620, %v2621
  %v2623 = vtanh.pop %v2622
  %v2624 = vmul.f32 %v2619, %v2623
  %s2625 = scalar_lea.vmem %s47, 24
  %v2626 = vld [vmem:[%s2625] sm:$0xff]
  %v2631 = vcombine.low %v2499, %v2501
  %v2632 = vcombine.low %v2570, %v2572
  %v2634 = vunpack.c.l.s4 1983009808
  %v2635 = vunpack.c.0.s8 %v2634
  %v2636 = vlaneseq
  %v2637 = vshrl.u32 %v2636, 7
  %v2638 = vsub.s32 %v2635, %v2637
  %v2639 = vrot.slane %v2631, %v2638
  %v2641 = vunpack.c.l.s4 1983009808
  %v2642 = vunpack.c.0.s8 %v2641
  %v2643 = vlaneseq
  %v2644 = vshrl.u32 %v2643, 7
  %v2645 = vsub.s32 %v2642, %v2644
  %v2646 = vrot.slane %v2632, %v2645
  %v2647 = vcombine.low %v2639, %v2646
  %v2649 = vadd.f32 %v2626, %v2647
  %v2650 = vld [vmem:[#allocation5] sm:$0x3]
  %v2651 = vmul.f32 %v2649, 0.5
  %v2652 = vtanh.pop %v2651
  %v2653 = vadd.f32 %v2652, 1.0
  %v2654 = vmul.f32 %v2653, 0.5
  %v2656 = vrot.slane %v2649, 2
  %v2658 = vmul.f32 %v2656, 0.5
  %v2659 = vtanh.pop %v2658
  %v2660 = vadd.f32 %v2659, 1.0
  %v2661 = vmul.f32 %v2660, 0.5
  %v2662 = vrot.slane %v2649, 4
  %v2664 = vtanh.pop %v2662
  %v2665 = vrot.slane %v2649, 6
  %v2667 = vmul.f32 %v2665, 0.5
  %v2668 = vtanh.pop %v2667
  %v2669 = vadd.f32 %v2668, 1.0
  %v2670 = vmul.f32 %v2669, 0.5
  %v2671 = vmul.f32 %v2661, %v2650
  %v2672 = vmul.f32 %v2654, %v2664
  %v2673 = vadd.f32 %v2671, %v2672
  %v2674 = vtanh.pop %v2673
  %v2675 = vmul.f32 %v2670, %v2674
  %2676 = vst [vmem:[#allocation2] sm:$0x3] %v2624
  %2677 = vst [vmem:[#allocation3] sm:$0x3] %v2622
  %2678 = vst [vmem:[#allocation4] sm:$0x3] %v2675
  %2679 = vst [vmem:[#allocation5] sm:$0x3] %v2673
  %s2680 = scalar_lea.vmem %s4, 8
  %2681 = vst [vmem:[%s2680] sm:$0x3] %v2624
  %s2682 = scalar_lea.vmem %s55, 6
  %2683 = vst [vmem:[%s2682] sm:$0x3] %v2675
  %v2684 = vld [vmem:[#allocation2] sm:$0x3]
  %v2685 = vld [vmem:[%s2] sm:$0xff]
  %v2686 = vld [vmem:[%s2 + $0x8] sm:$0xff]
  %v2687 = vld [vmem:[%s2 + $0x10] sm:$0xff]
  %v2688 = vld [vmem:[%s2 + $0x18] sm:$0xff]
  %v2689 = vld [vmem:[%s2 + $0x20] sm:$0xff]
  %v2690 = vld [vmem:[%s2 + $0x28] sm:$0xff]
  %v2691 = vld [vmem:[%s2 + $0x30] sm:$0xff]
  %v2692 = vld [vmem:[%s2 + $0x38] sm:$0xff]
  %v2693 = vld [vmem:[%s2 + $0x40] sm:$0xff]
  %v2694 = vld [vmem:[%s2 + $0x48] sm:$0xff]
  %v2695 = vld [vmem:[%s2 + $0x50] sm:$0xff]
  %v2696 = vld [vmem:[%s2 + $0x58] sm:$0xff]
  %v2697 = vld [vmem:[%s2 + $0x60] sm:$0xff]
  %v2698 = vld [vmem:[%s2 + $0x68] sm:$0xff]
  %v2699 = vld [vmem:[%s2 + $0x70] sm:$0xff]
  %v2700 = vld [vmem:[%s2 + $0x78] sm:$0xff]
  %v2701 = vld [vmem:[%s2 + $0x80] sm:$0xff]
  %v2702 = vld [vmem:[%s2 + $0x88] sm:$0xff]
  %v2703 = vld [vmem:[%s2 + $0x90] sm:$0xff]
  %v2704 = vld [vmem:[%s2 + $0x98] sm:$0xff]
  %v2705 = vld [vmem:[%s2 + $0xa0] sm:$0xff]
  %v2706 = vld [vmem:[%s2 + $0xa8] sm:$0xff]
  %v2707 = vld [vmem:[%s2 + $0xb0] sm:$0xff]
  %v2708 = vld [vmem:[%s2 + $0xb8] sm:$0xff]
  %v2709 = vld [vmem:[%s2 + $0xc0] sm:$0xff]
  %v2710 = vld [vmem:[%s2 + $0xc8] sm:$0xff]
  %v2711 = vld [vmem:[%s2 + $0xd0] sm:$0xff]
  %v2712 = vld [vmem:[%s2 + $0xd8] sm:$0xff]
  %v2713 = vld [vmem:[%s2 + $0xe0] sm:$0xff]
  %v2714 = vld [vmem:[%s2 + $0xe8] sm:$0xff]
  %v2715 = vld [vmem:[%s2 + $0xf0] sm:$0xff]
  %v2716 = vld [vmem:[%s2 + $0xf8] sm:$0xff]
  %v2717 = vld [vmem:[%s2 + $0x100] sm:$0xff]
  %v2718 = vld [vmem:[%s2 + $0x108] sm:$0xff]
  %v2719 = vld [vmem:[%s2 + $0x110] sm:$0xff]
  %v2720 = vld [vmem:[%s2 + $0x118] sm:$0xff]
  %v2721 = vld [vmem:[%s2 + $0x120] sm:$0xff]
  %v2722 = vld [vmem:[%s2 + $0x128] sm:$0xff]
  %v2723 = vld [vmem:[%s2 + $0x130] sm:$0xff]
  %v2724 = vld [vmem:[%s2 + $0x138] sm:$0xff]
  %v2725 = vld [vmem:[%s2 + $0x140] sm:$0xff]
  %v2726 = vld [vmem:[%s2 + $0x148] sm:$0xff]
  %v2727 = vld [vmem:[%s2 + $0x150] sm:$0xff]
  %v2728 = vld [vmem:[%s2 + $0x158] sm:$0xff]
  %v2729 = vld [vmem:[%s2 + $0x160] sm:$0xff]
  %v2730 = vld [vmem:[%s2 + $0x168] sm:$0xff]
  %v2731 = vld [vmem:[%s2 + $0x170] sm:$0xff]
  %v2732 = vld [vmem:[%s2 + $0x178] sm:$0xff]
  %v2733 = vld [vmem:[%s2 + $0x180] sm:$0xff]
  %v2734 = vld [vmem:[%s2 + $0x188] sm:$0xff]
  %v2735 = vld [vmem:[%s2 + $0x190] sm:$0xff]
  %v2736 = vld [vmem:[%s2 + $0x198] sm:$0xff]
  %v2737 = vld [vmem:[%s2 + $0x1a0] sm:$0xff]
  %v2738 = vld [vmem:[%s2 + $0x1a8] sm:$0xff]
  %v2739 = vld [vmem:[%s2 + $0x1b0] sm:$0xff]
  %v2740 = vld [vmem:[%s2 + $0x1b8] sm:$0xff]
  %v2741 = vld [vmem:[%s2 + $0x1c0] sm:$0xff]
  %v2742 = vld [vmem:[%s2 + $0x1c8] sm:$0xff]
  %v2743 = vld [vmem:[%s2 + $0x1d0] sm:$0xff]
  %v2744 = vld [vmem:[%s2 + $0x1d8] sm:$0xff]
  %v2745 = vld [vmem:[%s2 + $0x1e0] sm:$0xff]
  %v2746 = vld [vmem:[%s2 + $0x1e8] sm:$0xff]
  %v2747 = vld [vmem:[%s2 + $0x1f0] sm:$0xff]
  %v2748 = vld [vmem:[%s2 + $0x1f8] sm:$0xff]
  %2749 = vmatprep.subr.mxu0 %v2746
  %2750 = vmatpush1.msra.mxu0 %v2745
  %2751 = vmatprep.subr.mxu0 %v2742
  %2752 = vmatpush1.msra.mxu0 %v2741
  %2753 = vmatprep.subr.mxu0 %v2738
  %2754 = vmatpush1.msra.mxu0 %v2737
  %2755 = vmatprep.subr.mxu0 %v2734
  %2756 = vmatpush1.msra.mxu0 %v2733
  %2757 = vmatprep.subr.mxu0 %v2730
  %2758 = vmatpush1.msra.mxu0 %v2729
  %2759 = vmatprep.subr.mxu0 %v2726
  %2760 = vmatpush1.msra.mxu0 %v2725
  %2761 = vmatprep.subr.mxu0 %v2722
  %2762 = vmatpush1.msra.mxu0 %v2721
  %2763 = vmatprep.subr.mxu0 %v2718
  %2764 = vmatpush1.msra.mxu0 %v2717
  %2765 = vmatprep.subr.mxu0 %v2714
  %2766 = vmatpush1.msra.mxu0 %v2713
  %2767 = vmatprep.subr.mxu0 %v2710
  %2768 = vmatpush1.msra.mxu0 %v2709
  %2769 = vmatprep.subr.mxu0 %v2706
  %2770 = vmatpush1.msra.mxu0 %v2705
  %2771 = vmatprep.subr.mxu0 %v2702
  %2772 = vmatpush1.msra.mxu0 %v2701
  %2773 = vmatprep.subr.mxu0 %v2698
  %2774 = vmatpush1.msra.mxu0 %v2697
  %2775 = vmatprep.subr.mxu0 %v2694
  %2776 = vmatpush1.msra.mxu0 %v2693
  %2777 = vmatprep.subr.mxu0 %v2690
  %2778 = vmatpush1.msra.mxu0 %v2689
  %2779 = vmatprep.subr.mxu0 %v2686
  %2780 = vmatpush1.msra.mxu0 %v2685
  %2781 = vmatprep.subr.mxu0 0.0
  %2782 = vmatpush2.msra.mxu0 0.0
  %2783 = vmatprep.subr.mxu0 0.0
  %2784 = vmatpush2.msra.mxu0 0.0
  %2785 = vmatprep.subr.mxu0 0.0
  %2786 = vmatpush2.msra.mxu0 0.0
  %2787 = vmatprep.subr.mxu0 0.0
  %2788 = vmatpush2.msra.mxu0 0.0
  %2789 = vmatprep.subr.mxu0 0.0
  %2790 = vmatpush2.msra.mxu0 0.0
  %2791 = vmatprep.subr.mxu0 0.0
  %2792 = vmatpush2.msra.mxu0 0.0
  %2793 = vmatprep.subr.mxu0 0.0
  %2794 = vmatpush2.msra.mxu0 0.0
  %2795 = vmatprep.subr.mxu0 0.0
  %2796 = vmatpush2.msra.mxu0 0.0
  %2797 = vmatprep.subr.mxu0 0.0
  %2798 = vmatpush2.msra.mxu0 0.0
  %2799 = vmatprep.subr.mxu0 0.0
  %2800 = vmatpush2.msra.mxu0 0.0
  %2801 = vmatprep.subr.mxu0 0.0
  %2802 = vmatpush2.msra.mxu0 0.0
  %2803 = vmatprep.subr.mxu0 0.0
  %2804 = vmatpush2.msra.mxu0 0.0
  %2805 = vmatprep.subr.mxu0 0.0
  %2806 = vmatpush2.msra.mxu0 0.0
  %2807 = vmatprep.subr.mxu0 0.0
  %2808 = vmatpush2.msra.mxu0 0.0
  %2809 = vmatprep.subr.mxu0 0.0
  %2810 = vmatpush2.msra.mxu0 0.0
  %2811 = vmatprep.subr.mxu0 0.0
  %2812 = vmatpush2.msra.mxu0 0.0
  %2813 = vmatprep.mubr.f32.mxu0 0.0
  %2814 = vmatmul.mubr.f32.gmra.mxu0 %v2684
  %v2815 = vpop.f32.mrf.mxu0
  %v2816 = vadd.f32 0.0, %v2815
  %v2817 = vpop.f32.mrf.mxu0
  %v2818 = vadd.f32 0.0, %v2817
  %2819 = vdwg.mxu0
  %2820 = vmatprep.subr.mxu0 %v2748
  %2821 = vmatpush1.msra.mxu0 %v2747
  %2822 = vmatprep.subr.mxu0 %v2744
  %2823 = vmatpush1.msra.mxu0 %v2743
  %2824 = vmatprep.subr.mxu0 %v2740
  %2825 = vmatpush1.msra.mxu0 %v2739
  %2826 = vmatprep.subr.mxu0 %v2736
  %2827 = vmatpush1.msra.mxu0 %v2735
  %2828 = vmatprep.subr.mxu0 %v2732
  %2829 = vmatpush1.msra.mxu0 %v2731
  %2830 = vmatprep.subr.mxu0 %v2728
  %2831 = vmatpush1.msra.mxu0 %v2727
  %2832 = vmatprep.subr.mxu0 %v2724
  %2833 = vmatpush1.msra.mxu0 %v2723
  %2834 = vmatprep.subr.mxu0 %v2720
  %2835 = vmatpush1.msra.mxu0 %v2719
  %2836 = vmatprep.subr.mxu0 %v2716
  %2837 = vmatpush1.msra.mxu0 %v2715
  %2838 = vmatprep.subr.mxu0 %v2712
  %2839 = vmatpush1.msra.mxu0 %v2711
  %2840 = vmatprep.subr.mxu0 %v2708
  %2841 = vmatpush1.msra.mxu0 %v2707
  %2842 = vmatprep.subr.mxu0 %v2704
  %2843 = vmatpush1.msra.mxu0 %v2703
  %2844 = vmatprep.subr.mxu0 %v2700
  %2845 = vmatpush1.msra.mxu0 %v2699
  %2846 = vmatprep.subr.mxu0 %v2696
  %2847 = vmatpush1.msra.mxu0 %v2695
  %2848 = vmatprep.subr.mxu0 %v2692
  %2849 = vmatpush1.msra.mxu0 %v2691
  %2850 = vmatprep.subr.mxu0 %v2688
  %2851 = vmatpush1.msra.mxu0 %v2687
  %2852 = vmatprep.subr.mxu0 0.0
  %2853 = vmatpush2.msra.mxu0 0.0
  %2854 = vmatprep.subr.mxu0 0.0
  %2855 = vmatpush2.msra.mxu0 0.0
  %2856 = vmatprep.subr.mxu0 0.0
  %2857 = vmatpush2.msra.mxu0 0.0
  %2858 = vmatprep.subr.mxu0 0.0
  %2859 = vmatpush2.msra.mxu0 0.0
  %2860 = vmatprep.subr.mxu0 0.0
  %2861 = vmatpush2.msra.mxu0 0.0
  %2862 = vmatprep.subr.mxu0 0.0
  %2863 = vmatpush2.msra.mxu0 0.0
  %2864 = vmatprep.subr.mxu0 0.0
  %2865 = vmatpush2.msra.mxu0 0.0
  %2866 = vmatprep.subr.mxu0 0.0
  %2867 = vmatpush2.msra.mxu0 0.0
  %2868 = vmatprep.subr.mxu0 0.0
  %2869 = vmatpush2.msra.mxu0 0.0
  %2870 = vmatprep.subr.mxu0 0.0
  %2871 = vmatpush2.msra.mxu0 0.0
  %2872 = vmatprep.subr.mxu0 0.0
  %2873 = vmatpush2.msra.mxu0 0.0
  %2874 = vmatprep.subr.mxu0 0.0
  %2875 = vmatpush2.msra.mxu0 0.0
  %2876 = vmatprep.subr.mxu0 0.0
  %2877 = vmatpush2.msra.mxu0 0.0
  %2878 = vmatprep.subr.mxu0 0.0
  %2879 = vmatpush2.msra.mxu0 0.0
  %2880 = vmatprep.subr.mxu0 0.0
  %2881 = vmatpush2.msra.mxu0 0.0
  %2882 = vmatprep.subr.mxu0 0.0
  %2883 = vmatpush2.msra.mxu0 0.0
  %2884 = vmatprep.mubr.f32.mxu0 0.0
  %2885 = vmatmul.mubr.f32.gmra.mxu0 %v2684
  %v2886 = vpop.f32.mrf.mxu0
  %v2887 = vadd.f32 0.0, %v2886
  %v2888 = vpop.f32.mrf.mxu0
  %v2889 = vadd.f32 0.0, %v2888
  %2890 = vdwg.mxu0
  %v2891 = vld [vmem:[#allocation4] sm:$0x3]
  %v2892 = vld [vmem:[%s3] sm:$0xff]
  %v2893 = vld [vmem:[%s3 + $0x8] sm:$0xff]
  %v2894 = vld [vmem:[%s3 + $0x10] sm:$0xff]
  %v2895 = vld [vmem:[%s3 + $0x18] sm:$0xff]
  %v2896 = vld [vmem:[%s3 + $0x20] sm:$0xff]
  %v2897 = vld [vmem:[%s3 + $0x28] sm:$0xff]
  %v2898 = vld [vmem:[%s3 + $0x30] sm:$0xff]
  %v2899 = vld [vmem:[%s3 + $0x38] sm:$0xff]
  %v2900 = vld [vmem:[%s3 + $0x40] sm:$0xff]
  %v2901 = vld [vmem:[%s3 + $0x48] sm:$0xff]
  %v2902 = vld [vmem:[%s3 + $0x50] sm:$0xff]
  %v2903 = vld [vmem:[%s3 + $0x58] sm:$0xff]
  %v2904 = vld [vmem:[%s3 + $0x60] sm:$0xff]
  %v2905 = vld [vmem:[%s3 + $0x68] sm:$0xff]
  %v2906 = vld [vmem:[%s3 + $0x70] sm:$0xff]
  %v2907 = vld [vmem:[%s3 + $0x78] sm:$0xff]
  %v2908 = vld [vmem:[%s3 + $0x80] sm:$0xff]
  %v2909 = vld [vmem:[%s3 + $0x88] sm:$0xff]
  %v2910 = vld [vmem:[%s3 + $0x90] sm:$0xff]
  %v2911 = vld [vmem:[%s3 + $0x98] sm:$0xff]
  %v2912 = vld [vmem:[%s3 + $0xa0] sm:$0xff]
  %v2913 = vld [vmem:[%s3 + $0xa8] sm:$0xff]
  %v2914 = vld [vmem:[%s3 + $0xb0] sm:$0xff]
  %v2915 = vld [vmem:[%s3 + $0xb8] sm:$0xff]
  %v2916 = vld [vmem:[%s3 + $0xc0] sm:$0xff]
  %v2917 = vld [vmem:[%s3 + $0xc8] sm:$0xff]
  %v2918 = vld [vmem:[%s3 + $0xd0] sm:$0xff]
  %v2919 = vld [vmem:[%s3 + $0xd8] sm:$0xff]
  %v2920 = vld [vmem:[%s3 + $0xe0] sm:$0xff]
  %v2921 = vld [vmem:[%s3 + $0xe8] sm:$0xff]
  %v2922 = vld [vmem:[%s3 + $0xf0] sm:$0xff]
  %v2923 = vld [vmem:[%s3 + $0xf8] sm:$0xff]
  %v2924 = vld [vmem:[%s3 + $0x100] sm:$0xff]
  %v2925 = vld [vmem:[%s3 + $0x108] sm:$0xff]
  %v2926 = vld [vmem:[%s3 + $0x110] sm:$0xff]
  %v2927 = vld [vmem:[%s3 + $0x118] sm:$0xff]
  %v2928 = vld [vmem:[%s3 + $0x120] sm:$0xff]
  %v2929 = vld [vmem:[%s3 + $0x128] sm:$0xff]
  %v2930 = vld [vmem:[%s3 + $0x130] sm:$0xff]
  %v2931 = vld [vmem:[%s3 + $0x138] sm:$0xff]
  %v2932 = vld [vmem:[%s3 + $0x140] sm:$0xff]
  %v2933 = vld [vmem:[%s3 + $0x148] sm:$0xff]
  %v2934 = vld [vmem:[%s3 + $0x150] sm:$0xff]
  %v2935 = vld [vmem:[%s3 + $0x158] sm:$0xff]
  %v2936 = vld [vmem:[%s3 + $0x160] sm:$0xff]
  %v2937 = vld [vmem:[%s3 + $0x168] sm:$0xff]
  %v2938 = vld [vmem:[%s3 + $0x170] sm:$0xff]
  %v2939 = vld [vmem:[%s3 + $0x178] sm:$0xff]
  %v2940 = vld [vmem:[%s3 + $0x180] sm:$0xff]
  %v2941 = vld [vmem:[%s3 + $0x188] sm:$0xff]
  %v2942 = vld [vmem:[%s3 + $0x190] sm:$0xff]
  %v2943 = vld [vmem:[%s3 + $0x198] sm:$0xff]
  %v2944 = vld [vmem:[%s3 + $0x1a0] sm:$0xff]
  %v2945 = vld [vmem:[%s3 + $0x1a8] sm:$0xff]
  %v2946 = vld [vmem:[%s3 + $0x1b0] sm:$0xff]
  %v2947 = vld [vmem:[%s3 + $0x1b8] sm:$0xff]
  %v2948 = vld [vmem:[%s3 + $0x1c0] sm:$0xff]
  %v2949 = vld [vmem:[%s3 + $0x1c8] sm:$0xff]
  %v2950 = vld [vmem:[%s3 + $0x1d0] sm:$0xff]
  %v2951 = vld [vmem:[%s3 + $0x1d8] sm:$0xff]
  %v2952 = vld [vmem:[%s3 + $0x1e0] sm:$0xff]
  %v2953 = vld [vmem:[%s3 + $0x1e8] sm:$0xff]
  %v2954 = vld [vmem:[%s3 + $0x1f0] sm:$0xff]
  %v2955 = vld [vmem:[%s3 + $0x1f8] sm:$0xff]
  %2956 = vmatprep.subr.mxu0 %v2953
  %2957 = vmatpush1.msra.mxu0 %v2952
  %2958 = vmatprep.subr.mxu0 %v2949
  %2959 = vmatpush1.msra.mxu0 %v2948
  %2960 = vmatprep.subr.mxu0 %v2945
  %2961 = vmatpush1.msra.mxu0 %v2944
  %2962 = vmatprep.subr.mxu0 %v2941
  %2963 = vmatpush1.msra.mxu0 %v2940
  %2964 = vmatprep.subr.mxu0 %v2937
  %2965 = vmatpush1.msra.mxu0 %v2936
  %2966 = vmatprep.subr.mxu0 %v2933
  %2967 = vmatpush1.msra.mxu0 %v2932
  %2968 = vmatprep.subr.mxu0 %v2929
  %2969 = vmatpush1.msra.mxu0 %v2928
  %2970 = vmatprep.subr.mxu0 %v2925
  %2971 = vmatpush1.msra.mxu0 %v2924
  %2972 = vmatprep.subr.mxu0 %v2921
  %2973 = vmatpush1.msra.mxu0 %v2920
  %2974 = vmatprep.subr.mxu0 %v2917
  %2975 = vmatpush1.msra.mxu0 %v2916
  %2976 = vmatprep.subr.mxu0 %v2913
  %2977 = vmatpush1.msra.mxu0 %v2912
  %2978 = vmatprep.subr.mxu0 %v2909
  %2979 = vmatpush1.msra.mxu0 %v2908
  %2980 = vmatprep.subr.mxu0 %v2905
  %2981 = vmatpush1.msra.mxu0 %v2904
  %2982 = vmatprep.subr.mxu0 %v2901
  %2983 = vmatpush1.msra.mxu0 %v2900
  %2984 = vmatprep.subr.mxu0 %v2897
  %2985 = vmatpush1.msra.mxu0 %v2896
  %2986 = vmatprep.subr.mxu0 %v2893
  %2987 = vmatpush1.msra.mxu0 %v2892
  %2988 = vmatprep.subr.mxu0 0.0
  %2989 = vmatpush2.msra.mxu0 0.0
  %2990 = vmatprep.subr.mxu0 0.0
  %2991 = vmatpush2.msra.mxu0 0.0
  %2992 = vmatprep.subr.mxu0 0.0
  %2993 = vmatpush2.msra.mxu0 0.0
  %2994 = vmatprep.subr.mxu0 0.0
  %2995 = vmatpush2.msra.mxu0 0.0
  %2996 = vmatprep.subr.mxu0 0.0
  %2997 = vmatpush2.msra.mxu0 0.0
  %2998 = vmatprep.subr.mxu0 0.0
  %2999 = vmatpush2.msra.mxu0 0.0
  %3000 = vmatprep.subr.mxu0 0.0
  %3001 = vmatpush2.msra.mxu0 0.0
  %3002 = vmatprep.subr.mxu0 0.0
  %3003 = vmatpush2.msra.mxu0 0.0
  %3004 = vmatprep.subr.mxu0 0.0
  %3005 = vmatpush2.msra.mxu0 0.0
  %3006 = vmatprep.subr.mxu0 0.0
  %3007 = vmatpush2.msra.mxu0 0.0
  %3008 = vmatprep.subr.mxu0 0.0
  %3009 = vmatpush2.msra.mxu0 0.0
  %3010 = vmatprep.subr.mxu0 0.0
  %3011 = vmatpush2.msra.mxu0 0.0
  %3012 = vmatprep.subr.mxu0 0.0
  %3013 = vmatpush2.msra.mxu0 0.0
  %3014 = vmatprep.subr.mxu0 0.0
  %3015 = vmatpush2.msra.mxu0 0.0
  %3016 = vmatprep.subr.mxu0 0.0
  %3017 = vmatpush2.msra.mxu0 0.0
  %3018 = vmatprep.subr.mxu0 0.0
  %3019 = vmatpush2.msra.mxu0 0.0
  %3020 = vmatprep.mubr.f32.mxu0 0.0
  %3021 = vmatmul.mubr.f32.gmra.mxu0 %v2891
  %v3022 = vpop.f32.mrf.mxu0
  %v3023 = vadd.f32 0.0, %v3022
  %v3024 = vpop.f32.mrf.mxu0
  %v3025 = vadd.f32 0.0, %v3024
  %3026 = vdwg.mxu0
  %3027 = vmatprep.subr.mxu0 %v2955
  %3028 = vmatpush1.msra.mxu0 %v2954
  %3029 = vmatprep.subr.mxu0 %v2951
  %3030 = vmatpush1.msra.mxu0 %v2950
  %3031 = vmatprep.subr.mxu0 %v2947
  %3032 = vmatpush1.msra.mxu0 %v2946
  %3033 = vmatprep.subr.mxu0 %v2943
  %3034 = vmatpush1.msra.mxu0 %v2942
  %3035 = vmatprep.subr.mxu0 %v2939
  %3036 = vmatpush1.msra.mxu0 %v2938
  %3037 = vmatprep.subr.mxu0 %v2935
  %3038 = vmatpush1.msra.mxu0 %v2934
  %3039 = vmatprep.subr.mxu0 %v2931
  %3040 = vmatpush1.msra.mxu0 %v2930
  %3041 = vmatprep.subr.mxu0 %v2927
  %3042 = vmatpush1.msra.mxu0 %v2926
  %3043 = vmatprep.subr.mxu0 %v2923
  %3044 = vmatpush1.msra.mxu0 %v2922
  %3045 = vmatprep.subr.mxu0 %v2919
  %3046 = vmatpush1.msra.mxu0 %v2918
  %3047 = vmatprep.subr.mxu0 %v2915
  %3048 = vmatpush1.msra.mxu0 %v2914
  %3049 = vmatprep.subr.mxu0 %v2911
  %3050 = vmatpush1.msra.mxu0 %v2910
  %3051 = vmatprep.subr.mxu0 %v2907
  %3052 = vmatpush1.msra.mxu0 %v2906
  %3053 = vmatprep.subr.mxu0 %v2903
  %3054 = vmatpush1.msra.mxu0 %v2902
  %3055 = vmatprep.subr.mxu0 %v2899
  %3056 = vmatpush1.msra.mxu0 %v2898
  %3057 = vmatprep.subr.mxu0 %v2895
  %3058 = vmatpush1.msra.mxu0 %v2894
  %3059 = vmatprep.subr.mxu0 0.0
  %3060 = vmatpush2.msra.mxu0 0.0
  %3061 = vmatprep.subr.mxu0 0.0
  %3062 = vmatpush2.msra.mxu0 0.0
  %3063 = vmatprep.subr.mxu0 0.0
  %3064 = vmatpush2.msra.mxu0 0.0
  %3065 = vmatprep.subr.mxu0 0.0
  %3066 = vmatpush2.msra.mxu0 0.0
  %3067 = vmatprep.subr.mxu0 0.0
  %3068 = vmatpush2.msra.mxu0 0.0
  %3069 = vmatprep.subr.mxu0 0.0
  %3070 = vmatpush2.msra.mxu0 0.0
  %3071 = vmatprep.subr.mxu0 0.0
  %3072 = vmatpush2.msra.mxu0 0.0
  %3073 = vmatprep.subr.mxu0 0.0
  %3074 = vmatpush2.msra.mxu0 0.0
  %3075 = vmatprep.subr.mxu0 0.0
  %3076 = vmatpush2.msra.mxu0 0.0
  %3077 = vmatprep.subr.mxu0 0.0
  %3078 = vmatpush2.msra.mxu0 0.0
  %3079 = vmatprep.subr.mxu0 0.0
  %3080 = vmatpush2.msra.mxu0 0.0
  %3081 = vmatprep.subr.mxu0 0.0
  %3082 = vmatpush2.msra.mxu0 0.0
  %3083 = vmatprep.subr.mxu0 0.0
  %3084 = vmatpush2.msra.mxu0 0.0
  %3085 = vmatprep.subr.mxu0 0.0
  %3086 = vmatpush2.msra.mxu0 0.0
  %3087 = vmatprep.subr.mxu0 0.0
  %3088 = vmatpush2.msra.mxu0 0.0
  %3089 = vmatprep.subr.mxu0 0.0
  %3090 = vmatpush2.msra.mxu0 0.0
  %3091 = vmatprep.mubr.f32.mxu0 0.0
  %3092 = vmatmul.mubr.f32.gmra.mxu0 %v2891
  %v3093 = vpop.f32.mrf.mxu0
  %v3094 = vadd.f32 0.0, %v3093
  %v3095 = vpop.f32.mrf.mxu0
  %v3096 = vadd.f32 0.0, %v3095
  %3097 = vdwg.mxu0
  %s3098 = scalar_lea.vmem %s0, 40
  %v3099 = vld [vmem:[%s3098] sm:$0xff]
  %v3104 = vcombine.low %v2816, %v2818
  %v3105 = vcombine.low %v2887, %v2889
  %v3107 = vunpack.c.l.s4 1983009808
  %v3108 = vunpack.c.0.s8 %v3107
  %v3109 = vlaneseq
  %v3110 = vshrl.u32 %v3109, 7
  %v3111 = vsub.s32 %v3108, %v3110
  %v3112 = vrot.slane %v3104, %v3111
  %v3114 = vunpack.c.l.s4 1983009808
  %v3115 = vunpack.c.0.s8 %v3114
  %v3116 = vlaneseq
  %v3117 = vshrl.u32 %v3116, 7
  %v3118 = vsub.s32 %v3115, %v3117
  %v3119 = vrot.slane %v3105, %v3118
  %v3120 = vcombine.low %v3112, %v3119
  %v3122 = vadd.f32 %v3099, %v3120
  %v3123 = vld [vmem:[#allocation3] sm:$0x3]
  %v3124 = vmul.f32 %v3122, 0.5
  %v3125 = vtanh.pop %v3124
  %v3126 = vadd.f32 %v3125, 1.0
  %v3127 = vmul.f32 %v3126, 0.5
  %v3129 = vrot.slane %v3122, 2
  %v3131 = vmul.f32 %v3129, 0.5
  %v3132 = vtanh.pop %v3131
  %v3133 = vadd.f32 %v3132, 1.0
  %v3134 = vmul.f32 %v3133, 0.5
  %v3135 = vrot.slane %v3122, 4
  %v3137 = vtanh.pop %v3135
  %v3138 = vrot.slane %v3122, 6
  %v3140 = vmul.f32 %v3138, 0.5
  %v3141 = vtanh.pop %v3140
  %v3142 = vadd.f32 %v3141, 1.0
  %v3143 = vmul.f32 %v3142, 0.5
  %v3144 = vmul.f32 %v3134, %v3123
  %v3145 = vmul.f32 %v3127, %v3137
  %v3146 = vadd.f32 %v3144, %v3145
  %v3147 = vtanh.pop %v3146
  %v3148 = vmul.f32 %v3143, %v3147
  %s3149 = scalar_lea.vmem %s47, 16
  %v3150 = vld [vmem:[%s3149] sm:$0xff]
  %v3155 = vcombine.low %v3023, %v3025
  %v3156 = vcombine.low %v3094, %v3096
  %v3158 = vunpack.c.l.s4 1983009808
  %v3159 = vunpack.c.0.s8 %v3158
  %v3160 = vlaneseq
  %v3161 = vshrl.u32 %v3160, 7
  %v3162 = vsub.s32 %v3159, %v3161
  %v3163 = vrot.slane %v3155, %v3162
  %v3165 = vunpack.c.l.s4 1983009808
  %v3166 = vunpack.c.0.s8 %v3165
  %v3167 = vlaneseq
  %v3168 = vshrl.u32 %v3167, 7
  %v3169 = vsub.s32 %v3166, %v3168
  %v3170 = vrot.slane %v3156, %v3169
  %v3171 = vcombine.low %v3163, %v3170
  %v3173 = vadd.f32 %v3150, %v3171
  %v3174 = vld [vmem:[#allocation5] sm:$0x3]
  %v3175 = vmul.f32 %v3173, 0.5
  %v3176 = vtanh.pop %v3175
  %v3177 = vadd.f32 %v3176, 1.0
  %v3178 = vmul.f32 %v3177, 0.5
  %v3180 = vrot.slane %v3173, 2
  %v3182 = vmul.f32 %v3180, 0.5
  %v3183 = vtanh.pop %v3182
  %v3184 = vadd.f32 %v3183, 1.0
  %v3185 = vmul.f32 %v3184, 0.5
  %v3186 = vrot.slane %v3173, 4
  %v3188 = vtanh.pop %v3186
  %v3189 = vrot.slane %v3173, 6
  %v3191 = vmul.f32 %v3189, 0.5
  %v3192 = vtanh.pop %v3191
  %v3193 = vadd.f32 %v3192, 1.0
  %v3194 = vmul.f32 %v3193, 0.5
  %v3195 = vmul.f32 %v3185, %v3174
  %v3196 = vmul.f32 %v3178, %v3188
  %v3197 = vadd.f32 %v3195, %v3196
  %v3198 = vtanh.pop %v3197
  %v3199 = vmul.f32 %v3194, %v3198
  %3200 = vst [vmem:[#allocation2] sm:$0x3] %v3148
  %3201 = vst [vmem:[#allocation3] sm:$0x3] %v3146
  %3202 = vst [vmem:[#allocation4] sm:$0x3] %v3199
  %3203 = vst [vmem:[#allocation5] sm:$0x3] %v3197
  %s3204 = scalar_lea.vmem %s4, 10
  %3205 = vst [vmem:[%s3204] sm:$0x3] %v3148
  %s3206 = scalar_lea.vmem %s55, 4
  %3207 = vst [vmem:[%s3206] sm:$0x3] %v3199
  %v3208 = vld [vmem:[#allocation2] sm:$0x3]
  %v3209 = vld [vmem:[%s2] sm:$0xff]
  %v3210 = vld [vmem:[%s2 + $0x8] sm:$0xff]
  %v3211 = vld [vmem:[%s2 + $0x10] sm:$0xff]
  %v3212 = vld [vmem:[%s2 + $0x18] sm:$0xff]
  %v3213 = vld [vmem:[%s2 + $0x20] sm:$0xff]
  %v3214 = vld [vmem:[%s2 + $0x28] sm:$0xff]
  %v3215 = vld [vmem:[%s2 + $0x30] sm:$0xff]
  %v3216 = vld [vmem:[%s2 + $0x38] sm:$0xff]
  %v3217 = vld [vmem:[%s2 + $0x40] sm:$0xff]
  %v3218 = vld [vmem:[%s2 + $0x48] sm:$0xff]
  %v3219 = vld [vmem:[%s2 + $0x50] sm:$0xff]
  %v3220 = vld [vmem:[%s2 + $0x58] sm:$0xff]
  %v3221 = vld [vmem:[%s2 + $0x60] sm:$0xff]
  %v3222 = vld [vmem:[%s2 + $0x68] sm:$0xff]
  %v3223 = vld [vmem:[%s2 + $0x70] sm:$0xff]
  %v3224 = vld [vmem:[%s2 + $0x78] sm:$0xff]
  %v3225 = vld [vmem:[%s2 + $0x80] sm:$0xff]
  %v3226 = vld [vmem:[%s2 + $0x88] sm:$0xff]
  %v3227 = vld [vmem:[%s2 + $0x90] sm:$0xff]
  %v3228 = vld [vmem:[%s2 + $0x98] sm:$0xff]
  %v3229 = vld [vmem:[%s2 + $0xa0] sm:$0xff]
  %v3230 = vld [vmem:[%s2 + $0xa8] sm:$0xff]
  %v3231 = vld [vmem:[%s2 + $0xb0] sm:$0xff]
  %v3232 = vld [vmem:[%s2 + $0xb8] sm:$0xff]
  %v3233 = vld [vmem:[%s2 + $0xc0] sm:$0xff]
  %v3234 = vld [vmem:[%s2 + $0xc8] sm:$0xff]
  %v3235 = vld [vmem:[%s2 + $0xd0] sm:$0xff]
  %v3236 = vld [vmem:[%s2 + $0xd8] sm:$0xff]
  %v3237 = vld [vmem:[%s2 + $0xe0] sm:$0xff]
  %v3238 = vld [vmem:[%s2 + $0xe8] sm:$0xff]
  %v3239 = vld [vmem:[%s2 + $0xf0] sm:$0xff]
  %v3240 = vld [vmem:[%s2 + $0xf8] sm:$0xff]
  %v3241 = vld [vmem:[%s2 + $0x100] sm:$0xff]
  %v3242 = vld [vmem:[%s2 + $0x108] sm:$0xff]
  %v3243 = vld [vmem:[%s2 + $0x110] sm:$0xff]
  %v3244 = vld [vmem:[%s2 + $0x118] sm:$0xff]
  %v3245 = vld [vmem:[%s2 + $0x120] sm:$0xff]
  %v3246 = vld [vmem:[%s2 + $0x128] sm:$0xff]
  %v3247 = vld [vmem:[%s2 + $0x130] sm:$0xff]
  %v3248 = vld [vmem:[%s2 + $0x138] sm:$0xff]
  %v3249 = vld [vmem:[%s2 + $0x140] sm:$0xff]
  %v3250 = vld [vmem:[%s2 + $0x148] sm:$0xff]
  %v3251 = vld [vmem:[%s2 + $0x150] sm:$0xff]
  %v3252 = vld [vmem:[%s2 + $0x158] sm:$0xff]
  %v3253 = vld [vmem:[%s2 + $0x160] sm:$0xff]
  %v3254 = vld [vmem:[%s2 + $0x168] sm:$0xff]
  %v3255 = vld [vmem:[%s2 + $0x170] sm:$0xff]
  %v3256 = vld [vmem:[%s2 + $0x178] sm:$0xff]
  %v3257 = vld [vmem:[%s2 + $0x180] sm:$0xff]
  %v3258 = vld [vmem:[%s2 + $0x188] sm:$0xff]
  %v3259 = vld [vmem:[%s2 + $0x190] sm:$0xff]
  %v3260 = vld [vmem:[%s2 + $0x198] sm:$0xff]
  %v3261 = vld [vmem:[%s2 + $0x1a0] sm:$0xff]
  %v3262 = vld [vmem:[%s2 + $0x1a8] sm:$0xff]
  %v3263 = vld [vmem:[%s2 + $0x1b0] sm:$0xff]
  %v3264 = vld [vmem:[%s2 + $0x1b8] sm:$0xff]
  %v3265 = vld [vmem:[%s2 + $0x1c0] sm:$0xff]
  %v3266 = vld [vmem:[%s2 + $0x1c8] sm:$0xff]
  %v3267 = vld [vmem:[%s2 + $0x1d0] sm:$0xff]
  %v3268 = vld [vmem:[%s2 + $0x1d8] sm:$0xff]
  %v3269 = vld [vmem:[%s2 + $0x1e0] sm:$0xff]
  %v3270 = vld [vmem:[%s2 + $0x1e8] sm:$0xff]
  %v3271 = vld [vmem:[%s2 + $0x1f0] sm:$0xff]
  %v3272 = vld [vmem:[%s2 + $0x1f8] sm:$0xff]
  %3273 = vmatprep.subr.mxu0 %v3270
  %3274 = vmatpush1.msra.mxu0 %v3269
  %3275 = vmatprep.subr.mxu0 %v3266
  %3276 = vmatpush1.msra.mxu0 %v3265
  %3277 = vmatprep.subr.mxu0 %v3262
  %3278 = vmatpush1.msra.mxu0 %v3261
  %3279 = vmatprep.subr.mxu0 %v3258
  %3280 = vmatpush1.msra.mxu0 %v3257
  %3281 = vmatprep.subr.mxu0 %v3254
  %3282 = vmatpush1.msra.mxu0 %v3253
  %3283 = vmatprep.subr.mxu0 %v3250
  %3284 = vmatpush1.msra.mxu0 %v3249
  %3285 = vmatprep.subr.mxu0 %v3246
  %3286 = vmatpush1.msra.mxu0 %v3245
  %3287 = vmatprep.subr.mxu0 %v3242
  %3288 = vmatpush1.msra.mxu0 %v3241
  %3289 = vmatprep.subr.mxu0 %v3238
  %3290 = vmatpush1.msra.mxu0 %v3237
  %3291 = vmatprep.subr.mxu0 %v3234
  %3292 = vmatpush1.msra.mxu0 %v3233
  %3293 = vmatprep.subr.mxu0 %v3230
  %3294 = vmatpush1.msra.mxu0 %v3229
  %3295 = vmatprep.subr.mxu0 %v3226
  %3296 = vmatpush1.msra.mxu0 %v3225
  %3297 = vmatprep.subr.mxu0 %v3222
  %3298 = vmatpush1.msra.mxu0 %v3221
  %3299 = vmatprep.subr.mxu0 %v3218
  %3300 = vmatpush1.msra.mxu0 %v3217
  %3301 = vmatprep.subr.mxu0 %v3214
  %3302 = vmatpush1.msra.mxu0 %v3213
  %3303 = vmatprep.subr.mxu0 %v3210
  %3304 = vmatpush1.msra.mxu0 %v3209
  %3305 = vmatprep.subr.mxu0 0.0
  %3306 = vmatpush2.msra.mxu0 0.0
  %3307 = vmatprep.subr.mxu0 0.0
  %3308 = vmatpush2.msra.mxu0 0.0
  %3309 = vmatprep.subr.mxu0 0.0
  %3310 = vmatpush2.msra.mxu0 0.0
  %3311 = vmatprep.subr.mxu0 0.0
  %3312 = vmatpush2.msra.mxu0 0.0
  %3313 = vmatprep.subr.mxu0 0.0
  %3314 = vmatpush2.msra.mxu0 0.0
  %3315 = vmatprep.subr.mxu0 0.0
  %3316 = vmatpush2.msra.mxu0 0.0
  %3317 = vmatprep.subr.mxu0 0.0
  %3318 = vmatpush2.msra.mxu0 0.0
  %3319 = vmatprep.subr.mxu0 0.0
  %3320 = vmatpush2.msra.mxu0 0.0
  %3321 = vmatprep.subr.mxu0 0.0
  %3322 = vmatpush2.msra.mxu0 0.0
  %3323 = vmatprep.subr.mxu0 0.0
  %3324 = vmatpush2.msra.mxu0 0.0
  %3325 = vmatprep.subr.mxu0 0.0
  %3326 = vmatpush2.msra.mxu0 0.0
  %3327 = vmatprep.subr.mxu0 0.0
  %3328 = vmatpush2.msra.mxu0 0.0
  %3329 = vmatprep.subr.mxu0 0.0
  %3330 = vmatpush2.msra.mxu0 0.0
  %3331 = vmatprep.subr.mxu0 0.0
  %3332 = vmatpush2.msra.mxu0 0.0
  %3333 = vmatprep.subr.mxu0 0.0
  %3334 = vmatpush2.msra.mxu0 0.0
  %3335 = vmatprep.subr.mxu0 0.0
  %3336 = vmatpush2.msra.mxu0 0.0
  %3337 = vmatprep.mubr.f32.mxu0 0.0
  %3338 = vmatmul.mubr.f32.gmra.mxu0 %v3208
  %v3339 = vpop.f32.mrf.mxu0
  %v3340 = vadd.f32 0.0, %v3339
  %v3341 = vpop.f32.mrf.mxu0
  %v3342 = vadd.f32 0.0, %v3341
  %3343 = vdwg.mxu0
  %3344 = vmatprep.subr.mxu0 %v3272
  %3345 = vmatpush1.msra.mxu0 %v3271
  %3346 = vmatprep.subr.mxu0 %v3268
  %3347 = vmatpush1.msra.mxu0 %v3267
  %3348 = vmatprep.subr.mxu0 %v3264
  %3349 = vmatpush1.msra.mxu0 %v3263
  %3350 = vmatprep.subr.mxu0 %v3260
  %3351 = vmatpush1.msra.mxu0 %v3259
  %3352 = vmatprep.subr.mxu0 %v3256
  %3353 = vmatpush1.msra.mxu0 %v3255
  %3354 = vmatprep.subr.mxu0 %v3252
  %3355 = vmatpush1.msra.mxu0 %v3251
  %3356 = vmatprep.subr.mxu0 %v3248
  %3357 = vmatpush1.msra.mxu0 %v3247
  %3358 = vmatprep.subr.mxu0 %v3244
  %3359 = vmatpush1.msra.mxu0 %v3243
  %3360 = vmatprep.subr.mxu0 %v3240
  %3361 = vmatpush1.msra.mxu0 %v3239
  %3362 = vmatprep.subr.mxu0 %v3236
  %3363 = vmatpush1.msra.mxu0 %v3235
  %3364 = vmatprep.subr.mxu0 %v3232
  %3365 = vmatpush1.msra.mxu0 %v3231
  %3366 = vmatprep.subr.mxu0 %v3228
  %3367 = vmatpush1.msra.mxu0 %v3227
  %3368 = vmatprep.subr.mxu0 %v3224
  %3369 = vmatpush1.msra.mxu0 %v3223
  %3370 = vmatprep.subr.mxu0 %v3220
  %3371 = vmatpush1.msra.mxu0 %v3219
  %3372 = vmatprep.subr.mxu0 %v3216
  %3373 = vmatpush1.msra.mxu0 %v3215
  %3374 = vmatprep.subr.mxu0 %v3212
  %3375 = vmatpush1.msra.mxu0 %v3211
  %3376 = vmatprep.subr.mxu0 0.0
  %3377 = vmatpush2.msra.mxu0 0.0
  %3378 = vmatprep.subr.mxu0 0.0
  %3379 = vmatpush2.msra.mxu0 0.0
  %3380 = vmatprep.subr.mxu0 0.0
  %3381 = vmatpush2.msra.mxu0 0.0
  %3382 = vmatprep.subr.mxu0 0.0
  %3383 = vmatpush2.msra.mxu0 0.0
  %3384 = vmatprep.subr.mxu0 0.0
  %3385 = vmatpush2.msra.mxu0 0.0
  %3386 = vmatprep.subr.mxu0 0.0
  %3387 = vmatpush2.msra.mxu0 0.0
  %3388 = vmatprep.subr.mxu0 0.0
  %3389 = vmatpush2.msra.mxu0 0.0
  %3390 = vmatprep.subr.mxu0 0.0
  %3391 = vmatpush2.msra.mxu0 0.0
  %3392 = vmatprep.subr.mxu0 0.0
  %3393 = vmatpush2.msra.mxu0 0.0
  %3394 = vmatprep.subr.mxu0 0.0
  %3395 = vmatpush2.msra.mxu0 0.0
  %3396 = vmatprep.subr.mxu0 0.0
  %3397 = vmatpush2.msra.mxu0 0.0
  %3398 = vmatprep.subr.mxu0 0.0
  %3399 = vmatpush2.msra.mxu0 0.0
  %3400 = vmatprep.subr.mxu0 0.0
  %3401 = vmatpush2.msra.mxu0 0.0
  %3402 = vmatprep.subr.mxu0 0.0
  %3403 = vmatpush2.msra.mxu0 0.0
  %3404 = vmatprep.subr.mxu0 0.0
  %3405 = vmatpush2.msra.mxu0 0.0
  %3406 = vmatprep.subr.mxu0 0.0
  %3407 = vmatpush2.msra.mxu0 0.0
  %3408 = vmatprep.mubr.f32.mxu0 0.0
  %3409 = vmatmul.mubr.f32.gmra.mxu0 %v3208
  %v3410 = vpop.f32.mrf.mxu0
  %v3411 = vadd.f32 0.0, %v3410
  %v3412 = vpop.f32.mrf.mxu0
  %v3413 = vadd.f32 0.0, %v3412
  %3414 = vdwg.mxu0
  %v3415 = vld [vmem:[#allocation4] sm:$0x3]
  %v3416 = vld [vmem:[%s3] sm:$0xff]
  %v3417 = vld [vmem:[%s3 + $0x8] sm:$0xff]
  %v3418 = vld [vmem:[%s3 + $0x10] sm:$0xff]
  %v3419 = vld [vmem:[%s3 + $0x18] sm:$0xff]
  %v3420 = vld [vmem:[%s3 + $0x20] sm:$0xff]
  %v3421 = vld [vmem:[%s3 + $0x28] sm:$0xff]
  %v3422 = vld [vmem:[%s3 + $0x30] sm:$0xff]
  %v3423 = vld [vmem:[%s3 + $0x38] sm:$0xff]
  %v3424 = vld [vmem:[%s3 + $0x40] sm:$0xff]
  %v3425 = vld [vmem:[%s3 + $0x48] sm:$0xff]
  %v3426 = vld [vmem:[%s3 + $0x50] sm:$0xff]
  %v3427 = vld [vmem:[%s3 + $0x58] sm:$0xff]
  %v3428 = vld [vmem:[%s3 + $0x60] sm:$0xff]
  %v3429 = vld [vmem:[%s3 + $0x68] sm:$0xff]
  %v3430 = vld [vmem:[%s3 + $0x70] sm:$0xff]
  %v3431 = vld [vmem:[%s3 + $0x78] sm:$0xff]
  %v3432 = vld [vmem:[%s3 + $0x80] sm:$0xff]
  %v3433 = vld [vmem:[%s3 + $0x88] sm:$0xff]
  %v3434 = vld [vmem:[%s3 + $0x90] sm:$0xff]
  %v3435 = vld [vmem:[%s3 + $0x98] sm:$0xff]
  %v3436 = vld [vmem:[%s3 + $0xa0] sm:$0xff]
  %v3437 = vld [vmem:[%s3 + $0xa8] sm:$0xff]
  %v3438 = vld [vmem:[%s3 + $0xb0] sm:$0xff]
  %v3439 = vld [vmem:[%s3 + $0xb8] sm:$0xff]
  %v3440 = vld [vmem:[%s3 + $0xc0] sm:$0xff]
  %v3441 = vld [vmem:[%s3 + $0xc8] sm:$0xff]
  %v3442 = vld [vmem:[%s3 + $0xd0] sm:$0xff]
  %v3443 = vld [vmem:[%s3 + $0xd8] sm:$0xff]
  %v3444 = vld [vmem:[%s3 + $0xe0] sm:$0xff]
  %v3445 = vld [vmem:[%s3 + $0xe8] sm:$0xff]
  %v3446 = vld [vmem:[%s3 + $0xf0] sm:$0xff]
  %v3447 = vld [vmem:[%s3 + $0xf8] sm:$0xff]
  %v3448 = vld [vmem:[%s3 + $0x100] sm:$0xff]
  %v3449 = vld [vmem:[%s3 + $0x108] sm:$0xff]
  %v3450 = vld [vmem:[%s3 + $0x110] sm:$0xff]
  %v3451 = vld [vmem:[%s3 + $0x118] sm:$0xff]
  %v3452 = vld [vmem:[%s3 + $0x120] sm:$0xff]
  %v3453 = vld [vmem:[%s3 + $0x128] sm:$0xff]
  %v3454 = vld [vmem:[%s3 + $0x130] sm:$0xff]
  %v3455 = vld [vmem:[%s3 + $0x138] sm:$0xff]
  %v3456 = vld [vmem:[%s3 + $0x140] sm:$0xff]
  %v3457 = vld [vmem:[%s3 + $0x148] sm:$0xff]
  %v3458 = vld [vmem:[%s3 + $0x150] sm:$0xff]
  %v3459 = vld [vmem:[%s3 + $0x158] sm:$0xff]
  %v3460 = vld [vmem:[%s3 + $0x160] sm:$0xff]
  %v3461 = vld [vmem:[%s3 + $0x168] sm:$0xff]
  %v3462 = vld [vmem:[%s3 + $0x170] sm:$0xff]
  %v3463 = vld [vmem:[%s3 + $0x178] sm:$0xff]
  %v3464 = vld [vmem:[%s3 + $0x180] sm:$0xff]
  %v3465 = vld [vmem:[%s3 + $0x188] sm:$0xff]
  %v3466 = vld [vmem:[%s3 + $0x190] sm:$0xff]
  %v3467 = vld [vmem:[%s3 + $0x198] sm:$0xff]
  %v3468 = vld [vmem:[%s3 + $0x1a0] sm:$0xff]
  %v3469 = vld [vmem:[%s3 + $0x1a8] sm:$0xff]
  %v3470 = vld [vmem:[%s3 + $0x1b0] sm:$0xff]
  %v3471 = vld [vmem:[%s3 + $0x1b8] sm:$0xff]
  %v3472 = vld [vmem:[%s3 + $0x1c0] sm:$0xff]
  %v3473 = vld [vmem:[%s3 + $0x1c8] sm:$0xff]
  %v3474 = vld [vmem:[%s3 + $0x1d0] sm:$0xff]
  %v3475 = vld [vmem:[%s3 + $0x1d8] sm:$0xff]
  %v3476 = vld [vmem:[%s3 + $0x1e0] sm:$0xff]
  %v3477 = vld [vmem:[%s3 + $0x1e8] sm:$0xff]
  %v3478 = vld [vmem:[%s3 + $0x1f0] sm:$0xff]
  %v3479 = vld [vmem:[%s3 + $0x1f8] sm:$0xff]
  %3480 = vmatprep.subr.mxu0 %v3477
  %3481 = vmatpush1.msra.mxu0 %v3476
  %3482 = vmatprep.subr.mxu0 %v3473
  %3483 = vmatpush1.msra.mxu0 %v3472
  %3484 = vmatprep.subr.mxu0 %v3469
  %3485 = vmatpush1.msra.mxu0 %v3468
  %3486 = vmatprep.subr.mxu0 %v3465
  %3487 = vmatpush1.msra.mxu0 %v3464
  %3488 = vmatprep.subr.mxu0 %v3461
  %3489 = vmatpush1.msra.mxu0 %v3460
  %3490 = vmatprep.subr.mxu0 %v3457
  %3491 = vmatpush1.msra.mxu0 %v3456
  %3492 = vmatprep.subr.mxu0 %v3453
  %3493 = vmatpush1.msra.mxu0 %v3452
  %3494 = vmatprep.subr.mxu0 %v3449
  %3495 = vmatpush1.msra.mxu0 %v3448
  %3496 = vmatprep.subr.mxu0 %v3445
  %3497 = vmatpush1.msra.mxu0 %v3444
  %3498 = vmatprep.subr.mxu0 %v3441
  %3499 = vmatpush1.msra.mxu0 %v3440
  %3500 = vmatprep.subr.mxu0 %v3437
  %3501 = vmatpush1.msra.mxu0 %v3436
  %3502 = vmatprep.subr.mxu0 %v3433
  %3503 = vmatpush1.msra.mxu0 %v3432
  %3504 = vmatprep.subr.mxu0 %v3429
  %3505 = vmatpush1.msra.mxu0 %v3428
  %3506 = vmatprep.subr.mxu0 %v3425
  %3507 = vmatpush1.msra.mxu0 %v3424
  %3508 = vmatprep.subr.mxu0 %v3421
  %3509 = vmatpush1.msra.mxu0 %v3420
  %3510 = vmatprep.subr.mxu0 %v3417
  %3511 = vmatpush1.msra.mxu0 %v3416
  %3512 = vmatprep.subr.mxu0 0.0
  %3513 = vmatpush2.msra.mxu0 0.0
  %3514 = vmatprep.subr.mxu0 0.0
  %3515 = vmatpush2.msra.mxu0 0.0
  %3516 = vmatprep.subr.mxu0 0.0
  %3517 = vmatpush2.msra.mxu0 0.0
  %3518 = vmatprep.subr.mxu0 0.0
  %3519 = vmatpush2.msra.mxu0 0.0
  %3520 = vmatprep.subr.mxu0 0.0
  %3521 = vmatpush2.msra.mxu0 0.0
  %3522 = vmatprep.subr.mxu0 0.0
  %3523 = vmatpush2.msra.mxu0 0.0
  %3524 = vmatprep.subr.mxu0 0.0
  %3525 = vmatpush2.msra.mxu0 0.0
  %3526 = vmatprep.subr.mxu0 0.0
  %3527 = vmatpush2.msra.mxu0 0.0
  %3528 = vmatprep.subr.mxu0 0.0
  %3529 = vmatpush2.msra.mxu0 0.0
  %3530 = vmatprep.subr.mxu0 0.0
  %3531 = vmatpush2.msra.mxu0 0.0
  %3532 = vmatprep.subr.mxu0 0.0
  %3533 = vmatpush2.msra.mxu0 0.0
  %3534 = vmatprep.subr.mxu0 0.0
  %3535 = vmatpush2.msra.mxu0 0.0
  %3536 = vmatprep.subr.mxu0 0.0
  %3537 = vmatpush2.msra.mxu0 0.0
  %3538 = vmatprep.subr.mxu0 0.0
  %3539 = vmatpush2.msra.mxu0 0.0
  %3540 = vmatprep.subr.mxu0 0.0
  %3541 = vmatpush2.msra.mxu0 0.0
  %3542 = vmatprep.subr.mxu0 0.0
  %3543 = vmatpush2.msra.mxu0 0.0
  %3544 = vmatprep.mubr.f32.mxu0 0.0
  %3545 = vmatmul.mubr.f32.gmra.mxu0 %v3415
  %v3546 = vpop.f32.mrf.mxu0
  %v3547 = vadd.f32 0.0, %v3546
  %v3548 = vpop.f32.mrf.mxu0
  %v3549 = vadd.f32 0.0, %v3548
  %3550 = vdwg.mxu0
  %3551 = vmatprep.subr.mxu0 %v3479
  %3552 = vmatpush1.msra.mxu0 %v3478
  %3553 = vmatprep.subr.mxu0 %v3475
  %3554 = vmatpush1.msra.mxu0 %v3474
  %3555 = vmatprep.subr.mxu0 %v3471
  %3556 = vmatpush1.msra.mxu0 %v3470
  %3557 = vmatprep.subr.mxu0 %v3467
  %3558 = vmatpush1.msra.mxu0 %v3466
  %3559 = vmatprep.subr.mxu0 %v3463
  %3560 = vmatpush1.msra.mxu0 %v3462
  %3561 = vmatprep.subr.mxu0 %v3459
  %3562 = vmatpush1.msra.mxu0 %v3458
  %3563 = vmatprep.subr.mxu0 %v3455
  %3564 = vmatpush1.msra.mxu0 %v3454
  %3565 = vmatprep.subr.mxu0 %v3451
  %3566 = vmatpush1.msra.mxu0 %v3450
  %3567 = vmatprep.subr.mxu0 %v3447
  %3568 = vmatpush1.msra.mxu0 %v3446
  %3569 = vmatprep.subr.mxu0 %v3443
  %3570 = vmatpush1.msra.mxu0 %v3442
  %3571 = vmatprep.subr.mxu0 %v3439
  %3572 = vmatpush1.msra.mxu0 %v3438
  %3573 = vmatprep.subr.mxu0 %v3435
  %3574 = vmatpush1.msra.mxu0 %v3434
  %3575 = vmatprep.subr.mxu0 %v3431
  %3576 = vmatpush1.msra.mxu0 %v3430
  %3577 = vmatprep.subr.mxu0 %v3427
  %3578 = vmatpush1.msra.mxu0 %v3426
  %3579 = vmatprep.subr.mxu0 %v3423
  %3580 = vmatpush1.msra.mxu0 %v3422
  %3581 = vmatprep.subr.mxu0 %v3419
  %3582 = vmatpush1.msra.mxu0 %v3418
  %3583 = vmatprep.subr.mxu0 0.0
  %3584 = vmatpush2.msra.mxu0 0.0
  %3585 = vmatprep.subr.mxu0 0.0
  %3586 = vmatpush2.msra.mxu0 0.0
  %3587 = vmatprep.subr.mxu0 0.0
  %3588 = vmatpush2.msra.mxu0 0.0
  %3589 = vmatprep.subr.mxu0 0.0
  %3590 = vmatpush2.msra.mxu0 0.0
  %3591 = vmatprep.subr.mxu0 0.0
  %3592 = vmatpush2.msra.mxu0 0.0
  %3593 = vmatprep.subr.mxu0 0.0
  %3594 = vmatpush2.msra.mxu0 0.0
  %3595 = vmatprep.subr.mxu0 0.0
  %3596 = vmatpush2.msra.mxu0 0.0
  %3597 = vmatprep.subr.mxu0 0.0
  %3598 = vmatpush2.msra.mxu0 0.0
  %3599 = vmatprep.subr.mxu0 0.0
  %3600 = vmatpush2.msra.mxu0 0.0
  %3601 = vmatprep.subr.mxu0 0.0
  %3602 = vmatpush2.msra.mxu0 0.0
  %3603 = vmatprep.subr.mxu0 0.0
  %3604 = vmatpush2.msra.mxu0 0.0
  %3605 = vmatprep.subr.mxu0 0.0
  %3606 = vmatpush2.msra.mxu0 0.0
  %3607 = vmatprep.subr.mxu0 0.0
  %3608 = vmatpush2.msra.mxu0 0.0
  %3609 = vmatprep.subr.mxu0 0.0
  %3610 = vmatpush2.msra.mxu0 0.0
  %3611 = vmatprep.subr.mxu0 0.0
  %3612 = vmatpush2.msra.mxu0 0.0
  %3613 = vmatprep.subr.mxu0 0.0
  %3614 = vmatpush2.msra.mxu0 0.0
  %3615 = vmatprep.mubr.f32.mxu0 0.0
  %3616 = vmatmul.mubr.f32.gmra.mxu0 %v3415
  %v3617 = vpop.f32.mrf.mxu0
  %v3618 = vadd.f32 0.0, %v3617
  %v3619 = vpop.f32.mrf.mxu0
  %v3620 = vadd.f32 0.0, %v3619
  %3621 = vdwg.mxu0
  %s3622 = scalar_lea.vmem %s0, 48
  %v3623 = vld [vmem:[%s3622] sm:$0xff]
  %v3628 = vcombine.low %v3340, %v3342
  %v3629 = vcombine.low %v3411, %v3413
  %v3631 = vunpack.c.l.s4 1983009808
  %v3632 = vunpack.c.0.s8 %v3631
  %v3633 = vlaneseq
  %v3634 = vshrl.u32 %v3633, 7
  %v3635 = vsub.s32 %v3632, %v3634
  %v3636 = vrot.slane %v3628, %v3635
  %v3638 = vunpack.c.l.s4 1983009808
  %v3639 = vunpack.c.0.s8 %v3638
  %v3640 = vlaneseq
  %v3641 = vshrl.u32 %v3640, 7
  %v3642 = vsub.s32 %v3639, %v3641
  %v3643 = vrot.slane %v3629, %v3642
  %v3644 = vcombine.low %v3636, %v3643
  %v3646 = vadd.f32 %v3623, %v3644
  %v3647 = vld [vmem:[#allocation3] sm:$0x3]
  %v3648 = vmul.f32 %v3646, 0.5
  %v3649 = vtanh.pop %v3648
  %v3650 = vadd.f32 %v3649, 1.0
  %v3651 = vmul.f32 %v3650, 0.5
  %v3653 = vrot.slane %v3646, 2
  %v3655 = vmul.f32 %v3653, 0.5
  %v3656 = vtanh.pop %v3655
  %v3657 = vadd.f32 %v3656, 1.0
  %v3658 = vmul.f32 %v3657, 0.5
  %v3659 = vrot.slane %v3646, 4
  %v3661 = vtanh.pop %v3659
  %v3662 = vrot.slane %v3646, 6
  %v3664 = vmul.f32 %v3662, 0.5
  %v3665 = vtanh.pop %v3664
  %v3666 = vadd.f32 %v3665, 1.0
  %v3667 = vmul.f32 %v3666, 0.5
  %v3668 = vmul.f32 %v3658, %v3647
  %v3669 = vmul.f32 %v3651, %v3661
  %v3670 = vadd.f32 %v3668, %v3669
  %v3671 = vtanh.pop %v3670
  %v3672 = vmul.f32 %v3667, %v3671
  %s3673 = scalar_lea.vmem %s47, 8
  %v3674 = vld [vmem:[%s3673] sm:$0xff]
  %v3679 = vcombine.low %v3547, %v3549
  %v3680 = vcombine.low %v3618, %v3620
  %v3682 = vunpack.c.l.s4 1983009808
  %v3683 = vunpack.c.0.s8 %v3682
  %v3684 = vlaneseq
  %v3685 = vshrl.u32 %v3684, 7
  %v3686 = vsub.s32 %v3683, %v3685
  %v3687 = vrot.slane %v3679, %v3686
  %v3689 = vunpack.c.l.s4 1983009808
  %v3690 = vunpack.c.0.s8 %v3689
  %v3691 = vlaneseq
  %v3692 = vshrl.u32 %v3691, 7
  %v3693 = vsub.s32 %v3690, %v3692
  %v3694 = vrot.slane %v3680, %v3693
  %v3695 = vcombine.low %v3687, %v3694
  %v3697 = vadd.f32 %v3674, %v3695
  %v3698 = vld [vmem:[#allocation5] sm:$0x3]
  %v3699 = vmul.f32 %v3697, 0.5
  %v3700 = vtanh.pop %v3699
  %v3701 = vadd.f32 %v3700, 1.0
  %v3702 = vmul.f32 %v3701, 0.5
  %v3704 = vrot.slane %v3697, 2
  %v3706 = vmul.f32 %v3704, 0.5
  %v3707 = vtanh.pop %v3706
  %v3708 = vadd.f32 %v3707, 1.0
  %v3709 = vmul.f32 %v3708, 0.5
  %v3710 = vrot.slane %v3697, 4
  %v3712 = vtanh.pop %v3710
  %v3713 = vrot.slane %v3697, 6
  %v3715 = vmul.f32 %v3713, 0.5
  %v3716 = vtanh.pop %v3715
  %v3717 = vadd.f32 %v3716, 1.0
  %v3718 = vmul.f32 %v3717, 0.5
  %v3719 = vmul.f32 %v3709, %v3698
  %v3720 = vmul.f32 %v3702, %v3712
  %v3721 = vadd.f32 %v3719, %v3720
  %v3722 = vtanh.pop %v3721
  %v3723 = vmul.f32 %v3718, %v3722
  %3724 = vst [vmem:[#allocation2] sm:$0x3] %v3672
  %3725 = vst [vmem:[#allocation3] sm:$0x3] %v3670
  %3726 = vst [vmem:[#allocation4] sm:$0x3] %v3723
  %3727 = vst [vmem:[#allocation5] sm:$0x3] %v3721
  %s3728 = scalar_lea.vmem %s4, 12
  %3729 = vst [vmem:[%s3728] sm:$0x3] %v3672
  %s3730 = scalar_lea.vmem %s55, 2
  %3731 = vst [vmem:[%s3730] sm:$0x3] %v3723
  %v3732 = vld [vmem:[#allocation2] sm:$0x3]
  %v3733 = vld [vmem:[%s2] sm:$0xff]
  %v3734 = vld [vmem:[%s2 + $0x8] sm:$0xff]
  %v3735 = vld [vmem:[%s2 + $0x10] sm:$0xff]
  %v3736 = vld [vmem:[%s2 + $0x18] sm:$0xff]
  %v3737 = vld [vmem:[%s2 + $0x20] sm:$0xff]
  %v3738 = vld [vmem:[%s2 + $0x28] sm:$0xff]
  %v3739 = vld [vmem:[%s2 + $0x30] sm:$0xff]
  %v3740 = vld [vmem:[%s2 + $0x38] sm:$0xff]
  %v3741 = vld [vmem:[%s2 + $0x40] sm:$0xff]
  %v3742 = vld [vmem:[%s2 + $0x48] sm:$0xff]
  %v3743 = vld [vmem:[%s2 + $0x50] sm:$0xff]
  %v3744 = vld [vmem:[%s2 + $0x58] sm:$0xff]
  %v3745 = vld [vmem:[%s2 + $0x60] sm:$0xff]
  %v3746 = vld [vmem:[%s2 + $0x68] sm:$0xff]
  %v3747 = vld [vmem:[%s2 + $0x70] sm:$0xff]
  %v3748 = vld [vmem:[%s2 + $0x78] sm:$0xff]
  %v3749 = vld [vmem:[%s2 + $0x80] sm:$0xff]
  %v3750 = vld [vmem:[%s2 + $0x88] sm:$0xff]
  %v3751 = vld [vmem:[%s2 + $0x90] sm:$0xff]
  %v3752 = vld [vmem:[%s2 + $0x98] sm:$0xff]
  %v3753 = vld [vmem:[%s2 + $0xa0] sm:$0xff]
  %v3754 = vld [vmem:[%s2 + $0xa8] sm:$0xff]
  %v3755 = vld [vmem:[%s2 + $0xb0] sm:$0xff]
  %v3756 = vld [vmem:[%s2 + $0xb8] sm:$0xff]
  %v3757 = vld [vmem:[%s2 + $0xc0] sm:$0xff]
  %v3758 = vld [vmem:[%s2 + $0xc8] sm:$0xff]
  %v3759 = vld [vmem:[%s2 + $0xd0] sm:$0xff]
  %v3760 = vld [vmem:[%s2 + $0xd8] sm:$0xff]
  %v3761 = vld [vmem:[%s2 + $0xe0] sm:$0xff]
  %v3762 = vld [vmem:[%s2 + $0xe8] sm:$0xff]
  %v3763 = vld [vmem:[%s2 + $0xf0] sm:$0xff]
  %v3764 = vld [vmem:[%s2 + $0xf8] sm:$0xff]
  %v3765 = vld [vmem:[%s2 + $0x100] sm:$0xff]
  %v3766 = vld [vmem:[%s2 + $0x108] sm:$0xff]
  %v3767 = vld [vmem:[%s2 + $0x110] sm:$0xff]
  %v3768 = vld [vmem:[%s2 + $0x118] sm:$0xff]
  %v3769 = vld [vmem:[%s2 + $0x120] sm:$0xff]
  %v3770 = vld [vmem:[%s2 + $0x128] sm:$0xff]
  %v3771 = vld [vmem:[%s2 + $0x130] sm:$0xff]
  %v3772 = vld [vmem:[%s2 + $0x138] sm:$0xff]
  %v3773 = vld [vmem:[%s2 + $0x140] sm:$0xff]
  %v3774 = vld [vmem:[%s2 + $0x148] sm:$0xff]
  %v3775 = vld [vmem:[%s2 + $0x150] sm:$0xff]
  %v3776 = vld [vmem:[%s2 + $0x158] sm:$0xff]
  %v3777 = vld [vmem:[%s2 + $0x160] sm:$0xff]
  %v3778 = vld [vmem:[%s2 + $0x168] sm:$0xff]
  %v3779 = vld [vmem:[%s2 + $0x170] sm:$0xff]
  %v3780 = vld [vmem:[%s2 + $0x178] sm:$0xff]
  %v3781 = vld [vmem:[%s2 + $0x180] sm:$0xff]
  %v3782 = vld [vmem:[%s2 + $0x188] sm:$0xff]
  %v3783 = vld [vmem:[%s2 + $0x190] sm:$0xff]
  %v3784 = vld [vmem:[%s2 + $0x198] sm:$0xff]
  %v3785 = vld [vmem:[%s2 + $0x1a0] sm:$0xff]
  %v3786 = vld [vmem:[%s2 + $0x1a8] sm:$0xff]
  %v3787 = vld [vmem:[%s2 + $0x1b0] sm:$0xff]
  %v3788 = vld [vmem:[%s2 + $0x1b8] sm:$0xff]
  %v3789 = vld [vmem:[%s2 + $0x1c0] sm:$0xff]
  %v3790 = vld [vmem:[%s2 + $0x1c8] sm:$0xff]
  %v3791 = vld [vmem:[%s2 + $0x1d0] sm:$0xff]
  %v3792 = vld [vmem:[%s2 + $0x1d8] sm:$0xff]
  %v3793 = vld [vmem:[%s2 + $0x1e0] sm:$0xff]
  %v3794 = vld [vmem:[%s2 + $0x1e8] sm:$0xff]
  %v3795 = vld [vmem:[%s2 + $0x1f0] sm:$0xff]
  %v3796 = vld [vmem:[%s2 + $0x1f8] sm:$0xff]
  %3797 = vmatprep.subr.mxu0 %v3794
  %3798 = vmatpush1.msra.mxu0 %v3793
  %3799 = vmatprep.subr.mxu0 %v3790
  %3800 = vmatpush1.msra.mxu0 %v3789
  %3801 = vmatprep.subr.mxu0 %v3786
  %3802 = vmatpush1.msra.mxu0 %v3785
  %3803 = vmatprep.subr.mxu0 %v3782
  %3804 = vmatpush1.msra.mxu0 %v3781
  %3805 = vmatprep.subr.mxu0 %v3778
  %3806 = vmatpush1.msra.mxu0 %v3777
  %3807 = vmatprep.subr.mxu0 %v3774
  %3808 = vmatpush1.msra.mxu0 %v3773
  %3809 = vmatprep.subr.mxu0 %v3770
  %3810 = vmatpush1.msra.mxu0 %v3769
  %3811 = vmatprep.subr.mxu0 %v3766
  %3812 = vmatpush1.msra.mxu0 %v3765
  %3813 = vmatprep.subr.mxu0 %v3762
  %3814 = vmatpush1.msra.mxu0 %v3761
  %3815 = vmatprep.subr.mxu0 %v3758
  %3816 = vmatpush1.msra.mxu0 %v3757
  %3817 = vmatprep.subr.mxu0 %v3754
  %3818 = vmatpush1.msra.mxu0 %v3753
  %3819 = vmatprep.subr.mxu0 %v3750
  %3820 = vmatpush1.msra.mxu0 %v3749
  %3821 = vmatprep.subr.mxu0 %v3746
  %3822 = vmatpush1.msra.mxu0 %v3745
  %3823 = vmatprep.subr.mxu0 %v3742
  %3824 = vmatpush1.msra.mxu0 %v3741
  %3825 = vmatprep.subr.mxu0 %v3738
  %3826 = vmatpush1.msra.mxu0 %v3737
  %3827 = vmatprep.subr.mxu0 %v3734
  %3828 = vmatpush1.msra.mxu0 %v3733
  %3829 = vmatprep.subr.mxu0 0.0
  %3830 = vmatpush2.msra.mxu0 0.0
  %3831 = vmatprep.subr.mxu0 0.0
  %3832 = vmatpush2.msra.mxu0 0.0
  %3833 = vmatprep.subr.mxu0 0.0
  %3834 = vmatpush2.msra.mxu0 0.0
  %3835 = vmatprep.subr.mxu0 0.0
  %3836 = vmatpush2.msra.mxu0 0.0
  %3837 = vmatprep.subr.mxu0 0.0
  %3838 = vmatpush2.msra.mxu0 0.0
  %3839 = vmatprep.subr.mxu0 0.0
  %3840 = vmatpush2.msra.mxu0 0.0
  %3841 = vmatprep.subr.mxu0 0.0
  %3842 = vmatpush2.msra.mxu0 0.0
  %3843 = vmatprep.subr.mxu0 0.0
  %3844 = vmatpush2.msra.mxu0 0.0
  %3845 = vmatprep.subr.mxu0 0.0
  %3846 = vmatpush2.msra.mxu0 0.0
  %3847 = vmatprep.subr.mxu0 0.0
  %3848 = vmatpush2.msra.mxu0 0.0
  %3849 = vmatprep.subr.mxu0 0.0
  %3850 = vmatpush2.msra.mxu0 0.0
  %3851 = vmatprep.subr.mxu0 0.0
  %3852 = vmatpush2.msra.mxu0 0.0
  %3853 = vmatprep.subr.mxu0 0.0
  %3854 = vmatpush2.msra.mxu0 0.0
  %3855 = vmatprep.subr.mxu0 0.0
  %3856 = vmatpush2.msra.mxu0 0.0
  %3857 = vmatprep.subr.mxu0 0.0
  %3858 = vmatpush2.msra.mxu0 0.0
  %3859 = vmatprep.subr.mxu0 0.0
  %3860 = vmatpush2.msra.mxu0 0.0
  %3861 = vmatprep.mubr.f32.mxu0 0.0
  %3862 = vmatmul.mubr.f32.gmra.mxu0 %v3732
  %v3863 = vpop.f32.mrf.mxu0
  %v3864 = vadd.f32 0.0, %v3863
  %v3865 = vpop.f32.mrf.mxu0
  %v3866 = vadd.f32 0.0, %v3865
  %3867 = vdwg.mxu0
  %3868 = vmatprep.subr.mxu0 %v3796
  %3869 = vmatpush1.msra.mxu0 %v3795
  %3870 = vmatprep.subr.mxu0 %v3792
  %3871 = vmatpush1.msra.mxu0 %v3791
  %3872 = vmatprep.subr.mxu0 %v3788
  %3873 = vmatpush1.msra.mxu0 %v3787
  %3874 = vmatprep.subr.mxu0 %v3784
  %3875 = vmatpush1.msra.mxu0 %v3783
  %3876 = vmatprep.subr.mxu0 %v3780
  %3877 = vmatpush1.msra.mxu0 %v3779
  %3878 = vmatprep.subr.mxu0 %v3776
  %3879 = vmatpush1.msra.mxu0 %v3775
  %3880 = vmatprep.subr.mxu0 %v3772
  %3881 = vmatpush1.msra.mxu0 %v3771
  %3882 = vmatprep.subr.mxu0 %v3768
  %3883 = vmatpush1.msra.mxu0 %v3767
  %3884 = vmatprep.subr.mxu0 %v3764
  %3885 = vmatpush1.msra.mxu0 %v3763
  %3886 = vmatprep.subr.mxu0 %v3760
  %3887 = vmatpush1.msra.mxu0 %v3759
  %3888 = vmatprep.subr.mxu0 %v3756
  %3889 = vmatpush1.msra.mxu0 %v3755
  %3890 = vmatprep.subr.mxu0 %v3752
  %3891 = vmatpush1.msra.mxu0 %v3751
  %3892 = vmatprep.subr.mxu0 %v3748
  %3893 = vmatpush1.msra.mxu0 %v3747
  %3894 = vmatprep.subr.mxu0 %v3744
  %3895 = vmatpush1.msra.mxu0 %v3743
  %3896 = vmatprep.subr.mxu0 %v3740
  %3897 = vmatpush1.msra.mxu0 %v3739
  %3898 = vmatprep.subr.mxu0 %v3736
  %3899 = vmatpush1.msra.mxu0 %v3735
  %3900 = vmatprep.subr.mxu0 0.0
  %3901 = vmatpush2.msra.mxu0 0.0
  %3902 = vmatprep.subr.mxu0 0.0
  %3903 = vmatpush2.msra.mxu0 0.0
  %3904 = vmatprep.subr.mxu0 0.0
  %3905 = vmatpush2.msra.mxu0 0.0
  %3906 = vmatprep.subr.mxu0 0.0
  %3907 = vmatpush2.msra.mxu0 0.0
  %3908 = vmatprep.subr.mxu0 0.0
  %3909 = vmatpush2.msra.mxu0 0.0
  %3910 = vmatprep.subr.mxu0 0.0
  %3911 = vmatpush2.msra.mxu0 0.0
  %3912 = vmatprep.subr.mxu0 0.0
  %3913 = vmatpush2.msra.mxu0 0.0
  %3914 = vmatprep.subr.mxu0 0.0
  %3915 = vmatpush2.msra.mxu0 0.0
  %3916 = vmatprep.subr.mxu0 0.0
  %3917 = vmatpush2.msra.mxu0 0.0
  %3918 = vmatprep.subr.mxu0 0.0
  %3919 = vmatpush2.msra.mxu0 0.0
  %3920 = vmatprep.subr.mxu0 0.0
  %3921 = vmatpush2.msra.mxu0 0.0
  %3922 = vmatprep.subr.mxu0 0.0
  %3923 = vmatpush2.msra.mxu0 0.0
  %3924 = vmatprep.subr.mxu0 0.0
  %3925 = vmatpush2.msra.mxu0 0.0
  %3926 = vmatprep.subr.mxu0 0.0
  %3927 = vmatpush2.msra.mxu0 0.0
  %3928 = vmatprep.subr.mxu0 0.0
  %3929 = vmatpush2.msra.mxu0 0.0
  %3930 = vmatprep.subr.mxu0 0.0
  %3931 = vmatpush2.msra.mxu0 0.0
  %3932 = vmatprep.mubr.f32.mxu0 0.0
  %3933 = vmatmul.mubr.f32.gmra.mxu0 %v3732
  %v3934 = vpop.f32.mrf.mxu0
  %v3935 = vadd.f32 0.0, %v3934
  %v3936 = vpop.f32.mrf.mxu0
  %v3937 = vadd.f32 0.0, %v3936
  %3938 = vdwg.mxu0
  %v3939 = vld [vmem:[#allocation4] sm:$0x3]
  %v3940 = vld [vmem:[%s3] sm:$0xff]
  %v3941 = vld [vmem:[%s3 + $0x8] sm:$0xff]
  %v3942 = vld [vmem:[%s3 + $0x10] sm:$0xff]
  %v3943 = vld [vmem:[%s3 + $0x18] sm:$0xff]
  %v3944 = vld [vmem:[%s3 + $0x20] sm:$0xff]
  %v3945 = vld [vmem:[%s3 + $0x28] sm:$0xff]
  %v3946 = vld [vmem:[%s3 + $0x30] sm:$0xff]
  %v3947 = vld [vmem:[%s3 + $0x38] sm:$0xff]
  %v3948 = vld [vmem:[%s3 + $0x40] sm:$0xff]
  %v3949 = vld [vmem:[%s3 + $0x48] sm:$0xff]
  %v3950 = vld [vmem:[%s3 + $0x50] sm:$0xff]
  %v3951 = vld [vmem:[%s3 + $0x58] sm:$0xff]
  %v3952 = vld [vmem:[%s3 + $0x60] sm:$0xff]
  %v3953 = vld [vmem:[%s3 + $0x68] sm:$0xff]
  %v3954 = vld [vmem:[%s3 + $0x70] sm:$0xff]
  %v3955 = vld [vmem:[%s3 + $0x78] sm:$0xff]
  %v3956 = vld [vmem:[%s3 + $0x80] sm:$0xff]
  %v3957 = vld [vmem:[%s3 + $0x88] sm:$0xff]
  %v3958 = vld [vmem:[%s3 + $0x90] sm:$0xff]
  %v3959 = vld [vmem:[%s3 + $0x98] sm:$0xff]
  %v3960 = vld [vmem:[%s3 + $0xa0] sm:$0xff]
  %v3961 = vld [vmem:[%s3 + $0xa8] sm:$0xff]
  %v3962 = vld [vmem:[%s3 + $0xb0] sm:$0xff]
  %v3963 = vld [vmem:[%s3 + $0xb8] sm:$0xff]
  %v3964 = vld [vmem:[%s3 + $0xc0] sm:$0xff]
  %v3965 = vld [vmem:[%s3 + $0xc8] sm:$0xff]
  %v3966 = vld [vmem:[%s3 + $0xd0] sm:$0xff]
  %v3967 = vld [vmem:[%s3 + $0xd8] sm:$0xff]
  %v3968 = vld [vmem:[%s3 + $0xe0] sm:$0xff]
  %v3969 = vld [vmem:[%s3 + $0xe8] sm:$0xff]
  %v3970 = vld [vmem:[%s3 + $0xf0] sm:$0xff]
  %v3971 = vld [vmem:[%s3 + $0xf8] sm:$0xff]
  %v3972 = vld [vmem:[%s3 + $0x100] sm:$0xff]
  %v3973 = vld [vmem:[%s3 + $0x108] sm:$0xff]
  %v3974 = vld [vmem:[%s3 + $0x110] sm:$0xff]
  %v3975 = vld [vmem:[%s3 + $0x118] sm:$0xff]
  %v3976 = vld [vmem:[%s3 + $0x120] sm:$0xff]
  %v3977 = vld [vmem:[%s3 + $0x128] sm:$0xff]
  %v3978 = vld [vmem:[%s3 + $0x130] sm:$0xff]
  %v3979 = vld [vmem:[%s3 + $0x138] sm:$0xff]
  %v3980 = vld [vmem:[%s3 + $0x140] sm:$0xff]
  %v3981 = vld [vmem:[%s3 + $0x148] sm:$0xff]
  %v3982 = vld [vmem:[%s3 + $0x150] sm:$0xff]
  %v3983 = vld [vmem:[%s3 + $0x158] sm:$0xff]
  %v3984 = vld [vmem:[%s3 + $0x160] sm:$0xff]
  %v3985 = vld [vmem:[%s3 + $0x168] sm:$0xff]
  %v3986 = vld [vmem:[%s3 + $0x170] sm:$0xff]
  %v3987 = vld [vmem:[%s3 + $0x178] sm:$0xff]
  %v3988 = vld [vmem:[%s3 + $0x180] sm:$0xff]
  %v3989 = vld [vmem:[%s3 + $0x188] sm:$0xff]
  %v3990 = vld [vmem:[%s3 + $0x190] sm:$0xff]
  %v3991 = vld [vmem:[%s3 + $0x198] sm:$0xff]
  %v3992 = vld [vmem:[%s3 + $0x1a0] sm:$0xff]
  %v3993 = vld [vmem:[%s3 + $0x1a8] sm:$0xff]
  %v3994 = vld [vmem:[%s3 + $0x1b0] sm:$0xff]
  %v3995 = vld [vmem:[%s3 + $0x1b8] sm:$0xff]
  %v3996 = vld [vmem:[%s3 + $0x1c0] sm:$0xff]
  %v3997 = vld [vmem:[%s3 + $0x1c8] sm:$0xff]
  %v3998 = vld [vmem:[%s3 + $0x1d0] sm:$0xff]
  %v3999 = vld [vmem:[%s3 + $0x1d8] sm:$0xff]
  %v4000 = vld [vmem:[%s3 + $0x1e0] sm:$0xff]
  %v4001 = vld [vmem:[%s3 + $0x1e8] sm:$0xff]
  %v4002 = vld [vmem:[%s3 + $0x1f0] sm:$0xff]
  %v4003 = vld [vmem:[%s3 + $0x1f8] sm:$0xff]
  %4004 = vmatprep.subr.mxu0 %v4001
  %4005 = vmatpush1.msra.mxu0 %v4000
  %4006 = vmatprep.subr.mxu0 %v3997
  %4007 = vmatpush1.msra.mxu0 %v3996
  %4008 = vmatprep.subr.mxu0 %v3993
  %4009 = vmatpush1.msra.mxu0 %v3992
  %4010 = vmatprep.subr.mxu0 %v3989
  %4011 = vmatpush1.msra.mxu0 %v3988
  %4012 = vmatprep.subr.mxu0 %v3985
  %4013 = vmatpush1.msra.mxu0 %v3984
  %4014 = vmatprep.subr.mxu0 %v3981
  %4015 = vmatpush1.msra.mxu0 %v3980
  %4016 = vmatprep.subr.mxu0 %v3977
  %4017 = vmatpush1.msra.mxu0 %v3976
  %4018 = vmatprep.subr.mxu0 %v3973
  %4019 = vmatpush1.msra.mxu0 %v3972
  %4020 = vmatprep.subr.mxu0 %v3969
  %4021 = vmatpush1.msra.mxu0 %v3968
  %4022 = vmatprep.subr.mxu0 %v3965
  %4023 = vmatpush1.msra.mxu0 %v3964
  %4024 = vmatprep.subr.mxu0 %v3961
  %4025 = vmatpush1.msra.mxu0 %v3960
  %4026 = vmatprep.subr.mxu0 %v3957
  %4027 = vmatpush1.msra.mxu0 %v3956
  %4028 = vmatprep.subr.mxu0 %v3953
  %4029 = vmatpush1.msra.mxu0 %v3952
  %4030 = vmatprep.subr.mxu0 %v3949
  %4031 = vmatpush1.msra.mxu0 %v3948
  %4032 = vmatprep.subr.mxu0 %v3945
  %4033 = vmatpush1.msra.mxu0 %v3944
  %4034 = vmatprep.subr.mxu0 %v3941
  %4035 = vmatpush1.msra.mxu0 %v3940
  %4036 = vmatprep.subr.mxu0 0.0
  %4037 = vmatpush2.msra.mxu0 0.0
  %4038 = vmatprep.subr.mxu0 0.0
  %4039 = vmatpush2.msra.mxu0 0.0
  %4040 = vmatprep.subr.mxu0 0.0
  %4041 = vmatpush2.msra.mxu0 0.0
  %4042 = vmatprep.subr.mxu0 0.0
  %4043 = vmatpush2.msra.mxu0 0.0
  %4044 = vmatprep.subr.mxu0 0.0
  %4045 = vmatpush2.msra.mxu0 0.0
  %4046 = vmatprep.subr.mxu0 0.0
  %4047 = vmatpush2.msra.mxu0 0.0
  %4048 = vmatprep.subr.mxu0 0.0
  %4049 = vmatpush2.msra.mxu0 0.0
  %4050 = vmatprep.subr.mxu0 0.0
  %4051 = vmatpush2.msra.mxu0 0.0
  %4052 = vmatprep.subr.mxu0 0.0
  %4053 = vmatpush2.msra.mxu0 0.0
  %4054 = vmatprep.subr.mxu0 0.0
  %4055 = vmatpush2.msra.mxu0 0.0
  %4056 = vmatprep.subr.mxu0 0.0
  %4057 = vmatpush2.msra.mxu0 0.0
  %4058 = vmatprep.subr.mxu0 0.0
  %4059 = vmatpush2.msra.mxu0 0.0
  %4060 = vmatprep.subr.mxu0 0.0
  %4061 = vmatpush2.msra.mxu0 0.0
  %4062 = vmatprep.subr.mxu0 0.0
  %4063 = vmatpush2.msra.mxu0 0.0
  %4064 = vmatprep.subr.mxu0 0.0
  %4065 = vmatpush2.msra.mxu0 0.0
  %4066 = vmatprep.subr.mxu0 0.0
  %4067 = vmatpush2.msra.mxu0 0.0
  %4068 = vmatprep.mubr.f32.mxu0 0.0
  %4069 = vmatmul.mubr.f32.gmra.mxu0 %v3939
  %v4070 = vpop.f32.mrf.mxu0
  %v4071 = vadd.f32 0.0, %v4070
  %v4072 = vpop.f32.mrf.mxu0
  %v4073 = vadd.f32 0.0, %v4072
  %4074 = vdwg.mxu0
  %4075 = vmatprep.subr.mxu0 %v4003
  %4076 = vmatpush1.msra.mxu0 %v4002
  %4077 = vmatprep.subr.mxu0 %v3999
  %4078 = vmatpush1.msra.mxu0 %v3998
  %4079 = vmatprep.subr.mxu0 %v3995
  %4080 = vmatpush1.msra.mxu0 %v3994
  %4081 = vmatprep.subr.mxu0 %v3991
  %4082 = vmatpush1.msra.mxu0 %v3990
  %4083 = vmatprep.subr.mxu0 %v3987
  %4084 = vmatpush1.msra.mxu0 %v3986
  %4085 = vmatprep.subr.mxu0 %v3983
  %4086 = vmatpush1.msra.mxu0 %v3982
  %4087 = vmatprep.subr.mxu0 %v3979
  %4088 = vmatpush1.msra.mxu0 %v3978
  %4089 = vmatprep.subr.mxu0 %v3975
  %4090 = vmatpush1.msra.mxu0 %v3974
  %4091 = vmatprep.subr.mxu0 %v3971
  %4092 = vmatpush1.msra.mxu0 %v3970
  %4093 = vmatprep.subr.mxu0 %v3967
  %4094 = vmatpush1.msra.mxu0 %v3966
  %4095 = vmatprep.subr.mxu0 %v3963
  %4096 = vmatpush1.msra.mxu0 %v3962
  %4097 = vmatprep.subr.mxu0 %v3959
  %4098 = vmatpush1.msra.mxu0 %v3958
  %4099 = vmatprep.subr.mxu0 %v3955
  %4100 = vmatpush1.msra.mxu0 %v3954
  %4101 = vmatprep.subr.mxu0 %v3951
  %4102 = vmatpush1.msra.mxu0 %v3950
  %4103 = vmatprep.subr.mxu0 %v3947
  %4104 = vmatpush1.msra.mxu0 %v3946
  %4105 = vmatprep.subr.mxu0 %v3943
  %4106 = vmatpush1.msra.mxu0 %v3942
  %4107 = vmatprep.subr.mxu0 0.0
  %4108 = vmatpush2.msra.mxu0 0.0
  %4109 = vmatprep.subr.mxu0 0.0
  %4110 = vmatpush2.msra.mxu0 0.0
  %4111 = vmatprep.subr.mxu0 0.0
  %4112 = vmatpush2.msra.mxu0 0.0
  %4113 = vmatprep.subr.mxu0 0.0
  %4114 = vmatpush2.msra.mxu0 0.0
  %4115 = vmatprep.subr.mxu0 0.0
  %4116 = vmatpush2.msra.mxu0 0.0
  %4117 = vmatprep.subr.mxu0 0.0
  %4118 = vmatpush2.msra.mxu0 0.0
  %4119 = vmatprep.subr.mxu0 0.0
  %4120 = vmatpush2.msra.mxu0 0.0
  %4121 = vmatprep.subr.mxu0 0.0
  %4122 = vmatpush2.msra.mxu0 0.0
  %4123 = vmatprep.subr.mxu0 0.0
  %4124 = vmatpush2.msra.mxu0 0.0
  %4125 = vmatprep.subr.mxu0 0.0
  %4126 = vmatpush2.msra.mxu0 0.0
  %4127 = vmatprep.subr.mxu0 0.0
  %4128 = vmatpush2.msra.mxu0 0.0
  %4129 = vmatprep.subr.mxu0 0.0
  %4130 = vmatpush2.msra.mxu0 0.0
  %4131 = vmatprep.subr.mxu0 0.0
  %4132 = vmatpush2.msra.mxu0 0.0
  %4133 = vmatprep.subr.mxu0 0.0
  %4134 = vmatpush2.msra.mxu0 0.0
  %4135 = vmatprep.subr.mxu0 0.0
  %4136 = vmatpush2.msra.mxu0 0.0
  %4137 = vmatprep.subr.mxu0 0.0
  %4138 = vmatpush2.msra.mxu0 0.0
  %4139 = vmatprep.mubr.f32.mxu0 0.0
  %4140 = vmatmul.mubr.f32.gmra.mxu0 %v3939
  %v4141 = vpop.f32.mrf.mxu0
  %v4142 = vadd.f32 0.0, %v4141
  %v4143 = vpop.f32.mrf.mxu0
  %v4144 = vadd.f32 0.0, %v4143
  %4145 = vdwg.mxu0
  %s4146 = scalar_lea.vmem %s0, 56
  %v4147 = vld [vmem:[%s4146] sm:$0xff]
  %v4152 = vcombine.low %v3864, %v3866
  %v4153 = vcombine.low %v3935, %v3937
  %v4155 = vunpack.c.l.s4 1983009808
  %v4156 = vunpack.c.0.s8 %v4155
  %v4157 = vlaneseq
  %v4158 = vshrl.u32 %v4157, 7
  %v4159 = vsub.s32 %v4156, %v4158
  %v4160 = vrot.slane %v4152, %v4159
  %v4162 = vunpack.c.l.s4 1983009808
  %v4163 = vunpack.c.0.s8 %v4162
  %v4164 = vlaneseq
  %v4165 = vshrl.u32 %v4164, 7
  %v4166 = vsub.s32 %v4163, %v4165
  %v4167 = vrot.slane %v4153, %v4166
  %v4168 = vcombine.low %v4160, %v4167
  %v4170 = vadd.f32 %v4147, %v4168
  %v4171 = vld [vmem:[#allocation3] sm:$0x3]
  %v4172 = vmul.f32 %v4170, 0.5
  %v4173 = vtanh.pop %v4172
  %v4174 = vadd.f32 %v4173, 1.0
  %v4175 = vmul.f32 %v4174, 0.5
  %v4177 = vrot.slane %v4170, 2
  %v4179 = vmul.f32 %v4177, 0.5
  %v4180 = vtanh.pop %v4179
  %v4181 = vadd.f32 %v4180, 1.0
  %v4182 = vmul.f32 %v4181, 0.5
  %v4183 = vrot.slane %v4170, 4
  %v4185 = vtanh.pop %v4183
  %v4186 = vrot.slane %v4170, 6
  %v4188 = vmul.f32 %v4186, 0.5
  %v4189 = vtanh.pop %v4188
  %v4190 = vadd.f32 %v4189, 1.0
  %v4191 = vmul.f32 %v4190, 0.5
  %v4192 = vmul.f32 %v4182, %v4171
  %v4193 = vmul.f32 %v4175, %v4185
  %v4194 = vadd.f32 %v4192, %v4193
  %v4195 = vtanh.pop %v4194
  %v4196 = vmul.f32 %v4191, %v4195
  %v4197 = vld [vmem:[%s47] sm:$0xff]
  %v4202 = vcombine.low %v4071, %v4073
  %v4203 = vcombine.low %v4142, %v4144
  %v4205 = vunpack.c.l.s4 1983009808
  %v4206 = vunpack.c.0.s8 %v4205
  %v4207 = vlaneseq
  %v4208 = vshrl.u32 %v4207, 7
  %v4209 = vsub.s32 %v4206, %v4208
  %v4210 = vrot.slane %v4202, %v4209
  %v4212 = vunpack.c.l.s4 1983009808
  %v4213 = vunpack.c.0.s8 %v4212
  %v4214 = vlaneseq
  %v4215 = vshrl.u32 %v4214, 7
  %v4216 = vsub.s32 %v4213, %v4215
  %v4217 = vrot.slane %v4203, %v4216
  %v4218 = vcombine.low %v4210, %v4217
  %v4220 = vadd.f32 %v4197, %v4218
  %v4221 = vld [vmem:[#allocation5] sm:$0x3]
  %v4222 = vmul.f32 %v4220, 0.5
  %v4223 = vtanh.pop %v4222
  %v4224 = vadd.f32 %v4223, 1.0
  %v4225 = vmul.f32 %v4224, 0.5
  %v4227 = vrot.slane %v4220, 2
  %v4229 = vmul.f32 %v4227, 0.5
  %v4230 = vtanh.pop %v4229
  %v4231 = vadd.f32 %v4230, 1.0
  %v4232 = vmul.f32 %v4231, 0.5
  %v4233 = vrot.slane %v4220, 4
  %v4235 = vtanh.pop %v4233
  %v4236 = vrot.slane %v4220, 6
  %v4238 = vmul.f32 %v4236, 0.5
  %v4239 = vtanh.pop %v4238
  %v4240 = vadd.f32 %v4239, 1.0
  %v4241 = vmul.f32 %v4240, 0.5
  %v4242 = vmul.f32 %v4232, %v4221
  %v4243 = vmul.f32 %v4225, %v4235
  %v4244 = vadd.f32 %v4242, %v4243
  %v4245 = vtanh.pop %v4244
  %v4246 = vmul.f32 %v4241, %v4245
  %4247 = vst [vmem:[#allocation2] sm:$0x3] %v4196
  %4248 = vst [vmem:[#allocation3] sm:$0x3] %v4194
  %4249 = vst [vmem:[#allocation4] sm:$0x3] %v4246
  %4250 = vst [vmem:[#allocation5] sm:$0x3] %v4244
  %s4251 = scalar_lea.vmem %s4, 14
  %4252 = vst [vmem:[%s4251] sm:$0x3] %v4196
  %4253 = vst [vmem:[%s55] sm:$0x3] %v4246
  %s4254 = ssub.s32 0, 0
  %s4255 = smul.u32 8, %s4254
  %p4256 = scmp.lt.s32.totalorder %s4255, 7
  %s4257 = scalar_select %p4256, %s4255, 7
  %s4258 = smul.addr %s4257, 2
  %s4259 = scalar_lea.vmem %s5, %s4258
  // Predicated region
  $region22: #{ocr_forward.4} parent=0 // pred_check
    _
  $region23: #{ocr_forward.4} parent=0 // pred_check_branch
    %4261 = sbr.rel (0) target = $region25
  $region24: #{ocr_forward.4} parent=0 // pred_region
    _
  $region25: #{ocr_forward.4} parent=0 // pred_fallthru
    _
  // Predicated region
  $region26: #{ocr_forward.4} parent=0 // pred_check
    _
  $region27: #{ocr_forward.4} parent=0 // pred_check_branch
    %4263 = sbr.rel (0) target = $region29
  $region28: #{ocr_forward.4} parent=0 // pred_region
    %s4264 = ssub.s32 0, 0
    %s4265 = smul.u32 8, %s4264
  $region29: #{ocr_forward.4} parent=0 // pred_fallthru
    _
  // Predicated region
  $region30: #{ocr_forward.4} parent=0 // pred_check
    _
  $region31: #{ocr_forward.4} parent=0 // pred_check_branch
    %4267 = sbr.rel (0) target = $region33
  $region32: #{ocr_forward.4} parent=0 // pred_region
    _
  $region33: #{ocr_forward.4} parent=0 // pred_fallthru
    _
  // Predicated region
  $region34: #{ocr_forward.4} parent=0 // pred_check
    _
  $region35: #{ocr_forward.4} parent=0 // pred_check_branch
    %4269 = sbr.rel (0) target = $region37
  $region36: #{ocr_forward.4} parent=0 // pred_region
    %s4270 = ssub.s32 0, 0
    %s4271 = smul.u32 8, %s4270
    %p4272 = scmp.lt.s32.totalorder %s4271, 7
    %s4273 = scalar_select %p4272, %s4271, 7
    %s4274 = smul.addr %s4273, 2
    %s4275 = scalar_lea.vmem %s5, %s4274
  $region37: #{ocr_forward.4} parent=0 // pred_fallthru
    _

</llo_original>
